<compile_context>
chip_gen: v7x
topology: tpu7x:2x2x1
jax: 0.10.0
libtpu: 0.0.40
codegen_flags: <defaults>
</compile_context>

<pallas_src>
import functools

import jax
import jax.numpy as jnp
from jax.experimental import pallas as pl
from jax.experimental.pallas import tpu as pltpu

H1 = 1024   # fc hidden width
HL = 128    # enl hidden width


def _round_up(x, m):
    return (x + m - 1) // m * m


# ---------------------------------------------------------------------------
# Kernel (grid = (batch_tiles, 2*K); k axis is sequential / "arbitrary")
# ---------------------------------------------------------------------------
def encoder_kernel(
    y_ref, eps_ref,              # (TB, TK) f32, (TB, EW) f32 [eps_z | eps_l | pad]
    win_ref, bin_ref,            # (TK, 1152) bf16, (1, 1152) f32   [fc1 | enl1*bn1]
    fc2_w_ref, fc2_b_ref,        # (1024, TK) bf16, (1, TK) f32
    enl2_w_ref, enl2_b_ref,      # (128, 128) bf16, (1, 128) f32    [bn2 folded]
    zcat_w_ref, zcat_b_ref,      # (TK, 2*nl) bf16, (1, 2*nl) f32   [z1 | z2]
    lcat_w_ref, lcat_b_ref,      # (128, 2)   bf16, (1, 2)    f32   [l1 | l2]
    out_ref,                     # (TB, OW) f32  [mu_z|logvar_z|z|mu_l|logvar_l|l|pad]
    acc_ref, h1_ref, zc_ref,     # VMEM scratch (persist across the k axis)
    *, n_latent, k_tiles,
):
    nl = n_latent
    k = pl.program_id(1)

    @pl.when(k == 0)
    def _init():
        acc_ref[...] = jnp.zeros_like(acc_ref)
        zc_ref[...] = jnp.zeros_like(zc_ref)

    # Phase 1: accumulate the fused fc1|enl1 pre-activation over n_input tiles.
    @pl.when(k < k_tiles)
    def _phase1():
        logy = jnp.log(y_ref[...] + 1.0)
        acc_ref[...] += jnp.dot(logy.astype(win_ref.dtype), win_ref[...],
                                preferred_element_type=jnp.float32)

    # Phase boundary: finish layer 1, run the (small) l branch, stash h1 for phase 2.
    @pl.when(k == k_tiles)
    def _mid():
        a = jnp.maximum(acc_ref[...] + bin_ref[...], 0.0)   # ReLU / BN-folded ReLU
        h1_ref[...] = a[:, :H1].astype(h1_ref.dtype)
        w = a[:, H1:]
        w = jnp.maximum(
            jnp.dot(w.astype(enl2_w_ref.dtype), enl2_w_ref[...],
                    preferred_element_type=jnp.float32) + enl2_b_ref[...], 0.0)
        lc = jnp.dot(w.astype(lcat_w_ref.dtype), lcat_w_ref[...],
                     preferred_element_type=jnp.float32) + lcat_b_ref[...]
        mu_l = lc[:, 0:1]
        logvar_l = lc[:, 1:2]
        l = mu_l + jnp.exp(0.5 * logvar_l) * eps_ref[:, nl:nl + 1]
        out_ref[:, 3 * nl:3 * nl + 2] = lc                       # [mu_l | logvar_l]
        out_ref[:, 3 * nl + 2:3 * nl + 3] = l
        pad = out_ref.shape[1] - (3 * nl + 3)
        if pad > 0:
            out_ref[:, 3 * nl + 3:] = jnp.zeros(
                (out_ref.shape[0], pad), out_ref.dtype)

    # Phase 2: stream fc2 columns / zcat rows, accumulate the z-head logits.
    @pl.when(k >= k_tiles)
    def _phase2():
        hj = jnp.maximum(
            jnp.dot(h1_ref[...], fc2_w_ref[...],
                    preferred_element_type=jnp.float32) + fc2_b_ref[...], 0.0)
        zc_ref[...] += jnp.dot(hj.astype(zcat_w_ref.dtype), zcat_w_ref[...],
                               preferred_element_type=jnp.float32)

    # Finalize at the last k step for this batch tile.
    @pl.when(k == 2 * k_tiles - 1)
    def _fin():
        zc = zc_ref[...] + zcat_b_ref[...]
        mu_z = zc[:, :nl]
        logvar_z = zc[:, nl:]
        z = mu_z + jnp.exp(0.5 * logvar_z) * eps_ref[:, :nl]
        out_ref[:, :2 * nl] = zc                                 # [mu_z | logvar_z]
        out_ref[:, 2 * nl:3 * nl] = z


# ---------------------------------------------------------------------------
# Parameter packing (fold BN, fuse shared-LHS heads, cast weights to bf16)
# ---------------------------------------------------------------------------
def pack_params(p, compute_dtype=jnp.bfloat16):
    enl1_w = p["enl1_w"] * p["bn1_s"]
    enl1_b = p["enl1_b"] * p["bn1_s"] + p["bn1_t"]
    enl2_w = p["enl2_w"] * p["bn2_s"]
    enl2_b = p["enl2_b"] * p["bn2_s"] + p["bn2_t"]
    return {
        "win": jnp.concatenate([p["fc1_w"], enl1_w], axis=1).astype(compute_dtype),
        "bin": jnp.concatenate([p["fc1_b"], enl1_b], axis=1).astype(jnp.float32),
        "fc2_w": p["fc2_w"].astype(compute_dtype),
        "fc2_b": p["fc2_b"].astype(jnp.float32),
        "enl2_w": enl2_w.astype(compute_dtype),
        "enl2_b": enl2_b.astype(jnp.float32),
        "zcat_w": jnp.concatenate([p["z1_w"], p["z2_w"]], axis=1).astype(compute_dtype),
        "zcat_b": jnp.concatenate([p["z1_b"], p["z2_b"]], axis=1).astype(jnp.float32),
        "lcat_w": jnp.concatenate([p["l1_w"], p["l2_w"]], axis=1).astype(compute_dtype),
        "lcat_b": jnp.concatenate([p["l1_b"], p["l2_b"]], axis=1).astype(jnp.float32),
    }


# ---------------------------------------------------------------------------
# Wrapper
# ---------------------------------------------------------------------------
def _vmem_limit_bytes(TB, TK, nl, EW, OW):
    """Resident VMEM footprint (bytes) with 2x double-buffering on streamed blocks."""
    streamed = 2 * (TK * (H1 + HL) * 2      # win block (bf16)
                    + H1 * TK * 2           # fc2_w block (bf16)
                    + TK * 4                # fc2_b block (f32)
                    + TK * 2 * nl * 2)      # zcat_w block (bf16)
    pinned = ((H1 + HL) * 4 + HL * HL * 2 + HL * 4
              + 2 * nl * 4 + HL * 2 * 2 + 2 * 4)
    io_blocks = 2 * TB * (TK + EW + OW) * 4
    scratch = TB * ((H1 + HL) * 4 + H1 * 2 + 2 * nl * 4)
    total = streamed + pinned + io_blocks + scratch
    return int(min(2 * total + (8 << 20), 100 << 20))


def encoder_forward(y, eps_z, eps_l, packed, n_latent, *,
                    batch_tile=128, k_tile=None, vmem_budget_bytes=40 << 20):
    """Eval-mode Encoder forward. Returns (mu_z, logvar_z, z, mu_l, logvar_l, l).

    batch_tile: 128 default (v5e/v7x); pass 256 on v6e for the 256x256 MXU.
    k_tile: None -> auto (fully VMEM-resident weights when they fit the budget,
            otherwise stream n_input in 512-wide tiles).
    """
    B, n_in = y.shape
    nl = n_latent

    # ---- batch tiling ----
    TB = min(batch_tile, _round_up(B, 8))
    Bp = _round_up(B, TB)

    # ---- n_input tiling: resident (K == 1) when the bf16 weight set fits ----
    if k_tile is None:
        n128 = _round_up(n_in, 128)
        w_bytes = 2 * n128 * (H1 + HL) + 2 * H1 * n128 + 2 * n128 * 2 * nl
        k_tile = n128 if w_bytes <= vmem_budget_bytes else 512
    TK = min(_round_up(k_tile, 128), _round_up(n_in, 128))
    n_in_p = _round_up(n_in, TK)
    K = n_in_p // TK

    EW = _round_up(nl + 1, 128)        # eps slab lanes: [eps_z | eps_l | pad]
    OW = _round_up(3 * nl + 3, 128)    # out slab lanes: [mu_z|logvar_z|z|mu_l|logvar_l|l|pad]

    # ---- pad inputs / weights to the tile grid (zero padding is exact: log(0+1)=0) ----
    y_p = jnp.pad(y, ((0, Bp - B), (0, n_in_p - n_in)))
    eps = jnp.concatenate([eps_z, eps_l], axis=1)
    eps = jnp.pad(eps, ((0, Bp - B), (0, EW - (nl + 1))))

    win = jnp.pad(packed["win"], ((0, n_in_p - n_in), (0, 0)))
    fc2_w = jnp.pad(packed["fc2_w"], ((0, 0), (0, n_in_p - n_in)))
    fc2_b = jnp.pad(packed["fc2_b"], ((0, 0), (0, n_in_p - n_in)))
    zcat_w = jnp.pad(packed["zcat_w"], ((0, n_in_p - n_in), (0, 0)))

    # ---- index maps (phase-clamped so no re-DMA happens in the other phase) ----
    y_map = lambda b, k: (b, jnp.minimum(k, K - 1))
    win_map = lambda b, k: (jnp.minimum(k, K - 1), 0)
    col_map = lambda b, k: (0, jnp.maximum(k - K, 0))
    zrow_map = lambda b, k: (jnp.maximum(k - K, 0), 0)
    row_map = lambda b, k: (b, 0)
    pin_map = lambda b, k: (0, 0)

    vmem_limit = _vmem_limit_bytes(TB, TK, nl, EW, OW)

    def build(single_buffer):
        def pin_spec(shape):
            if single_buffer:
                return pl.BlockSpec(shape, pin_map, pipeline_mode=pl.Buffered(1))
            return pl.BlockSpec(shape, pin_map)

        def stream_spec(shape, imap):
            if single_buffer and K == 1:     # constant index -> truly pinned
                return pl.BlockSpec(shape, imap, pipeline_mode=pl.Buffered(1))
            return pl.BlockSpec(shape, imap)

        in_specs = [
            pl.BlockSpec((TB, TK), y_map),
            pl.BlockSpec((TB, EW), row_map),
            stream_spec((TK, H1 + HL), win_map),
            pin_spec((1, H1 + HL)),
            stream_spec((H1, TK), col_map),
            stream_spec((1, TK), col_map),
            pin_spec((HL, HL)),
            pin_spec((1, HL)),
            stream_spec((TK, 2 * nl), zrow_map),
            pin_spec((1, 2 * nl)),
            pin_spec((HL, 2)),
            pin_spec((1, 2)),
        ]
        return pl.pallas_call(
            functools.partial(encoder_kernel, n_latent=nl, k_tiles=K),
            grid=(Bp // TB, 2 * K),
            in_specs=in_specs,
            out_specs=pl.BlockSpec((TB, OW), row_map),
            out_shape=jax.ShapeDtypeStruct((Bp, OW), jnp.float32),
            scratch_shapes=[
                pltpu.VMEM((TB, H1 + HL), jnp.float32),   # first-layer pre-act accumulator
                pltpu.VMEM((TB, H1), jnp.bfloat16),       # h1 = relu(fc1), held for phase 2
                pltpu.VMEM((TB, 2 * nl), jnp.float32),    # z-head logit accumulator
            ],
            compiler_params=pltpu.CompilerParams(
                dimension_semantics=("parallel", "arbitrary"),
                vmem_limit_bytes=vmem_limit,
            ),
        )

    args = (y_p, eps, win, packed["bin"], fc2_w, fc2_b,
            packed["enl2_w"], packed["enl2_b"], zcat_w, packed["zcat_b"],
            packed["lcat_w"], packed["lcat_b"])
    try:
        out = build(single_buffer=True)(*args)
    except Exception:
        # pipeline_mode=pl.Buffered(1) not supported on this jax -> default buffering.
        out = build(single_buffer=False)(*args)

    mu_z = out[:B, :nl]
    logvar_z = out[:B, nl:2 * nl]
    z = out[:B, 2 * nl:3 * nl]
    mu_l = out[:B, 3 * nl:3 * nl + 1]
    logvar_l = out[:B, 3 * nl + 1:3 * nl + 2]
    l = out[:B, 3 * nl + 2:3 * nl + 3]
    return mu_z, logvar_z, z, mu_l, logvar_l, l


# ---------------------------------------------------------------------------
# Init + references
# ---------------------------------------------------------------------------
def init_params(key, n_input, n_latent, std=0.01, bn_eps=1e-5):
    """Mirror the PyTorch module's init: Linear W~N(0,std), b=0; weights stored
    transposed as (in, out); BN running stats folded into per-feature scale/shift."""
    keys = jax.random.split(key, 8)
    p = {}
    p["fc1_w"] = std * jax.random.normal(keys[0], (n_input, H1), jnp.float32)
    p["fc1_b"] = jnp.zeros((1, H1), jnp.float32)
    p["fc2_w"] = std * jax.random.normal(keys[1], (H1, n_input), jnp.float32)
    p["fc2_b"] = jnp.zeros((1, n_input), jnp.float32)
    p["z1_w"] = std * jax.random.normal(keys[2], (n_input, n_latent), jnp.float32)
    p["z1_b"] = jnp.zeros((1, n_latent), jnp.float32)
    p["z2_w"] = std * jax.random.normal(keys[3], (n_input, n_latent), jnp.float32)
    p["z2_b"] = jnp.zeros((1, n_latent), jnp.float32)
    p["enl1_w"] = std * jax.random.normal(keys[4], (n_input, HL), jnp.float32)
    p["enl1_b"] = jnp.zeros((1, HL), jnp.float32)
    p["enl2_w"] = std * jax.random.normal(keys[5], (HL, HL), jnp.float32)
    p["enl2_b"] = jnp.zeros((1, HL), jnp.float32)
    gamma = jnp.ones((1, HL), jnp.float32)
    beta = jnp.zeros((1, HL), jnp.float32)
    rmean = jnp.zeros((1, HL), jnp.float32)
    rvar = jnp.ones((1, HL), jnp.float32)
    scale = gamma / jnp.sqrt(rvar + bn_eps)
    p["bn1_s"] = scale
    p["bn1_t"] = beta - rmean * scale
    p["bn2_s"] = scale
    p["bn2_t"] = beta - rmean * scale
    p["l1_w"] = std * jax.random.normal(keys[6], (HL, 1), jnp.float32)
    p["l1_b"] = jnp.zeros((1, 1), jnp.float32)
    p["l2_w"] = std * jax.random.normal(keys[7], (HL, 1), jnp.float32)
    p["l2_b"] = jnp.zeros((1, 1), jnp.float32)
    return p


def encoder_reference_f32(y, eps_z, eps_l, p):
    """Pure-JAX f32 reference mirroring the PyTorch module (eval mode)."""
    logy = jnp.log(y + 1.0)
    h = jnp.maximum(logy @ p["fc1_w"] + p["fc1_b"], 0.0)
    h = jnp.maximum(h @ p["fc2_w"] + p["fc2_b"], 0.0)
    mu_z = h @ p["z1_w"] + p["z1_b"]
    logvar_z = h @ p["z2_w"] + p["z2_b"]
    z = mu_z + jnp.exp(0.5 * logvar_z) * eps_z
    w = logy
    w = jnp.maximum((w @ p["enl1_w"] + p["enl1_b"]) * p["bn1_s"] + p["bn1_t"], 0.0)
    w = jnp.maximum((w @ p["enl2_w"] + p["enl2_b"]) * p["bn2_s"] + p["bn2_t"], 0.0)
    mu_l = w @ p["l1_w"] + p["l1_b"]
    logvar_l = w @ p["l2_w"] + p["l2_b"]
    l = mu_l + jnp.exp(0.5 * logvar_l) * eps_l
    return mu_z, logvar_z, z, mu_l, logvar_l, l


def encoder_reference_packed(y, eps_z, eps_l, packed, n_latent):
    """Reference using exactly the kernel's numerical recipe (bf16 weights, f32 acc)."""
    dt = packed["win"].dtype
    logy = jnp.log(y + 1.0)
    a = jnp.dot(logy.astype(dt), packed["win"],
                preferred_element_type=jnp.float32) + packed["bin"]
    a = jnp.maximum(a, 0.0)
    h, w = a[:, :H1], a[:, H1:]
    h = jnp.maximum(jnp.dot(h.astype(dt), packed["fc2_w"],
                            preferred_element_type=jnp.float32) + packed["fc2_b"], 0.0)
    w = jnp.maximum(jnp.dot(w.astype(dt), packed["enl2_w"],
                            preferred_element_type=jnp.float32) + packed["enl2_b"], 0.0)
    zc = jnp.dot(h.astype(dt), packed["zcat_w"],
                 preferred_element_type=jnp.float32) + packed["zcat_b"]
    mu_z, logvar_z = zc[:, :n_latent], zc[:, n_latent:]
    z = mu_z + jnp.exp(0.5 * logvar_z) * eps_z
    lc = jnp.dot(w.astype(dt), packed["lcat_w"],
                 preferred_element_type=jnp.float32) + packed["lcat_b"]
    mu_l, logvar_l = lc[:, 0:1], lc[:, 1:2]
    l = mu_l + jnp.exp(0.5 * logvar_l) * eps_l
    return mu_z, logvar_z, z, mu_l, logvar_l, l


if __name__ == "__main__":
    B, n_input, n_latent = 16, 256, 32
    key = jax.random.PRNGKey(0)
    k_y, k_eps_z, k_eps_l, k_params = jax.random.split(key, 4)

    # Non-negative count-like input (scPI operates on count data).
    y = jax.random.uniform(k_y, (B, n_input), jnp.float32, 0.0, 10.0)
    eps_z = jax.random.normal(k_eps_z, (B, n_latent), jnp.float32)
    eps_l = jax.random.normal(k_eps_l, (B, 1), jnp.float32)

    params = init_params(k_params, n_input, n_latent)
    packed = pack_params(params)

    refs_bf16 = encoder_reference_packed(y, eps_z, eps_l, packed, n_latent)
    refs_f32 = encoder_reference_f32(y, eps_z, eps_l, params)

    # Config 1: auto -> weights fully VMEM-resident (K=1), single batch tile.
    # Config 2: forced streaming path (K=2) with two batch tiles -> exercises the
    #           accumulator re-init, both phases and weight streaming.
    for cfg in (dict(), dict(k_tile=128, batch_tile=8)):
        outs = encoder_forward(y, eps_z, eps_l, packed, n_latent, **cfg)
        outs = jax.block_until_ready(outs)

        # Tight check against the bf16-weight reference (same numerical recipe).
        for o, r in zip(outs, refs_bf16):
            assert o.shape == r.shape and o.dtype == jnp.float32, cfg
            assert jnp.allclose(o, r, atol=1e-3, rtol=1e-3), cfg

        # Loose check against the full-f32 module reference (bf16 weight rounding).
        for o, r in zip(outs, refs_f32):
            assert jnp.allclose(o, r, atol=2e-2, rtol=2e-2), cfg

    print("KERNEL_OK")
</pallas_src>

<mosaic_0001>
module attributes {stable_mosaic.version = 11 : i64} {
  func.func @encoder_kernel(%arg0: i32, %arg1: i32, %arg2: memref<16x256xf32, #tpu.memory_space<vmem>>, %arg3: memref<16x128xf32, #tpu.memory_space<vmem>>, %arg4: memref<256x1152xbf16, #tpu.memory_space<vmem>>, %arg5: memref<1x1152xf32, #tpu.memory_space<vmem>>, %arg6: memref<1024x256xbf16, #tpu.memory_space<vmem>>, %arg7: memref<1x256xf32, #tpu.memory_space<vmem>>, %arg8: memref<128x128xbf16, #tpu.memory_space<vmem>>, %arg9: memref<1x128xf32, #tpu.memory_space<vmem>>, %arg10: memref<256x64xbf16, #tpu.memory_space<vmem>>, %arg11: memref<1x64xf32, #tpu.memory_space<vmem>>, %arg12: memref<128x2xbf16, #tpu.memory_space<vmem>>, %arg13: memref<1x2xf32, #tpu.memory_space<vmem>>, %arg14: memref<16x128xf32, #tpu.memory_space<vmem>>, %arg15: memref<16x1152xf32, #tpu.memory_space<vmem>>, %arg16: memref<16x1024xbf16, #tpu.memory_space<vmem>>, %arg17: memref<16x64xf32, #tpu.memory_space<vmem>>) attributes {dimension_semantics = [#tpu.dimension_semantics<parallel>, #tpu.dimension_semantics<arbitrary>], iteration_bounds = array<i64: 1, 2>, scalar_prefetch = 0 : i64, scratch_operands = 3 : i64, tpu.core_type = #tpu.core_type<tc>, window_params = [{transform_indices = @transform_0, window_bounds = array<i64: 16, 256>}, {transform_indices = @transform_1, window_bounds = array<i64: 16, 128>}, {pipeline_mode = #tpu.pipeline_mode<synchronous>, transform_indices = @transform_2, window_bounds = array<i64: 256, 1152>}, {pipeline_mode = #tpu.pipeline_mode<synchronous>, transform_indices = @transform_3, window_bounds = array<i64: 1, 1152>}, {pipeline_mode = #tpu.pipeline_mode<synchronous>, transform_indices = @transform_4, window_bounds = array<i64: 1024, 256>}, {pipeline_mode = #tpu.pipeline_mode<synchronous>, transform_indices = @transform_5, window_bounds = array<i64: 1, 256>}, {pipeline_mode = #tpu.pipeline_mode<synchronous>, transform_indices = @transform_6, window_bounds = array<i64: 128, 128>}, {pipeline_mode = #tpu.pipeline_mode<synchronous>, transform_indices = @transform_7, window_bounds = array<i64: 1, 128>}, {pipeline_mode = #tpu.pipeline_mode<synchronous>, transform_indices = @transform_8, window_bounds = array<i64: 256, 64>}, {pipeline_mode = #tpu.pipeline_mode<synchronous>, transform_indices = @transform_9, window_bounds = array<i64: 1, 64>}, {pipeline_mode = #tpu.pipeline_mode<synchronous>, transform_indices = @transform_10, window_bounds = array<i64: 128, 2>}, {pipeline_mode = #tpu.pipeline_mode<synchronous>, transform_indices = @transform_11, window_bounds = array<i64: 1, 2>}, {transform_indices = @transform_12, window_bounds = array<i64: 16, 128>}]} {
    %c0_i32 = arith.constant 0 : i32
    %0 = arith.cmpi eq, %arg1, %c0_i32 : i32
    %1 = arith.extui %0 : i1 to i32
    %c0_i32_0 = arith.constant 0 : i32
    %2 = arith.cmpi ne, %1, %c0_i32_0 : i32
    scf.if %2 {
      %cst = arith.constant 0.000000e+00 : f32
      %15 = vector.broadcast %cst : f32 to vector<16x1152xf32>
      %c0 = arith.constant 0 : index
      %c0_8 = arith.constant 0 : index
      %16 = vector.load %arg15[%c0, %c0_8] : memref<16x1152xf32, #tpu.memory_space<vmem>>, vector<16x1152xf32>
      tpu.vector_store %arg15[%c0, %c0_8], %15 {strides = array<i32>} : memref<16x1152xf32, #tpu.memory_space<vmem>>, vector<16x1152xf32>,
      %cst_9 = arith.constant 0.000000e+00 : f32
      %17 = vector.broadcast %cst_9 : f32 to vector<16x64xf32>
      %c0_10 = arith.constant 0 : index
      %c0_11 = arith.constant 0 : index
      %18 = vector.load %arg17[%c0_10, %c0_11] : memref<16x64xf32, #tpu.memory_space<vmem>>, vector<16x64xf32>
      tpu.vector_store %arg17[%c0_10, %c0_11], %17 {strides = array<i32>} : memref<16x64xf32, #tpu.memory_space<vmem>>, vector<16x64xf32>,
    } else {
    }
    %c1_i32 = arith.constant 1 : i32
    %3 = arith.cmpi slt, %arg1, %c1_i32 : i32
    %4 = arith.extui %3 : i1 to i32
    %c0_i32_1 = arith.constant 0 : i32
    %5 = arith.cmpi ne, %4, %c0_i32_1 : i32
    scf.if %5 {
      %c0 = arith.constant 0 : index
      %c0_8 = arith.constant 0 : index
      %15 = vector.load %arg2[%c0, %c0_8] : memref<16x256xf32, #tpu.memory_space<vmem>>, vector<16x256xf32>
      %cst = arith.constant 1.000000e+00 : f32
      %16 = vector.broadcast %cst : f32 to vector<16x256xf32>
      %17 = arith.addf %15, %16 : vector<16x256xf32>
      %18 = math.log %17 : vector<16x256xf32>
      %c0_9 = arith.constant 0 : index
      %c0_10 = arith.constant 0 : index
      %19 = vector.load %arg15[%c0_9, %c0_10] : memref<16x1152xf32, #tpu.memory_space<vmem>>, vector<16x1152xf32>
      %20 = arith.truncf %18 : vector<16x256xf32> to vector<16x256xbf16>
      %c0_11 = arith.constant 0 : index
      %c0_12 = arith.constant 0 : index
      %21 = vector.load %arg4[%c0_11, %c0_12] : memref<256x1152xbf16, #tpu.memory_space<vmem>>, vector<256x1152xbf16>
      %cst_13 = arith.constant dense<0.000000e+00> : vector<16x1152xf32>
      %22 = tpu.matmul %20, %21, %cst_13 {dimension_numbers = #tpu.dot_dimension_numbers<[1], [0], [0], [1], [0, 0, 1, 1], [], []>} : vector<16x256xbf16>, vector<256x1152xbf16>, vector<16x1152xf32> -> vector<16x1152xf32>
      %23 = arith.addf %19, %22 : vector<16x1152xf32>
      %c0_14 = arith.constant 0 : index
      %c0_15 = arith.constant 0 : index
      %24 = vector.load %arg15[%c0_14, %c0_15] : memref<16x1152xf32, #tpu.memory_space<vmem>>, vector<16x1152xf32>
      tpu.vector_store %arg15[%c0_14, %c0_15], %23 {strides = array<i32>} : memref<16x1152xf32, #tpu.memory_space<vmem>>, vector<16x1152xf32>,
    } else {
    }
    %c1_i32_2 = arith.constant 1 : i32
    %6 = arith.cmpi eq, %arg1, %c1_i32_2 : i32
    %7 = arith.extui %6 : i1 to i32
    %c0_i32_3 = arith.constant 0 : i32
    %8 = arith.cmpi ne, %7, %c0_i32_3 : i32
    scf.if %8 {
      %c0 = arith.constant 0 : index
      %c0_8 = arith.constant 0 : index
      %15 = vector.load %arg15[%c0, %c0_8] : memref<16x1152xf32, #tpu.memory_space<vmem>>, vector<16x1152xf32>
      %c0_9 = arith.constant 0 : index
      %c0_10 = arith.constant 0 : index
      %16 = vector.load %arg5[%c0_9, %c0_10] : memref<1x1152xf32, #tpu.memory_space<vmem>>, vector<1x1152xf32>
      %17 = vector.broadcast %16 : vector<1x1152xf32> to vector<16x1152xf32>
      %18 = arith.addf %15, %17 : vector<16x1152xf32>
      %cst = arith.constant 0.000000e+00 : f32
      %19 = vector.broadcast %cst : f32 to vector<16x1152xf32>
      %20 = arith.maximumf %18, %19 : vector<16x1152xf32>
      %21 = vector.extract_strided_slice %20 {offsets = [0, 0], sizes = [16, 1024], strides = [1, 1]} : vector<16x1152xf32> to vector<16x1024xf32>
      %22 = arith.truncf %21 : vector<16x1024xf32> to vector<16x1024xbf16>
      %c0_11 = arith.constant 0 : index
      %c0_12 = arith.constant 0 : index
      %23 = vector.load %arg16[%c0_11, %c0_12] : memref<16x1024xbf16, #tpu.memory_space<vmem>>, vector<16x1024xbf16>
      tpu.vector_store %arg16[%c0_11, %c0_12], %22 {strides = array<i32>} : memref<16x1024xbf16, #tpu.memory_space<vmem>>, vector<16x1024xbf16>,
      %24 = vector.extract_strided_slice %20 {offsets = [0, 1024], sizes = [16, 128], strides = [1, 1]} : vector<16x1152xf32> to vector<16x128xf32>
      %25 = arith.truncf %24 : vector<16x128xf32> to vector<16x128xbf16>
      %c0_13 = arith.constant 0 : index
      %c0_14 = arith.constant 0 : index
      %26 = vector.load %arg8[%c0_13, %c0_14] : memref<128x128xbf16, #tpu.memory_space<vmem>>, vector<128x128xbf16>
      %cst_15 = arith.constant dense<0.000000e+00> : vector<16x128xf32>
      %27 = tpu.matmul %25, %26, %cst_15 {dimension_numbers = #tpu.dot_dimension_numbers<[1], [0], [0], [1], [0, 0, 1, 1], [], []>} : vector<16x128xbf16>, vector<128x128xbf16>, vector<16x128xf32> -> vector<16x128xf32>
      %c0_16 = arith.constant 0 : index
      %c0_17 = arith.constant 0 : index
      %28 = vector.load %arg9[%c0_16, %c0_17] : memref<1x128xf32, #tpu.memory_space<vmem>>, vector<1x128xf32>
      %29 = vector.broadcast %28 : vector<1x128xf32> to vector<16x128xf32>
      %30 = arith.addf %27, %29 : vector<16x128xf32>
      %cst_18 = arith.constant 0.000000e+00 : f32
      %31 = vector.broadcast %cst_18 : f32 to vector<16x128xf32>
      %32 = arith.maximumf %30, %31 : vector<16x128xf32>
      %33 = arith.truncf %32 : vector<16x128xf32> to vector<16x128xbf16>
      %c0_19 = arith.constant 0 : index
      %c0_20 = arith.constant 0 : index
      %34 = vector.load %arg12[%c0_19, %c0_20] : memref<128x2xbf16, #tpu.memory_space<vmem>>, vector<128x2xbf16>
      %cst_21 = arith.constant dense<0.000000e+00> : vector<16x2xf32>
      %35 = tpu.matmul %33, %34, %cst_21 {dimension_numbers = #tpu.dot_dimension_numbers<[1], [0], [0], [1], [0, 0, 1, 1], [], []>} : vector<16x128xbf16>, vector<128x2xbf16>, vector<16x2xf32> -> vector<16x2xf32>
      %c0_22 = arith.constant 0 : index
      %c0_23 = arith.constant 0 : index
      %36 = vector.load %arg13[%c0_22, %c0_23] : memref<1x2xf32, #tpu.memory_space<vmem>>, vector<1x2xf32>
      %37 = vector.broadcast %36 : vector<1x2xf32> to vector<16x2xf32>
      %38 = arith.addf %35, %37 : vector<16x2xf32>
      %39 = vector.extract_strided_slice %38 {offsets = [0, 0], sizes = [16, 1], strides = [1, 1]} : vector<16x2xf32> to vector<16x1xf32>
      %40 = vector.extract_strided_slice %38 {offsets = [0, 1], sizes = [16, 1], strides = [1, 1]} : vector<16x2xf32> to vector<16x1xf32>
      %cst_24 = arith.constant 5.000000e-01 : f32
      %41 = vector.broadcast %cst_24 : f32 to vector<16x1xf32>
      %42 = arith.mulf %41, %40 : vector<16x1xf32>
      %43 = math.exp %42 : vector<16x1xf32>
      %c0_25 = arith.constant 0 : index
      %c32 = arith.constant 32 : index
      %44 = vector.load %arg3[%c0_25, %c32] : memref<16x128xf32, #tpu.memory_space<vmem>>, vector<16x1xf32>
      %45 = arith.mulf %43, %44 : vector<16x1xf32>
      %46 = arith.addf %39, %45 : vector<16x1xf32>
      %c0_26 = arith.constant 0 : index
      %c96 = arith.constant 96 : index
      %47 = vector.load %arg14[%c0_26, %c96] : memref<16x128xf32, #tpu.memory_space<vmem>>, vector<16x2xf32>
      tpu.vector_store %arg14[%c0_26, %c96], %38 {strides = array<i32>} : memref<16x128xf32, #tpu.memory_space<vmem>>, vector<16x2xf32>,
      %c0_27 = arith.constant 0 : index
      %c98 = arith.constant 98 : index
      %48 = vector.load %arg14[%c0_27, %c98] : memref<16x128xf32, #tpu.memory_space<vmem>>, vector<16x1xf32>
      tpu.vector_store %arg14[%c0_27, %c98], %46 {strides = array<i32>} : memref<16x128xf32, #tpu.memory_space<vmem>>, vector<16x1xf32>,
      %cst_28 = arith.constant 0.000000e+00 : f32
      %49 = vector.broadcast %cst_28 : f32 to vector<16x29xf32>
      %c0_29 = arith.constant 0 : index
      %c99 = arith.constant 99 : index
      %50 = vector.load %arg14[%c0_29, %c99] : memref<16x128xf32, #tpu.memory_space<vmem>>, vector<16x29xf32>
      tpu.vector_store %arg14[%c0_29, %c99], %49 {strides = array<i32>} : memref<16x128xf32, #tpu.memory_space<vmem>>, vector<16x29xf32>,
    } else {
    }
    %c1_i32_4 = arith.constant 1 : i32
    %9 = arith.cmpi sge, %arg1, %c1_i32_4 : i32
    %10 = arith.extui %9 : i1 to i32
    %c0_i32_5 = arith.constant 0 : i32
    %11 = arith.cmpi ne, %10, %c0_i32_5 : i32
    scf.if %11 {
      %c0 = arith.constant 0 : index
      %c0_8 = arith.constant 0 : index
      %15 = vector.load %arg16[%c0, %c0_8] : memref<16x1024xbf16, #tpu.memory_space<vmem>>, vector<16x1024xbf16>
      %c0_9 = arith.constant 0 : index
      %c0_10 = arith.constant 0 : index
      %16 = vector.load %arg6[%c0_9, %c0_10] : memref<1024x256xbf16, #tpu.memory_space<vmem>>, vector<1024x256xbf16>
      %cst = arith.constant dense<0.000000e+00> : vector<16x256xf32>
      %17 = tpu.matmul %15, %16, %cst {dimension_numbers = #tpu.dot_dimension_numbers<[1], [0], [0], [1], [0, 0, 1, 1], [], []>} : vector<16x1024xbf16>, vector<1024x256xbf16>, vector<16x256xf32> -> vector<16x256xf32>
      %c0_11 = arith.constant 0 : index
      %c0_12 = arith.constant 0 : index
      %18 = vector.load %arg7[%c0_11, %c0_12] : memref<1x256xf32, #tpu.memory_space<vmem>>, vector<1x256xf32>
      %19 = vector.broadcast %18 : vector<1x256xf32> to vector<16x256xf32>
      %20 = arith.addf %17, %19 : vector<16x256xf32>
      %cst_13 = arith.constant 0.000000e+00 : f32
      %21 = vector.broadcast %cst_13 : f32 to vector<16x256xf32>
      %22 = arith.maximumf %20, %21 : vector<16x256xf32>
      %c0_14 = arith.constant 0 : index
      %c0_15 = arith.constant 0 : index
      %23 = vector.load %arg17[%c0_14, %c0_15] : memref<16x64xf32, #tpu.memory_space<vmem>>, vector<16x64xf32>
      %24 = arith.truncf %22 : vector<16x256xf32> to vector<16x256xbf16>
      %c0_16 = arith.constant 0 : index
      %c0_17 = arith.constant 0 : index
      %25 = vector.load %arg10[%c0_16, %c0_17] : memref<256x64xbf16, #tpu.memory_space<vmem>>, vector<256x64xbf16>
      %cst_18 = arith.constant dense<0.000000e+00> : vector<16x64xf32>
      %26 = tpu.matmul %24, %25, %cst_18 {dimension_numbers = #tpu.dot_dimension_numbers<[1], [0], [0], [1], [0, 0, 1, 1], [], []>} : vector<16x256xbf16>, vector<256x64xbf16>, vector<16x64xf32> -> vector<16x64xf32>
      %27 = arith.addf %23, %26 : vector<16x64xf32>
      %c0_19 = arith.constant 0 : index
      %c0_20 = arith.constant 0 : index
      %28 = vector.load %arg17[%c0_19, %c0_20] : memref<16x64xf32, #tpu.memory_space<vmem>>, vector<16x64xf32>
      tpu.vector_store %arg17[%c0_19, %c0_20], %27 {strides = array<i32>} : memref<16x64xf32, #tpu.memory_space<vmem>>, vector<16x64xf32>,
    } else {
    }
    %c1_i32_6 = arith.constant 1 : i32
    %12 = arith.cmpi eq, %arg1, %c1_i32_6 : i32
    %13 = arith.extui %12 : i1 to i32
    %c0_i32_7 = arith.constant 0 : i32
    %14 = arith.cmpi ne, %13, %c0_i32_7 : i32
    scf.if %14 {
      %c0 = arith.constant 0 : index
      %c0_8 = arith.constant 0 : index
      %15 = vector.load %arg17[%c0, %c0_8] : memref<16x64xf32, #tpu.memory_space<vmem>>, vector<16x64xf32>
      %c0_9 = arith.constant 0 : index
      %c0_10 = arith.constant 0 : index
      %16 = vector.load %arg11[%c0_9, %c0_10] : memref<1x64xf32, #tpu.memory_space<vmem>>, vector<1x64xf32>
      %17 = vector.broadcast %16 : vector<1x64xf32> to vector<16x64xf32>
      %18 = arith.addf %15, %17 : vector<16x64xf32>
      %19 = vector.extract_strided_slice %18 {offsets = [0, 0], sizes = [16, 32], strides = [1, 1]} : vector<16x64xf32> to vector<16x32xf32>
      %20 = vector.extract_strided_slice %18 {offsets = [0, 32], sizes = [16, 32], strides = [1, 1]} : vector<16x64xf32> to vector<16x32xf32>
      %cst = arith.constant 5.000000e-01 : f32
      %21 = vector.broadcast %cst : f32 to vector<16x32xf32>
      %22 = arith.mulf %21, %20 : vector<16x32xf32>
      %23 = math.exp %22 : vector<16x32xf32>
      %c0_11 = arith.constant 0 : index
      %c0_12 = arith.constant 0 : index
      %24 = vector.load %arg3[%c0_11, %c0_12] : memref<16x128xf32, #tpu.memory_space<vmem>>, vector<16x32xf32>
      %25 = arith.mulf %23, %24 : vector<16x32xf32>
      %26 = arith.addf %19, %25 : vector<16x32xf32>
      %c0_13 = arith.constant 0 : index
      %c0_14 = arith.constant 0 : index
      %27 = vector.load %arg14[%c0_13, %c0_14] : memref<16x128xf32, #tpu.memory_space<vmem>>, vector<16x64xf32>
      tpu.vector_store %arg14[%c0_13, %c0_14], %18 {strides = array<i32>} : memref<16x128xf32, #tpu.memory_space<vmem>>, vector<16x64xf32>,
      %c0_15 = arith.constant 0 : index
      %c64 = arith.constant 64 : index
      %28 = vector.load %arg14[%c0_15, %c64] : memref<16x128xf32, #tpu.memory_space<vmem>>, vector<16x32xf32>
      tpu.vector_store %arg14[%c0_15, %c64], %26 {strides = array<i32>} : memref<16x128xf32, #tpu.memory_space<vmem>>, vector<16x32xf32>,
    } else {
    }
    return
  }
  func.func @transform_0(%arg0: i32, %arg1: i32) -> (i32, i32) {
    %c0_i32 = arith.constant 0 : i32
    %0 = arith.minsi %arg1, %c0_i32 : i32
    %c0_i32_0 = arith.constant 0 : i32
    return %arg0, %0 : i32, i32
  }
  func.func @transform_1(%arg0: i32, %arg1: i32) -> (i32, i32) {
    %c0_i32 = arith.constant 0 : i32
    %c0_i32_0 = arith.constant 0 : i32
    return %arg0, %c0_i32 : i32, i32
  }
  func.func @transform_2(%arg0: i32, %arg1: i32) -> (i32, i32) {
    %c0_i32 = arith.constant 0 : i32
    %0 = arith.minsi %arg1, %c0_i32 : i32
    %c0_i32_0 = arith.constant 0 : i32
    %c0_i32_1 = arith.constant 0 : i32
    return %0, %c0_i32_0 : i32, i32
  }
  func.func @transform_3(%arg0: i32, %arg1: i32) -> (i32, i32) {
    %c0_i32 = arith.constant 0 : i32
    %c0_i32_0 = arith.constant 0 : i32
    %c0_i32_1 = arith.constant 0 : i32
    return %c0_i32, %c0_i32_0 : i32, i32
  }
  func.func @transform_4(%arg0: i32, %arg1: i32) -> (i32, i32) {
    %c1_i32 = arith.constant 1 : i32
    %0 = arith.subi %arg1, %c1_i32 : i32
    %c0_i32 = arith.constant 0 : i32
    %1 = arith.maxsi %0, %c0_i32 : i32
    %c0_i32_0 = arith.constant 0 : i32
    %c0_i32_1 = arith.constant 0 : i32
    return %c0_i32_0, %1 : i32, i32
  }
  func.func @transform_5(%arg0: i32, %arg1: i32) -> (i32, i32) {
    %c1_i32 = arith.constant 1 : i32
    %0 = arith.subi %arg1, %c1_i32 : i32
    %c0_i32 = arith.constant 0 : i32
    %1 = arith.maxsi %0, %c0_i32 : i32
    %c0_i32_0 = arith.constant 0 : i32
    %c0_i32_1 = arith.constant 0 : i32
    return %c0_i32_0, %1 : i32, i32
  }
  func.func @transform_6(%arg0: i32, %arg1: i32) -> (i32, i32) {
    %c0_i32 = arith.constant 0 : i32
    %c0_i32_0 = arith.constant 0 : i32
    %c0_i32_1 = arith.constant 0 : i32
    return %c0_i32, %c0_i32_0 : i32, i32
  }
  func.func @transform_7(%arg0: i32, %arg1: i32) -> (i32, i32) {
    %c0_i32 = arith.constant 0 : i32
    %c0_i32_0 = arith.constant 0 : i32
    %c0_i32_1 = arith.constant 0 : i32
    return %c0_i32, %c0_i32_0 : i32, i32
  }
  func.func @transform_8(%arg0: i32, %arg1: i32) -> (i32, i32) {
    %c1_i32 = arith.constant 1 : i32
    %0 = arith.subi %arg1, %c1_i32 : i32
    %c0_i32 = arith.constant 0 : i32
    %1 = arith.maxsi %0, %c0_i32 : i32
    %c0_i32_0 = arith.constant 0 : i32
    %c0_i32_1 = arith.constant 0 : i32
    return %1, %c0_i32_0 : i32, i32
  }
  func.func @transform_9(%arg0: i32, %arg1: i32) -> (i32, i32) {
    %c0_i32 = arith.constant 0 : i32
    %c0_i32_0 = arith.constant 0 : i32
    %c0_i32_1 = arith.constant 0 : i32
    return %c0_i32, %c0_i32_0 : i32, i32
  }
  func.func @transform_10(%arg0: i32, %arg1: i32) -> (i32, i32) {
    %c0_i32 = arith.constant 0 : i32
    %c0_i32_0 = arith.constant 0 : i32
    %c0_i32_1 = arith.constant 0 : i32
    return %c0_i32, %c0_i32_0 : i32, i32
  }
  func.func @transform_11(%arg0: i32, %arg1: i32) -> (i32, i32) {
    %c0_i32 = arith.constant 0 : i32
    %c0_i32_0 = arith.constant 0 : i32
    %c0_i32_1 = arith.constant 0 : i32
    return %c0_i32, %c0_i32_0 : i32, i32
  }
  func.func @transform_12(%arg0: i32, %arg1: i32) -> (i32, i32) {
    %c0_i32 = arith.constant 0 : i32
    %c0_i32_0 = arith.constant 0 : i32
    return %arg0, %c0_i32 : i32, i32
  }
}

module attributes {stable_mosaic.version = 11 : i64} {
  func.func @encoder_kernel(%arg0: i32, %arg1: i32, %arg2: memref<16x256xf32, #tpu.memory_space<vmem>>, %arg3: memref<16x128xf32, #tpu.memory_space<vmem>>, %arg4: memref<256x1152xbf16, #tpu.memory_space<vmem>>, %arg5: memref<1x1152xf32, #tpu.memory_space<vmem>>, %arg6: memref<1024x256xbf16, #tpu.memory_space<vmem>>, %arg7: memref<1x256xf32, #tpu.memory_space<vmem>>, %arg8: memref<128x128xbf16, #tpu.memory_space<vmem>>, %arg9: memref<1x128xf32, #tpu.memory_space<vmem>>, %arg10: memref<256x64xbf16, #tpu.memory_space<vmem>>, %arg11: memref<1x64xf32, #tpu.memory_space<vmem>>, %arg12: memref<128x2xbf16, #tpu.memory_space<vmem>>, %arg13: memref<1x2xf32, #tpu.memory_space<vmem>>, %arg14: memref<16x128xf32, #tpu.memory_space<vmem>>, %arg15: memref<16x1152xf32, #tpu.memory_space<vmem>>, %arg16: memref<16x1024xbf16, #tpu.memory_space<vmem>>, %arg17: memref<16x64xf32, #tpu.memory_space<vmem>>) attributes {dimension_semantics = [#tpu.dimension_semantics<parallel>, #tpu.dimension_semantics<arbitrary>], iteration_bounds = array<i64: 1, 2>, scalar_prefetch = 0 : i64, scratch_operands = 3 : i64, tpu.core_type = #tpu.core_type<tc>, window_params = [{transform_indices = @transform_0, window_bounds = array<i64: 16, 256>}, {transform_indices = @transform_1, window_bounds = array<i64: 16, 128>}, {transform_indices = @transform_2, window_bounds = array<i64: 256, 1152>}, {pipeline_mode = #tpu.pipeline_mode<synchronous>, transform_indices = @transform_3, window_bounds = array<i64: 1, 1152>}, {transform_indices = @transform_4, window_bounds = array<i64: 1024, 256>}, {transform_indices = @transform_5, window_bounds = array<i64: 1, 256>}, {pipeline_mode = #tpu.pipeline_mode<synchronous>, transform_indices = @transform_6, window_bounds = array<i64: 128, 128>}, {pipeline_mode = #tpu.pipeline_mode<synchronous>, transform_indices = @transform_7, window_bounds = array<i64: 1, 128>}, {transform_indices = @transform_8, window_bounds = array<i64: 256, 64>}, {pipeline_mode = #tpu.pipeline_mode<synchronous>, transform_indices = @transform_9, window_bounds = array<i64: 1, 64>}, {pipeline_mode = #tpu.pipeline_mode<synchronous>, transform_indices = @transform_10, window_bounds = array<i64: 128, 2>}, {pipeline_mode = #tpu.pipeline_mode<synchronous>, transform_indices = @transform_11, window_bounds = array<i64: 1, 2>}, {transform_indices = @transform_12, window_bounds = array<i64: 16, 128>}]} {
    %c0_i32 = arith.constant 0 : i32
    %0 = arith.cmpi eq, %arg1, %c0_i32 : i32
    %1 = arith.extui %0 : i1 to i32
    %c0_i32_0 = arith.constant 0 : i32
    %2 = arith.cmpi ne, %1, %c0_i32_0 : i32
    scf.if %2 {
      %cst = arith.constant 0.000000e+00 : f32
      %15 = vector.broadcast %cst : f32 to vector<16x1152xf32>
      %c0 = arith.constant 0 : index
      %c0_8 = arith.constant 0 : index
      %16 = vector.load %arg15[%c0, %c0_8] : memref<16x1152xf32, #tpu.memory_space<vmem>>, vector<16x1152xf32>
      tpu.vector_store %arg15[%c0, %c0_8], %15 {strides = array<i32>} : memref<16x1152xf32, #tpu.memory_space<vmem>>, vector<16x1152xf32>,
      %cst_9 = arith.constant 0.000000e+00 : f32
      %17 = vector.broadcast %cst_9 : f32 to vector<16x64xf32>
      %c0_10 = arith.constant 0 : index
      %c0_11 = arith.constant 0 : index
      %18 = vector.load %arg17[%c0_10, %c0_11] : memref<16x64xf32, #tpu.memory_space<vmem>>, vector<16x64xf32>
      tpu.vector_store %arg17[%c0_10, %c0_11], %17 {strides = array<i32>} : memref<16x64xf32, #tpu.memory_space<vmem>>, vector<16x64xf32>,
    } else {
    }
    %c1_i32 = arith.constant 1 : i32
    %3 = arith.cmpi slt, %arg1, %c1_i32 : i32
    %4 = arith.extui %3 : i1 to i32
    %c0_i32_1 = arith.constant 0 : i32
    %5 = arith.cmpi ne, %4, %c0_i32_1 : i32
    scf.if %5 {
      %c0 = arith.constant 0 : index
      %c0_8 = arith.constant 0 : index
      %15 = vector.load %arg2[%c0, %c0_8] : memref<16x256xf32, #tpu.memory_space<vmem>>, vector<16x256xf32>
      %cst = arith.constant 1.000000e+00 : f32
      %16 = vector.broadcast %cst : f32 to vector<16x256xf32>
      %17 = arith.addf %15, %16 : vector<16x256xf32>
      %18 = math.log %17 : vector<16x256xf32>
      %c0_9 = arith.constant 0 : index
      %c0_10 = arith.constant 0 : index
      %19 = vector.load %arg15[%c0_9, %c0_10] : memref<16x1152xf32, #tpu.memory_space<vmem>>, vector<16x1152xf32>
      %20 = arith.truncf %18 : vector<16x256xf32> to vector<16x256xbf16>
      %c0_11 = arith.constant 0 : index
      %c0_12 = arith.constant 0 : index
      %21 = vector.load %arg4[%c0_11, %c0_12] : memref<256x1152xbf16, #tpu.memory_space<vmem>>, vector<256x1152xbf16>
      %cst_13 = arith.constant dense<0.000000e+00> : vector<16x1152xf32>
      %22 = tpu.matmul %20, %21, %cst_13 {dimension_numbers = #tpu.dot_dimension_numbers<[1], [0], [0], [1], [0, 0, 1, 1], [], []>} : vector<16x256xbf16>, vector<256x1152xbf16>, vector<16x1152xf32> -> vector<16x1152xf32>
      %23 = arith.addf %19, %22 : vector<16x1152xf32>
      %c0_14 = arith.constant 0 : index
      %c0_15 = arith.constant 0 : index
      %24 = vector.load %arg15[%c0_14, %c0_15] : memref<16x1152xf32, #tpu.memory_space<vmem>>, vector<16x1152xf32>
      tpu.vector_store %arg15[%c0_14, %c0_15], %23 {strides = array<i32>} : memref<16x1152xf32, #tpu.memory_space<vmem>>, vector<16x1152xf32>,
    } else {
    }
    %c1_i32_2 = arith.constant 1 : i32
    %6 = arith.cmpi eq, %arg1, %c1_i32_2 : i32
    %7 = arith.extui %6 : i1 to i32
    %c0_i32_3 = arith.constant 0 : i32
    %8 = arith.cmpi ne, %7, %c0_i32_3 : i32
    scf.if %8 {
      %c0 = arith.constant 0 : index
      %c0_8 = arith.constant 0 : index
      %15 = vector.load %arg15[%c0, %c0_8] : memref<16x1152xf32, #tpu.memory_space<vmem>>, vector<16x1152xf32>
      %c0_9 = arith.constant 0 : index
      %c0_10 = arith.constant 0 : index
      %16 = vector.load %arg5[%c0_9, %c0_10] : memref<1x1152xf32, #tpu.memory_space<vmem>>, vector<1x1152xf32>
      %17 = vector.broadcast %16 : vector<1x1152xf32> to vector<16x1152xf32>
      %18 = arith.addf %15, %17 : vector<16x1152xf32>
      %cst = arith.constant 0.000000e+00 : f32
      %19 = vector.broadcast %cst : f32 to vector<16x1152xf32>
      %20 = arith.maximumf %18, %19 : vector<16x1152xf32>
      %21 = vector.extract_strided_slice %20 {offsets = [0, 0], sizes = [16, 1024], strides = [1, 1]} : vector<16x1152xf32> to vector<16x1024xf32>
      %22 = arith.truncf %21 : vector<16x1024xf32> to vector<16x1024xbf16>
      %c0_11 = arith.constant 0 : index
      %c0_12 = arith.constant 0 : index
      %23 = vector.load %arg16[%c0_11, %c0_12] : memref<16x1024xbf16, #tpu.memory_space<vmem>>, vector<16x1024xbf16>
      tpu.vector_store %arg16[%c0_11, %c0_12], %22 {strides = array<i32>} : memref<16x1024xbf16, #tpu.memory_space<vmem>>, vector<16x1024xbf16>,
      %24 = vector.extract_strided_slice %20 {offsets = [0, 1024], sizes = [16, 128], strides = [1, 1]} : vector<16x1152xf32> to vector<16x128xf32>
      %25 = arith.truncf %24 : vector<16x128xf32> to vector<16x128xbf16>
      %c0_13 = arith.constant 0 : index
      %c0_14 = arith.constant 0 : index
      %26 = vector.load %arg8[%c0_13, %c0_14] : memref<128x128xbf16, #tpu.memory_space<vmem>>, vector<128x128xbf16>
      %cst_15 = arith.constant dense<0.000000e+00> : vector<16x128xf32>
      %27 = tpu.matmul %25, %26, %cst_15 {dimension_numbers = #tpu.dot_dimension_numbers<[1], [0], [0], [1], [0, 0, 1, 1], [], []>} : vector<16x128xbf16>, vector<128x128xbf16>, vector<16x128xf32> -> vector<16x128xf32>
      %c0_16 = arith.constant 0 : index
      %c0_17 = arith.constant 0 : index
      %28 = vector.load %arg9[%c0_16, %c0_17] : memref<1x128xf32, #tpu.memory_space<vmem>>, vector<1x128xf32>
      %29 = vector.broadcast %28 : vector<1x128xf32> to vector<16x128xf32>
      %30 = arith.addf %27, %29 : vector<16x128xf32>
      %cst_18 = arith.constant 0.000000e+00 : f32
      %31 = vector.broadcast %cst_18 : f32 to vector<16x128xf32>
      %32 = arith.maximumf %30, %31 : vector<16x128xf32>
      %33 = arith.truncf %32 : vector<16x128xf32> to vector<16x128xbf16>
      %c0_19 = arith.constant 0 : index
      %c0_20 = arith.constant 0 : index
      %34 = vector.load %arg12[%c0_19, %c0_20] : memref<128x2xbf16, #tpu.memory_space<vmem>>, vector<128x2xbf16>
      %cst_21 = arith.constant dense<0.000000e+00> : vector<16x2xf32>
      %35 = tpu.matmul %33, %34, %cst_21 {dimension_numbers = #tpu.dot_dimension_numbers<[1], [0], [0], [1], [0, 0, 1, 1], [], []>} : vector<16x128xbf16>, vector<128x2xbf16>, vector<16x2xf32> -> vector<16x2xf32>
      %c0_22 = arith.constant 0 : index
      %c0_23 = arith.constant 0 : index
      %36 = vector.load %arg13[%c0_22, %c0_23] : memref<1x2xf32, #tpu.memory_space<vmem>>, vector<1x2xf32>
      %37 = vector.broadcast %36 : vector<1x2xf32> to vector<16x2xf32>
      %38 = arith.addf %35, %37 : vector<16x2xf32>
      %39 = vector.extract_strided_slice %38 {offsets = [0, 0], sizes = [16, 1], strides = [1, 1]} : vector<16x2xf32> to vector<16x1xf32>
      %40 = vector.extract_strided_slice %38 {offsets = [0, 1], sizes = [16, 1], strides = [1, 1]} : vector<16x2xf32> to vector<16x1xf32>
      %cst_24 = arith.constant 5.000000e-01 : f32
      %41 = vector.broadcast %cst_24 : f32 to vector<16x1xf32>
      %42 = arith.mulf %41, %40 : vector<16x1xf32>
      %43 = math.exp %42 : vector<16x1xf32>
      %c0_25 = arith.constant 0 : index
      %c32 = arith.constant 32 : index
      %44 = vector.load %arg3[%c0_25, %c32] : memref<16x128xf32, #tpu.memory_space<vmem>>, vector<16x1xf32>
      %45 = arith.mulf %43, %44 : vector<16x1xf32>
      %46 = arith.addf %39, %45 : vector<16x1xf32>
      %c0_26 = arith.constant 0 : index
      %c96 = arith.constant 96 : index
      %47 = vector.load %arg14[%c0_26, %c96] : memref<16x128xf32, #tpu.memory_space<vmem>>, vector<16x2xf32>
      tpu.vector_store %arg14[%c0_26, %c96], %38 {strides = array<i32>} : memref<16x128xf32, #tpu.memory_space<vmem>>, vector<16x2xf32>,
      %c0_27 = arith.constant 0 : index
      %c98 = arith.constant 98 : index
      %48 = vector.load %arg14[%c0_27, %c98] : memref<16x128xf32, #tpu.memory_space<vmem>>, vector<16x1xf32>
      tpu.vector_store %arg14[%c0_27, %c98], %46 {strides = array<i32>} : memref<16x128xf32, #tpu.memory_space<vmem>>, vector<16x1xf32>,
      %cst_28 = arith.constant 0.000000e+00 : f32
      %49 = vector.broadcast %cst_28 : f32 to vector<16x29xf32>
      %c0_29 = arith.constant 0 : index
      %c99 = arith.constant 99 : index
      %50 = vector.load %arg14[%c0_29, %c99] : memref<16x128xf32, #tpu.memory_space<vmem>>, vector<16x29xf32>
      tpu.vector_store %arg14[%c0_29, %c99], %49 {strides = array<i32>} : memref<16x128xf32, #tpu.memory_space<vmem>>, vector<16x29xf32>,
    } else {
    }
    %c1_i32_4 = arith.constant 1 : i32
    %9 = arith.cmpi sge, %arg1, %c1_i32_4 : i32
    %10 = arith.extui %9 : i1 to i32
    %c0_i32_5 = arith.constant 0 : i32
    %11 = arith.cmpi ne, %10, %c0_i32_5 : i32
    scf.if %11 {
      %c0 = arith.constant 0 : index
      %c0_8 = arith.constant 0 : index
      %15 = vector.load %arg16[%c0, %c0_8] : memref<16x1024xbf16, #tpu.memory_space<vmem>>, vector<16x1024xbf16>
      %c0_9 = arith.constant 0 : index
      %c0_10 = arith.constant 0 : index
      %16 = vector.load %arg6[%c0_9, %c0_10] : memref<1024x256xbf16, #tpu.memory_space<vmem>>, vector<1024x256xbf16>
      %cst = arith.constant dense<0.000000e+00> : vector<16x256xf32>
      %17 = tpu.matmul %15, %16, %cst {dimension_numbers = #tpu.dot_dimension_numbers<[1], [0], [0], [1], [0, 0, 1, 1], [], []>} : vector<16x1024xbf16>, vector<1024x256xbf16>, vector<16x256xf32> -> vector<16x256xf32>
      %c0_11 = arith.constant 0 : index
      %c0_12 = arith.constant 0 : index
      %18 = vector.load %arg7[%c0_11, %c0_12] : memref<1x256xf32, #tpu.memory_space<vmem>>, vector<1x256xf32>
      %19 = vector.broadcast %18 : vector<1x256xf32> to vector<16x256xf32>
      %20 = arith.addf %17, %19 : vector<16x256xf32>
      %cst_13 = arith.constant 0.000000e+00 : f32
      %21 = vector.broadcast %cst_13 : f32 to vector<16x256xf32>
      %22 = arith.maximumf %20, %21 : vector<16x256xf32>
      %c0_14 = arith.constant 0 : index
      %c0_15 = arith.constant 0 : index
      %23 = vector.load %arg17[%c0_14, %c0_15] : memref<16x64xf32, #tpu.memory_space<vmem>>, vector<16x64xf32>
      %24 = arith.truncf %22 : vector<16x256xf32> to vector<16x256xbf16>
      %c0_16 = arith.constant 0 : index
      %c0_17 = arith.constant 0 : index
      %25 = vector.load %arg10[%c0_16, %c0_17] : memref<256x64xbf16, #tpu.memory_space<vmem>>, vector<256x64xbf16>
      %cst_18 = arith.constant dense<0.000000e+00> : vector<16x64xf32>
      %26 = tpu.matmul %24, %25, %cst_18 {dimension_numbers = #tpu.dot_dimension_numbers<[1], [0], [0], [1], [0, 0, 1, 1], [], []>} : vector<16x256xbf16>, vector<256x64xbf16>, vector<16x64xf32> -> vector<16x64xf32>
      %27 = arith.addf %23, %26 : vector<16x64xf32>
      %c0_19 = arith.constant 0 : index
      %c0_20 = arith.constant 0 : index
      %28 = vector.load %arg17[%c0_19, %c0_20] : memref<16x64xf32, #tpu.memory_space<vmem>>, vector<16x64xf32>
      tpu.vector_store %arg17[%c0_19, %c0_20], %27 {strides = array<i32>} : memref<16x64xf32, #tpu.memory_space<vmem>>, vector<16x64xf32>,
    } else {
    }
    %c1_i32_6 = arith.constant 1 : i32
    %12 = arith.cmpi eq, %arg1, %c1_i32_6 : i32
    %13 = arith.extui %12 : i1 to i32
    %c0_i32_7 = arith.constant 0 : i32
    %14 = arith.cmpi ne, %13, %c0_i32_7 : i32
    scf.if %14 {
      %c0 = arith.constant 0 : index
      %c0_8 = arith.constant 0 : index
      %15 = vector.load %arg17[%c0, %c0_8] : memref<16x64xf32, #tpu.memory_space<vmem>>, vector<16x64xf32>
      %c0_9 = arith.constant 0 : index
      %c0_10 = arith.constant 0 : index
      %16 = vector.load %arg11[%c0_9, %c0_10] : memref<1x64xf32, #tpu.memory_space<vmem>>, vector<1x64xf32>
      %17 = vector.broadcast %16 : vector<1x64xf32> to vector<16x64xf32>
      %18 = arith.addf %15, %17 : vector<16x64xf32>
      %19 = vector.extract_strided_slice %18 {offsets = [0, 0], sizes = [16, 32], strides = [1, 1]} : vector<16x64xf32> to vector<16x32xf32>
      %20 = vector.extract_strided_slice %18 {offsets = [0, 32], sizes = [16, 32], strides = [1, 1]} : vector<16x64xf32> to vector<16x32xf32>
      %cst = arith.constant 5.000000e-01 : f32
      %21 = vector.broadcast %cst : f32 to vector<16x32xf32>
      %22 = arith.mulf %21, %20 : vector<16x32xf32>
      %23 = math.exp %22 : vector<16x32xf32>
      %c0_11 = arith.constant 0 : index
      %c0_12 = arith.constant 0 : index
      %24 = vector.load %arg3[%c0_11, %c0_12] : memref<16x128xf32, #tpu.memory_space<vmem>>, vector<16x32xf32>
      %25 = arith.mulf %23, %24 : vector<16x32xf32>
      %26 = arith.addf %19, %25 : vector<16x32xf32>
      %c0_13 = arith.constant 0 : index
      %c0_14 = arith.constant 0 : index
      %27 = vector.load %arg14[%c0_13, %c0_14] : memref<16x128xf32, #tpu.memory_space<vmem>>, vector<16x64xf32>
      tpu.vector_store %arg14[%c0_13, %c0_14], %18 {strides = array<i32>} : memref<16x128xf32, #tpu.memory_space<vmem>>, vector<16x64xf32>,
      %c0_15 = arith.constant 0 : index
      %c64 = arith.constant 64 : index
      %28 = vector.load %arg14[%c0_15, %c64] : memref<16x128xf32, #tpu.memory_space<vmem>>, vector<16x32xf32>
      tpu.vector_store %arg14[%c0_15, %c64], %26 {strides = array<i32>} : memref<16x128xf32, #tpu.memory_space<vmem>>, vector<16x32xf32>,
    } else {
    }
    return
  }
  func.func @transform_0(%arg0: i32, %arg1: i32) -> (i32, i32) {
    %c0_i32 = arith.constant 0 : i32
    %0 = arith.minsi %arg1, %c0_i32 : i32
    %c0_i32_0 = arith.constant 0 : i32
    return %arg0, %0 : i32, i32
  }
  func.func @transform_1(%arg0: i32, %arg1: i32) -> (i32, i32) {
    %c0_i32 = arith.constant 0 : i32
    %c0_i32_0 = arith.constant 0 : i32
    return %arg0, %c0_i32 : i32, i32
  }
  func.func @transform_2(%arg0: i32, %arg1: i32) -> (i32, i32) {
    %c0_i32 = arith.constant 0 : i32
    %0 = arith.minsi %arg1, %c0_i32 : i32
    %c0_i32_0 = arith.constant 0 : i32
    %c0_i32_1 = arith.constant 0 : i32
    return %0, %c0_i32_0 : i32, i32
  }
  func.func @transform_3(%arg0: i32, %arg1: i32) -> (i32, i32) {
    %c0_i32 = arith.constant 0 : i32
    %c0_i32_0 = arith.constant 0 : i32
    %c0_i32_1 = arith.constant 0 : i32
    return %c0_i32, %c0_i32_0 : i32, i32
  }
  func.func @transform_4(%arg0: i32, %arg1: i32) -> (i32, i32) {
    %c1_i32 = arith.constant 1 : i32
    %0 = arith.subi %arg1, %c1_i32 : i32
    %c0_i32 = arith.constant 0 : i32
    %1 = arith.maxsi %0, %c0_i32 : i32
    %c0_i32_0 = arith.constant 0 : i32
    %c0_i32_1 = arith.constant 0 : i32
    return %c0_i32_0, %1 : i32, i32
  }
  func.func @transform_5(%arg0: i32, %arg1: i32) -> (i32, i32) {
    %c1_i32 = arith.constant 1 : i32
    %0 = arith.subi %arg1, %c1_i32 : i32
    %c0_i32 = arith.constant 0 : i32
    %1 = arith.maxsi %0, %c0_i32 : i32
    %c0_i32_0 = arith.constant 0 : i32
    %c0_i32_1 = arith.constant 0 : i32
    return %c0_i32_0, %1 : i32, i32
  }
  func.func @transform_6(%arg0: i32, %arg1: i32) -> (i32, i32) {
    %c0_i32 = arith.constant 0 : i32
    %c0_i32_0 = arith.constant 0 : i32
    %c0_i32_1 = arith.constant 0 : i32
    return %c0_i32, %c0_i32_0 : i32, i32
  }
  func.func @transform_7(%arg0: i32, %arg1: i32) -> (i32, i32) {
    %c0_i32 = arith.constant 0 : i32
    %c0_i32_0 = arith.constant 0 : i32
    %c0_i32_1 = arith.constant 0 : i32
    return %c0_i32, %c0_i32_0 : i32, i32
  }
  func.func @transform_8(%arg0: i32, %arg1: i32) -> (i32, i32) {
    %c1_i32 = arith.constant 1 : i32
    %0 = arith.subi %arg1, %c1_i32 : i32
    %c0_i32 = arith.constant 0 : i32
    %1 = arith.maxsi %0, %c0_i32 : i32
    %c0_i32_0 = arith.constant 0 : i32
    %c0_i32_1 = arith.constant 0 : i32
    return %1, %c0_i32_0 : i32, i32
  }
  func.func @transform_9(%arg0: i32, %arg1: i32) -> (i32, i32) {
    %c0_i32 = arith.constant 0 : i32
    %c0_i32_0 = arith.constant 0 : i32
    %c0_i32_1 = arith.constant 0 : i32
    return %c0_i32, %c0_i32_0 : i32, i32
  }
  func.func @transform_10(%arg0: i32, %arg1: i32) -> (i32, i32) {
    %c0_i32 = arith.constant 0 : i32
    %c0_i32_0 = arith.constant 0 : i32
    %c0_i32_1 = arith.constant 0 : i32
    return %c0_i32, %c0_i32_0 : i32, i32
  }
  func.func @transform_11(%arg0: i32, %arg1: i32) -> (i32, i32) {
    %c0_i32 = arith.constant 0 : i32
    %c0_i32_0 = arith.constant 0 : i32
    %c0_i32_1 = arith.constant 0 : i32
    return %c0_i32, %c0_i32_0 : i32, i32
  }
  func.func @transform_12(%arg0: i32, %arg1: i32) -> (i32, i32) {
    %c0_i32 = arith.constant 0 : i32
    %c0_i32_0 = arith.constant 0 : i32
    return %arg0, %c0_i32 : i32, i32
  }
}

</mosaic_0001>

<llo_original>
// kernel: tpu_custom_call.1
$region0: #{tpu_custom_call.1}
  #allocation0 [shape = 'u32[]', space=smem, size = 0x4, offset = 0x4, fixed_abs, tag = 'smem constant byte address 0x4 - core index']
  #allocation1 [shape = 'u32[144,128]{1,0:T(1,128)}', space=vmem, size = 0x12000, scoped, tag = 'internal scratch']
  #allocation2 [shape = 'f32[16,1152]{1,0:T(8,128)}', space=vmem, size = 0x12000, scoped, tag = 'scratch operand']
  #allocation3 [shape = 'bf16[16,1024]{1,0:T(16,128)(2,1)}', space=vmem, size = 0x8000, scoped, tag = 'scratch operand']
  #allocation4 [shape = 'f32[16,64]{1,0:T(8,128)}', space=vmem, size = 0x2000, scoped, tag = 'scratch operand']
  %s0 = inlined_call_operand.vmem [shape: f32[16,256], index: 0, kind: input, shape index: {}]
  %s1 = inlined_call_operand.vmem [shape: f32[16,128], index: 1, kind: input, shape index: {}]
  %s2 = inlined_call_operand.hbm [shape: bf16[256,1152], index: 2, kind: input, shape index: {}]
  %s3 = inlined_call_operand.vmem [shape: f32[1,1152], index: 3, kind: input, shape index: {}]
  %s4 = inlined_call_operand.hbm [shape: bf16[1024,256], index: 4, kind: input, shape index: {}]
  %s5 = inlined_call_operand.vmem [shape: f32[1,256], index: 5, kind: input, shape index: {}]
  %s6 = inlined_call_operand.vmem [shape: bf16[128,128], index: 6, kind: input, shape index: {}]
  %s7 = inlined_call_operand.vmem [shape: f32[1,128], index: 7, kind: input, shape index: {}]
  %s8 = inlined_call_operand.vmem [shape: bf16[256,64], index: 8, kind: input, shape index: {}]
  %s9 = inlined_call_operand.vmem [shape: f32[1,64], index: 9, kind: input, shape index: {}]
  %s10 = inlined_call_operand.vmem [shape: bf16[128,2], index: 10, kind: input, shape index: {}]
  %s11 = inlined_call_operand.vmem [shape: f32[1,2], index: 11, kind: input, shape index: {}]
  %s12 = inlined_call_operand.hbm [shape: f32[16,128], index: 12, kind: output, shape index: {}]
  %s13 = sld [smem:[#allocation0]]
  $region109: #{tpu_custom_call.1} parent=0
    _
  %s15 = ssub.s32 1, %s13
  %s16 = scalar_select 0, %s15, %s13
  $region1: #{tpu_custom_call.1} parent=0
    #allocation5 [shape = 'u8[589824]{0}', space=vmem, size = 0x90000, scoped, tag = 'input window, operand 2, single buffered']
    #allocation6 [shape = 's32[2]{0}', space=sflag, size = 0x8, scoped, tag = 'scoped memory for tpu_custom_call.1']
    #allocation7 [shape = 's32[2]{0}', space=sflag, size = 0x8, scoped, tag = 'scoped memory for tpu_custom_call.1']
    #allocation8 [shape = 'u8[524288]{0}', space=vmem, size = 0x80000, scoped, tag = 'input window, operand 4, single buffered']
    #allocation9 [shape = 's32[1]{0}', space=sflag, size = 0x4, scoped, tag = 'scoped memory for tpu_custom_call.1']
    #allocation10 [shape = 'u8[8192]{0}', space=vmem, size = 0x2000, scoped, tag = 'output window, operand 0, single buffered']
    %17 = vsyncpa [#allocation6], 0
    %18 = vsyncpa [#allocation9], 0
    %19 = vsyncpa [#allocation7], 0
    loop: start=0, step=1, limit=4
    $region2: #{tpu_custom_call.1} parent=1 // loop_pre_header
      _
    $region3: #{tpu_custom_call.1} parent=1 // loop_header
      %s21 = sphi 0, %s25
      %p22 = scmp.ge.s32.totalorder %s21, 4
      %s28 = sphi 0, %s40
      %s29 = sphi 0, %s36
      %s30 = sphi 0, %s28
      %s31 = sphi 0, %s29
      %s32 = sphi 0, %s30
      %s33 = sphi 0, %s31
      %s49 = sphi 0, %s51
      %s52 = sphi 0, %s49
      %s53 = sphi 0, %s52
      %s69 = sphi 0, %s53
      %s75 = sphi 0, %s77
      %s78 = sphi 0, %s75
      %s79 = sphi 0, %s78
      %s95 = sphi 0, %s79
      %s105 = sphi 0, %s107
      %s108 = sphi 0, %s105
      %s109 = sphi 0, %s108
      %s125 = sphi 0, %s109
      %s129 = sphi 0, %s129
      %s131 = sphi 0, %s129
      %s132 = sphi 0, %s131
      %s146 = sphi 0, %s132
      %s158 = sphi 0, %s160
      %s161 = sphi 0, %s158
      %s162 = sphi 0, %s161
      %s178 = sphi 0, %s162
      %s190 = sphi 0, %s192
      %s193 = sphi 0, %s190
      %s194 = sphi 0, %s193
      %s210 = sphi 0, %s194
      %s214 = sphi 0, %s214
      %s216 = sphi 0, %s214
      %s217 = sphi 0, %s216
      %s231 = sphi 0, %s217
      %s235 = sphi 0, %s235
      %s237 = sphi 0, %s235
      %s238 = sphi 0, %s237
      %s252 = sphi 0, %s238
      %s264 = sphi 0, %s266
      %s267 = sphi 0, %s264
      %s268 = sphi 0, %s267
      %s284 = sphi 0, %s268
      %s288 = sphi 0, %s288
      %s290 = sphi 0, %s288
      %s291 = sphi 0, %s290
      %s305 = sphi 0, %s291
      %s309 = sphi 0, %s309
      %s311 = sphi 0, %s309
      %s312 = sphi 0, %s311
      %s326 = sphi 0, %s312
      %s330 = sphi 0, %s330
      %s332 = sphi 0, %s330
      %s333 = sphi 0, %s332
      %s347 = sphi 0, %s333
      %s353 = sphi 0, %s355
      %s356 = sphi 0, %s353
      %s357 = sphi 0, %s356
      %s373 = sphi 0, %s357
    $region4: #{tpu_custom_call.1} parent=1 // loop_header_branch
      %24 = sbr.rel (%p22) target = $region8
    $region5: #{tpu_custom_call.1} parent=1 // loop_body
      %s26 = ssub.s32 %s21, 1
      %s27 = ssub.s32 %s21, 2
      %s34 = sadd.s32 1, %s29
      %p35 = scmp.ge.s32.totalorder %s34, 2
      %s36 = scalar_select %p35, 0, %s34
      %s37 = sadd.s32 1, %s28
      %s38 = scalar_select %p35, %s37, %s28
      %p39 = scmp.ge.s32.totalorder %s38, 1
      %s40 = scalar_select %p39, 0, %s38
      %p41 = scmp.lt.s32.totalorder %s29, 0
      %s42 = scalar_select %p41, %s29, 0
      %p43 = scmp.lt.s32.totalorder %s36, 0
      %s44 = scalar_select %p43, %s36, 0
      %s45 = ssub.s32 %s28, %s40
      %s46 = ssub.s32 %s42, %s44
      %s47 = sor.u32 %s45, %s46
      %p48 = scmp.eq.s32.totalorder %s47, 0
      %s50 = sadd.s32 %s49, 1
      %s51 = scalar_select %p48, %s49, %s50
      %p54 = pneg %p48
      %p55 = scmp.eq.s32.totalorder %s21, 1
      %p56 = por %p54, %p55
      %p57 = scmp.ne.s32.totalorder %s49, %s52
      %p58 = scmp.eq.s32.totalorder %s21, 0
      %p59 = por %p57, %p58
      %p60 = scmp.ne.s32.totalorder %s49, %s52
      %p61 = scmp.eq.s32.totalorder %s26, 1
      %p62 = por %p60, %p61
      %p63 = scmp.ne.s32.totalorder %s52, %s53
      %p64 = scmp.eq.s32.totalorder %s26, 0
      %p65 = por %p63, %p64
      %p66 = scmp.ne.s32.totalorder %s52, %s53
      %p67 = scmp.eq.s32.totalorder %s27, 1
      %p68 = por %p66, %p67
      %p70 = scmp.ne.s32.totalorder %s53, %s69
      %p71 = scmp.eq.s32.totalorder %s27, 0
      %p72 = por %p70, %p71
      %s73 = ssub.s32 %s28, %s40
      %p74 = scmp.eq.s32.totalorder %s73, 0
      %s76 = sadd.s32 %s75, 1
      %s77 = scalar_select %p74, %s75, %s76
      %p80 = pneg %p74
      %p81 = scmp.eq.s32.totalorder %s21, 1
      %p82 = por %p80, %p81
      %p83 = scmp.ne.s32.totalorder %s75, %s78
      %p84 = scmp.eq.s32.totalorder %s21, 0
      %p85 = por %p83, %p84
      %p86 = scmp.ne.s32.totalorder %s75, %s78
      %p87 = scmp.eq.s32.totalorder %s26, 1
      %p88 = por %p86, %p87
      %p89 = scmp.ne.s32.totalorder %s78, %s79
      %p90 = scmp.eq.s32.totalorder %s26, 0
      %p91 = por %p89, %p90
      %p92 = scmp.ne.s32.totalorder %s78, %s79
      %p93 = scmp.eq.s32.totalorder %s27, 1
      %p94 = por %p92, %p93
      %p96 = scmp.ne.s32.totalorder %s79, %s95
      %p97 = scmp.eq.s32.totalorder %s27, 0
      %p98 = por %p96, %p97
      %p99 = scmp.lt.s32.totalorder %s29, 0
      %s100 = scalar_select %p99, %s29, 0
      %p101 = scmp.lt.s32.totalorder %s36, 0
      %s102 = scalar_select %p101, %s36, 0
      %s103 = ssub.s32 %s100, %s102
      %p104 = scmp.eq.s32.totalorder %s103, 0
      %s106 = sadd.s32 %s105, 1
      %s107 = scalar_select %p104, %s105, %s106
      %p110 = pneg %p104
      %p111 = scmp.eq.s32.totalorder %s21, 1
      %p112 = por %p110, %p111
      %p113 = scmp.ne.s32.totalorder %s105, %s108
      %p114 = scmp.eq.s32.totalorder %s21, 0
      %p115 = por %p113, %p114
      %p116 = scmp.ne.s32.totalorder %s105, %s108
      %p117 = scmp.eq.s32.totalorder %s26, 1
      %p118 = por %p116, %p117
      %p119 = scmp.ne.s32.totalorder %s108, %s109
      %p120 = scmp.eq.s32.totalorder %s26, 0
      %p121 = por %p119, %p120
      %p122 = scmp.ne.s32.totalorder %s108, %s109
      %p123 = scmp.eq.s32.totalorder %s27, 1
      %p124 = por %p122, %p123
      %p126 = scmp.ne.s32.totalorder %s109, %s125
      %p127 = scmp.eq.s32.totalorder %s27, 0
      %p128 = por %p126, %p127
      %s130 = sadd.s32 %s129, 1
      %p133 = scmp.eq.s32.totalorder %s21, 1
      %p134 = scmp.ne.s32.totalorder %s129, %s131
      %p135 = scmp.eq.s32.totalorder %s21, 0
      %p136 = por %p134, %p135
      %p137 = scmp.ne.s32.totalorder %s129, %s131
      %p138 = scmp.eq.s32.totalorder %s26, 1
      %p139 = por %p137, %p138
      %p140 = scmp.ne.s32.totalorder %s131, %s132
      %p141 = scmp.eq.s32.totalorder %s26, 0
      %p142 = por %p140, %p141
      %p143 = scmp.ne.s32.totalorder %s131, %s132
      %p144 = scmp.eq.s32.totalorder %s27, 1
      %p145 = por %p143, %p144
      %p147 = scmp.ne.s32.totalorder %s132, %s146
      %p148 = scmp.eq.s32.totalorder %s27, 0
      %p149 = por %p147, %p148
      %s150 = ssub.s32 %s29, 1
      %p151 = scmp.gt.s32.totalorder %s150, 0
      %s152 = scalar_select %p151, %s150, 0
      %s153 = ssub.s32 %s36, 1
      %p154 = scmp.gt.s32.totalorder %s153, 0
      %s155 = scalar_select %p154, %s153, 0
      %s156 = ssub.s32 %s152, %s155
      %p157 = scmp.eq.s32.totalorder %s156, 0
      %s159 = sadd.s32 %s158, 1
      %s160 = scalar_select %p157, %s158, %s159
      %p163 = pneg %p157
      %p164 = scmp.eq.s32.totalorder %s21, 1
      %p165 = por %p163, %p164
      %p166 = scmp.ne.s32.totalorder %s158, %s161
      %p167 = scmp.eq.s32.totalorder %s21, 0
      %p168 = por %p166, %p167
      %p169 = scmp.ne.s32.totalorder %s158, %s161
      %p170 = scmp.eq.s32.totalorder %s26, 1
      %p171 = por %p169, %p170
      %p172 = scmp.ne.s32.totalorder %s161, %s162
      %p173 = scmp.eq.s32.totalorder %s26, 0
      %p174 = por %p172, %p173
      %p175 = scmp.ne.s32.totalorder %s161, %s162
      %p176 = scmp.eq.s32.totalorder %s27, 1
      %p177 = por %p175, %p176
      %p179 = scmp.ne.s32.totalorder %s162, %s178
      %p180 = scmp.eq.s32.totalorder %s27, 0
      %p181 = por %p179, %p180
      %s182 = ssub.s32 %s29, 1
      %p183 = scmp.gt.s32.totalorder %s182, 0
      %s184 = scalar_select %p183, %s182, 0
      %s185 = ssub.s32 %s36, 1
      %p186 = scmp.gt.s32.totalorder %s185, 0
      %s187 = scalar_select %p186, %s185, 0
      %s188 = ssub.s32 %s184, %s187
      %p189 = scmp.eq.s32.totalorder %s188, 0
      %s191 = sadd.s32 %s190, 1
      %s192 = scalar_select %p189, %s190, %s191
      %p195 = pneg %p189
      %p196 = scmp.eq.s32.totalorder %s21, 1
      %p197 = por %p195, %p196
      %p198 = scmp.ne.s32.totalorder %s190, %s193
      %p199 = scmp.eq.s32.totalorder %s21, 0
      %p200 = por %p198, %p199
      %p201 = scmp.ne.s32.totalorder %s190, %s193
      %p202 = scmp.eq.s32.totalorder %s26, 1
      %p203 = por %p201, %p202
      %p204 = scmp.ne.s32.totalorder %s193, %s194
      %p205 = scmp.eq.s32.totalorder %s26, 0
      %p206 = por %p204, %p205
      %p207 = scmp.ne.s32.totalorder %s193, %s194
      %p208 = scmp.eq.s32.totalorder %s27, 1
      %p209 = por %p207, %p208
      %p211 = scmp.ne.s32.totalorder %s194, %s210
      %p212 = scmp.eq.s32.totalorder %s27, 0
      %p213 = por %p211, %p212
      %s215 = sadd.s32 %s214, 1
      %p218 = scmp.eq.s32.totalorder %s21, 1
      %p219 = scmp.ne.s32.totalorder %s214, %s216
      %p220 = scmp.eq.s32.totalorder %s21, 0
      %p221 = por %p219, %p220
      %p222 = scmp.ne.s32.totalorder %s214, %s216
      %p223 = scmp.eq.s32.totalorder %s26, 1
      %p224 = por %p222, %p223
      %p225 = scmp.ne.s32.totalorder %s216, %s217
      %p226 = scmp.eq.s32.totalorder %s26, 0
      %p227 = por %p225, %p226
      %p228 = scmp.ne.s32.totalorder %s216, %s217
      %p229 = scmp.eq.s32.totalorder %s27, 1
      %p230 = por %p228, %p229
      %p232 = scmp.ne.s32.totalorder %s217, %s231
      %p233 = scmp.eq.s32.totalorder %s27, 0
      %p234 = por %p232, %p233
      %s236 = sadd.s32 %s235, 1
      %p239 = scmp.eq.s32.totalorder %s21, 1
      %p240 = scmp.ne.s32.totalorder %s235, %s237
      %p241 = scmp.eq.s32.totalorder %s21, 0
      %p242 = por %p240, %p241
      %p243 = scmp.ne.s32.totalorder %s235, %s237
      %p244 = scmp.eq.s32.totalorder %s26, 1
      %p245 = por %p243, %p244
      %p246 = scmp.ne.s32.totalorder %s237, %s238
      %p247 = scmp.eq.s32.totalorder %s26, 0
      %p248 = por %p246, %p247
      %p249 = scmp.ne.s32.totalorder %s237, %s238
      %p250 = scmp.eq.s32.totalorder %s27, 1
      %p251 = por %p249, %p250
      %p253 = scmp.ne.s32.totalorder %s238, %s252
      %p254 = scmp.eq.s32.totalorder %s27, 0
      %p255 = por %p253, %p254
      %s256 = ssub.s32 %s29, 1
      %p257 = scmp.gt.s32.totalorder %s256, 0
      %s258 = scalar_select %p257, %s256, 0
      %s259 = ssub.s32 %s36, 1
      %p260 = scmp.gt.s32.totalorder %s259, 0
      %s261 = scalar_select %p260, %s259, 0
      %s262 = ssub.s32 %s258, %s261
      %p263 = scmp.eq.s32.totalorder %s262, 0
      %s265 = sadd.s32 %s264, 1
      %s266 = scalar_select %p263, %s264, %s265
      %p269 = pneg %p263
      %p270 = scmp.eq.s32.totalorder %s21, 1
      %p271 = por %p269, %p270
      %p272 = scmp.ne.s32.totalorder %s264, %s267
      %p273 = scmp.eq.s32.totalorder %s21, 0
      %p274 = por %p272, %p273
      %p275 = scmp.ne.s32.totalorder %s264, %s267
      %p276 = scmp.eq.s32.totalorder %s26, 1
      %p277 = por %p275, %p276
      %p278 = scmp.ne.s32.totalorder %s267, %s268
      %p279 = scmp.eq.s32.totalorder %s26, 0
      %p280 = por %p278, %p279
      %p281 = scmp.ne.s32.totalorder %s267, %s268
      %p282 = scmp.eq.s32.totalorder %s27, 1
      %p283 = por %p281, %p282
      %p285 = scmp.ne.s32.totalorder %s268, %s284
      %p286 = scmp.eq.s32.totalorder %s27, 0
      %p287 = por %p285, %p286
      %s289 = sadd.s32 %s288, 1
      %p292 = scmp.eq.s32.totalorder %s21, 1
      %p293 = scmp.ne.s32.totalorder %s288, %s290
      %p294 = scmp.eq.s32.totalorder %s21, 0
      %p295 = por %p293, %p294
      %p296 = scmp.ne.s32.totalorder %s288, %s290
      %p297 = scmp.eq.s32.totalorder %s26, 1
      %p298 = por %p296, %p297
      %p299 = scmp.ne.s32.totalorder %s290, %s291
      %p300 = scmp.eq.s32.totalorder %s26, 0
      %p301 = por %p299, %p300
      %p302 = scmp.ne.s32.totalorder %s290, %s291
      %p303 = scmp.eq.s32.totalorder %s27, 1
      %p304 = por %p302, %p303
      %p306 = scmp.ne.s32.totalorder %s291, %s305
      %p307 = scmp.eq.s32.totalorder %s27, 0
      %p308 = por %p306, %p307
      %s310 = sadd.s32 %s309, 1
      %p313 = scmp.eq.s32.totalorder %s21, 1
      %p314 = scmp.ne.s32.totalorder %s309, %s311
      %p315 = scmp.eq.s32.totalorder %s21, 0
      %p316 = por %p314, %p315
      %p317 = scmp.ne.s32.totalorder %s309, %s311
      %p318 = scmp.eq.s32.totalorder %s26, 1
      %p319 = por %p317, %p318
      %p320 = scmp.ne.s32.totalorder %s311, %s312
      %p321 = scmp.eq.s32.totalorder %s26, 0
      %p322 = por %p320, %p321
      %p323 = scmp.ne.s32.totalorder %s311, %s312
      %p324 = scmp.eq.s32.totalorder %s27, 1
      %p325 = por %p323, %p324
      %p327 = scmp.ne.s32.totalorder %s312, %s326
      %p328 = scmp.eq.s32.totalorder %s27, 0
      %p329 = por %p327, %p328
      %s331 = sadd.s32 %s330, 1
      %p334 = scmp.eq.s32.totalorder %s21, 1
      %p335 = scmp.ne.s32.totalorder %s330, %s332
      %p336 = scmp.eq.s32.totalorder %s21, 0
      %p337 = por %p335, %p336
      %p338 = scmp.ne.s32.totalorder %s330, %s332
      %p339 = scmp.eq.s32.totalorder %s26, 1
      %p340 = por %p338, %p339
      %p341 = scmp.ne.s32.totalorder %s332, %s333
      %p342 = scmp.eq.s32.totalorder %s26, 0
      %p343 = por %p341, %p342
      %p344 = scmp.ne.s32.totalorder %s332, %s333
      %p345 = scmp.eq.s32.totalorder %s27, 1
      %p346 = por %p344, %p345
      %p348 = scmp.ne.s32.totalorder %s333, %s347
      %p349 = scmp.eq.s32.totalorder %s27, 0
      %p350 = por %p348, %p349
      %s351 = ssub.s32 %s28, %s40
      %p352 = scmp.eq.s32.totalorder %s351, 0
      %s354 = sadd.s32 %s353, 1
      %s355 = scalar_select %p352, %s353, %s354
      %p358 = pneg %p352
      %p359 = scmp.eq.s32.totalorder %s21, 1
      %p360 = por %p358, %p359
      %p361 = scmp.ne.s32.totalorder %s353, %s356
      %p362 = scmp.eq.s32.totalorder %s21, 0
      %p363 = por %p361, %p362
      %p364 = scmp.ne.s32.totalorder %s353, %s356
      %p365 = scmp.eq.s32.totalorder %s26, 1
      %p366 = por %p364, %p365
      %p367 = scmp.ne.s32.totalorder %s356, %s357
      %p368 = scmp.eq.s32.totalorder %s26, 0
      %p369 = por %p367, %p368
      %p370 = scmp.ne.s32.totalorder %s356, %s357
      %p371 = scmp.eq.s32.totalorder %s27, 1
      %p372 = por %p370, %p371
      %p374 = scmp.ne.s32.totalorder %s357, %s373
      %p375 = scmp.eq.s32.totalorder %s27, 0
      %p376 = por %p374, %p375
      %p377 = scmp.le.s32.totalorder 1, %s21
      %p378 = scmp.lt.s32.totalorder %s21, 3
      %p379 = pnand %p377, %p378
      %p380 = pneg %p379
      // Predicated region
      $region9: #{tpu_custom_call.1} parent=5 // pred_check
        _
      $region10: #{tpu_custom_call.1} parent=5 // pred_check_branch
        %382 = sbr.rel (%p379) target = $region12
      $region11: #{tpu_custom_call.1} parent=5 // pred_region
        %s383 = ssub.s32 %s21, 1
        // Predicated region
        $region13: #{tpu_custom_call.1} parent=11 // pred_check
          %p384 = pneg %p91
        $region14: #{tpu_custom_call.1} parent=11 // pred_check_branch
          %386 = sbr.rel (%p384) target = $region16
        $region15: #{tpu_custom_call.1} parent=11 // pred_region
          %s387 = smul.u32 2, %s30
          %p388 = scmp.lt.s32.totalorder %s387, 1
          %s389 = scalar_select %p388, %s387, 1
          %s390 = smul.addr %s389, 8
          %s391 = scalar_lea.vmem %s1, %s390
          %s392 = smul.u32 2, %s30
        $region16: #{tpu_custom_call.1} parent=11 // pred_fallthru
          _
        // Predicated region
        $region17: #{tpu_custom_call.1} parent=11 // pred_check
          %p393 = pneg %p121
        $region18: #{tpu_custom_call.1} parent=11 // pred_check_branch
          %395 = sbr.rel (%p393) target = $region20
        $region19: #{tpu_custom_call.1} parent=11 // pred_region
          %p396 = scmp.lt.s32.totalorder %s31, 0
          %s397 = scalar_select %p396, %s31, 0
          %s398 = smul.u32 32, %s397
          %s400 = ssub.s32 18432, 18432
          %401 = vsyncadd [#allocation6], %s400
          %s402 = smul.addr %s398, 9
          %s403 = smul.addr %s402, 64
          %s404 = scalar_lea.hbm %s2, %s403
          %s405 = sshll.u32 [#allocation5], 4
          %s406 = int_to_ptr.vmem [resolvable:$true] %s405
          %411 = dma.hbm_to_vmem [thread:$0]  %s404, 18432, %s406, [#allocation6], 576, 576, 36
        $region20: #{tpu_custom_call.1} parent=11 // pred_fallthru
          _
        // Predicated region
        $region21: #{tpu_custom_call.1} parent=11 // pred_check
          %p412 = pneg %p142
        $region22: #{tpu_custom_call.1} parent=11 // pred_check_branch
          %414 = sbr.rel (%p412) target = $region24
        $region23: #{tpu_custom_call.1} parent=11 // pred_region
          _
        $region24: #{tpu_custom_call.1} parent=11 // pred_fallthru
          _
        // Predicated region
        $region25: #{tpu_custom_call.1} parent=11 // pred_check
          %p415 = pneg %p174
        $region26: #{tpu_custom_call.1} parent=11 // pred_check_branch
          %417 = sbr.rel (%p415) target = $region28
        $region27: #{tpu_custom_call.1} parent=11 // pred_region
          %s418 = ssub.s32 %s31, 1
          %p419 = scmp.gt.s32.totalorder %s418, 0
          %s420 = scalar_select %p419, %s418, 0
          %s421 = smul.u32 2, %s420
          %s423 = ssub.s32 16384, 16384
          %424 = vsyncadd [#allocation9], %s423
          %s425 = smul.addr %s421, 64
          %s426 = scalar_lea.hbm %s4, %s425
          %s427 = sshll.u32 [#allocation8], 4
          %s428 = int_to_ptr.vmem [resolvable:$true] %s427
          %433 = dma.hbm_to_vmem [thread:$0]  %s426, 16384, %s428, [#allocation9], 128, 128, 8
        $region28: #{tpu_custom_call.1} parent=11 // pred_fallthru
          _
        // Predicated region
        $region29: #{tpu_custom_call.1} parent=11 // pred_check
          %p434 = pneg %p206
        $region30: #{tpu_custom_call.1} parent=11 // pred_check_branch
          %436 = sbr.rel (%p434) target = $region32
        $region31: #{tpu_custom_call.1} parent=11 // pred_region
          %s437 = ssub.s32 %s31, 1
          %p438 = scmp.gt.s32.totalorder %s437, 0
          %s439 = scalar_select %p438, %s437, 0
          %s440 = smul.u32 2, %s439
          %p441 = scmp.lt.s32.totalorder %s440, 1
          %s442 = scalar_select %p441, %s440, 1
          %s443 = scalar_lea.vmem %s5, %s442
          %s444 = ssub.s32 %s31, 1
          %p445 = scmp.gt.s32.totalorder %s444, 0
          %s446 = scalar_select %p445, %s444, 0
          %s447 = smul.u32 2, %s446
        $region32: #{tpu_custom_call.1} parent=11 // pred_fallthru
          _
        // Predicated region
        $region33: #{tpu_custom_call.1} parent=11 // pred_check
          %p448 = pneg %p227
        $region34: #{tpu_custom_call.1} parent=11 // pred_check_branch
          %450 = sbr.rel (%p448) target = $region36
        $region35: #{tpu_custom_call.1} parent=11 // pred_region
          _
        $region36: #{tpu_custom_call.1} parent=11 // pred_fallthru
          _
        // Predicated region
        $region37: #{tpu_custom_call.1} parent=11 // pred_check
          %p451 = pneg %p248
        $region38: #{tpu_custom_call.1} parent=11 // pred_check_branch
          %453 = sbr.rel (%p451) target = $region40
        $region39: #{tpu_custom_call.1} parent=11 // pred_region
          _
        $region40: #{tpu_custom_call.1} parent=11 // pred_fallthru
          _
        // Predicated region
        $region41: #{tpu_custom_call.1} parent=11 // pred_check
          %p454 = pneg %p280
        $region42: #{tpu_custom_call.1} parent=11 // pred_check_branch
          %456 = sbr.rel (%p454) target = $region44
        $region43: #{tpu_custom_call.1} parent=11 // pred_region
          %s457 = ssub.s32 %s31, 1
          %p458 = scmp.gt.s32.totalorder %s457, 0
          %s459 = scalar_select %p458, %s457, 0
          %s460 = smul.u32 32, %s459
          %p461 = scmp.lt.s32.totalorder %s460, 31
          %s462 = scalar_select %p461, %s460, 31
          %s463 = smul.addr %s462, 4
          %s464 = scalar_lea.vmem %s8, %s463
          %s465 = ssub.s32 %s31, 1
          %p466 = scmp.gt.s32.totalorder %s465, 0
          %s467 = scalar_select %p466, %s465, 0
          %s468 = smul.u32 32, %s467
        $region44: #{tpu_custom_call.1} parent=11 // pred_fallthru
          _
        // Predicated region
        $region45: #{tpu_custom_call.1} parent=11 // pred_check
          %p469 = pneg %p301
        $region46: #{tpu_custom_call.1} parent=11 // pred_check_branch
          %471 = sbr.rel (%p469) target = $region48
        $region47: #{tpu_custom_call.1} parent=11 // pred_region
          _
        $region48: #{tpu_custom_call.1} parent=11 // pred_fallthru
          _
        // Predicated region
        $region49: #{tpu_custom_call.1} parent=11 // pred_check
          %p472 = pneg %p322
        $region50: #{tpu_custom_call.1} parent=11 // pred_check_branch
          %474 = sbr.rel (%p472) target = $region52
        $region51: #{tpu_custom_call.1} parent=11 // pred_region
          _
        $region52: #{tpu_custom_call.1} parent=11 // pred_fallthru
          _
        // Predicated region
        $region53: #{tpu_custom_call.1} parent=11 // pred_check
          %p475 = pneg %p343
        $region54: #{tpu_custom_call.1} parent=11 // pred_check_branch
          %477 = sbr.rel (%p475) target = $region56
        $region55: #{tpu_custom_call.1} parent=11 // pred_region
          _
        $region56: #{tpu_custom_call.1} parent=11 // pred_fallthru
          _
      $region12: #{tpu_custom_call.1} parent=5 // pred_fallthru
        _
      %p478 = scmp.lt.s32.totalorder %s21, 2
      // Predicated region
      $region57: #{tpu_custom_call.1} parent=5 // pred_check
        %p479 = pneg %p478
      $region58: #{tpu_custom_call.1} parent=5 // pred_check_branch
        %481 = sbr.rel (%p479) target = $region60
      $region59: #{tpu_custom_call.1} parent=5 // pred_region
        // Predicated region
        $region61: #{tpu_custom_call.1} parent=59 // pred_check
          %p482 = pneg %p59
        $region62: #{tpu_custom_call.1} parent=59 // pred_check_branch
          %484 = sbr.rel (%p482) target = $region64
        $region63: #{tpu_custom_call.1} parent=59 // pred_region
          %p485 = scmp.lt.s32.totalorder %s29, 0
          %s486 = scalar_select %p485, %s29, 0
          %s487 = smul.u32 2, %s28
          %s488 = smul.u32 2, %s486
          %p489 = scmp.lt.s32.totalorder %s487, 1
          %s490 = scalar_select %p489, %s487, 1
          %p491 = scmp.lt.s32.totalorder %s488, 1
          %s492 = scalar_select %p491, %s488, 1
          %s493 = smul.addr %s490, 2
          %s494 = sadd.s32 %s492, %s493
          %s495 = smul.addr %s494, 8
          %s496 = scalar_lea.vmem %s0, %s495
          %p497 = scmp.lt.s32.totalorder %s29, 0
          %s498 = scalar_select %p497, %s29, 0
          %s499 = smul.u32 2, %s28
          %s500 = smul.u32 2, %s498
        $region64: #{tpu_custom_call.1} parent=59 // pred_fallthru
          _
      $region60: #{tpu_custom_call.1} parent=5 // pred_fallthru
        _
      %p501 = scmp.le.s32.totalorder 1, %s21
      %p502 = scmp.lt.s32.totalorder %s21, 3
      %p503 = pnand %p501, %p502
      %p504 = pneg %p503
      // Predicated region
      $region65: #{tpu_custom_call.1} parent=5 // pred_check
        _
      $region66: #{tpu_custom_call.1} parent=5 // pred_check_branch
        %506 = sbr.rel (%p503) target = $region68
      $region67: #{tpu_custom_call.1} parent=5 // pred_region
        %s507 = ssub.s32 %s21, 1
        // Predicated region
        $region69: #{tpu_custom_call.1} parent=67 // pred_check
          %p508 = pneg %p121
        $region70: #{tpu_custom_call.1} parent=67 // pred_check_branch
          %510 = sbr.rel (%p508) target = $region72
        $region71: #{tpu_custom_call.1} parent=67 // pred_region
          %511 = dma.done [#allocation6], 18432
        $region72: #{tpu_custom_call.1} parent=67 // pred_fallthru
          _
        // Predicated region
        $region73: #{tpu_custom_call.1} parent=67 // pred_check
          %p512 = pneg %p174
        $region74: #{tpu_custom_call.1} parent=67 // pred_check_branch
          %514 = sbr.rel (%p512) target = $region76
        $region75: #{tpu_custom_call.1} parent=67 // pred_region
          %515 = dma.done [#allocation9], 16384
        $region76: #{tpu_custom_call.1} parent=67 // pred_fallthru
          _
        %p516 = scmp.lt.s32.totalorder %s31, 0
        %s517 = scalar_select %p516, %s31, 0
        %s518 = smul.u32 2, %s30
        %s519 = smul.u32 2, %s517
        %p520 = scmp.lt.s32.totalorder %s518, 1
        %s521 = scalar_select %p520, %s518, 1
        %p522 = scmp.lt.s32.totalorder %s519, 1
        %s523 = scalar_select %p522, %s519, 1
        %s524 = smul.addr %s521, 2
        %s525 = sadd.s32 %s523, %s524
        %s526 = smul.addr %s525, 8
        %s527 = scalar_lea.vmem %s0, %s526
        %p528 = pneg %p65
        %p529 = pneg %p62
        %s530 = smul.u32 2, %s30
        %p531 = scmp.lt.s32.totalorder %s530, 1
        %s532 = scalar_select %p531, %s530, 1
        %s533 = smul.addr %s532, 8
        %s534 = scalar_lea.vmem %s1, %s533
        %p535 = pneg %p91
        %p536 = pneg %p88
        %p537 = pneg %p121
        %p538 = pneg %p118
        %p539 = pneg %p142
        %p540 = pneg %p139
        %p541 = pneg %p174
        %p542 = pneg %p171
        %s543 = ssub.s32 %s31, 1
        %p544 = scmp.gt.s32.totalorder %s543, 0
        %s545 = scalar_select %p544, %s543, 0
        %s546 = smul.u32 2, %s545
        %p547 = scmp.lt.s32.totalorder %s546, 1
        %s548 = scalar_select %p547, %s546, 1
        %s549 = scalar_lea.vmem %s5, %s548
        %p550 = pneg %p206
        %p551 = pneg %p203
        %p552 = pneg %p227
        %p553 = pneg %p224
        %p554 = pneg %p248
        %p555 = pneg %p245
        %s556 = ssub.s32 %s31, 1
        %p557 = scmp.gt.s32.totalorder %s556, 0
        %s558 = scalar_select %p557, %s556, 0
        %s559 = smul.u32 32, %s558
        %p560 = scmp.lt.s32.totalorder %s559, 31
        %s561 = scalar_select %p560, %s559, 31
        %s562 = smul.addr %s561, 4
        %s563 = scalar_lea.vmem %s8, %s562
        %p564 = pneg %p280
        %p565 = pneg %p277
        %p566 = pneg %p301
        %p567 = pneg %p298
        %p568 = pneg %p322
        %p569 = pneg %p319
        %p570 = pneg %p343
        %p571 = pneg %p340
        %p572 = pneg %p369
        %p573 = pneg %p366
        %p574 = scmp.lt.s32.totalorder %s31, 0
        %s575 = scalar_select %p574, %s31, 0
        %s576 = smul.u32 2, %s30
        %s577 = smul.u32 2, %s575
        %p578 = scmp.lt.s32.totalorder %s576, 1
        %s579 = scalar_select %p578, %s576, 1
        %p580 = scmp.lt.s32.totalorder %s577, 1
        %s581 = scalar_select %p580, %s577, 1
        %s582 = smul.addr %s579, 2
        %s583 = sadd.s32 %s581, %s582
        %s584 = smul.addr %s583, 8
        %s585 = scalar_lea.vmem %s0, %s584
        %p586 = scmp.lt.s32.totalorder %s31, 0
        %s587 = scalar_select %p586, %s31, 0
        %s588 = smul.u32 2, %s30
        %s589 = smul.u32 2, %s587
        %s590 = smul.u32 2, %s30
        %p591 = scmp.lt.s32.totalorder %s590, 1
        %s592 = scalar_select %p591, %s590, 1
        %s593 = smul.addr %s592, 8
        %s594 = scalar_lea.vmem %s1, %s593
        %s595 = smul.u32 2, %s30
        %p596 = scmp.lt.s32.totalorder %s31, 0
        %s597 = scalar_select %p596, %s31, 0
        %s598 = smul.u32 32, %s597
        %s599 = ssub.s32 %s31, 1
        %p600 = scmp.gt.s32.totalorder %s599, 0
        %s601 = scalar_select %p600, %s599, 0
        %s602 = smul.u32 2, %s601
        %s603 = ssub.s32 %s31, 1
        %p604 = scmp.gt.s32.totalorder %s603, 0
        %s605 = scalar_select %p604, %s603, 0
        %s606 = smul.u32 2, %s605
        %p607 = scmp.lt.s32.totalorder %s606, 1
        %s608 = scalar_select %p607, %s606, 1
        %s609 = scalar_lea.vmem %s5, %s608
        %s610 = ssub.s32 %s31, 1
        %p611 = scmp.gt.s32.totalorder %s610, 0
        %s612 = scalar_select %p611, %s610, 0
        %s613 = smul.u32 2, %s612
        %s614 = ssub.s32 %s31, 1
        %p615 = scmp.gt.s32.totalorder %s614, 0
        %s616 = scalar_select %p615, %s614, 0
        %s617 = smul.u32 32, %s616
        %p618 = scmp.lt.s32.totalorder %s617, 31
        %s619 = scalar_select %p618, %s617, 31
        %s620 = smul.addr %s619, 4
        %s621 = scalar_lea.vmem %s8, %s620
        %s622 = ssub.s32 %s31, 1
        %p623 = scmp.gt.s32.totalorder %s622, 0
        %s624 = scalar_select %p623, %s622, 0
        %s625 = smul.u32 32, %s624
        %s626 = smul.u32 2, %s30
        %p628 = scmp.eq.s32.totalorder %s31, 0
        // Predicated region
        $region77: #{tpu_custom_call.1} parent=67 // pred_check
          %p629 = pneg %p628
        $region78: #{tpu_custom_call.1} parent=67 // pred_check_branch
          %631 = sbr.rel (%p629) target = $region80
        $region79: #{tpu_custom_call.1} parent=67 // pred_region
          %632 = vst [vmem:[#allocation2] sm:$0xff] 0.0
          %633 = vst [vmem:[#allocation2 + $0x8] sm:$0xff] 0.0
          %634 = vst [vmem:[#allocation2 + $0x10] sm:$0xff] 0.0
          %635 = vst [vmem:[#allocation2 + $0x18] sm:$0xff] 0.0
          %636 = vst [vmem:[#allocation2 + $0x20] sm:$0xff] 0.0
          %637 = vst [vmem:[#allocation2 + $0x28] sm:$0xff] 0.0
          %638 = vst [vmem:[#allocation2 + $0x30] sm:$0xff] 0.0
          %639 = vst [vmem:[#allocation2 + $0x38] sm:$0xff] 0.0
          %640 = vst [vmem:[#allocation2 + $0x40] sm:$0xff] 0.0
          %641 = vst [vmem:[#allocation2 + $0x48] sm:$0xff] 0.0
          %642 = vst [vmem:[#allocation2 + $0x50] sm:$0xff] 0.0
          %643 = vst [vmem:[#allocation2 + $0x58] sm:$0xff] 0.0
          %644 = vst [vmem:[#allocation2 + $0x60] sm:$0xff] 0.0
          %645 = vst [vmem:[#allocation2 + $0x68] sm:$0xff] 0.0
          %646 = vst [vmem:[#allocation2 + $0x70] sm:$0xff] 0.0
          %647 = vst [vmem:[#allocation2 + $0x78] sm:$0xff] 0.0
          %648 = vst [vmem:[#allocation2 + $0x80] sm:$0xff] 0.0
          %649 = vst [vmem:[#allocation2 + $0x88] sm:$0xff] 0.0
          %vm650 = vcmask 523264
          %651 = vst.msk [vmem:[#allocation4] sm:$0xff] %vm650, 0.0
          %652 = vst.msk [vmem:[#allocation4 + $0x8] sm:$0xff] %vm650, 0.0
        $region80: #{tpu_custom_call.1} parent=67 // pred_fallthru
          _
        %p653 = scmp.lt.s32.totalorder %s31, 1
        // Predicated region
        $region81: #{tpu_custom_call.1} parent=67 // pred_check
          %p654 = pneg %p653
        $region82: #{tpu_custom_call.1} parent=67 // pred_check_branch
          %656 = sbr.rel (%p654) target = $region84
        $region83: #{tpu_custom_call.1} parent=67 // pred_region
          %v657 = vld [vmem:[%s585] sm:$0xff]
          %v658 = vld [vmem:[%s585 + $0x8] sm:$0xff]
          %v659 = vld [vmem:[%s585 + $0x10] sm:$0xff]
          %v660 = vld [vmem:[%s585 + $0x18] sm:$0xff]
          %v661 = vadd.f32 %v657, 1.0
          %v662 = vadd.f32 %v658, 1.0
          %v663 = vadd.f32 %v659, 1.0
          %v664 = vadd.f32 %v660, 1.0
          %v665 = vlog2.pop %v661
          %v666 = vmul.f32 %v665, 0.6931472
          %v667 = vlog2.pop %v662
          %v668 = vmul.f32 %v667, 0.6931472
          %v669 = vlog2.pop %v663
          %v670 = vmul.f32 %v669, 0.6931472
          %v671 = vlog2.pop %v664
          %v672 = vmul.f32 %v671, 0.6931472
          %v673 = vld [vmem:[#allocation2] sm:$0xff]
          %v674 = vld [vmem:[#allocation2 + $0x8] sm:$0xff]
          %v675 = vld [vmem:[#allocation2 + $0x10] sm:$0xff]
          %v676 = vld [vmem:[#allocation2 + $0x18] sm:$0xff]
          %v677 = vld [vmem:[#allocation2 + $0x20] sm:$0xff]
          %v678 = vld [vmem:[#allocation2 + $0x28] sm:$0xff]
          %v679 = vld [vmem:[#allocation2 + $0x30] sm:$0xff]
          %v680 = vld [vmem:[#allocation2 + $0x38] sm:$0xff]
          %v681 = vld [vmem:[#allocation2 + $0x40] sm:$0xff]
          %v682 = vld [vmem:[#allocation2 + $0x48] sm:$0xff]
          %v683 = vld [vmem:[#allocation2 + $0x50] sm:$0xff]
          %v684 = vld [vmem:[#allocation2 + $0x58] sm:$0xff]
          %v685 = vld [vmem:[#allocation2 + $0x60] sm:$0xff]
          %v686 = vld [vmem:[#allocation2 + $0x68] sm:$0xff]
          %v687 = vld [vmem:[#allocation2 + $0x70] sm:$0xff]
          %v688 = vld [vmem:[#allocation2 + $0x78] sm:$0xff]
          %v689 = vld [vmem:[#allocation2 + $0x80] sm:$0xff]
          %v690 = vld [vmem:[#allocation2 + $0x88] sm:$0xff]
          %v691 = vpack.c.bf16 %v670, %v666
          %v692 = vpack.c.bf16 %v672, %v668
          %v693 = vld [vmem:[#allocation5] sm:$0xff]
          %v694 = vld [vmem:[#allocation5 + $0x8] sm:$0xff]
          %v695 = vld [vmem:[#allocation5 + $0x10] sm:$0xff]
          %v696 = vld [vmem:[#allocation5 + $0x18] sm:$0xff]
          %v697 = vld [vmem:[#allocation5 + $0x20] sm:$0xf]
          %v698 = vld [vmem:[#allocation5 + $0x24] sm:$0xff]
          %v699 = vld [vmem:[#allocation5 + $0x2c] sm:$0xff]
          %v700 = vld [vmem:[#allocation5 + $0x34] sm:$0xff]
          %v701 = vld [vmem:[#allocation5 + $0x3c] sm:$0xff]
          %v702 = vld [vmem:[#allocation5 + $0x44] sm:$0xf]
          %v703 = vld [vmem:[#allocation5 + $0x48] sm:$0xff]
          %v704 = vld [vmem:[#allocation5 + $0x50] sm:$0xff]
          %v705 = vld [vmem:[#allocation5 + $0x58] sm:$0xff]
          %v706 = vld [vmem:[#allocation5 + $0x60] sm:$0xff]
          %v707 = vld [vmem:[#allocation5 + $0x68] sm:$0xf]
          %v708 = vld [vmem:[#allocation5 + $0x6c] sm:$0xff]
          %v709 = vld [vmem:[#allocation5 + $0x74] sm:$0xff]
          %v710 = vld [vmem:[#allocation5 + $0x7c] sm:$0xff]
          %v711 = vld [vmem:[#allocation5 + $0x84] sm:$0xff]
          %v712 = vld [vmem:[#allocation5 + $0x8c] sm:$0xf]
          %v713 = vld [vmem:[#allocation5 + $0x90] sm:$0xff]
          %v714 = vld [vmem:[#allocation5 + $0x98] sm:$0xff]
          %v715 = vld [vmem:[#allocation5 + $0xa0] sm:$0xff]
          %v716 = vld [vmem:[#allocation5 + $0xa8] sm:$0xff]
          %v717 = vld [vmem:[#allocation5 + $0xb0] sm:$0xf]
          %v718 = vld [vmem:[#allocation5 + $0xb4] sm:$0xff]
          %v719 = vld [vmem:[#allocation5 + $0xbc] sm:$0xff]
          %v720 = vld [vmem:[#allocation5 + $0xc4] sm:$0xff]
          %v721 = vld [vmem:[#allocation5 + $0xcc] sm:$0xff]
          %v722 = vld [vmem:[#allocation5 + $0xd4] sm:$0xf]
          %v723 = vld [vmem:[#allocation5 + $0xd8] sm:$0xff]
          %v724 = vld [vmem:[#allocation5 + $0xe0] sm:$0xff]
          %v725 = vld [vmem:[#allocation5 + $0xe8] sm:$0xff]
          %v726 = vld [vmem:[#allocation5 + $0xf0] sm:$0xff]
          %v727 = vld [vmem:[#allocation5 + $0xf8] sm:$0xf]
          %v728 = vld [vmem:[#allocation5 + $0xfc] sm:$0xff]
          %v729 = vld [vmem:[#allocation5 + $0x104] sm:$0xff]
          %v730 = vld [vmem:[#allocation5 + $0x10c] sm:$0xff]
          %v731 = vld [vmem:[#allocation5 + $0x114] sm:$0xff]
          %v732 = vld [vmem:[#allocation5 + $0x11c] sm:$0xf]
          %v733 = vld [vmem:[#allocation5 + $0x120] sm:$0xff]
          %v734 = vld [vmem:[#allocation5 + $0x128] sm:$0xff]
          %v735 = vld [vmem:[#allocation5 + $0x130] sm:$0xff]
          %v736 = vld [vmem:[#allocation5 + $0x138] sm:$0xff]
          %v737 = vld [vmem:[#allocation5 + $0x140] sm:$0xf]
          %v738 = vld [vmem:[#allocation5 + $0x144] sm:$0xff]
          %v739 = vld [vmem:[#allocation5 + $0x14c] sm:$0xff]
          %v740 = vld [vmem:[#allocation5 + $0x154] sm:$0xff]
          %v741 = vld [vmem:[#allocation5 + $0x15c] sm:$0xff]
          %v742 = vld [vmem:[#allocation5 + $0x164] sm:$0xf]
          %v743 = vld [vmem:[#allocation5 + $0x168] sm:$0xff]
          %v744 = vld [vmem:[#allocation5 + $0x170] sm:$0xff]
          %v745 = vld [vmem:[#allocation5 + $0x178] sm:$0xff]
          %v746 = vld [vmem:[#allocation5 + $0x180] sm:$0xff]
          %v747 = vld [vmem:[#allocation5 + $0x188] sm:$0xf]
          %v748 = vld [vmem:[#allocation5 + $0x18c] sm:$0xff]
          %v749 = vld [vmem:[#allocation5 + $0x194] sm:$0xff]
          %v750 = vld [vmem:[#allocation5 + $0x19c] sm:$0xff]
          %v751 = vld [vmem:[#allocation5 + $0x1a4] sm:$0xff]
          %v752 = vld [vmem:[#allocation5 + $0x1ac] sm:$0xf]
          %v753 = vld [vmem:[#allocation5 + $0x1b0] sm:$0xff]
          %v754 = vld [vmem:[#allocation5 + $0x1b8] sm:$0xff]
          %v755 = vld [vmem:[#allocation5 + $0x1c0] sm:$0xff]
          %v756 = vld [vmem:[#allocation5 + $0x1c8] sm:$0xff]
          %v757 = vld [vmem:[#allocation5 + $0x1d0] sm:$0xf]
          %v758 = vld [vmem:[#allocation5 + $0x1d4] sm:$0xff]
          %v759 = vld [vmem:[#allocation5 + $0x1dc] sm:$0xff]
          %v760 = vld [vmem:[#allocation5 + $0x1e4] sm:$0xff]
          %v761 = vld [vmem:[#allocation5 + $0x1ec] sm:$0xff]
          %v762 = vld [vmem:[#allocation5 + $0x1f4] sm:$0xf]
          %v763 = vld [vmem:[#allocation5 + $0x1f8] sm:$0xff]
          %v764 = vld [vmem:[#allocation5 + $0x200] sm:$0xff]
          %v765 = vld [vmem:[#allocation5 + $0x208] sm:$0xff]
          %v766 = vld [vmem:[#allocation5 + $0x210] sm:$0xff]
          %v767 = vld [vmem:[#allocation5 + $0x218] sm:$0xf]
          %v768 = vld [vmem:[#allocation5 + $0x21c] sm:$0xff]
          %v769 = vld [vmem:[#allocation5 + $0x224] sm:$0xff]
          %v770 = vld [vmem:[#allocation5 + $0x22c] sm:$0xff]
          %v771 = vld [vmem:[#allocation5 + $0x234] sm:$0xff]
          %v772 = vld [vmem:[#allocation5 + $0x23c] sm:$0xf]
          %v773 = vld [vmem:[#allocation5 + $0x240] sm:$0xff]
          %v774 = vld [vmem:[#allocation5 + $0x248] sm:$0xff]
          %v775 = vld [vmem:[#allocation5 + $0x250] sm:$0xff]
          %v776 = vld [vmem:[#allocation5 + $0x258] sm:$0xff]
          %v777 = vld [vmem:[#allocation5 + $0x260] sm:$0xf]
          %v778 = vld [vmem:[#allocation5 + $0x264] sm:$0xff]
          %v779 = vld [vmem:[#allocation5 + $0x26c] sm:$0xff]
          %v780 = vld [vmem:[#allocation5 + $0x274] sm:$0xff]
          %v781 = vld [vmem:[#allocation5 + $0x27c] sm:$0xff]
          %v782 = vld [vmem:[#allocation5 + $0x284] sm:$0xf]
          %v783 = vld [vmem:[#allocation5 + $0x288] sm:$0xff]
          %v784 = vld [vmem:[#allocation5 + $0x290] sm:$0xff]
          %v785 = vld [vmem:[#allocation5 + $0x298] sm:$0xff]
          %v786 = vld [vmem:[#allocation5 + $0x2a0] sm:$0xff]
          %v787 = vld [vmem:[#allocation5 + $0x2a8] sm:$0xf]
          %v788 = vld [vmem:[#allocation5 + $0x2ac] sm:$0xff]
          %v789 = vld [vmem:[#allocation5 + $0x2b4] sm:$0xff]
          %v790 = vld [vmem:[#allocation5 + $0x2bc] sm:$0xff]
          %v791 = vld [vmem:[#allocation5 + $0x2c4] sm:$0xff]
          %v792 = vld [vmem:[#allocation5 + $0x2cc] sm:$0xf]
          %v793 = vld [vmem:[#allocation5 + $0x2d0] sm:$0xff]
          %v794 = vld [vmem:[#allocation5 + $0x2d8] sm:$0xff]
          %v795 = vld [vmem:[#allocation5 + $0x2e0] sm:$0xff]
          %v796 = vld [vmem:[#allocation5 + $0x2e8] sm:$0xff]
          %v797 = vld [vmem:[#allocation5 + $0x2f0] sm:$0xf]
          %v798 = vld [vmem:[#allocation5 + $0x2f4] sm:$0xff]
          %v799 = vld [vmem:[#allocation5 + $0x2fc] sm:$0xff]
          %v800 = vld [vmem:[#allocation5 + $0x304] sm:$0xff]
          %v801 = vld [vmem:[#allocation5 + $0x30c] sm:$0xff]
          %v802 = vld [vmem:[#allocation5 + $0x314] sm:$0xf]
          %v803 = vld [vmem:[#allocation5 + $0x318] sm:$0xff]
          %v804 = vld [vmem:[#allocation5 + $0x320] sm:$0xff]
          %v805 = vld [vmem:[#allocation5 + $0x328] sm:$0xff]
          %v806 = vld [vmem:[#allocation5 + $0x330] sm:$0xff]
          %v807 = vld [vmem:[#allocation5 + $0x338] sm:$0xf]
          %v808 = vld [vmem:[#allocation5 + $0x33c] sm:$0xff]
          %v809 = vld [vmem:[#allocation5 + $0x344] sm:$0xff]
          %v810 = vld [vmem:[#allocation5 + $0x34c] sm:$0xff]
          %v811 = vld [vmem:[#allocation5 + $0x354] sm:$0xff]
          %v812 = vld [vmem:[#allocation5 + $0x35c] sm:$0xf]
          %v813 = vld [vmem:[#allocation5 + $0x360] sm:$0xff]
          %v814 = vld [vmem:[#allocation5 + $0x368] sm:$0xff]
          %v815 = vld [vmem:[#allocation5 + $0x370] sm:$0xff]
          %v816 = vld [vmem:[#allocation5 + $0x378] sm:$0xff]
          %v817 = vld [vmem:[#allocation5 + $0x380] sm:$0xf]
          %v818 = vld [vmem:[#allocation5 + $0x384] sm:$0xff]
          %v819 = vld [vmem:[#allocation5 + $0x38c] sm:$0xff]
          %v820 = vld [vmem:[#allocation5 + $0x394] sm:$0xff]
          %v821 = vld [vmem:[#allocation5 + $0x39c] sm:$0xff]
          %v822 = vld [vmem:[#allocation5 + $0x3a4] sm:$0xf]
          %v823 = vld [vmem:[#allocation5 + $0x3a8] sm:$0xff]
          %v824 = vld [vmem:[#allocation5 + $0x3b0] sm:$0xff]
          %v825 = vld [vmem:[#allocation5 + $0x3b8] sm:$0xff]
          %v826 = vld [vmem:[#allocation5 + $0x3c0] sm:$0xff]
          %v827 = vld [vmem:[#allocation5 + $0x3c8] sm:$0xf]
          %v828 = vld [vmem:[#allocation5 + $0x3cc] sm:$0xff]
          %v829 = vld [vmem:[#allocation5 + $0x3d4] sm:$0xff]
          %v830 = vld [vmem:[#allocation5 + $0x3dc] sm:$0xff]
          %v831 = vld [vmem:[#allocation5 + $0x3e4] sm:$0xff]
          %v832 = vld [vmem:[#allocation5 + $0x3ec] sm:$0xf]
          %v833 = vld [vmem:[#allocation5 + $0x3f0] sm:$0xff]
          %v834 = vld [vmem:[#allocation5 + $0x3f8] sm:$0xff]
          %v835 = vld [vmem:[#allocation5 + $0x400] sm:$0xff]
          %v836 = vld [vmem:[#allocation5 + $0x408] sm:$0xff]
          %v837 = vld [vmem:[#allocation5 + $0x410] sm:$0xf]
          %v838 = vld [vmem:[#allocation5 + $0x414] sm:$0xff]
          %v839 = vld [vmem:[#allocation5 + $0x41c] sm:$0xff]
          %v840 = vld [vmem:[#allocation5 + $0x424] sm:$0xff]
          %v841 = vld [vmem:[#allocation5 + $0x42c] sm:$0xff]
          %v842 = vld [vmem:[#allocation5 + $0x434] sm:$0xf]
          %v843 = vld [vmem:[#allocation5 + $0x438] sm:$0xff]
          %v844 = vld [vmem:[#allocation5 + $0x440] sm:$0xff]
          %v845 = vld [vmem:[#allocation5 + $0x448] sm:$0xff]
          %v846 = vld [vmem:[#allocation5 + $0x450] sm:$0xff]
          %v847 = vld [vmem:[#allocation5 + $0x458] sm:$0xf]
          %v848 = vld [vmem:[#allocation5 + $0x45c] sm:$0xff]
          %v849 = vld [vmem:[#allocation5 + $0x464] sm:$0xff]
          %v850 = vld [vmem:[#allocation5 + $0x46c] sm:$0xff]
          %v851 = vld [vmem:[#allocation5 + $0x474] sm:$0xff]
          %v852 = vld [vmem:[#allocation5 + $0x47c] sm:$0xf]
          %v1013 = vunpack.c.l.b16 %v693
          %v1014 = vunpack.c.h.b16 %v693
          %v1015 = vunpack.c.l.b16 %v694
          %v1016 = vunpack.c.h.b16 %v694
          %v1017 = vunpack.c.l.b16 %v695
          %v1018 = vunpack.c.h.b16 %v695
          %v1019 = vunpack.c.l.b16 %v696
          %v1020 = vunpack.c.h.b16 %v696
          %v1021 = vunpack.c.l.b16 %v697
          %v1022 = vunpack.c.l.b16 %v698
          %v1023 = vunpack.c.h.b16 %v698
          %v1024 = vunpack.c.l.b16 %v699
          %v1025 = vunpack.c.h.b16 %v699
          %v1026 = vunpack.c.l.b16 %v700
          %v1027 = vunpack.c.h.b16 %v700
          %v1028 = vunpack.c.l.b16 %v701
          %v1029 = vunpack.c.h.b16 %v701
          %v1030 = vunpack.c.l.b16 %v702
          %v1031 = vunpack.c.l.b16 %v703
          %v1032 = vunpack.c.h.b16 %v703
          %v1033 = vunpack.c.l.b16 %v704
          %v1034 = vunpack.c.h.b16 %v704
          %v1035 = vunpack.c.l.b16 %v705
          %v1036 = vunpack.c.h.b16 %v705
          %v1037 = vunpack.c.l.b16 %v706
          %v1038 = vunpack.c.h.b16 %v706
          %v1039 = vunpack.c.l.b16 %v707
          %v1040 = vunpack.c.l.b16 %v708
          %v1041 = vunpack.c.h.b16 %v708
          %v1042 = vunpack.c.l.b16 %v709
          %v1043 = vunpack.c.h.b16 %v709
          %v1044 = vunpack.c.l.b16 %v710
          %v1045 = vunpack.c.h.b16 %v710
          %v1046 = vunpack.c.l.b16 %v711
          %v1047 = vunpack.c.h.b16 %v711
          %v1048 = vunpack.c.l.b16 %v712
          %v1049 = vunpack.c.l.b16 %v713
          %v1050 = vunpack.c.h.b16 %v713
          %v1051 = vunpack.c.l.b16 %v714
          %v1052 = vunpack.c.h.b16 %v714
          %v1053 = vunpack.c.l.b16 %v715
          %v1054 = vunpack.c.h.b16 %v715
          %v1055 = vunpack.c.l.b16 %v716
          %v1056 = vunpack.c.h.b16 %v716
          %v1057 = vunpack.c.l.b16 %v717
          %v1058 = vunpack.c.l.b16 %v718
          %v1059 = vunpack.c.h.b16 %v718
          %v1060 = vunpack.c.l.b16 %v719
          %v1061 = vunpack.c.h.b16 %v719
          %v1062 = vunpack.c.l.b16 %v720
          %v1063 = vunpack.c.h.b16 %v720
          %v1064 = vunpack.c.l.b16 %v721
          %v1065 = vunpack.c.h.b16 %v721
          %v1066 = vunpack.c.l.b16 %v722
          %v1067 = vunpack.c.l.b16 %v723
          %v1068 = vunpack.c.h.b16 %v723
          %v1069 = vunpack.c.l.b16 %v724
          %v1070 = vunpack.c.h.b16 %v724
          %v1071 = vunpack.c.l.b16 %v725
          %v1072 = vunpack.c.h.b16 %v725
          %v1073 = vunpack.c.l.b16 %v726
          %v1074 = vunpack.c.h.b16 %v726
          %v1075 = vunpack.c.l.b16 %v727
          %v1076 = vunpack.c.l.b16 %v728
          %v1077 = vunpack.c.h.b16 %v728
          %v1078 = vunpack.c.l.b16 %v729
          %v1079 = vunpack.c.h.b16 %v729
          %v1080 = vunpack.c.l.b16 %v730
          %v1081 = vunpack.c.h.b16 %v730
          %v1082 = vunpack.c.l.b16 %v731
          %v1083 = vunpack.c.h.b16 %v731
          %v1084 = vunpack.c.l.b16 %v732
          %v1085 = vunpack.c.l.b16 %v733
          %v1086 = vunpack.c.h.b16 %v733
          %v1087 = vunpack.c.l.b16 %v734
          %v1088 = vunpack.c.h.b16 %v734
          %v1089 = vunpack.c.l.b16 %v735
          %v1090 = vunpack.c.h.b16 %v735
          %v1091 = vunpack.c.l.b16 %v736
          %v1092 = vunpack.c.h.b16 %v736
          %v1093 = vunpack.c.l.b16 %v737
          %v1094 = vunpack.c.l.b16 %v738
          %v1095 = vunpack.c.h.b16 %v738
          %v1096 = vunpack.c.l.b16 %v739
          %v1097 = vunpack.c.h.b16 %v739
          %v1098 = vunpack.c.l.b16 %v740
          %v1099 = vunpack.c.h.b16 %v740
          %v1100 = vunpack.c.l.b16 %v741
          %v1101 = vunpack.c.h.b16 %v741
          %v1102 = vunpack.c.l.b16 %v742
          %v1103 = vunpack.c.l.b16 %v743
          %v1104 = vunpack.c.h.b16 %v743
          %v1105 = vunpack.c.l.b16 %v744
          %v1106 = vunpack.c.h.b16 %v744
          %v1107 = vunpack.c.l.b16 %v745
          %v1108 = vunpack.c.h.b16 %v745
          %v1109 = vunpack.c.l.b16 %v746
          %v1110 = vunpack.c.h.b16 %v746
          %v1111 = vunpack.c.l.b16 %v747
          %v1112 = vunpack.c.l.b16 %v748
          %v1113 = vunpack.c.h.b16 %v748
          %v1114 = vunpack.c.l.b16 %v749
          %v1115 = vunpack.c.h.b16 %v749
          %v1116 = vunpack.c.l.b16 %v750
          %v1117 = vunpack.c.h.b16 %v750
          %v1118 = vunpack.c.l.b16 %v751
          %v1119 = vunpack.c.h.b16 %v751
          %v1120 = vunpack.c.l.b16 %v752
          %v1121 = vunpack.c.l.b16 %v753
          %v1122 = vunpack.c.h.b16 %v753
          %v1123 = vunpack.c.l.b16 %v754
          %v1124 = vunpack.c.h.b16 %v754
          %v1125 = vunpack.c.l.b16 %v755
          %v1126 = vunpack.c.h.b16 %v755
          %v1127 = vunpack.c.l.b16 %v756
          %v1128 = vunpack.c.h.b16 %v756
          %v1129 = vunpack.c.l.b16 %v757
          %v1130 = vunpack.c.l.b16 %v758
          %v1131 = vunpack.c.h.b16 %v758
          %v1132 = vunpack.c.l.b16 %v759
          %v1133 = vunpack.c.h.b16 %v759
          %v1134 = vunpack.c.l.b16 %v760
          %v1135 = vunpack.c.h.b16 %v760
          %v1136 = vunpack.c.l.b16 %v761
          %v1137 = vunpack.c.h.b16 %v761
          %v1138 = vunpack.c.l.b16 %v762
          %v1139 = vunpack.c.l.b16 %v763
          %v1140 = vunpack.c.h.b16 %v763
          %v1141 = vunpack.c.l.b16 %v764
          %v1142 = vunpack.c.h.b16 %v764
          %v1143 = vunpack.c.l.b16 %v765
          %v1144 = vunpack.c.h.b16 %v765
          %v1145 = vunpack.c.l.b16 %v766
          %v1146 = vunpack.c.h.b16 %v766
          %v1147 = vunpack.c.l.b16 %v767
          %v1148 = vunpack.c.l.b16 %v768
          %v1149 = vunpack.c.h.b16 %v768
          %v1150 = vunpack.c.l.b16 %v769
          %v1151 = vunpack.c.h.b16 %v769
          %v1152 = vunpack.c.l.b16 %v770
          %v1153 = vunpack.c.h.b16 %v770
          %v1154 = vunpack.c.l.b16 %v771
          %v1155 = vunpack.c.h.b16 %v771
          %v1156 = vunpack.c.l.b16 %v772
          %v1157 = vunpack.c.l.b16 %v773
          %v1158 = vunpack.c.h.b16 %v773
          %v1159 = vunpack.c.l.b16 %v774
          %v1160 = vunpack.c.h.b16 %v774
          %v1161 = vunpack.c.l.b16 %v775
          %v1162 = vunpack.c.h.b16 %v775
          %v1163 = vunpack.c.l.b16 %v776
          %v1164 = vunpack.c.h.b16 %v776
          %v1165 = vunpack.c.l.b16 %v777
          %v1166 = vunpack.c.l.b16 %v778
          %v1167 = vunpack.c.h.b16 %v778
          %v1168 = vunpack.c.l.b16 %v779
          %v1169 = vunpack.c.h.b16 %v779
          %v1170 = vunpack.c.l.b16 %v780
          %v1171 = vunpack.c.h.b16 %v780
          %v1172 = vunpack.c.l.b16 %v781
          %v1173 = vunpack.c.h.b16 %v781
          %v1174 = vunpack.c.l.b16 %v782
          %v1175 = vunpack.c.l.b16 %v783
          %v1176 = vunpack.c.h.b16 %v783
          %v1177 = vunpack.c.l.b16 %v784
          %v1178 = vunpack.c.h.b16 %v784
          %v1179 = vunpack.c.l.b16 %v785
          %v1180 = vunpack.c.h.b16 %v785
          %v1181 = vunpack.c.l.b16 %v786
          %v1182 = vunpack.c.h.b16 %v786
          %v1183 = vunpack.c.l.b16 %v787
          %v1184 = vunpack.c.l.b16 %v788
          %v1185 = vunpack.c.h.b16 %v788
          %v1186 = vunpack.c.l.b16 %v789
          %v1187 = vunpack.c.h.b16 %v789
          %v1188 = vunpack.c.l.b16 %v790
          %v1189 = vunpack.c.h.b16 %v790
          %v1190 = vunpack.c.l.b16 %v791
          %v1191 = vunpack.c.h.b16 %v791
          %v1192 = vunpack.c.l.b16 %v792
          %v1193 = vunpack.c.l.b16 %v793
          %v1194 = vunpack.c.h.b16 %v793
          %v1195 = vunpack.c.l.b16 %v794
          %v1196 = vunpack.c.h.b16 %v794
          %v1197 = vunpack.c.l.b16 %v795
          %v1198 = vunpack.c.h.b16 %v795
          %v1199 = vunpack.c.l.b16 %v796
          %v1200 = vunpack.c.h.b16 %v796
          %v1201 = vunpack.c.l.b16 %v797
          %v1202 = vunpack.c.l.b16 %v798
          %v1203 = vunpack.c.h.b16 %v798
          %v1204 = vunpack.c.l.b16 %v799
          %v1205 = vunpack.c.h.b16 %v799
          %v1206 = vunpack.c.l.b16 %v800
          %v1207 = vunpack.c.h.b16 %v800
          %v1208 = vunpack.c.l.b16 %v801
          %v1209 = vunpack.c.h.b16 %v801
          %v1210 = vunpack.c.l.b16 %v802
          %v1211 = vunpack.c.l.b16 %v803
          %v1212 = vunpack.c.h.b16 %v803
          %v1213 = vunpack.c.l.b16 %v804
          %v1214 = vunpack.c.h.b16 %v804
          %v1215 = vunpack.c.l.b16 %v805
          %v1216 = vunpack.c.h.b16 %v805
          %v1217 = vunpack.c.l.b16 %v806
          %v1218 = vunpack.c.h.b16 %v806
          %v1219 = vunpack.c.l.b16 %v807
          %v1220 = vunpack.c.l.b16 %v808
          %v1221 = vunpack.c.h.b16 %v808
          %v1222 = vunpack.c.l.b16 %v809
          %v1223 = vunpack.c.h.b16 %v809
          %v1224 = vunpack.c.l.b16 %v810
          %v1225 = vunpack.c.h.b16 %v810
          %v1226 = vunpack.c.l.b16 %v811
          %v1227 = vunpack.c.h.b16 %v811
          %v1228 = vunpack.c.l.b16 %v812
          %v1229 = vunpack.c.l.b16 %v813
          %v1230 = vunpack.c.h.b16 %v813
          %v1231 = vunpack.c.l.b16 %v814
          %v1232 = vunpack.c.h.b16 %v814
          %v1233 = vunpack.c.l.b16 %v815
          %v1234 = vunpack.c.h.b16 %v815
          %v1235 = vunpack.c.l.b16 %v816
          %v1236 = vunpack.c.h.b16 %v816
          %v1237 = vunpack.c.l.b16 %v817
          %v1238 = vunpack.c.l.b16 %v818
          %v1239 = vunpack.c.h.b16 %v818
          %v1240 = vunpack.c.l.b16 %v819
          %v1241 = vunpack.c.h.b16 %v819
          %v1242 = vunpack.c.l.b16 %v820
          %v1243 = vunpack.c.h.b16 %v820
          %v1244 = vunpack.c.l.b16 %v821
          %v1245 = vunpack.c.h.b16 %v821
          %v1246 = vunpack.c.l.b16 %v822
          %v1247 = vunpack.c.l.b16 %v823
          %v1248 = vunpack.c.h.b16 %v823
          %v1249 = vunpack.c.l.b16 %v824
          %v1250 = vunpack.c.h.b16 %v824
          %v1251 = vunpack.c.l.b16 %v825
          %v1252 = vunpack.c.h.b16 %v825
          %v1253 = vunpack.c.l.b16 %v826
          %v1254 = vunpack.c.h.b16 %v826
          %v1255 = vunpack.c.l.b16 %v827
          %v1256 = vunpack.c.l.b16 %v828
          %v1257 = vunpack.c.h.b16 %v828
          %v1258 = vunpack.c.l.b16 %v829
          %v1259 = vunpack.c.h.b16 %v829
          %v1260 = vunpack.c.l.b16 %v830
          %v1261 = vunpack.c.h.b16 %v830
          %v1262 = vunpack.c.l.b16 %v831
          %v1263 = vunpack.c.h.b16 %v831
          %v1264 = vunpack.c.l.b16 %v832
          %v1265 = vunpack.c.l.b16 %v833
          %v1266 = vunpack.c.h.b16 %v833
          %v1267 = vunpack.c.l.b16 %v834
          %v1268 = vunpack.c.h.b16 %v834
          %v1269 = vunpack.c.l.b16 %v835
          %v1270 = vunpack.c.h.b16 %v835
          %v1271 = vunpack.c.l.b16 %v836
          %v1272 = vunpack.c.h.b16 %v836
          %v1273 = vunpack.c.l.b16 %v837
          %v1274 = vunpack.c.l.b16 %v838
          %v1275 = vunpack.c.h.b16 %v838
          %v1276 = vunpack.c.l.b16 %v839
          %v1277 = vunpack.c.h.b16 %v839
          %v1278 = vunpack.c.l.b16 %v840
          %v1279 = vunpack.c.h.b16 %v840
          %v1280 = vunpack.c.l.b16 %v841
          %v1281 = vunpack.c.h.b16 %v841
          %v1282 = vunpack.c.l.b16 %v842
          %v1283 = vunpack.c.l.b16 %v843
          %v1284 = vunpack.c.h.b16 %v843
          %v1285 = vunpack.c.l.b16 %v844
          %v1286 = vunpack.c.h.b16 %v844
          %v1287 = vunpack.c.l.b16 %v845
          %v1288 = vunpack.c.h.b16 %v845
          %v1289 = vunpack.c.l.b16 %v846
          %v1290 = vunpack.c.h.b16 %v846
          %v1291 = vunpack.c.l.b16 %v847
          %v1292 = vunpack.c.l.b16 %v848
          %v1293 = vunpack.c.h.b16 %v848
          %v1294 = vunpack.c.l.b16 %v849
          %v1295 = vunpack.c.h.b16 %v849
          %v1296 = vunpack.c.l.b16 %v850
          %v1297 = vunpack.c.h.b16 %v850
          %v1298 = vunpack.c.l.b16 %v851
          %v1299 = vunpack.c.h.b16 %v851
          %v1300 = vunpack.c.l.b16 %v852
          %v1301 = vpack.c.b16 %v1022, %v1013
          %v1302 = vpack.c.b16 %v1023, %v1014
          %v1303 = vpack.c.b16 %v1024, %v1015
          %v1304 = vpack.c.b16 %v1025, %v1016
          %v1305 = vpack.c.b16 %v1026, %v1017
          %v1306 = vpack.c.b16 %v1027, %v1018
          %v1307 = vpack.c.b16 %v1028, %v1019
          %v1308 = vpack.c.b16 %v1029, %v1020
          %v1309 = vpack.c.b16 %v1030, %v1021
          %v1310 = vpack.c.b16 %v1040, %v1031
          %v1311 = vpack.c.b16 %v1041, %v1032
          %v1312 = vpack.c.b16 %v1042, %v1033
          %v1313 = vpack.c.b16 %v1043, %v1034
          %v1314 = vpack.c.b16 %v1044, %v1035
          %v1315 = vpack.c.b16 %v1045, %v1036
          %v1316 = vpack.c.b16 %v1046, %v1037
          %v1317 = vpack.c.b16 %v1047, %v1038
          %v1318 = vpack.c.b16 %v1048, %v1039
          %v1319 = vpack.c.b16 %v1058, %v1049
          %v1320 = vpack.c.b16 %v1059, %v1050
          %v1321 = vpack.c.b16 %v1060, %v1051
          %v1322 = vpack.c.b16 %v1061, %v1052
          %v1323 = vpack.c.b16 %v1062, %v1053
          %v1324 = vpack.c.b16 %v1063, %v1054
          %v1325 = vpack.c.b16 %v1064, %v1055
          %v1326 = vpack.c.b16 %v1065, %v1056
          %v1327 = vpack.c.b16 %v1066, %v1057
          %v1328 = vpack.c.b16 %v1076, %v1067
          %v1329 = vpack.c.b16 %v1077, %v1068
          %v1330 = vpack.c.b16 %v1078, %v1069
          %v1331 = vpack.c.b16 %v1079, %v1070
          %v1332 = vpack.c.b16 %v1080, %v1071
          %v1333 = vpack.c.b16 %v1081, %v1072
          %v1334 = vpack.c.b16 %v1082, %v1073
          %v1335 = vpack.c.b16 %v1083, %v1074
          %v1336 = vpack.c.b16 %v1084, %v1075
          %v1337 = vpack.c.b16 %v1094, %v1085
          %v1338 = vpack.c.b16 %v1095, %v1086
          %v1339 = vpack.c.b16 %v1096, %v1087
          %v1340 = vpack.c.b16 %v1097, %v1088
          %v1341 = vpack.c.b16 %v1098, %v1089
          %v1342 = vpack.c.b16 %v1099, %v1090
          %v1343 = vpack.c.b16 %v1100, %v1091
          %v1344 = vpack.c.b16 %v1101, %v1092
          %v1345 = vpack.c.b16 %v1102, %v1093
          %v1346 = vpack.c.b16 %v1112, %v1103
          %v1347 = vpack.c.b16 %v1113, %v1104
          %v1348 = vpack.c.b16 %v1114, %v1105
          %v1349 = vpack.c.b16 %v1115, %v1106
          %v1350 = vpack.c.b16 %v1116, %v1107
          %v1351 = vpack.c.b16 %v1117, %v1108
          %v1352 = vpack.c.b16 %v1118, %v1109
          %v1353 = vpack.c.b16 %v1119, %v1110
          %v1354 = vpack.c.b16 %v1120, %v1111
          %v1355 = vpack.c.b16 %v1130, %v1121
          %v1356 = vpack.c.b16 %v1131, %v1122
          %v1357 = vpack.c.b16 %v1132, %v1123
          %v1358 = vpack.c.b16 %v1133, %v1124
          %v1359 = vpack.c.b16 %v1134, %v1125
          %v1360 = vpack.c.b16 %v1135, %v1126
          %v1361 = vpack.c.b16 %v1136, %v1127
          %v1362 = vpack.c.b16 %v1137, %v1128
          %v1363 = vpack.c.b16 %v1138, %v1129
          %v1364 = vpack.c.b16 %v1148, %v1139
          %v1365 = vpack.c.b16 %v1149, %v1140
          %v1366 = vpack.c.b16 %v1150, %v1141
          %v1367 = vpack.c.b16 %v1151, %v1142
          %v1368 = vpack.c.b16 %v1152, %v1143
          %v1369 = vpack.c.b16 %v1153, %v1144
          %v1370 = vpack.c.b16 %v1154, %v1145
          %v1371 = vpack.c.b16 %v1155, %v1146
          %v1372 = vpack.c.b16 %v1156, %v1147
          %v1373 = vpack.c.b16 %v1166, %v1157
          %v1374 = vpack.c.b16 %v1167, %v1158
          %v1375 = vpack.c.b16 %v1168, %v1159
          %v1376 = vpack.c.b16 %v1169, %v1160
          %v1377 = vpack.c.b16 %v1170, %v1161
          %v1378 = vpack.c.b16 %v1171, %v1162
          %v1379 = vpack.c.b16 %v1172, %v1163
          %v1380 = vpack.c.b16 %v1173, %v1164
          %v1381 = vpack.c.b16 %v1174, %v1165
          %v1382 = vpack.c.b16 %v1184, %v1175
          %v1383 = vpack.c.b16 %v1185, %v1176
          %v1384 = vpack.c.b16 %v1186, %v1177
          %v1385 = vpack.c.b16 %v1187, %v1178
          %v1386 = vpack.c.b16 %v1188, %v1179
          %v1387 = vpack.c.b16 %v1189, %v1180
          %v1388 = vpack.c.b16 %v1190, %v1181
          %v1389 = vpack.c.b16 %v1191, %v1182
          %v1390 = vpack.c.b16 %v1192, %v1183
          %v1391 = vpack.c.b16 %v1202, %v1193
          %v1392 = vpack.c.b16 %v1203, %v1194
          %v1393 = vpack.c.b16 %v1204, %v1195
          %v1394 = vpack.c.b16 %v1205, %v1196
          %v1395 = vpack.c.b16 %v1206, %v1197
          %v1396 = vpack.c.b16 %v1207, %v1198
          %v1397 = vpack.c.b16 %v1208, %v1199
          %v1398 = vpack.c.b16 %v1209, %v1200
          %v1399 = vpack.c.b16 %v1210, %v1201
          %v1400 = vpack.c.b16 %v1220, %v1211
          %v1401 = vpack.c.b16 %v1221, %v1212
          %v1402 = vpack.c.b16 %v1222, %v1213
          %v1403 = vpack.c.b16 %v1223, %v1214
          %v1404 = vpack.c.b16 %v1224, %v1215
          %v1405 = vpack.c.b16 %v1225, %v1216
          %v1406 = vpack.c.b16 %v1226, %v1217
          %v1407 = vpack.c.b16 %v1227, %v1218
          %v1408 = vpack.c.b16 %v1228, %v1219
          %v1409 = vpack.c.b16 %v1238, %v1229
          %v1410 = vpack.c.b16 %v1239, %v1230
          %v1411 = vpack.c.b16 %v1240, %v1231
          %v1412 = vpack.c.b16 %v1241, %v1232
          %v1413 = vpack.c.b16 %v1242, %v1233
          %v1414 = vpack.c.b16 %v1243, %v1234
          %v1415 = vpack.c.b16 %v1244, %v1235
          %v1416 = vpack.c.b16 %v1245, %v1236
          %v1417 = vpack.c.b16 %v1246, %v1237
          %v1418 = vpack.c.b16 %v1256, %v1247
          %v1419 = vpack.c.b16 %v1257, %v1248
          %v1420 = vpack.c.b16 %v1258, %v1249
          %v1421 = vpack.c.b16 %v1259, %v1250
          %v1422 = vpack.c.b16 %v1260, %v1251
          %v1423 = vpack.c.b16 %v1261, %v1252
          %v1424 = vpack.c.b16 %v1262, %v1253
          %v1425 = vpack.c.b16 %v1263, %v1254
          %v1426 = vpack.c.b16 %v1264, %v1255
          %v1427 = vpack.c.b16 %v1274, %v1265
          %v1428 = vpack.c.b16 %v1275, %v1266
          %v1429 = vpack.c.b16 %v1276, %v1267
          %v1430 = vpack.c.b16 %v1277, %v1268
          %v1431 = vpack.c.b16 %v1278, %v1269
          %v1432 = vpack.c.b16 %v1279, %v1270
          %v1433 = vpack.c.b16 %v1280, %v1271
          %v1434 = vpack.c.b16 %v1281, %v1272
          %v1435 = vpack.c.b16 %v1282, %v1273
          %v1436 = vpack.c.b16 %v1292, %v1283
          %v1437 = vpack.c.b16 %v1293, %v1284
          %v1438 = vpack.c.b16 %v1294, %v1285
          %v1439 = vpack.c.b16 %v1295, %v1286
          %v1440 = vpack.c.b16 %v1296, %v1287
          %v1441 = vpack.c.b16 %v1297, %v1288
          %v1442 = vpack.c.b16 %v1298, %v1289
          %v1443 = vpack.c.b16 %v1299, %v1290
          %v1444 = vpack.c.b16 %v1300, %v1291
          %1589 = vmatprep.subr.bf16.mxu0 %v1302
          %1590 = vmatpush1.bf16.msra.mxu0 %v1301
          %1591 = vmatprep.subr.bf16.mxu0 %v1311
          %1592 = vmatpush1.bf16.msra.mxu0 %v1310
          %1593 = vmatprep.subr.bf16.mxu0 %v1320
          %1594 = vmatpush1.bf16.msra.mxu0 %v1319
          %1595 = vmatprep.subr.bf16.mxu0 %v1329
          %1596 = vmatpush1.bf16.msra.mxu0 %v1328
          %1597 = vmatprep.subr.bf16.mxu0 %v1338
          %1598 = vmatpush1.bf16.msra.mxu0 %v1337
          %1599 = vmatprep.subr.bf16.mxu0 %v1347
          %1600 = vmatpush1.bf16.msra.mxu0 %v1346
          %1601 = vmatprep.subr.bf16.mxu0 %v1356
          %1602 = vmatpush1.bf16.msra.mxu0 %v1355
          %1603 = vmatprep.subr.bf16.mxu0 %v1365
          %1604 = vmatpush1.bf16.msra.mxu0 %v1364
          %1605 = vmatprep.subr.bf16.mxu0 %v1374
          %1606 = vmatpush1.bf16.msra.mxu0 %v1373
          %1607 = vmatprep.subr.bf16.mxu0 %v1383
          %1608 = vmatpush1.bf16.msra.mxu0 %v1382
          %1609 = vmatprep.subr.bf16.mxu0 %v1392
          %1610 = vmatpush1.bf16.msra.mxu0 %v1391
          %1611 = vmatprep.subr.bf16.mxu0 %v1401
          %1612 = vmatpush1.bf16.msra.mxu0 %v1400
          %1613 = vmatprep.subr.bf16.mxu0 %v1410
          %1614 = vmatpush1.bf16.msra.mxu0 %v1409
          %1615 = vmatprep.subr.bf16.mxu0 %v1419
          %1616 = vmatpush1.bf16.msra.mxu0 %v1418
          %1617 = vmatprep.subr.bf16.mxu0 %v1428
          %1618 = vmatpush1.bf16.msra.mxu0 %v1427
          %1619 = vmatprep.subr.bf16.mxu0 %v1437
          %1620 = vmatpush1.bf16.msra.mxu0 %v1436
          %1621 = vmatprep.mubr.bf16.mxu0 %v692
          %1622 = vmatmul.mubr.bf16.gmra.mrb[0].mxu0 %v691
          %v1623 = vpop.f32.mrb[0].mxu0
          %v1624 = vadd.f32 0.0, %v1623
          %v1625 = vpop.f32.mrb[0].mxu0
          %v1626 = vadd.f32 0.0, %v1625
          %v1627 = vpop.f32.mrb[0].mxu0
          %v1628 = vadd.f32 0.0, %v1627
          %v1629 = vpop.f32.mrb[0].mxu0
          %v1630 = vadd.f32 0.0, %v1629
          %1631 = vdwg.mxu0
          %1632 = vmatprep.subr.bf16.mxu0 %v1304
          %1633 = vmatpush1.bf16.msra.mxu0 %v1303
          %1634 = vmatprep.subr.bf16.mxu0 %v1313
          %1635 = vmatpush1.bf16.msra.mxu0 %v1312
          %1636 = vmatprep.subr.bf16.mxu0 %v1322
          %1637 = vmatpush1.bf16.msra.mxu0 %v1321
          %1638 = vmatprep.subr.bf16.mxu0 %v1331
          %1639 = vmatpush1.bf16.msra.mxu0 %v1330
          %1640 = vmatprep.subr.bf16.mxu0 %v1340
          %1641 = vmatpush1.bf16.msra.mxu0 %v1339
          %1642 = vmatprep.subr.bf16.mxu0 %v1349
          %1643 = vmatpush1.bf16.msra.mxu0 %v1348
          %1644 = vmatprep.subr.bf16.mxu0 %v1358
          %1645 = vmatpush1.bf16.msra.mxu0 %v1357
          %1646 = vmatprep.subr.bf16.mxu0 %v1367
          %1647 = vmatpush1.bf16.msra.mxu0 %v1366
          %1648 = vmatprep.subr.bf16.mxu0 %v1376
          %1649 = vmatpush1.bf16.msra.mxu0 %v1375
          %1650 = vmatprep.subr.bf16.mxu0 %v1385
          %1651 = vmatpush1.bf16.msra.mxu0 %v1384
          %1652 = vmatprep.subr.bf16.mxu0 %v1394
          %1653 = vmatpush1.bf16.msra.mxu0 %v1393
          %1654 = vmatprep.subr.bf16.mxu0 %v1403
          %1655 = vmatpush1.bf16.msra.mxu0 %v1402
          %1656 = vmatprep.subr.bf16.mxu0 %v1412
          %1657 = vmatpush1.bf16.msra.mxu0 %v1411
          %1658 = vmatprep.subr.bf16.mxu0 %v1421
          %1659 = vmatpush1.bf16.msra.mxu0 %v1420
          %1660 = vmatprep.subr.bf16.mxu0 %v1430
          %1661 = vmatpush1.bf16.msra.mxu0 %v1429
          %1662 = vmatprep.subr.bf16.mxu0 %v1439
          %1663 = vmatpush1.bf16.msra.mxu0 %v1438
          %1664 = vmatprep.mubr.bf16.mxu0 %v692
          %1665 = vmatmul.mubr.bf16.gmra.mrb[0].mxu0 %v691
          %v1666 = vpop.f32.mrb[0].mxu0
          %v1667 = vadd.f32 0.0, %v1666
          %v1668 = vpop.f32.mrb[0].mxu0
          %v1669 = vadd.f32 0.0, %v1668
          %v1670 = vpop.f32.mrb[0].mxu0
          %v1671 = vadd.f32 0.0, %v1670
          %v1672 = vpop.f32.mrb[0].mxu0
          %v1673 = vadd.f32 0.0, %v1672
          %1674 = vdwg.mxu0
          %1675 = vmatprep.subr.bf16.mxu0 %v1306
          %1676 = vmatpush1.bf16.msra.mxu0 %v1305
          %1677 = vmatprep.subr.bf16.mxu0 %v1315
          %1678 = vmatpush1.bf16.msra.mxu0 %v1314
          %1679 = vmatprep.subr.bf16.mxu0 %v1324
          %1680 = vmatpush1.bf16.msra.mxu0 %v1323
          %1681 = vmatprep.subr.bf16.mxu0 %v1333
          %1682 = vmatpush1.bf16.msra.mxu0 %v1332
          %1683 = vmatprep.subr.bf16.mxu0 %v1342
          %1684 = vmatpush1.bf16.msra.mxu0 %v1341
          %1685 = vmatprep.subr.bf16.mxu0 %v1351
          %1686 = vmatpush1.bf16.msra.mxu0 %v1350
          %1687 = vmatprep.subr.bf16.mxu0 %v1360
          %1688 = vmatpush1.bf16.msra.mxu0 %v1359
          %1689 = vmatprep.subr.bf16.mxu0 %v1369
          %1690 = vmatpush1.bf16.msra.mxu0 %v1368
          %1691 = vmatprep.subr.bf16.mxu0 %v1378
          %1692 = vmatpush1.bf16.msra.mxu0 %v1377
          %1693 = vmatprep.subr.bf16.mxu0 %v1387
          %1694 = vmatpush1.bf16.msra.mxu0 %v1386
          %1695 = vmatprep.subr.bf16.mxu0 %v1396
          %1696 = vmatpush1.bf16.msra.mxu0 %v1395
          %1697 = vmatprep.subr.bf16.mxu0 %v1405
          %1698 = vmatpush1.bf16.msra.mxu0 %v1404
          %1699 = vmatprep.subr.bf16.mxu0 %v1414
          %1700 = vmatpush1.bf16.msra.mxu0 %v1413
          %1701 = vmatprep.subr.bf16.mxu0 %v1423
          %1702 = vmatpush1.bf16.msra.mxu0 %v1422
          %1703 = vmatprep.subr.bf16.mxu0 %v1432
          %1704 = vmatpush1.bf16.msra.mxu0 %v1431
          %1705 = vmatprep.subr.bf16.mxu0 %v1441
          %1706 = vmatpush1.bf16.msra.mxu0 %v1440
          %1707 = vmatprep.mubr.bf16.mxu0 %v692
          %1708 = vmatmul.mubr.bf16.gmra.mrb[0].mxu0 %v691
          %v1709 = vpop.f32.mrb[0].mxu0
          %v1710 = vadd.f32 0.0, %v1709
          %v1711 = vpop.f32.mrb[0].mxu0
          %v1712 = vadd.f32 0.0, %v1711
          %v1713 = vpop.f32.mrb[0].mxu0
          %v1714 = vadd.f32 0.0, %v1713
          %v1715 = vpop.f32.mrb[0].mxu0
          %v1716 = vadd.f32 0.0, %v1715
          %1717 = vdwg.mxu0
          %1718 = vmatprep.subr.bf16.mxu0 %v1308
          %1719 = vmatpush1.bf16.msra.mxu0 %v1307
          %1720 = vmatprep.subr.bf16.mxu0 %v1317
          %1721 = vmatpush1.bf16.msra.mxu0 %v1316
          %1722 = vmatprep.subr.bf16.mxu0 %v1326
          %1723 = vmatpush1.bf16.msra.mxu0 %v1325
          %1724 = vmatprep.subr.bf16.mxu0 %v1335
          %1725 = vmatpush1.bf16.msra.mxu0 %v1334
          %1726 = vmatprep.subr.bf16.mxu0 %v1344
          %1727 = vmatpush1.bf16.msra.mxu0 %v1343
          %1728 = vmatprep.subr.bf16.mxu0 %v1353
          %1729 = vmatpush1.bf16.msra.mxu0 %v1352
          %1730 = vmatprep.subr.bf16.mxu0 %v1362
          %1731 = vmatpush1.bf16.msra.mxu0 %v1361
          %1732 = vmatprep.subr.bf16.mxu0 %v1371
          %1733 = vmatpush1.bf16.msra.mxu0 %v1370
          %1734 = vmatprep.subr.bf16.mxu0 %v1380
          %1735 = vmatpush1.bf16.msra.mxu0 %v1379
          %1736 = vmatprep.subr.bf16.mxu0 %v1389
          %1737 = vmatpush1.bf16.msra.mxu0 %v1388
          %1738 = vmatprep.subr.bf16.mxu0 %v1398
          %1739 = vmatpush1.bf16.msra.mxu0 %v1397
          %1740 = vmatprep.subr.bf16.mxu0 %v1407
          %1741 = vmatpush1.bf16.msra.mxu0 %v1406
          %1742 = vmatprep.subr.bf16.mxu0 %v1416
          %1743 = vmatpush1.bf16.msra.mxu0 %v1415
          %1744 = vmatprep.subr.bf16.mxu0 %v1425
          %1745 = vmatpush1.bf16.msra.mxu0 %v1424
          %1746 = vmatprep.subr.bf16.mxu0 %v1434
          %1747 = vmatpush1.bf16.msra.mxu0 %v1433
          %1748 = vmatprep.subr.bf16.mxu0 %v1443
          %1749 = vmatpush1.bf16.msra.mxu0 %v1442
          %1750 = vmatprep.mubr.bf16.mxu0 %v692
          %1751 = vmatmul.mubr.bf16.gmra.mrb[0].mxu0 %v691
          %v1752 = vpop.f32.mrb[0].mxu0
          %v1753 = vadd.f32 0.0, %v1752
          %v1754 = vpop.f32.mrb[0].mxu0
          %v1755 = vadd.f32 0.0, %v1754
          %v1756 = vpop.f32.mrb[0].mxu0
          %v1757 = vadd.f32 0.0, %v1756
          %v1758 = vpop.f32.mrb[0].mxu0
          %v1759 = vadd.f32 0.0, %v1758
          %1760 = vdwg.mxu0
          %1761 = vmatprep.subr.bf16.mxu0 0
          %1762 = vmatpush1.bf16.msra.mxu0 %v1309
          %1763 = vmatprep.subr.bf16.mxu0 0
          %1764 = vmatpush1.bf16.msra.mxu0 %v1318
          %1765 = vmatprep.subr.bf16.mxu0 0
          %1766 = vmatpush1.bf16.msra.mxu0 %v1327
          %1767 = vmatprep.subr.bf16.mxu0 0
          %1768 = vmatpush1.bf16.msra.mxu0 %v1336
          %1769 = vmatprep.subr.bf16.mxu0 0
          %1770 = vmatpush1.bf16.msra.mxu0 %v1345
          %1771 = vmatprep.subr.bf16.mxu0 0
          %1772 = vmatpush1.bf16.msra.mxu0 %v1354
          %1773 = vmatprep.subr.bf16.mxu0 0
          %1774 = vmatpush1.bf16.msra.mxu0 %v1363
          %1775 = vmatprep.subr.bf16.mxu0 0
          %1776 = vmatpush1.bf16.msra.mxu0 %v1372
          %1777 = vmatprep.subr.bf16.mxu0 0
          %1778 = vmatpush1.bf16.msra.mxu0 %v1381
          %1779 = vmatprep.subr.bf16.mxu0 0
          %1780 = vmatpush1.bf16.msra.mxu0 %v1390
          %1781 = vmatprep.subr.bf16.mxu0 0
          %1782 = vmatpush1.bf16.msra.mxu0 %v1399
          %1783 = vmatprep.subr.bf16.mxu0 0
          %1784 = vmatpush1.bf16.msra.mxu0 %v1408
          %1785 = vmatprep.subr.bf16.mxu0 0
          %1786 = vmatpush1.bf16.msra.mxu0 %v1417
          %1787 = vmatprep.subr.bf16.mxu0 0
          %1788 = vmatpush1.bf16.msra.mxu0 %v1426
          %1789 = vmatprep.subr.bf16.mxu0 0
          %1790 = vmatpush1.bf16.msra.mxu0 %v1435
          %1791 = vmatprep.subr.bf16.mxu0 0
          %1792 = vmatpush1.bf16.msra.mxu0 %v1444
          %1793 = vmatprep.mubr.bf16.mxu0 %v692
          %1794 = vmatmul.mubr.bf16.gmra.mrb[0].mxu0 %v691
          %v1795 = vpop.f32.mrb[0].mxu0
          %v1796 = vadd.f32 0.0, %v1795
          %v1797 = vpop.f32.mrb[0].mxu0
          %v1798 = vpop.f32.mrb[0].mxu0
          %v1799 = vadd.f32 0.0, %v1798
          %v1800 = vpop.f32.mrb[0].mxu0
          %1801 = vdwg.mxu0
          %v1802 = vadd.f32 %v673, %v1624
          %v1803 = vadd.f32 %v674, %v1626
          %v1804 = vadd.f32 %v675, %v1667
          %v1805 = vadd.f32 %v676, %v1669
          %v1806 = vadd.f32 %v677, %v1710
          %v1807 = vadd.f32 %v678, %v1712
          %v1808 = vadd.f32 %v679, %v1753
          %v1809 = vadd.f32 %v680, %v1755
          %v1810 = vadd.f32 %v681, %v1796
          %v1811 = vadd.f32 %v682, %v1628
          %v1812 = vadd.f32 %v683, %v1630
          %v1813 = vadd.f32 %v684, %v1671
          %v1814 = vadd.f32 %v685, %v1673
          %v1815 = vadd.f32 %v686, %v1714
          %v1816 = vadd.f32 %v687, %v1716
          %v1817 = vadd.f32 %v688, %v1757
          %v1818 = vadd.f32 %v689, %v1759
          %v1819 = vadd.f32 %v690, %v1799
          %1820 = vst [vmem:[#allocation2] sm:$0xff] %v1802
          %1821 = vst [vmem:[#allocation2 + $0x8] sm:$0xff] %v1803
          %1822 = vst [vmem:[#allocation2 + $0x10] sm:$0xff] %v1804
          %1823 = vst [vmem:[#allocation2 + $0x18] sm:$0xff] %v1805
          %1824 = vst [vmem:[#allocation2 + $0x20] sm:$0xff] %v1806
          %1825 = vst [vmem:[#allocation2 + $0x28] sm:$0xff] %v1807
          %1826 = vst [vmem:[#allocation2 + $0x30] sm:$0xff] %v1808
          %1827 = vst [vmem:[#allocation2 + $0x38] sm:$0xff] %v1809
          %1828 = vst [vmem:[#allocation2 + $0x40] sm:$0xff] %v1810
          %1829 = vst [vmem:[#allocation2 + $0x48] sm:$0xff] %v1811
          %1830 = vst [vmem:[#allocation2 + $0x50] sm:$0xff] %v1812
          %1831 = vst [vmem:[#allocation2 + $0x58] sm:$0xff] %v1813
          %1832 = vst [vmem:[#allocation2 + $0x60] sm:$0xff] %v1814
          %1833 = vst [vmem:[#allocation2 + $0x68] sm:$0xff] %v1815
          %1834 = vst [vmem:[#allocation2 + $0x70] sm:$0xff] %v1816
          %1835 = vst [vmem:[#allocation2 + $0x78] sm:$0xff] %v1817
          %1836 = vst [vmem:[#allocation2 + $0x80] sm:$0xff] %v1818
          %1837 = vst [vmem:[#allocation2 + $0x88] sm:$0xff] %v1819
        $region84: #{tpu_custom_call.1} parent=67 // pred_fallthru
          _
        %p1838 = scmp.eq.s32.totalorder %s31, 1
        // Predicated region
        $region85: #{tpu_custom_call.1} parent=67 // pred_check
          %p1839 = pneg %p1838
        $region86: #{tpu_custom_call.1} parent=67 // pred_check_branch
          %1841 = sbr.rel (%p1839) target = $region88
        $region87: #{tpu_custom_call.1} parent=67 // pred_region
          %v1842 = vld [vmem:[#allocation2] sm:$0xff]
          %v1843 = vld [vmem:[#allocation2 + $0x8] sm:$0xff]
          %v1844 = vld [vmem:[#allocation2 + $0x10] sm:$0xff]
          %v1845 = vld [vmem:[#allocation2 + $0x18] sm:$0xff]
          %v1846 = vld [vmem:[#allocation2 + $0x20] sm:$0xff]
          %v1847 = vld [vmem:[#allocation2 + $0x28] sm:$0xff]
          %v1848 = vld [vmem:[#allocation2 + $0x30] sm:$0xff]
          %v1849 = vld [vmem:[#allocation2 + $0x38] sm:$0xff]
          %v1850 = vld [vmem:[#allocation2 + $0x40] sm:$0xff]
          %v1851 = vld [vmem:[#allocation2 + $0x48] sm:$0xff]
          %v1852 = vld [vmem:[#allocation2 + $0x50] sm:$0xff]
          %v1853 = vld [vmem:[#allocation2 + $0x58] sm:$0xff]
          %v1854 = vld [vmem:[#allocation2 + $0x60] sm:$0xff]
          %v1855 = vld [vmem:[#allocation2 + $0x68] sm:$0xff]
          %v1856 = vld [vmem:[#allocation2 + $0x70] sm:$0xff]
          %v1857 = vld [vmem:[#allocation2 + $0x78] sm:$0xff]
          %v1858 = vld [vmem:[#allocation2 + $0x80] sm:$0xff]
          %v1859 = vld [vmem:[#allocation2 + $0x88] sm:$0xff]
          %v1860 = vld [vmem:[%s3] sm:$0xff]
          %v1861 = vld [vmem:[%s3 + $0x8] sm:$0x1]
          %v1864 = vlaneseq
          %v1865 = vshrl.u32 %v1864, 7
          %v1866 = vsub.s32 0, %v1865
          %v1867 = vrot.slane %v1860, %v1866
          %v1868 = vlaneseq
          %v1869 = vshrl.u32 %v1868, 7
          %v1870 = vsub.s32 1, %v1869
          %v1871 = vrot.slane %v1860, %v1870
          %v1872 = vlaneseq
          %v1873 = vshrl.u32 %v1872, 7
          %v1874 = vsub.s32 2, %v1873
          %v1875 = vrot.slane %v1860, %v1874
          %v1876 = vlaneseq
          %v1877 = vshrl.u32 %v1876, 7
          %v1878 = vsub.s32 3, %v1877
          %v1879 = vrot.slane %v1860, %v1878
          %v1880 = vlaneseq
          %v1881 = vshrl.u32 %v1880, 7
          %v1882 = vsub.s32 4, %v1881
          %v1883 = vrot.slane %v1860, %v1882
          %v1884 = vlaneseq
          %v1885 = vshrl.u32 %v1884, 7
          %v1886 = vsub.s32 5, %v1885
          %v1887 = vrot.slane %v1860, %v1886
          %v1888 = vlaneseq
          %v1889 = vshrl.u32 %v1888, 7
          %v1890 = vsub.s32 6, %v1889
          %v1891 = vrot.slane %v1860, %v1890
          %v1892 = vlaneseq
          %v1893 = vshrl.u32 %v1892, 7
          %v1894 = vsub.s32 7, %v1893
          %v1895 = vrot.slane %v1860, %v1894
          %v1896 = vlaneseq
          %v1897 = vshrl.u32 %v1896, 7
          %v1898 = vsub.s32 0, %v1897
          %v1899 = vrot.slane %v1861, %v1898
          %v1909 = vadd.f32 %v1842, %v1867
          %v1910 = vadd.f32 %v1843, %v1871
          %v1911 = vadd.f32 %v1844, %v1875
          %v1912 = vadd.f32 %v1845, %v1879
          %v1913 = vadd.f32 %v1846, %v1883
          %v1914 = vadd.f32 %v1847, %v1887
          %v1915 = vadd.f32 %v1848, %v1891
          %v1916 = vadd.f32 %v1849, %v1895
          %v1917 = vadd.f32 %v1850, %v1899
          %v1918 = vadd.f32 %v1851, %v1867
          %v1919 = vadd.f32 %v1852, %v1871
          %v1920 = vadd.f32 %v1853, %v1875
          %v1921 = vadd.f32 %v1854, %v1879
          %v1922 = vadd.f32 %v1855, %v1883
          %v1923 = vadd.f32 %v1856, %v1887
          %v1924 = vadd.f32 %v1857, %v1891
          %v1925 = vadd.f32 %v1858, %v1895
          %v1926 = vadd.f32 %v1859, %v1899
          %v1927 = vmax.f32 %v1909, 0.0
          %v1928 = vmax.f32 %v1910, 0.0
          %v1929 = vmax.f32 %v1911, 0.0
          %v1930 = vmax.f32 %v1912, 0.0
          %v1931 = vmax.f32 %v1913, 0.0
          %v1932 = vmax.f32 %v1914, 0.0
          %v1933 = vmax.f32 %v1915, 0.0
          %v1934 = vmax.f32 %v1916, 0.0
          %v1935 = vmax.f32 %v1917, 0.0
          %v1936 = vmax.f32 %v1918, 0.0
          %v1937 = vmax.f32 %v1919, 0.0
          %v1938 = vmax.f32 %v1920, 0.0
          %v1939 = vmax.f32 %v1921, 0.0
          %v1940 = vmax.f32 %v1922, 0.0
          %v1941 = vmax.f32 %v1923, 0.0
          %v1942 = vmax.f32 %v1924, 0.0
          %v1943 = vmax.f32 %v1925, 0.0
          %v1944 = vmax.f32 %v1926, 0.0
          %v1945 = vpack.c.bf16 %v1936, %v1927
          %v1946 = vpack.c.bf16 %v1937, %v1928
          %v1947 = vpack.c.bf16 %v1938, %v1929
          %v1948 = vpack.c.bf16 %v1939, %v1930
          %v1949 = vpack.c.bf16 %v1940, %v1931
          %v1950 = vpack.c.bf16 %v1941, %v1932
          %v1951 = vpack.c.bf16 %v1942, %v1933
          %v1952 = vpack.c.bf16 %v1943, %v1934
          %1953 = vst [vmem:[#allocation3] sm:$0xff] %v1945
          %1954 = vst [vmem:[#allocation3 + $0x8] sm:$0xff] %v1946
          %1955 = vst [vmem:[#allocation3 + $0x10] sm:$0xff] %v1947
          %1956 = vst [vmem:[#allocation3 + $0x18] sm:$0xff] %v1948
          %1957 = vst [vmem:[#allocation3 + $0x20] sm:$0xff] %v1949
          %1958 = vst [vmem:[#allocation3 + $0x28] sm:$0xff] %v1950
          %1959 = vst [vmem:[#allocation3 + $0x30] sm:$0xff] %v1951
          %1960 = vst [vmem:[#allocation3 + $0x38] sm:$0xff] %v1952
          %v1961 = vpack.c.bf16 %v1944, %v1935
          %v1962 = vld [vmem:[%s6] sm:$0xf]
          %v1963 = vld [vmem:[%s6 + $0x4] sm:$0xf]
          %v1964 = vld [vmem:[%s6 + $0x8] sm:$0xf]
          %v1965 = vld [vmem:[%s6 + $0xc] sm:$0xf]
          %v1966 = vld [vmem:[%s6 + $0x10] sm:$0xf]
          %v1967 = vld [vmem:[%s6 + $0x14] sm:$0xf]
          %v1968 = vld [vmem:[%s6 + $0x18] sm:$0xf]
          %v1969 = vld [vmem:[%s6 + $0x1c] sm:$0xf]
          %v1970 = vld [vmem:[%s6 + $0x20] sm:$0xf]
          %v1971 = vld [vmem:[%s6 + $0x24] sm:$0xf]
          %v1972 = vld [vmem:[%s6 + $0x28] sm:$0xf]
          %v1973 = vld [vmem:[%s6 + $0x2c] sm:$0xf]
          %v1974 = vld [vmem:[%s6 + $0x30] sm:$0xf]
          %v1975 = vld [vmem:[%s6 + $0x34] sm:$0xf]
          %v1976 = vld [vmem:[%s6 + $0x38] sm:$0xf]
          %v1977 = vld [vmem:[%s6 + $0x3c] sm:$0xf]
          %v1978 = vld [vmem:[%s7] sm:$0x1]
          %v1980 = vlaneseq
          %v1981 = vshrl.u32 %v1980, 7
          %v1982 = vsub.s32 0, %v1981
          %v1983 = vrot.slane %v1978, %v1982
          %v2001 = vunpack.c.l.b16 %v1962
          %v2002 = vunpack.c.l.b16 %v1963
          %v2003 = vunpack.c.l.b16 %v1964
          %v2004 = vunpack.c.l.b16 %v1965
          %v2005 = vunpack.c.l.b16 %v1966
          %v2006 = vunpack.c.l.b16 %v1967
          %v2007 = vunpack.c.l.b16 %v1968
          %v2008 = vunpack.c.l.b16 %v1969
          %v2009 = vunpack.c.l.b16 %v1970
          %v2010 = vunpack.c.l.b16 %v1971
          %v2011 = vunpack.c.l.b16 %v1972
          %v2012 = vunpack.c.l.b16 %v1973
          %v2013 = vunpack.c.l.b16 %v1974
          %v2014 = vunpack.c.l.b16 %v1975
          %v2015 = vunpack.c.l.b16 %v1976
          %v2016 = vunpack.c.l.b16 %v1977
          %v2017 = vpack.c.b16 %v2002, %v2001
          %v2018 = vpack.c.b16 %v2004, %v2003
          %v2019 = vpack.c.b16 %v2006, %v2005
          %v2020 = vpack.c.b16 %v2008, %v2007
          %v2021 = vpack.c.b16 %v2010, %v2009
          %v2022 = vpack.c.b16 %v2012, %v2011
          %v2023 = vpack.c.b16 %v2014, %v2013
          %v2024 = vpack.c.b16 %v2016, %v2015
          %2033 = vmatprep.subr.bf16.mxu0 0
          %2034 = vmatpush1.bf16.msra.mxu0 %v2017
          %2035 = vmatprep.subr.bf16.mxu0 0
          %2036 = vmatpush1.bf16.msra.mxu0 %v2018
          %2037 = vmatprep.subr.bf16.mxu0 0
          %2038 = vmatpush1.bf16.msra.mxu0 %v2019
          %2039 = vmatprep.subr.bf16.mxu0 0
          %2040 = vmatpush1.bf16.msra.mxu0 %v2020
          %2041 = vmatprep.subr.bf16.mxu0 0
          %2042 = vmatpush1.bf16.msra.mxu0 %v2021
          %2043 = vmatprep.subr.bf16.mxu0 0
          %2044 = vmatpush1.bf16.msra.mxu0 %v2022
          %2045 = vmatprep.subr.bf16.mxu0 0
          %2046 = vmatpush1.bf16.msra.mxu0 %v2023
          %2047 = vmatprep.subr.bf16.mxu0 0
          %2048 = vmatpush1.bf16.msra.mxu0 %v2024
          %2049 = vmatprep.subr.bf16.mxu0 0
          %2050 = vmatpush1.bf16.msra.mxu0 0
          %2051 = vmatprep.subr.bf16.mxu0 0
          %2052 = vmatpush1.bf16.msra.mxu0 0
          %2053 = vmatprep.subr.bf16.mxu0 0
          %2054 = vmatpush1.bf16.msra.mxu0 0
          %2055 = vmatprep.subr.bf16.mxu0 0
          %2056 = vmatpush1.bf16.msra.mxu0 0
          %2057 = vmatprep.subr.bf16.mxu0 0
          %2058 = vmatpush1.bf16.msra.mxu0 0
          %2059 = vmatprep.subr.bf16.mxu0 0
          %2060 = vmatpush1.bf16.msra.mxu0 0
          %2061 = vmatprep.subr.bf16.mxu0 0
          %2062 = vmatpush1.bf16.msra.mxu0 0
          %2063 = vmatprep.subr.bf16.mxu0 0
          %2064 = vmatpush1.bf16.msra.mxu0 0
          %2065 = vmatprep.mubr.bf16.mxu0 0
          %2066 = vmatmul.mubr.bf16.gmra.mrb[0].mxu0 %v1961
          %v2067 = vpop.f32.mrb[0].mxu0
          %v2068 = vadd.f32 %v1983, %v2067
          %v2069 = vpop.f32.mrb[0].mxu0
          %v2070 = vpop.f32.mrb[0].mxu0
          %v2071 = vadd.f32 %v1983, %v2070
          %v2072 = vpop.f32.mrb[0].mxu0
          %2073 = vdwg.mxu0
          %v2074 = vmax.f32 %v2068, 0.0
          %v2075 = vmax.f32 %v2071, 0.0
          %v2076 = vpack.c.bf16 %v2075, %v2074
          %v2077 = vld [vmem:[%s10] sm:$0xf]
          %v2078 = vld [vmem:[%s10 + $0x4] sm:$0xf]
          %v2079 = vld [vmem:[%s10 + $0x8] sm:$0xf]
          %v2080 = vld [vmem:[%s10 + $0xc] sm:$0xf]
          %v2081 = vld [vmem:[%s10 + $0x10] sm:$0xf]
          %v2082 = vld [vmem:[%s10 + $0x14] sm:$0xf]
          %v2083 = vld [vmem:[%s10 + $0x18] sm:$0xf]
          %v2084 = vld [vmem:[%s10 + $0x1c] sm:$0xf]
          %v2085 = vld [vmem:[%s10 + $0x20] sm:$0xf]
          %v2086 = vld [vmem:[%s10 + $0x24] sm:$0xf]
          %v2087 = vld [vmem:[%s10 + $0x28] sm:$0xf]
          %v2088 = vld [vmem:[%s10 + $0x2c] sm:$0xf]
          %v2089 = vld [vmem:[%s10 + $0x30] sm:$0xf]
          %v2090 = vld [vmem:[%s10 + $0x34] sm:$0xf]
          %v2091 = vld [vmem:[%s10 + $0x38] sm:$0xf]
          %v2092 = vld [vmem:[%s10 + $0x3c] sm:$0xf]
          %v2093 = vld [vmem:[%s11] sm:$0x1]
          %v2095 = vlaneseq
          %v2096 = vshrl.u32 %v2095, 7
          %v2097 = vsub.s32 0, %v2096
          %v2098 = vrot.slane %v2093, %v2097
          %v2116 = vunpack.c.l.b16 %v2077
          %v2117 = vunpack.c.l.b16 %v2078
          %v2118 = vunpack.c.l.b16 %v2079
          %v2119 = vunpack.c.l.b16 %v2080
          %v2120 = vunpack.c.l.b16 %v2081
          %v2121 = vunpack.c.l.b16 %v2082
          %v2122 = vunpack.c.l.b16 %v2083
          %v2123 = vunpack.c.l.b16 %v2084
          %v2124 = vunpack.c.l.b16 %v2085
          %v2125 = vunpack.c.l.b16 %v2086
          %v2126 = vunpack.c.l.b16 %v2087
          %v2127 = vunpack.c.l.b16 %v2088
          %v2128 = vunpack.c.l.b16 %v2089
          %v2129 = vunpack.c.l.b16 %v2090
          %v2130 = vunpack.c.l.b16 %v2091
          %v2131 = vunpack.c.l.b16 %v2092
          %v2132 = vpack.c.b16 %v2117, %v2116
          %v2133 = vpack.c.b16 %v2119, %v2118
          %v2134 = vpack.c.b16 %v2121, %v2120
          %v2135 = vpack.c.b16 %v2123, %v2122
          %v2136 = vpack.c.b16 %v2125, %v2124
          %v2137 = vpack.c.b16 %v2127, %v2126
          %v2138 = vpack.c.b16 %v2129, %v2128
          %v2139 = vpack.c.b16 %v2131, %v2130
          %2148 = vmatprep.subr.bf16.mxu0 0
          %2149 = vmatpush1.bf16.msra.mxu0 %v2132
          %2150 = vmatprep.subr.bf16.mxu0 0
          %2151 = vmatpush1.bf16.msra.mxu0 %v2133
          %2152 = vmatprep.subr.bf16.mxu0 0
          %2153 = vmatpush1.bf16.msra.mxu0 %v2134
          %2154 = vmatprep.subr.bf16.mxu0 0
          %2155 = vmatpush1.bf16.msra.mxu0 %v2135
          %2156 = vmatprep.subr.bf16.mxu0 0
          %2157 = vmatpush1.bf16.msra.mxu0 %v2136
          %2158 = vmatprep.subr.bf16.mxu0 0
          %2159 = vmatpush1.bf16.msra.mxu0 %v2137
          %2160 = vmatprep.subr.bf16.mxu0 0
          %2161 = vmatpush1.bf16.msra.mxu0 %v2138
          %2162 = vmatprep.subr.bf16.mxu0 0
          %2163 = vmatpush1.bf16.msra.mxu0 %v2139
          %2164 = vmatprep.subr.bf16.mxu0 0
          %2165 = vmatpush1.bf16.msra.mxu0 0
          %2166 = vmatprep.subr.bf16.mxu0 0
          %2167 = vmatpush1.bf16.msra.mxu0 0
          %2168 = vmatprep.subr.bf16.mxu0 0
          %2169 = vmatpush1.bf16.msra.mxu0 0
          %2170 = vmatprep.subr.bf16.mxu0 0
          %2171 = vmatpush1.bf16.msra.mxu0 0
          %2172 = vmatprep.subr.bf16.mxu0 0
          %2173 = vmatpush1.bf16.msra.mxu0 0
          %2174 = vmatprep.subr.bf16.mxu0 0
          %2175 = vmatpush1.bf16.msra.mxu0 0
          %2176 = vmatprep.subr.bf16.mxu0 0
          %2177 = vmatpush1.bf16.msra.mxu0 0
          %2178 = vmatprep.subr.bf16.mxu0 0
          %2179 = vmatpush1.bf16.msra.mxu0 0
          %2180 = vmatprep.mubr.bf16.mxu0 0
          %2181 = vmatmul.mubr.bf16.gmra.mrb[0].mxu0 %v2076
          %v2182 = vpop.f32.mrb[0].mxu0
          %v2183 = vadd.f32 %v2098, %v2182
          %v2184 = vpop.f32.mrb[0].mxu0
          %v2185 = vpop.f32.mrb[0].mxu0
          %v2186 = vadd.f32 %v2098, %v2185
          %v2187 = vpop.f32.mrb[0].mxu0
          %2188 = vdwg.mxu0
          %v2189 = vmul.f32 %v2183, 0.5
          %v2190 = vmul.f32 %v2186, 0.5
          %v2191 = vmul.f32 %v2189, 1.442695
          %v2192 = vpow.pop %v2191
          %v2193 = vmul.f32 %v2190, 1.442695
          %v2194 = vpow.pop %v2193
          %v2195 = vld [vmem:[%s594] sm:$0xff]
          %v2196 = vld [vmem:[%s594 + $0x8] sm:$0xff]
          %2199 = vrot.lane.b32.xlu0 %v2195, 97
          %v2200 = vpop.permute.xlu0 %2199
          %2201 = vrot.lane.b32.xlu0 %v2196, 97
          %v2202 = vpop.permute.xlu0 %2201
          %v2205 = vmul.f32 %v2192, %v2200
          %v2206 = vmul.f32 %v2194, %v2202
          %2209 = vrot.lane.b32.xlu0 %v2205, 127
          %v2210 = vpop.permute.xlu0 %2209
          %2211 = vrot.lane.b32.xlu0 %v2206, 127
          %v2212 = vpop.permute.xlu0 %2211
          %v2215 = vadd.f32 %v2183, %v2210
          %v2216 = vadd.f32 %v2186, %v2212
          %2219 = vrot.lane.b32.xlu0 %v2183, 96
          %v2220 = vpop.permute.xlu0 %2219
          %2221 = vrot.lane.b32.xlu0 %v2186, 96
          %v2222 = vpop.permute.xlu0 %2221
          %vm2225 = vcmask 802560
          %2226 = vst.msk [vmem:[#allocation10] sm:$0xff] %vm2225, %v2220
          %2227 = vst.msk [vmem:[#allocation10 + $0x8] sm:$0xff] %vm2225, %v2222
          %2230 = vrot.lane.b32.xlu0 %v2215, 98
          %v2231 = vpop.permute.xlu0 %2230
          %2232 = vrot.lane.b32.xlu0 %v2216, 98
          %v2233 = vpop.permute.xlu0 %2232
          %vm2236 = vcmask 810768
          %2237 = vst.msk [vmem:[#allocation10] sm:$0xff] %vm2236, %v2231
          %2238 = vst.msk [vmem:[#allocation10 + $0x8] sm:$0xff] %vm2236, %v2233
          %vm2239 = vcmask 1048344
          %2240 = vst.msk [vmem:[#allocation10] sm:$0xff] %vm2239, 0.0
          %2241 = vst.msk [vmem:[#allocation10 + $0x8] sm:$0xff] %vm2239, 0.0
        $region88: #{tpu_custom_call.1} parent=67 // pred_fallthru
          _
        %p2242 = scmp.ge.s32.totalorder %s31, 1
        // Predicated region
        $region89: #{tpu_custom_call.1} parent=67 // pred_check
          %p2243 = pneg %p2242
        $region90: #{tpu_custom_call.1} parent=67 // pred_check_branch
          %2245 = sbr.rel (%p2243) target = $region92
        $region91: #{tpu_custom_call.1} parent=67 // pred_region
          %v2246 = vld [vmem:[#allocation3] sm:$0xff]
          %v2247 = vld [vmem:[#allocation3 + $0x8] sm:$0xff]
          %v2248 = vld [vmem:[#allocation3 + $0x10] sm:$0xff]
          %v2249 = vld [vmem:[#allocation3 + $0x18] sm:$0xff]
          %v2250 = vld [vmem:[#allocation3 + $0x20] sm:$0xff]
          %v2251 = vld [vmem:[#allocation3 + $0x28] sm:$0xff]
          %v2252 = vld [vmem:[#allocation3 + $0x30] sm:$0xff]
          %v2253 = vld [vmem:[#allocation3 + $0x38] sm:$0xff]
          %v2254 = vld [vmem:[#allocation8] sm:$0xff]
          %v2255 = vld [vmem:[#allocation8 + $0x8] sm:$0xff]
          %v2256 = vld [vmem:[#allocation8 + $0x10] sm:$0xff]
          %v2257 = vld [vmem:[#allocation8 + $0x18] sm:$0xff]
          %v2258 = vld [vmem:[#allocation8 + $0x20] sm:$0xff]
          %v2259 = vld [vmem:[#allocation8 + $0x28] sm:$0xff]
          %v2260 = vld [vmem:[#allocation8 + $0x30] sm:$0xff]
          %v2261 = vld [vmem:[#allocation8 + $0x38] sm:$0xff]
          %v2262 = vld [vmem:[#allocation8 + $0x40] sm:$0xff]
          %v2263 = vld [vmem:[#allocation8 + $0x48] sm:$0xff]
          %v2264 = vld [vmem:[#allocation8 + $0x50] sm:$0xff]
          %v2265 = vld [vmem:[#allocation8 + $0x58] sm:$0xff]
          %v2266 = vld [vmem:[#allocation8 + $0x60] sm:$0xff]
          %v2267 = vld [vmem:[#allocation8 + $0x68] sm:$0xff]
          %v2268 = vld [vmem:[#allocation8 + $0x70] sm:$0xff]
          %v2269 = vld [vmem:[#allocation8 + $0x78] sm:$0xff]
          %v2270 = vld [vmem:[#allocation8 + $0x80] sm:$0xff]
          %v2271 = vld [vmem:[#allocation8 + $0x88] sm:$0xff]
          %v2272 = vld [vmem:[#allocation8 + $0x90] sm:$0xff]
          %v2273 = vld [vmem:[#allocation8 + $0x98] sm:$0xff]
          %v2274 = vld [vmem:[#allocation8 + $0xa0] sm:$0xff]
          %v2275 = vld [vmem:[#allocation8 + $0xa8] sm:$0xff]
          %v2276 = vld [vmem:[#allocation8 + $0xb0] sm:$0xff]
          %v2277 = vld [vmem:[#allocation8 + $0xb8] sm:$0xff]
          %v2278 = vld [vmem:[#allocation8 + $0xc0] sm:$0xff]
          %v2279 = vld [vmem:[#allocation8 + $0xc8] sm:$0xff]
          %v2280 = vld [vmem:[#allocation8 + $0xd0] sm:$0xff]
          %v2281 = vld [vmem:[#allocation8 + $0xd8] sm:$0xff]
          %v2282 = vld [vmem:[#allocation8 + $0xe0] sm:$0xff]
          %v2283 = vld [vmem:[#allocation8 + $0xe8] sm:$0xff]
          %v2284 = vld [vmem:[#allocation8 + $0xf0] sm:$0xff]
          %v2285 = vld [vmem:[#allocation8 + $0xf8] sm:$0xff]
          %v2286 = vld [vmem:[#allocation8 + $0x100] sm:$0xff]
          %v2287 = vld [vmem:[#allocation8 + $0x108] sm:$0xff]
          %v2288 = vld [vmem:[#allocation8 + $0x110] sm:$0xff]
          %v2289 = vld [vmem:[#allocation8 + $0x118] sm:$0xff]
          %v2290 = vld [vmem:[#allocation8 + $0x120] sm:$0xff]
          %v2291 = vld [vmem:[#allocation8 + $0x128] sm:$0xff]
          %v2292 = vld [vmem:[#allocation8 + $0x130] sm:$0xff]
          %v2293 = vld [vmem:[#allocation8 + $0x138] sm:$0xff]
          %v2294 = vld [vmem:[#allocation8 + $0x140] sm:$0xff]
          %v2295 = vld [vmem:[#allocation8 + $0x148] sm:$0xff]
          %v2296 = vld [vmem:[#allocation8 + $0x150] sm:$0xff]
          %v2297 = vld [vmem:[#allocation8 + $0x158] sm:$0xff]
          %v2298 = vld [vmem:[#allocation8 + $0x160] sm:$0xff]
          %v2299 = vld [vmem:[#allocation8 + $0x168] sm:$0xff]
          %v2300 = vld [vmem:[#allocation8 + $0x170] sm:$0xff]
          %v2301 = vld [vmem:[#allocation8 + $0x178] sm:$0xff]
          %v2302 = vld [vmem:[#allocation8 + $0x180] sm:$0xff]
          %v2303 = vld [vmem:[#allocation8 + $0x188] sm:$0xff]
          %v2304 = vld [vmem:[#allocation8 + $0x190] sm:$0xff]
          %v2305 = vld [vmem:[#allocation8 + $0x198] sm:$0xff]
          %v2306 = vld [vmem:[#allocation8 + $0x1a0] sm:$0xff]
          %v2307 = vld [vmem:[#allocation8 + $0x1a8] sm:$0xff]
          %v2308 = vld [vmem:[#allocation8 + $0x1b0] sm:$0xff]
          %v2309 = vld [vmem:[#allocation8 + $0x1b8] sm:$0xff]
          %v2310 = vld [vmem:[#allocation8 + $0x1c0] sm:$0xff]
          %v2311 = vld [vmem:[#allocation8 + $0x1c8] sm:$0xff]
          %v2312 = vld [vmem:[#allocation8 + $0x1d0] sm:$0xff]
          %v2313 = vld [vmem:[#allocation8 + $0x1d8] sm:$0xff]
          %v2314 = vld [vmem:[#allocation8 + $0x1e0] sm:$0xff]
          %v2315 = vld [vmem:[#allocation8 + $0x1e8] sm:$0xff]
          %v2316 = vld [vmem:[#allocation8 + $0x1f0] sm:$0xff]
          %v2317 = vld [vmem:[#allocation8 + $0x1f8] sm:$0xff]
          %v2318 = vld [vmem:[#allocation8 + $0x200] sm:$0xff]
          %v2319 = vld [vmem:[#allocation8 + $0x208] sm:$0xff]
          %v2320 = vld [vmem:[#allocation8 + $0x210] sm:$0xff]
          %v2321 = vld [vmem:[#allocation8 + $0x218] sm:$0xff]
          %v2322 = vld [vmem:[#allocation8 + $0x220] sm:$0xff]
          %v2323 = vld [vmem:[#allocation8 + $0x228] sm:$0xff]
          %v2324 = vld [vmem:[#allocation8 + $0x230] sm:$0xff]
          %v2325 = vld [vmem:[#allocation8 + $0x238] sm:$0xff]
          %v2326 = vld [vmem:[#allocation8 + $0x240] sm:$0xff]
          %v2327 = vld [vmem:[#allocation8 + $0x248] sm:$0xff]
          %v2328 = vld [vmem:[#allocation8 + $0x250] sm:$0xff]
          %v2329 = vld [vmem:[#allocation8 + $0x258] sm:$0xff]
          %v2330 = vld [vmem:[#allocation8 + $0x260] sm:$0xff]
          %v2331 = vld [vmem:[#allocation8 + $0x268] sm:$0xff]
          %v2332 = vld [vmem:[#allocation8 + $0x270] sm:$0xff]
          %v2333 = vld [vmem:[#allocation8 + $0x278] sm:$0xff]
          %v2334 = vld [vmem:[#allocation8 + $0x280] sm:$0xff]
          %v2335 = vld [vmem:[#allocation8 + $0x288] sm:$0xff]
          %v2336 = vld [vmem:[#allocation8 + $0x290] sm:$0xff]
          %v2337 = vld [vmem:[#allocation8 + $0x298] sm:$0xff]
          %v2338 = vld [vmem:[#allocation8 + $0x2a0] sm:$0xff]
          %v2339 = vld [vmem:[#allocation8 + $0x2a8] sm:$0xff]
          %v2340 = vld [vmem:[#allocation8 + $0x2b0] sm:$0xff]
          %v2341 = vld [vmem:[#allocation8 + $0x2b8] sm:$0xff]
          %v2342 = vld [vmem:[#allocation8 + $0x2c0] sm:$0xff]
          %v2343 = vld [vmem:[#allocation8 + $0x2c8] sm:$0xff]
          %v2344 = vld [vmem:[#allocation8 + $0x2d0] sm:$0xff]
          %v2345 = vld [vmem:[#allocation8 + $0x2d8] sm:$0xff]
          %v2346 = vld [vmem:[#allocation8 + $0x2e0] sm:$0xff]
          %v2347 = vld [vmem:[#allocation8 + $0x2e8] sm:$0xff]
          %v2348 = vld [vmem:[#allocation8 + $0x2f0] sm:$0xff]
          %v2349 = vld [vmem:[#allocation8 + $0x2f8] sm:$0xff]
          %v2350 = vld [vmem:[#allocation8 + $0x300] sm:$0xff]
          %v2351 = vld [vmem:[#allocation8 + $0x308] sm:$0xff]
          %v2352 = vld [vmem:[#allocation8 + $0x310] sm:$0xff]
          %v2353 = vld [vmem:[#allocation8 + $0x318] sm:$0xff]
          %v2354 = vld [vmem:[#allocation8 + $0x320] sm:$0xff]
          %v2355 = vld [vmem:[#allocation8 + $0x328] sm:$0xff]
          %v2356 = vld [vmem:[#allocation8 + $0x330] sm:$0xff]
          %v2357 = vld [vmem:[#allocation8 + $0x338] sm:$0xff]
          %v2358 = vld [vmem:[#allocation8 + $0x340] sm:$0xff]
          %v2359 = vld [vmem:[#allocation8 + $0x348] sm:$0xff]
          %v2360 = vld [vmem:[#allocation8 + $0x350] sm:$0xff]
          %v2361 = vld [vmem:[#allocation8 + $0x358] sm:$0xff]
          %v2362 = vld [vmem:[#allocation8 + $0x360] sm:$0xff]
          %v2363 = vld [vmem:[#allocation8 + $0x368] sm:$0xff]
          %v2364 = vld [vmem:[#allocation8 + $0x370] sm:$0xff]
          %v2365 = vld [vmem:[#allocation8 + $0x378] sm:$0xff]
          %v2366 = vld [vmem:[#allocation8 + $0x380] sm:$0xff]
          %v2367 = vld [vmem:[#allocation8 + $0x388] sm:$0xff]
          %v2368 = vld [vmem:[#allocation8 + $0x390] sm:$0xff]
          %v2369 = vld [vmem:[#allocation8 + $0x398] sm:$0xff]
          %v2370 = vld [vmem:[#allocation8 + $0x3a0] sm:$0xff]
          %v2371 = vld [vmem:[#allocation8 + $0x3a8] sm:$0xff]
          %v2372 = vld [vmem:[#allocation8 + $0x3b0] sm:$0xff]
          %v2373 = vld [vmem:[#allocation8 + $0x3b8] sm:$0xff]
          %v2374 = vld [vmem:[#allocation8 + $0x3c0] sm:$0xff]
          %v2375 = vld [vmem:[#allocation8 + $0x3c8] sm:$0xff]
          %v2376 = vld [vmem:[#allocation8 + $0x3d0] sm:$0xff]
          %v2377 = vld [vmem:[#allocation8 + $0x3d8] sm:$0xff]
          %v2378 = vld [vmem:[#allocation8 + $0x3e0] sm:$0xff]
          %v2379 = vld [vmem:[#allocation8 + $0x3e8] sm:$0xff]
          %v2380 = vld [vmem:[#allocation8 + $0x3f0] sm:$0xff]
          %v2381 = vld [vmem:[#allocation8 + $0x3f8] sm:$0xff]
          %v2382 = vld [vmem:[%s609] sm:$0x3]
          %v2384 = vlaneseq
          %v2385 = vshrl.u32 %v2384, 7
          %v2386 = vsub.s32 0, %v2385
          %v2387 = vrot.slane %v2382, %v2386
          %v2388 = vlaneseq
          %v2389 = vshrl.u32 %v2388, 7
          %v2390 = vsub.s32 1, %v2389
          %v2391 = vrot.slane %v2382, %v2390
          %v2522 = vunpack.c.l.b16 %v2254
          %v2523 = vunpack.c.h.b16 %v2254
          %v2524 = vunpack.c.l.b16 %v2255
          %v2525 = vunpack.c.h.b16 %v2255
          %v2526 = vunpack.c.l.b16 %v2256
          %v2527 = vunpack.c.h.b16 %v2256
          %v2528 = vunpack.c.l.b16 %v2257
          %v2529 = vunpack.c.h.b16 %v2257
          %v2530 = vunpack.c.l.b16 %v2258
          %v2531 = vunpack.c.h.b16 %v2258
          %v2532 = vunpack.c.l.b16 %v2259
          %v2533 = vunpack.c.h.b16 %v2259
          %v2534 = vunpack.c.l.b16 %v2260
          %v2535 = vunpack.c.h.b16 %v2260
          %v2536 = vunpack.c.l.b16 %v2261
          %v2537 = vunpack.c.h.b16 %v2261
          %v2538 = vunpack.c.l.b16 %v2262
          %v2539 = vunpack.c.h.b16 %v2262
          %v2540 = vunpack.c.l.b16 %v2263
          %v2541 = vunpack.c.h.b16 %v2263
          %v2542 = vunpack.c.l.b16 %v2264
          %v2543 = vunpack.c.h.b16 %v2264
          %v2544 = vunpack.c.l.b16 %v2265
          %v2545 = vunpack.c.h.b16 %v2265
          %v2546 = vunpack.c.l.b16 %v2266
          %v2547 = vunpack.c.h.b16 %v2266
          %v2548 = vunpack.c.l.b16 %v2267
          %v2549 = vunpack.c.h.b16 %v2267
          %v2550 = vunpack.c.l.b16 %v2268
          %v2551 = vunpack.c.h.b16 %v2268
          %v2552 = vunpack.c.l.b16 %v2269
          %v2553 = vunpack.c.h.b16 %v2269
          %v2554 = vunpack.c.l.b16 %v2270
          %v2555 = vunpack.c.h.b16 %v2270
          %v2556 = vunpack.c.l.b16 %v2271
          %v2557 = vunpack.c.h.b16 %v2271
          %v2558 = vunpack.c.l.b16 %v2272
          %v2559 = vunpack.c.h.b16 %v2272
          %v2560 = vunpack.c.l.b16 %v2273
          %v2561 = vunpack.c.h.b16 %v2273
          %v2562 = vunpack.c.l.b16 %v2274
          %v2563 = vunpack.c.h.b16 %v2274
          %v2564 = vunpack.c.l.b16 %v2275
          %v2565 = vunpack.c.h.b16 %v2275
          %v2566 = vunpack.c.l.b16 %v2276
          %v2567 = vunpack.c.h.b16 %v2276
          %v2568 = vunpack.c.l.b16 %v2277
          %v2569 = vunpack.c.h.b16 %v2277
          %v2570 = vunpack.c.l.b16 %v2278
          %v2571 = vunpack.c.h.b16 %v2278
          %v2572 = vunpack.c.l.b16 %v2279
          %v2573 = vunpack.c.h.b16 %v2279
          %v2574 = vunpack.c.l.b16 %v2280
          %v2575 = vunpack.c.h.b16 %v2280
          %v2576 = vunpack.c.l.b16 %v2281
          %v2577 = vunpack.c.h.b16 %v2281
          %v2578 = vunpack.c.l.b16 %v2282
          %v2579 = vunpack.c.h.b16 %v2282
          %v2580 = vunpack.c.l.b16 %v2283
          %v2581 = vunpack.c.h.b16 %v2283
          %v2582 = vunpack.c.l.b16 %v2284
          %v2583 = vunpack.c.h.b16 %v2284
          %v2584 = vunpack.c.l.b16 %v2285
          %v2585 = vunpack.c.h.b16 %v2285
          %v2586 = vunpack.c.l.b16 %v2286
          %v2587 = vunpack.c.h.b16 %v2286
          %v2588 = vunpack.c.l.b16 %v2287
          %v2589 = vunpack.c.h.b16 %v2287
          %v2590 = vunpack.c.l.b16 %v2288
          %v2591 = vunpack.c.h.b16 %v2288
          %v2592 = vunpack.c.l.b16 %v2289
          %v2593 = vunpack.c.h.b16 %v2289
          %v2594 = vunpack.c.l.b16 %v2290
          %v2595 = vunpack.c.h.b16 %v2290
          %v2596 = vunpack.c.l.b16 %v2291
          %v2597 = vunpack.c.h.b16 %v2291
          %v2598 = vunpack.c.l.b16 %v2292
          %v2599 = vunpack.c.h.b16 %v2292
          %v2600 = vunpack.c.l.b16 %v2293
          %v2601 = vunpack.c.h.b16 %v2293
          %v2602 = vunpack.c.l.b16 %v2294
          %v2603 = vunpack.c.h.b16 %v2294
          %v2604 = vunpack.c.l.b16 %v2295
          %v2605 = vunpack.c.h.b16 %v2295
          %v2606 = vunpack.c.l.b16 %v2296
          %v2607 = vunpack.c.h.b16 %v2296
          %v2608 = vunpack.c.l.b16 %v2297
          %v2609 = vunpack.c.h.b16 %v2297
          %v2610 = vunpack.c.l.b16 %v2298
          %v2611 = vunpack.c.h.b16 %v2298
          %v2612 = vunpack.c.l.b16 %v2299
          %v2613 = vunpack.c.h.b16 %v2299
          %v2614 = vunpack.c.l.b16 %v2300
          %v2615 = vunpack.c.h.b16 %v2300
          %v2616 = vunpack.c.l.b16 %v2301
          %v2617 = vunpack.c.h.b16 %v2301
          %v2618 = vunpack.c.l.b16 %v2302
          %v2619 = vunpack.c.h.b16 %v2302
          %v2620 = vunpack.c.l.b16 %v2303
          %v2621 = vunpack.c.h.b16 %v2303
          %v2622 = vunpack.c.l.b16 %v2304
          %v2623 = vunpack.c.h.b16 %v2304
          %v2624 = vunpack.c.l.b16 %v2305
          %v2625 = vunpack.c.h.b16 %v2305
          %v2626 = vunpack.c.l.b16 %v2306
          %v2627 = vunpack.c.h.b16 %v2306
          %v2628 = vunpack.c.l.b16 %v2307
          %v2629 = vunpack.c.h.b16 %v2307
          %v2630 = vunpack.c.l.b16 %v2308
          %v2631 = vunpack.c.h.b16 %v2308
          %v2632 = vunpack.c.l.b16 %v2309
          %v2633 = vunpack.c.h.b16 %v2309
          %v2634 = vunpack.c.l.b16 %v2310
          %v2635 = vunpack.c.h.b16 %v2310
          %v2636 = vunpack.c.l.b16 %v2311
          %v2637 = vunpack.c.h.b16 %v2311
          %v2638 = vunpack.c.l.b16 %v2312
          %v2639 = vunpack.c.h.b16 %v2312
          %v2640 = vunpack.c.l.b16 %v2313
          %v2641 = vunpack.c.h.b16 %v2313
          %v2642 = vunpack.c.l.b16 %v2314
          %v2643 = vunpack.c.h.b16 %v2314
          %v2644 = vunpack.c.l.b16 %v2315
          %v2645 = vunpack.c.h.b16 %v2315
          %v2646 = vunpack.c.l.b16 %v2316
          %v2647 = vunpack.c.h.b16 %v2316
          %v2648 = vunpack.c.l.b16 %v2317
          %v2649 = vunpack.c.h.b16 %v2317
          %v2650 = vunpack.c.l.b16 %v2318
          %v2651 = vunpack.c.h.b16 %v2318
          %v2652 = vunpack.c.l.b16 %v2319
          %v2653 = vunpack.c.h.b16 %v2319
          %v2654 = vunpack.c.l.b16 %v2320
          %v2655 = vunpack.c.h.b16 %v2320
          %v2656 = vunpack.c.l.b16 %v2321
          %v2657 = vunpack.c.h.b16 %v2321
          %v2658 = vunpack.c.l.b16 %v2322
          %v2659 = vunpack.c.h.b16 %v2322
          %v2660 = vunpack.c.l.b16 %v2323
          %v2661 = vunpack.c.h.b16 %v2323
          %v2662 = vunpack.c.l.b16 %v2324
          %v2663 = vunpack.c.h.b16 %v2324
          %v2664 = vunpack.c.l.b16 %v2325
          %v2665 = vunpack.c.h.b16 %v2325
          %v2666 = vunpack.c.l.b16 %v2326
          %v2667 = vunpack.c.h.b16 %v2326
          %v2668 = vunpack.c.l.b16 %v2327
          %v2669 = vunpack.c.h.b16 %v2327
          %v2670 = vunpack.c.l.b16 %v2328
          %v2671 = vunpack.c.h.b16 %v2328
          %v2672 = vunpack.c.l.b16 %v2329
          %v2673 = vunpack.c.h.b16 %v2329
          %v2674 = vunpack.c.l.b16 %v2330
          %v2675 = vunpack.c.h.b16 %v2330
          %v2676 = vunpack.c.l.b16 %v2331
          %v2677 = vunpack.c.h.b16 %v2331
          %v2678 = vunpack.c.l.b16 %v2332
          %v2679 = vunpack.c.h.b16 %v2332
          %v2680 = vunpack.c.l.b16 %v2333
          %v2681 = vunpack.c.h.b16 %v2333
          %v2682 = vunpack.c.l.b16 %v2334
          %v2683 = vunpack.c.h.b16 %v2334
          %v2684 = vunpack.c.l.b16 %v2335
          %v2685 = vunpack.c.h.b16 %v2335
          %v2686 = vunpack.c.l.b16 %v2336
          %v2687 = vunpack.c.h.b16 %v2336
          %v2688 = vunpack.c.l.b16 %v2337
          %v2689 = vunpack.c.h.b16 %v2337
          %v2690 = vunpack.c.l.b16 %v2338
          %v2691 = vunpack.c.h.b16 %v2338
          %v2692 = vunpack.c.l.b16 %v2339
          %v2693 = vunpack.c.h.b16 %v2339
          %v2694 = vunpack.c.l.b16 %v2340
          %v2695 = vunpack.c.h.b16 %v2340
          %v2696 = vunpack.c.l.b16 %v2341
          %v2697 = vunpack.c.h.b16 %v2341
          %v2698 = vunpack.c.l.b16 %v2342
          %v2699 = vunpack.c.h.b16 %v2342
          %v2700 = vunpack.c.l.b16 %v2343
          %v2701 = vunpack.c.h.b16 %v2343
          %v2702 = vunpack.c.l.b16 %v2344
          %v2703 = vunpack.c.h.b16 %v2344
          %v2704 = vunpack.c.l.b16 %v2345
          %v2705 = vunpack.c.h.b16 %v2345
          %v2706 = vunpack.c.l.b16 %v2346
          %v2707 = vunpack.c.h.b16 %v2346
          %v2708 = vunpack.c.l.b16 %v2347
          %v2709 = vunpack.c.h.b16 %v2347
          %v2710 = vunpack.c.l.b16 %v2348
          %v2711 = vunpack.c.h.b16 %v2348
          %v2712 = vunpack.c.l.b16 %v2349
          %v2713 = vunpack.c.h.b16 %v2349
          %v2714 = vunpack.c.l.b16 %v2350
          %v2715 = vunpack.c.h.b16 %v2350
          %v2716 = vunpack.c.l.b16 %v2351
          %v2717 = vunpack.c.h.b16 %v2351
          %v2718 = vunpack.c.l.b16 %v2352
          %v2719 = vunpack.c.h.b16 %v2352
          %v2720 = vunpack.c.l.b16 %v2353
          %v2721 = vunpack.c.h.b16 %v2353
          %v2722 = vunpack.c.l.b16 %v2354
          %v2723 = vunpack.c.h.b16 %v2354
          %v2724 = vunpack.c.l.b16 %v2355
          %v2725 = vunpack.c.h.b16 %v2355
          %v2726 = vunpack.c.l.b16 %v2356
          %v2727 = vunpack.c.h.b16 %v2356
          %v2728 = vunpack.c.l.b16 %v2357
          %v2729 = vunpack.c.h.b16 %v2357
          %v2730 = vunpack.c.l.b16 %v2358
          %v2731 = vunpack.c.h.b16 %v2358
          %v2732 = vunpack.c.l.b16 %v2359
          %v2733 = vunpack.c.h.b16 %v2359
          %v2734 = vunpack.c.l.b16 %v2360
          %v2735 = vunpack.c.h.b16 %v2360
          %v2736 = vunpack.c.l.b16 %v2361
          %v2737 = vunpack.c.h.b16 %v2361
          %v2738 = vunpack.c.l.b16 %v2362
          %v2739 = vunpack.c.h.b16 %v2362
          %v2740 = vunpack.c.l.b16 %v2363
          %v2741 = vunpack.c.h.b16 %v2363
          %v2742 = vunpack.c.l.b16 %v2364
          %v2743 = vunpack.c.h.b16 %v2364
          %v2744 = vunpack.c.l.b16 %v2365
          %v2745 = vunpack.c.h.b16 %v2365
          %v2746 = vunpack.c.l.b16 %v2366
          %v2747 = vunpack.c.h.b16 %v2366
          %v2748 = vunpack.c.l.b16 %v2367
          %v2749 = vunpack.c.h.b16 %v2367
          %v2750 = vunpack.c.l.b16 %v2368
          %v2751 = vunpack.c.h.b16 %v2368
          %v2752 = vunpack.c.l.b16 %v2369
          %v2753 = vunpack.c.h.b16 %v2369
          %v2754 = vunpack.c.l.b16 %v2370
          %v2755 = vunpack.c.h.b16 %v2370
          %v2756 = vunpack.c.l.b16 %v2371
          %v2757 = vunpack.c.h.b16 %v2371
          %v2758 = vunpack.c.l.b16 %v2372
          %v2759 = vunpack.c.h.b16 %v2372
          %v2760 = vunpack.c.l.b16 %v2373
          %v2761 = vunpack.c.h.b16 %v2373
          %v2762 = vunpack.c.l.b16 %v2374
          %v2763 = vunpack.c.h.b16 %v2374
          %v2764 = vunpack.c.l.b16 %v2375
          %v2765 = vunpack.c.h.b16 %v2375
          %v2766 = vunpack.c.l.b16 %v2376
          %v2767 = vunpack.c.h.b16 %v2376
          %v2768 = vunpack.c.l.b16 %v2377
          %v2769 = vunpack.c.h.b16 %v2377
          %v2770 = vunpack.c.l.b16 %v2378
          %v2771 = vunpack.c.h.b16 %v2378
          %v2772 = vunpack.c.l.b16 %v2379
          %v2773 = vunpack.c.h.b16 %v2379
          %v2774 = vunpack.c.l.b16 %v2380
          %v2775 = vunpack.c.h.b16 %v2380
          %v2776 = vunpack.c.l.b16 %v2381
          %v2777 = vunpack.c.h.b16 %v2381
          %v2778 = vpack.c.b16 %v2524, %v2522
          %v2779 = vpack.c.b16 %v2525, %v2523
          %v2780 = vpack.c.b16 %v2528, %v2526
          %v2781 = vpack.c.b16 %v2529, %v2527
          %v2782 = vpack.c.b16 %v2532, %v2530
          %v2783 = vpack.c.b16 %v2533, %v2531
          %v2784 = vpack.c.b16 %v2536, %v2534
          %v2785 = vpack.c.b16 %v2537, %v2535
          %v2786 = vpack.c.b16 %v2540, %v2538
          %v2787 = vpack.c.b16 %v2541, %v2539
          %v2788 = vpack.c.b16 %v2544, %v2542
          %v2789 = vpack.c.b16 %v2545, %v2543
          %v2790 = vpack.c.b16 %v2548, %v2546
          %v2791 = vpack.c.b16 %v2549, %v2547
          %v2792 = vpack.c.b16 %v2552, %v2550
          %v2793 = vpack.c.b16 %v2553, %v2551
          %v2794 = vpack.c.b16 %v2556, %v2554
          %v2795 = vpack.c.b16 %v2557, %v2555
          %v2796 = vpack.c.b16 %v2560, %v2558
          %v2797 = vpack.c.b16 %v2561, %v2559
          %v2798 = vpack.c.b16 %v2564, %v2562
          %v2799 = vpack.c.b16 %v2565, %v2563
          %v2800 = vpack.c.b16 %v2568, %v2566
          %v2801 = vpack.c.b16 %v2569, %v2567
          %v2802 = vpack.c.b16 %v2572, %v2570
          %v2803 = vpack.c.b16 %v2573, %v2571
          %v2804 = vpack.c.b16 %v2576, %v2574
          %v2805 = vpack.c.b16 %v2577, %v2575
          %v2806 = vpack.c.b16 %v2580, %v2578
          %v2807 = vpack.c.b16 %v2581, %v2579
          %v2808 = vpack.c.b16 %v2584, %v2582
          %v2809 = vpack.c.b16 %v2585, %v2583
          %v2810 = vpack.c.b16 %v2588, %v2586
          %v2811 = vpack.c.b16 %v2589, %v2587
          %v2812 = vpack.c.b16 %v2592, %v2590
          %v2813 = vpack.c.b16 %v2593, %v2591
          %v2814 = vpack.c.b16 %v2596, %v2594
          %v2815 = vpack.c.b16 %v2597, %v2595
          %v2816 = vpack.c.b16 %v2600, %v2598
          %v2817 = vpack.c.b16 %v2601, %v2599
          %v2818 = vpack.c.b16 %v2604, %v2602
          %v2819 = vpack.c.b16 %v2605, %v2603
          %v2820 = vpack.c.b16 %v2608, %v2606
          %v2821 = vpack.c.b16 %v2609, %v2607
          %v2822 = vpack.c.b16 %v2612, %v2610
          %v2823 = vpack.c.b16 %v2613, %v2611
          %v2824 = vpack.c.b16 %v2616, %v2614
          %v2825 = vpack.c.b16 %v2617, %v2615
          %v2826 = vpack.c.b16 %v2620, %v2618
          %v2827 = vpack.c.b16 %v2621, %v2619
          %v2828 = vpack.c.b16 %v2624, %v2622
          %v2829 = vpack.c.b16 %v2625, %v2623
          %v2830 = vpack.c.b16 %v2628, %v2626
          %v2831 = vpack.c.b16 %v2629, %v2627
          %v2832 = vpack.c.b16 %v2632, %v2630
          %v2833 = vpack.c.b16 %v2633, %v2631
          %v2834 = vpack.c.b16 %v2636, %v2634
          %v2835 = vpack.c.b16 %v2637, %v2635
          %v2836 = vpack.c.b16 %v2640, %v2638
          %v2837 = vpack.c.b16 %v2641, %v2639
          %v2838 = vpack.c.b16 %v2644, %v2642
          %v2839 = vpack.c.b16 %v2645, %v2643
          %v2840 = vpack.c.b16 %v2648, %v2646
          %v2841 = vpack.c.b16 %v2649, %v2647
          %v2842 = vpack.c.b16 %v2652, %v2650
          %v2843 = vpack.c.b16 %v2653, %v2651
          %v2844 = vpack.c.b16 %v2656, %v2654
          %v2845 = vpack.c.b16 %v2657, %v2655
          %v2846 = vpack.c.b16 %v2660, %v2658
          %v2847 = vpack.c.b16 %v2661, %v2659
          %v2848 = vpack.c.b16 %v2664, %v2662
          %v2849 = vpack.c.b16 %v2665, %v2663
          %v2850 = vpack.c.b16 %v2668, %v2666
          %v2851 = vpack.c.b16 %v2669, %v2667
          %v2852 = vpack.c.b16 %v2672, %v2670
          %v2853 = vpack.c.b16 %v2673, %v2671
          %v2854 = vpack.c.b16 %v2676, %v2674
          %v2855 = vpack.c.b16 %v2677, %v2675
          %v2856 = vpack.c.b16 %v2680, %v2678
          %v2857 = vpack.c.b16 %v2681, %v2679
          %v2858 = vpack.c.b16 %v2684, %v2682
          %v2859 = vpack.c.b16 %v2685, %v2683
          %v2860 = vpack.c.b16 %v2688, %v2686
          %v2861 = vpack.c.b16 %v2689, %v2687
          %v2862 = vpack.c.b16 %v2692, %v2690
          %v2863 = vpack.c.b16 %v2693, %v2691
          %v2864 = vpack.c.b16 %v2696, %v2694
          %v2865 = vpack.c.b16 %v2697, %v2695
          %v2866 = vpack.c.b16 %v2700, %v2698
          %v2867 = vpack.c.b16 %v2701, %v2699
          %v2868 = vpack.c.b16 %v2704, %v2702
          %v2869 = vpack.c.b16 %v2705, %v2703
          %v2870 = vpack.c.b16 %v2708, %v2706
          %v2871 = vpack.c.b16 %v2709, %v2707
          %v2872 = vpack.c.b16 %v2712, %v2710
          %v2873 = vpack.c.b16 %v2713, %v2711
          %v2874 = vpack.c.b16 %v2716, %v2714
          %v2875 = vpack.c.b16 %v2717, %v2715
          %v2876 = vpack.c.b16 %v2720, %v2718
          %v2877 = vpack.c.b16 %v2721, %v2719
          %v2878 = vpack.c.b16 %v2724, %v2722
          %v2879 = vpack.c.b16 %v2725, %v2723
          %v2880 = vpack.c.b16 %v2728, %v2726
          %v2881 = vpack.c.b16 %v2729, %v2727
          %v2882 = vpack.c.b16 %v2732, %v2730
          %v2883 = vpack.c.b16 %v2733, %v2731
          %v2884 = vpack.c.b16 %v2736, %v2734
          %v2885 = vpack.c.b16 %v2737, %v2735
          %v2886 = vpack.c.b16 %v2740, %v2738
          %v2887 = vpack.c.b16 %v2741, %v2739
          %v2888 = vpack.c.b16 %v2744, %v2742
          %v2889 = vpack.c.b16 %v2745, %v2743
          %v2890 = vpack.c.b16 %v2748, %v2746
          %v2891 = vpack.c.b16 %v2749, %v2747
          %v2892 = vpack.c.b16 %v2752, %v2750
          %v2893 = vpack.c.b16 %v2753, %v2751
          %v2894 = vpack.c.b16 %v2756, %v2754
          %v2895 = vpack.c.b16 %v2757, %v2755
          %v2896 = vpack.c.b16 %v2760, %v2758
          %v2897 = vpack.c.b16 %v2761, %v2759
          %v2898 = vpack.c.b16 %v2764, %v2762
          %v2899 = vpack.c.b16 %v2765, %v2763
          %v2900 = vpack.c.b16 %v2768, %v2766
          %v2901 = vpack.c.b16 %v2769, %v2767
          %v2902 = vpack.c.b16 %v2772, %v2770
          %v2903 = vpack.c.b16 %v2773, %v2771
          %v2904 = vpack.c.b16 %v2776, %v2774
          %v2905 = vpack.c.b16 %v2777, %v2775
          %3034 = vmatprep.subr.bf16.mxu0 %v2779
          %3035 = vmatpush1.bf16.msra.mxu0 %v2778
          %3036 = vmatprep.subr.bf16.mxu0 %v2781
          %3037 = vmatpush1.bf16.msra.mxu0 %v2780
          %3038 = vmatprep.subr.bf16.mxu0 %v2783
          %3039 = vmatpush1.bf16.msra.mxu0 %v2782
          %3040 = vmatprep.subr.bf16.mxu0 %v2785
          %3041 = vmatpush1.bf16.msra.mxu0 %v2784
          %3042 = vmatprep.subr.bf16.mxu0 %v2787
          %3043 = vmatpush1.bf16.msra.mxu0 %v2786
          %3044 = vmatprep.subr.bf16.mxu0 %v2789
          %3045 = vmatpush1.bf16.msra.mxu0 %v2788
          %3046 = vmatprep.subr.bf16.mxu0 %v2791
          %3047 = vmatpush1.bf16.msra.mxu0 %v2790
          %3048 = vmatprep.subr.bf16.mxu0 %v2793
          %3049 = vmatpush1.bf16.msra.mxu0 %v2792
          %3050 = vmatprep.subr.bf16.mxu0 %v2795
          %3051 = vmatpush1.bf16.msra.mxu0 %v2794
          %3052 = vmatprep.subr.bf16.mxu0 %v2797
          %3053 = vmatpush1.bf16.msra.mxu0 %v2796
          %3054 = vmatprep.subr.bf16.mxu0 %v2799
          %3055 = vmatpush1.bf16.msra.mxu0 %v2798
          %3056 = vmatprep.subr.bf16.mxu0 %v2801
          %3057 = vmatpush1.bf16.msra.mxu0 %v2800
          %3058 = vmatprep.subr.bf16.mxu0 %v2803
          %3059 = vmatpush1.bf16.msra.mxu0 %v2802
          %3060 = vmatprep.subr.bf16.mxu0 %v2805
          %3061 = vmatpush1.bf16.msra.mxu0 %v2804
          %3062 = vmatprep.subr.bf16.mxu0 %v2807
          %3063 = vmatpush1.bf16.msra.mxu0 %v2806
          %3064 = vmatprep.subr.bf16.mxu0 %v2809
          %3065 = vmatpush1.bf16.msra.mxu0 %v2808
          %3066 = vmatprep.mubr.bf16.mxu0 %v2247
          %3067 = vmatmul.mubr.bf16.gmra.mrb[0].mxu0 %v2246
          %v3068 = vpop.f32.mrb[0].mxu0
          %v3069 = vadd.f32 %v2387, %v3068
          %v3070 = vpop.f32.mrb[0].mxu0
          %v3071 = vadd.f32 %v2391, %v3070
          %v3072 = vpop.f32.mrb[0].mxu0
          %v3073 = vadd.f32 %v2387, %v3072
          %v3074 = vpop.f32.mrb[0].mxu0
          %v3075 = vadd.f32 %v2391, %v3074
          %3076 = vdwg.mxu0
          %3077 = vmatprep.subr.bf16.mxu0 %v2811
          %3078 = vmatpush1.bf16.msra.mxu0 %v2810
          %3079 = vmatprep.subr.bf16.mxu0 %v2813
          %3080 = vmatpush1.bf16.msra.mxu0 %v2812
          %3081 = vmatprep.subr.bf16.mxu0 %v2815
          %3082 = vmatpush1.bf16.msra.mxu0 %v2814
          %3083 = vmatprep.subr.bf16.mxu0 %v2817
          %3084 = vmatpush1.bf16.msra.mxu0 %v2816
          %3085 = vmatprep.subr.bf16.mxu0 %v2819
          %3086 = vmatpush1.bf16.msra.mxu0 %v2818
          %3087 = vmatprep.subr.bf16.mxu0 %v2821
          %3088 = vmatpush1.bf16.msra.mxu0 %v2820
          %3089 = vmatprep.subr.bf16.mxu0 %v2823
          %3090 = vmatpush1.bf16.msra.mxu0 %v2822
          %3091 = vmatprep.subr.bf16.mxu0 %v2825
          %3092 = vmatpush1.bf16.msra.mxu0 %v2824
          %3093 = vmatprep.subr.bf16.mxu0 %v2827
          %3094 = vmatpush1.bf16.msra.mxu0 %v2826
          %3095 = vmatprep.subr.bf16.mxu0 %v2829
          %3096 = vmatpush1.bf16.msra.mxu0 %v2828
          %3097 = vmatprep.subr.bf16.mxu0 %v2831
          %3098 = vmatpush1.bf16.msra.mxu0 %v2830
          %3099 = vmatprep.subr.bf16.mxu0 %v2833
          %3100 = vmatpush1.bf16.msra.mxu0 %v2832
          %3101 = vmatprep.subr.bf16.mxu0 %v2835
          %3102 = vmatpush1.bf16.msra.mxu0 %v2834
          %3103 = vmatprep.subr.bf16.mxu0 %v2837
          %3104 = vmatpush1.bf16.msra.mxu0 %v2836
          %3105 = vmatprep.subr.bf16.mxu0 %v2839
          %3106 = vmatpush1.bf16.msra.mxu0 %v2838
          %3107 = vmatprep.subr.bf16.mxu0 %v2841
          %3108 = vmatpush1.bf16.msra.mxu0 %v2840
          %3109 = vmatprep.mubr.bf16.mxu0 %v2249
          %3110 = vmatmul.mubr.bf16.gmra.mrb[0].mxu0 %v2248
          %v3111 = vpop.f32.mrb[0].mxu0
          %v3112 = vadd.f32 %v3069, %v3111
          %v3113 = vpop.f32.mrb[0].mxu0
          %v3114 = vadd.f32 %v3071, %v3113
          %v3115 = vpop.f32.mrb[0].mxu0
          %v3116 = vadd.f32 %v3073, %v3115
          %v3117 = vpop.f32.mrb[0].mxu0
          %v3118 = vadd.f32 %v3075, %v3117
          %3119 = vdwg.mxu0
          %3120 = vmatprep.subr.bf16.mxu0 %v2843
          %3121 = vmatpush1.bf16.msra.mxu0 %v2842
          %3122 = vmatprep.subr.bf16.mxu0 %v2845
          %3123 = vmatpush1.bf16.msra.mxu0 %v2844
          %3124 = vmatprep.subr.bf16.mxu0 %v2847
          %3125 = vmatpush1.bf16.msra.mxu0 %v2846
          %3126 = vmatprep.subr.bf16.mxu0 %v2849
          %3127 = vmatpush1.bf16.msra.mxu0 %v2848
          %3128 = vmatprep.subr.bf16.mxu0 %v2851
          %3129 = vmatpush1.bf16.msra.mxu0 %v2850
          %3130 = vmatprep.subr.bf16.mxu0 %v2853
          %3131 = vmatpush1.bf16.msra.mxu0 %v2852
          %3132 = vmatprep.subr.bf16.mxu0 %v2855
          %3133 = vmatpush1.bf16.msra.mxu0 %v2854
          %3134 = vmatprep.subr.bf16.mxu0 %v2857
          %3135 = vmatpush1.bf16.msra.mxu0 %v2856
          %3136 = vmatprep.subr.bf16.mxu0 %v2859
          %3137 = vmatpush1.bf16.msra.mxu0 %v2858
          %3138 = vmatprep.subr.bf16.mxu0 %v2861
          %3139 = vmatpush1.bf16.msra.mxu0 %v2860
          %3140 = vmatprep.subr.bf16.mxu0 %v2863
          %3141 = vmatpush1.bf16.msra.mxu0 %v2862
          %3142 = vmatprep.subr.bf16.mxu0 %v2865
          %3143 = vmatpush1.bf16.msra.mxu0 %v2864
          %3144 = vmatprep.subr.bf16.mxu0 %v2867
          %3145 = vmatpush1.bf16.msra.mxu0 %v2866
          %3146 = vmatprep.subr.bf16.mxu0 %v2869
          %3147 = vmatpush1.bf16.msra.mxu0 %v2868
          %3148 = vmatprep.subr.bf16.mxu0 %v2871
          %3149 = vmatpush1.bf16.msra.mxu0 %v2870
          %3150 = vmatprep.subr.bf16.mxu0 %v2873
          %3151 = vmatpush1.bf16.msra.mxu0 %v2872
          %3152 = vmatprep.mubr.bf16.mxu0 %v2251
          %3153 = vmatmul.mubr.bf16.gmra.mrb[0].mxu0 %v2250
          %v3154 = vpop.f32.mrb[0].mxu0
          %v3155 = vadd.f32 %v3112, %v3154
          %v3156 = vpop.f32.mrb[0].mxu0
          %v3157 = vadd.f32 %v3114, %v3156
          %v3158 = vpop.f32.mrb[0].mxu0
          %v3159 = vadd.f32 %v3116, %v3158
          %v3160 = vpop.f32.mrb[0].mxu0
          %v3161 = vadd.f32 %v3118, %v3160
          %3162 = vdwg.mxu0
          %3163 = vmatprep.subr.bf16.mxu0 %v2875
          %3164 = vmatpush1.bf16.msra.mxu0 %v2874
          %3165 = vmatprep.subr.bf16.mxu0 %v2877
          %3166 = vmatpush1.bf16.msra.mxu0 %v2876
          %3167 = vmatprep.subr.bf16.mxu0 %v2879
          %3168 = vmatpush1.bf16.msra.mxu0 %v2878
          %3169 = vmatprep.subr.bf16.mxu0 %v2881
          %3170 = vmatpush1.bf16.msra.mxu0 %v2880
          %3171 = vmatprep.subr.bf16.mxu0 %v2883
          %3172 = vmatpush1.bf16.msra.mxu0 %v2882
          %3173 = vmatprep.subr.bf16.mxu0 %v2885
          %3174 = vmatpush1.bf16.msra.mxu0 %v2884
          %3175 = vmatprep.subr.bf16.mxu0 %v2887
          %3176 = vmatpush1.bf16.msra.mxu0 %v2886
          %3177 = vmatprep.subr.bf16.mxu0 %v2889
          %3178 = vmatpush1.bf16.msra.mxu0 %v2888
          %3179 = vmatprep.subr.bf16.mxu0 %v2891
          %3180 = vmatpush1.bf16.msra.mxu0 %v2890
          %3181 = vmatprep.subr.bf16.mxu0 %v2893
          %3182 = vmatpush1.bf16.msra.mxu0 %v2892
          %3183 = vmatprep.subr.bf16.mxu0 %v2895
          %3184 = vmatpush1.bf16.msra.mxu0 %v2894
          %3185 = vmatprep.subr.bf16.mxu0 %v2897
          %3186 = vmatpush1.bf16.msra.mxu0 %v2896
          %3187 = vmatprep.subr.bf16.mxu0 %v2899
          %3188 = vmatpush1.bf16.msra.mxu0 %v2898
          %3189 = vmatprep.subr.bf16.mxu0 %v2901
          %3190 = vmatpush1.bf16.msra.mxu0 %v2900
          %3191 = vmatprep.subr.bf16.mxu0 %v2903
          %3192 = vmatpush1.bf16.msra.mxu0 %v2902
          %3193 = vmatprep.subr.bf16.mxu0 %v2905
          %3194 = vmatpush1.bf16.msra.mxu0 %v2904
          %3195 = vmatprep.mubr.bf16.mxu0 %v2253
          %3196 = vmatmul.mubr.bf16.gmra.mrb[0].mxu0 %v2252
          %v3197 = vpop.f32.mrb[0].mxu0
          %v3198 = vadd.f32 %v3155, %v3197
          %v3199 = vpop.f32.mrb[0].mxu0
          %v3200 = vadd.f32 %v3157, %v3199
          %v3201 = vpop.f32.mrb[0].mxu0
          %v3202 = vadd.f32 %v3159, %v3201
          %v3203 = vpop.f32.mrb[0].mxu0
          %v3204 = vadd.f32 %v3161, %v3203
          %3205 = vdwg.mxu0
          %v3206 = vmax.f32 %v3198, 0.0
          %v3207 = vmax.f32 %v3200, 0.0
          %v3208 = vmax.f32 %v3202, 0.0
          %v3209 = vmax.f32 %v3204, 0.0
          %v3210 = vld [vmem:[#allocation4] sm:$0xff]
          %v3211 = vld [vmem:[#allocation4 + $0x8] sm:$0xff]
          %v3212 = vpack.c.bf16 %v3208, %v3206
          %v3213 = vpack.c.bf16 %v3209, %v3207
          %v3214 = vld [vmem:[%s621] sm:$0xf]
          %v3215 = vld [vmem:[%s621 + $0x4] sm:$0xf]
          %v3216 = vld [vmem:[%s621 + $0x8] sm:$0xf]
          %v3217 = vld [vmem:[%s621 + $0xc] sm:$0xf]
          %v3218 = vld [vmem:[%s621 + $0x10] sm:$0xf]
          %v3219 = vld [vmem:[%s621 + $0x14] sm:$0xf]
          %v3220 = vld [vmem:[%s621 + $0x18] sm:$0xf]
          %v3221 = vld [vmem:[%s621 + $0x1c] sm:$0xf]
          %v3222 = vld [vmem:[%s621 + $0x20] sm:$0xf]
          %v3223 = vld [vmem:[%s621 + $0x24] sm:$0xf]
          %v3224 = vld [vmem:[%s621 + $0x28] sm:$0xf]
          %v3225 = vld [vmem:[%s621 + $0x2c] sm:$0xf]
          %v3226 = vld [vmem:[%s621 + $0x30] sm:$0xf]
          %v3227 = vld [vmem:[%s621 + $0x34] sm:$0xf]
          %v3228 = vld [vmem:[%s621 + $0x38] sm:$0xf]
          %v3229 = vld [vmem:[%s621 + $0x3c] sm:$0xf]
          %v3230 = vld [vmem:[%s621 + $0x40] sm:$0xf]
          %v3231 = vld [vmem:[%s621 + $0x44] sm:$0xf]
          %v3232 = vld [vmem:[%s621 + $0x48] sm:$0xf]
          %v3233 = vld [vmem:[%s621 + $0x4c] sm:$0xf]
          %v3234 = vld [vmem:[%s621 + $0x50] sm:$0xf]
          %v3235 = vld [vmem:[%s621 + $0x54] sm:$0xf]
          %v3236 = vld [vmem:[%s621 + $0x58] sm:$0xf]
          %v3237 = vld [vmem:[%s621 + $0x5c] sm:$0xf]
          %v3238 = vld [vmem:[%s621 + $0x60] sm:$0xf]
          %v3239 = vld [vmem:[%s621 + $0x64] sm:$0xf]
          %v3240 = vld [vmem:[%s621 + $0x68] sm:$0xf]
          %v3241 = vld [vmem:[%s621 + $0x6c] sm:$0xf]
          %v3242 = vld [vmem:[%s621 + $0x70] sm:$0xf]
          %v3243 = vld [vmem:[%s621 + $0x74] sm:$0xf]
          %v3244 = vld [vmem:[%s621 + $0x78] sm:$0xf]
          %v3245 = vld [vmem:[%s621 + $0x7c] sm:$0xf]
          %v3278 = vunpack.c.l.b16 %v3214
          %v3279 = vunpack.c.l.b16 %v3215
          %v3280 = vunpack.c.l.b16 %v3216
          %v3281 = vunpack.c.l.b16 %v3217
          %v3282 = vunpack.c.l.b16 %v3218
          %v3283 = vunpack.c.l.b16 %v3219
          %v3284 = vunpack.c.l.b16 %v3220
          %v3285 = vunpack.c.l.b16 %v3221
          %v3286 = vunpack.c.l.b16 %v3222
          %v3287 = vunpack.c.l.b16 %v3223
          %v3288 = vunpack.c.l.b16 %v3224
          %v3289 = vunpack.c.l.b16 %v3225
          %v3290 = vunpack.c.l.b16 %v3226
          %v3291 = vunpack.c.l.b16 %v3227
          %v3292 = vunpack.c.l.b16 %v3228
          %v3293 = vunpack.c.l.b16 %v3229
          %v3294 = vunpack.c.l.b16 %v3230
          %v3295 = vunpack.c.l.b16 %v3231
          %v3296 = vunpack.c.l.b16 %v3232
          %v3297 = vunpack.c.l.b16 %v3233
          %v3298 = vunpack.c.l.b16 %v3234
          %v3299 = vunpack.c.l.b16 %v3235
          %v3300 = vunpack.c.l.b16 %v3236
          %v3301 = vunpack.c.l.b16 %v3237
          %v3302 = vunpack.c.l.b16 %v3238
          %v3303 = vunpack.c.l.b16 %v3239
          %v3304 = vunpack.c.l.b16 %v3240
          %v3305 = vunpack.c.l.b16 %v3241
          %v3306 = vunpack.c.l.b16 %v3242
          %v3307 = vunpack.c.l.b16 %v3243
          %v3308 = vunpack.c.l.b16 %v3244
          %v3309 = vunpack.c.l.b16 %v3245
          %v3310 = vpack.c.b16 %v3279, %v3278
          %v3311 = vpack.c.b16 %v3281, %v3280
          %v3312 = vpack.c.b16 %v3283, %v3282
          %v3313 = vpack.c.b16 %v3285, %v3284
          %v3314 = vpack.c.b16 %v3287, %v3286
          %v3315 = vpack.c.b16 %v3289, %v3288
          %v3316 = vpack.c.b16 %v3291, %v3290
          %v3317 = vpack.c.b16 %v3293, %v3292
          %v3318 = vpack.c.b16 %v3295, %v3294
          %v3319 = vpack.c.b16 %v3297, %v3296
          %v3320 = vpack.c.b16 %v3299, %v3298
          %v3321 = vpack.c.b16 %v3301, %v3300
          %v3322 = vpack.c.b16 %v3303, %v3302
          %v3323 = vpack.c.b16 %v3305, %v3304
          %v3324 = vpack.c.b16 %v3307, %v3306
          %v3325 = vpack.c.b16 %v3309, %v3308
          %3342 = vmatprep.subr.bf16.mxu0 0
          %3343 = vmatpush1.bf16.msra.mxu0 %v3310
          %3344 = vmatprep.subr.bf16.mxu0 0
          %3345 = vmatpush1.bf16.msra.mxu0 %v3311
          %3346 = vmatprep.subr.bf16.mxu0 0
          %3347 = vmatpush1.bf16.msra.mxu0 %v3312
          %3348 = vmatprep.subr.bf16.mxu0 0
          %3349 = vmatpush1.bf16.msra.mxu0 %v3313
          %3350 = vmatprep.subr.bf16.mxu0 0
          %3351 = vmatpush1.bf16.msra.mxu0 %v3314
          %3352 = vmatprep.subr.bf16.mxu0 0
          %3353 = vmatpush1.bf16.msra.mxu0 %v3315
          %3354 = vmatprep.subr.bf16.mxu0 0
          %3355 = vmatpush1.bf16.msra.mxu0 %v3316
          %3356 = vmatprep.subr.bf16.mxu0 0
          %3357 = vmatpush1.bf16.msra.mxu0 %v3317
          %3358 = vmatprep.subr.bf16.mxu0 0
          %3359 = vmatpush1.bf16.msra.mxu0 %v3318
          %3360 = vmatprep.subr.bf16.mxu0 0
          %3361 = vmatpush1.bf16.msra.mxu0 %v3319
          %3362 = vmatprep.subr.bf16.mxu0 0
          %3363 = vmatpush1.bf16.msra.mxu0 %v3320
          %3364 = vmatprep.subr.bf16.mxu0 0
          %3365 = vmatpush1.bf16.msra.mxu0 %v3321
          %3366 = vmatprep.subr.bf16.mxu0 0
          %3367 = vmatpush1.bf16.msra.mxu0 %v3322
          %3368 = vmatprep.subr.bf16.mxu0 0
          %3369 = vmatpush1.bf16.msra.mxu0 %v3323
          %3370 = vmatprep.subr.bf16.mxu0 0
          %3371 = vmatpush1.bf16.msra.mxu0 %v3324
          %3372 = vmatprep.subr.bf16.mxu0 0
          %3373 = vmatpush1.bf16.msra.mxu0 %v3325
          %3374 = vmatprep.mubr.bf16.mxu0 %v3213
          %3375 = vmatmul.mubr.bf16.gmra.mrb[0].mxu0 %v3212
          %v3376 = vpop.f32.mrb[0].mxu0
          %v3377 = vadd.f32 0.0, %v3376
          %v3378 = vpop.f32.mrb[0].mxu0
          %v3379 = vpop.f32.mrb[0].mxu0
          %v3380 = vadd.f32 0.0, %v3379
          %v3381 = vpop.f32.mrb[0].mxu0
          %3382 = vdwg.mxu0
          %v3383 = vadd.f32 %v3210, %v3377
          %v3384 = vadd.f32 %v3211, %v3380
          %vm3385 = vcmask 523264
          %3386 = vst.msk [vmem:[#allocation4] sm:$0xff] %vm3385, %v3383
          %3387 = vst.msk [vmem:[#allocation4 + $0x8] sm:$0xff] %vm3385, %v3384
        $region92: #{tpu_custom_call.1} parent=67 // pred_fallthru
          _
        // Predicated region
        $region93: #{tpu_custom_call.1} parent=67 // pred_check
          %p3388 = pneg %p1838
        $region94: #{tpu_custom_call.1} parent=67 // pred_check_branch
          %3390 = sbr.rel (%p3388) target = $region96
        $region95: #{tpu_custom_call.1} parent=67 // pred_region
          %v3391 = vld [vmem:[#allocation4] sm:$0xff]
          %v3392 = vld [vmem:[#allocation4 + $0x8] sm:$0xff]
          %v3393 = vld [vmem:[%s9] sm:$0x1]
          %v3395 = vlaneseq
          %v3396 = vshrl.u32 %v3395, 7
          %v3397 = vsub.s32 0, %v3396
          %v3398 = vrot.slane %v3393, %v3397
          %v3400 = vadd.f32 %v3391, %v3398
          %v3401 = vadd.f32 %v3392, %v3398
          %v3402 = vmul.f32 %v3400, 0.5
          %v3403 = vmul.f32 %v3401, 0.5
          %v3404 = vmul.f32 %v3402, 1.442695
          %v3405 = vpow.pop %v3404
          %v3406 = vmul.f32 %v3403, 1.442695
          %v3407 = vpow.pop %v3406
          %v3408 = vld [vmem:[%s594] sm:$0xff]
          %v3409 = vld [vmem:[%s594 + $0x8] sm:$0xff]
          %3412 = vrot.lane.b32.xlu0 %v3408, 32
          %v3413 = vpop.permute.xlu0 %3412
          %3414 = vrot.lane.b32.xlu0 %v3409, 32
          %v3415 = vpop.permute.xlu0 %3414
          %v3418 = vmul.f32 %v3405, %v3413
          %v3419 = vmul.f32 %v3407, %v3415
          %3422 = vrot.lane.b32.xlu0 %v3418, 96
          %v3423 = vpop.permute.xlu0 %3422
          %3424 = vrot.lane.b32.xlu0 %v3419, 96
          %v3425 = vpop.permute.xlu0 %3424
          %v3428 = vadd.f32 %v3400, %v3423
          %v3429 = vadd.f32 %v3401, %v3425
          %vm3430 = vcmask 523264
          %3431 = vst.msk [vmem:[#allocation10] sm:$0xff] %vm3430, %v3400
          %3432 = vst.msk [vmem:[#allocation10 + $0x8] sm:$0xff] %vm3430, %v3401
          %3435 = vrot.lane.b32.xlu0 %v3428, 64
          %v3436 = vpop.permute.xlu0 %3435
          %3437 = vrot.lane.b32.xlu0 %v3429, 64
          %v3438 = vpop.permute.xlu0 %3437
          %vm3441 = vcmask 785920
          %3442 = vst.msk [vmem:[#allocation10] sm:$0xff] %vm3441, %v3436
          %3443 = vst.msk [vmem:[#allocation10 + $0x8] sm:$0xff] %vm3441, %v3438
        $region96: #{tpu_custom_call.1} parent=67 // pred_fallthru
          _
        // Predicated region
        $region97: #{tpu_custom_call.1} parent=67 // pred_check
          %p3444 = pneg %p366
        $region98: #{tpu_custom_call.1} parent=67 // pred_check_branch
          %3446 = sbr.rel (%p3444) target = $region100
        $region99: #{tpu_custom_call.1} parent=67 // pred_region
          %s3447 = smul.u32 2, %s30
          %s3449 = ssub.s32 256, 256
          %3450 = vsyncadd [#allocation7], %s3449
          %s3451 = smul.addr %s3447, 128
          %s3452 = scalar_lea.hbm %s12, %s3451
          %s3453 = sshll.u32 [#allocation10], 4
          %s3454 = int_to_ptr.vmem [resolvable:$true] %s3453
          %3459 = dma.vmem_to_hbm [thread:$0]  %s3454, 256, %s3452, [#allocation7], 128, 128, 8
        $region100: #{tpu_custom_call.1} parent=67 // pred_fallthru
          _
        // Predicated region
        $region101: #{tpu_custom_call.1} parent=67 // pred_check
          %p3460 = pneg %p366
        $region102: #{tpu_custom_call.1} parent=67 // pred_check_branch
          %3462 = sbr.rel (%p3460) target = $region104
        $region103: #{tpu_custom_call.1} parent=67 // pred_region
          %3463 = dma.done [#allocation7], 256
        $region104: #{tpu_custom_call.1} parent=67 // pred_fallthru
          _
      $region68: #{tpu_custom_call.1} parent=5 // pred_fallthru
        _
      %p3464 = scmp.le.s32.totalorder 2, %s21
      // Predicated region
      $region105: #{tpu_custom_call.1} parent=5 // pred_check
        %p3465 = pneg %p3464
      $region106: #{tpu_custom_call.1} parent=5 // pred_check_branch
        %3467 = sbr.rel (%p3465) target = $region108
      $region107: #{tpu_custom_call.1} parent=5 // pred_region
        %s3468 = ssub.s32 %s21, 2
      $region108: #{tpu_custom_call.1} parent=5 // pred_fallthru
        _
    $region6: #{tpu_custom_call.1} parent=1 // loop_footer
      %s25 = sadd.s32 1, %s21
    $region7: #{tpu_custom_call.1} parent=1 // loop_footer_branch
      %20 = sbr.rel target = $region3
    $region8: #{tpu_custom_call.1} parent=1 // loop_exit
      _
    %3469 = vsyncpa [#allocation6], 1
    %s3470 = scalar_lea.sflag [#allocation6], 1
    %3471 = vsyncpa %s3470, 1
    %3472 = vsyncpa [#allocation9], 1
    %3473 = vsyncpa [#allocation7], 1
    %s3474 = scalar_lea.sflag [#allocation7], 1
    %3475 = vsyncpa %s3474, 1

// kernel: tpu_custom_call.1
$region0: #{tpu_custom_call.1}
  #allocation0 [shape = 'u32[]', space=smem, size = 0x4, offset = 0x4, fixed_abs, tag = 'smem constant byte address 0x4 - core index']
  #allocation1 [shape = 'u32[144,128]{1,0:T(1,128)}', space=vmem, size = 0x12000, scoped, tag = 'internal scratch']
  #allocation2 [shape = 'f32[16,1152]{1,0:T(8,128)}', space=vmem, size = 0x12000, scoped, tag = 'scratch operand']
  #allocation3 [shape = 'bf16[16,1024]{1,0:T(16,128)(2,1)}', space=vmem, size = 0x8000, scoped, tag = 'scratch operand']
  #allocation4 [shape = 'f32[16,64]{1,0:T(8,128)}', space=vmem, size = 0x2000, scoped, tag = 'scratch operand']
  %s0 = inlined_call_operand.vmem [shape: f32[16,256], index: 0, kind: input, shape index: {}]
  %s1 = inlined_call_operand.vmem [shape: f32[16,128], index: 1, kind: input, shape index: {}]
  %s2 = inlined_call_operand.hbm [shape: bf16[256,1152], index: 2, kind: input, shape index: {}]
  %s3 = inlined_call_operand.vmem [shape: f32[1,1152], index: 3, kind: input, shape index: {}]
  %s4 = inlined_call_operand.hbm [shape: bf16[1024,256], index: 4, kind: input, shape index: {}]
  %s5 = inlined_call_operand.vmem [shape: f32[1,256], index: 5, kind: input, shape index: {}]
  %s6 = inlined_call_operand.vmem [shape: bf16[128,128], index: 6, kind: input, shape index: {}]
  %s7 = inlined_call_operand.vmem [shape: f32[1,128], index: 7, kind: input, shape index: {}]
  %s8 = inlined_call_operand.vmem [shape: bf16[256,64], index: 8, kind: input, shape index: {}]
  %s9 = inlined_call_operand.vmem [shape: f32[1,64], index: 9, kind: input, shape index: {}]
  %s10 = inlined_call_operand.vmem [shape: bf16[128,2], index: 10, kind: input, shape index: {}]
  %s11 = inlined_call_operand.vmem [shape: f32[1,2], index: 11, kind: input, shape index: {}]
  %s12 = inlined_call_operand.hbm [shape: f32[16,128], index: 12, kind: output, shape index: {}]
  %s13 = sld [smem:[#allocation0]]
  $region109: #{tpu_custom_call.1} parent=0
    _
  %s15 = ssub.s32 1, %s13
  %s16 = scalar_select 0, %s15, %s13
  $region1: #{tpu_custom_call.1} parent=0
    #allocation5 [shape = 'u8[1179648]{0}', space=vmem, size = 0x120000, scoped, tag = 'input window, operand 2']
    #allocation6 [shape = 's32[2]{0}', space=sflag, size = 0x8, scoped, tag = 'scoped memory for tpu_custom_call.1']
    #allocation7 [shape = 's32[2]{0}', space=sflag, size = 0x8, scoped, tag = 'scoped memory for tpu_custom_call.1']
    #allocation8 [shape = 'u8[1048576]{0}', space=vmem, size = 0x100000, scoped, tag = 'input window, operand 4']
    #allocation9 [shape = 's32[2]{0}', space=sflag, size = 0x8, scoped, tag = 'scoped memory for tpu_custom_call.1']
    #allocation10 [shape = 'u8[8192]{0}', space=vmem, size = 0x2000, scoped, tag = 'output window, operand 0, single buffered']
    %17 = vsyncpa [#allocation6], 0
    %s18 = scalar_lea.sflag [#allocation6], 1
    %19 = vsyncpa %s18, 0
    %20 = vsyncpa [#allocation9], 0
    %s21 = scalar_lea.sflag [#allocation9], 1
    %22 = vsyncpa %s21, 0
    %23 = vsyncpa [#allocation7], 0
    loop: start=0, step=1, limit=4
    $region2: #{tpu_custom_call.1} parent=1 // loop_pre_header
      _
    $region3: #{tpu_custom_call.1} parent=1 // loop_header
      %s25 = sphi 0, %s29
      %p26 = scmp.ge.s32.totalorder %s25, 4
      %s32 = sphi 0, %s44
      %s33 = sphi 0, %s40
      %s34 = sphi 0, %s32
      %s35 = sphi 0, %s33
      %s36 = sphi 0, %s34
      %s37 = sphi 0, %s35
      %s53 = sphi 0, %s55
      %s56 = sphi 0, %s53
      %s57 = sphi 0, %s56
      %s73 = sphi 0, %s57
      %s79 = sphi 0, %s81
      %s82 = sphi 0, %s79
      %s83 = sphi 0, %s82
      %s99 = sphi 0, %s83
      %s109 = sphi 0, %s111
      %s112 = sphi 0, %s109
      %s113 = sphi 0, %s112
      %s129 = sphi 0, %s113
      %s133 = sphi 0, %s133
      %s135 = sphi 0, %s133
      %s136 = sphi 0, %s135
      %s150 = sphi 0, %s136
      %s162 = sphi 0, %s164
      %s165 = sphi 0, %s162
      %s166 = sphi 0, %s165
      %s182 = sphi 0, %s166
      %s194 = sphi 0, %s196
      %s197 = sphi 0, %s194
      %s198 = sphi 0, %s197
      %s214 = sphi 0, %s198
      %s218 = sphi 0, %s218
      %s220 = sphi 0, %s218
      %s221 = sphi 0, %s220
      %s235 = sphi 0, %s221
      %s239 = sphi 0, %s239
      %s241 = sphi 0, %s239
      %s242 = sphi 0, %s241
      %s256 = sphi 0, %s242
      %s268 = sphi 0, %s270
      %s271 = sphi 0, %s268
      %s272 = sphi 0, %s271
      %s288 = sphi 0, %s272
      %s292 = sphi 0, %s292
      %s294 = sphi 0, %s292
      %s295 = sphi 0, %s294
      %s309 = sphi 0, %s295
      %s313 = sphi 0, %s313
      %s315 = sphi 0, %s313
      %s316 = sphi 0, %s315
      %s330 = sphi 0, %s316
      %s334 = sphi 0, %s334
      %s336 = sphi 0, %s334
      %s337 = sphi 0, %s336
      %s351 = sphi 0, %s337
      %s357 = sphi 0, %s359
      %s360 = sphi 0, %s357
      %s361 = sphi 0, %s360
      %s377 = sphi 0, %s361
    $region4: #{tpu_custom_call.1} parent=1 // loop_header_branch
      %28 = sbr.rel (%p26) target = $region8
    $region5: #{tpu_custom_call.1} parent=1 // loop_body
      %s30 = ssub.s32 %s25, 1
      %s31 = ssub.s32 %s25, 2
      %s38 = sadd.s32 1, %s33
      %p39 = scmp.ge.s32.totalorder %s38, 2
      %s40 = scalar_select %p39, 0, %s38
      %s41 = sadd.s32 1, %s32
      %s42 = scalar_select %p39, %s41, %s32
      %p43 = scmp.ge.s32.totalorder %s42, 1
      %s44 = scalar_select %p43, 0, %s42
      %p45 = scmp.lt.s32.totalorder %s33, 0
      %s46 = scalar_select %p45, %s33, 0
      %p47 = scmp.lt.s32.totalorder %s40, 0
      %s48 = scalar_select %p47, %s40, 0
      %s49 = ssub.s32 %s32, %s44
      %s50 = ssub.s32 %s46, %s48
      %s51 = sor.u32 %s49, %s50
      %p52 = scmp.eq.s32.totalorder %s51, 0
      %s54 = sadd.s32 %s53, 1
      %s55 = scalar_select %p52, %s53, %s54
      %p58 = pneg %p52
      %p59 = scmp.eq.s32.totalorder %s25, 1
      %p60 = por %p58, %p59
      %p61 = scmp.ne.s32.totalorder %s53, %s56
      %p62 = scmp.eq.s32.totalorder %s25, 0
      %p63 = por %p61, %p62
      %p64 = scmp.ne.s32.totalorder %s53, %s56
      %p65 = scmp.eq.s32.totalorder %s30, 1
      %p66 = por %p64, %p65
      %p67 = scmp.ne.s32.totalorder %s56, %s57
      %p68 = scmp.eq.s32.totalorder %s30, 0
      %p69 = por %p67, %p68
      %p70 = scmp.ne.s32.totalorder %s56, %s57
      %p71 = scmp.eq.s32.totalorder %s31, 1
      %p72 = por %p70, %p71
      %p74 = scmp.ne.s32.totalorder %s57, %s73
      %p75 = scmp.eq.s32.totalorder %s31, 0
      %p76 = por %p74, %p75
      %s77 = ssub.s32 %s32, %s44
      %p78 = scmp.eq.s32.totalorder %s77, 0
      %s80 = sadd.s32 %s79, 1
      %s81 = scalar_select %p78, %s79, %s80
      %p84 = pneg %p78
      %p85 = scmp.eq.s32.totalorder %s25, 1
      %p86 = por %p84, %p85
      %p87 = scmp.ne.s32.totalorder %s79, %s82
      %p88 = scmp.eq.s32.totalorder %s25, 0
      %p89 = por %p87, %p88
      %p90 = scmp.ne.s32.totalorder %s79, %s82
      %p91 = scmp.eq.s32.totalorder %s30, 1
      %p92 = por %p90, %p91
      %p93 = scmp.ne.s32.totalorder %s82, %s83
      %p94 = scmp.eq.s32.totalorder %s30, 0
      %p95 = por %p93, %p94
      %p96 = scmp.ne.s32.totalorder %s82, %s83
      %p97 = scmp.eq.s32.totalorder %s31, 1
      %p98 = por %p96, %p97
      %p100 = scmp.ne.s32.totalorder %s83, %s99
      %p101 = scmp.eq.s32.totalorder %s31, 0
      %p102 = por %p100, %p101
      %p103 = scmp.lt.s32.totalorder %s33, 0
      %s104 = scalar_select %p103, %s33, 0
      %p105 = scmp.lt.s32.totalorder %s40, 0
      %s106 = scalar_select %p105, %s40, 0
      %s107 = ssub.s32 %s104, %s106
      %p108 = scmp.eq.s32.totalorder %s107, 0
      %s110 = sadd.s32 %s109, 1
      %s111 = scalar_select %p108, %s109, %s110
      %p114 = pneg %p108
      %p115 = scmp.eq.s32.totalorder %s25, 1
      %p116 = por %p114, %p115
      %p117 = scmp.ne.s32.totalorder %s109, %s112
      %p118 = scmp.eq.s32.totalorder %s25, 0
      %p119 = por %p117, %p118
      %p120 = scmp.ne.s32.totalorder %s109, %s112
      %p121 = scmp.eq.s32.totalorder %s30, 1
      %p122 = por %p120, %p121
      %p123 = scmp.ne.s32.totalorder %s112, %s113
      %p124 = scmp.eq.s32.totalorder %s30, 0
      %p125 = por %p123, %p124
      %p126 = scmp.ne.s32.totalorder %s112, %s113
      %p127 = scmp.eq.s32.totalorder %s31, 1
      %p128 = por %p126, %p127
      %p130 = scmp.ne.s32.totalorder %s113, %s129
      %p131 = scmp.eq.s32.totalorder %s31, 0
      %p132 = por %p130, %p131
      %s134 = sadd.s32 %s133, 1
      %p137 = scmp.eq.s32.totalorder %s25, 1
      %p138 = scmp.ne.s32.totalorder %s133, %s135
      %p139 = scmp.eq.s32.totalorder %s25, 0
      %p140 = por %p138, %p139
      %p141 = scmp.ne.s32.totalorder %s133, %s135
      %p142 = scmp.eq.s32.totalorder %s30, 1
      %p143 = por %p141, %p142
      %p144 = scmp.ne.s32.totalorder %s135, %s136
      %p145 = scmp.eq.s32.totalorder %s30, 0
      %p146 = por %p144, %p145
      %p147 = scmp.ne.s32.totalorder %s135, %s136
      %p148 = scmp.eq.s32.totalorder %s31, 1
      %p149 = por %p147, %p148
      %p151 = scmp.ne.s32.totalorder %s136, %s150
      %p152 = scmp.eq.s32.totalorder %s31, 0
      %p153 = por %p151, %p152
      %s154 = ssub.s32 %s33, 1
      %p155 = scmp.gt.s32.totalorder %s154, 0
      %s156 = scalar_select %p155, %s154, 0
      %s157 = ssub.s32 %s40, 1
      %p158 = scmp.gt.s32.totalorder %s157, 0
      %s159 = scalar_select %p158, %s157, 0
      %s160 = ssub.s32 %s156, %s159
      %p161 = scmp.eq.s32.totalorder %s160, 0
      %s163 = sadd.s32 %s162, 1
      %s164 = scalar_select %p161, %s162, %s163
      %p167 = pneg %p161
      %p168 = scmp.eq.s32.totalorder %s25, 1
      %p169 = por %p167, %p168
      %p170 = scmp.ne.s32.totalorder %s162, %s165
      %p171 = scmp.eq.s32.totalorder %s25, 0
      %p172 = por %p170, %p171
      %p173 = scmp.ne.s32.totalorder %s162, %s165
      %p174 = scmp.eq.s32.totalorder %s30, 1
      %p175 = por %p173, %p174
      %p176 = scmp.ne.s32.totalorder %s165, %s166
      %p177 = scmp.eq.s32.totalorder %s30, 0
      %p178 = por %p176, %p177
      %p179 = scmp.ne.s32.totalorder %s165, %s166
      %p180 = scmp.eq.s32.totalorder %s31, 1
      %p181 = por %p179, %p180
      %p183 = scmp.ne.s32.totalorder %s166, %s182
      %p184 = scmp.eq.s32.totalorder %s31, 0
      %p185 = por %p183, %p184
      %s186 = ssub.s32 %s33, 1
      %p187 = scmp.gt.s32.totalorder %s186, 0
      %s188 = scalar_select %p187, %s186, 0
      %s189 = ssub.s32 %s40, 1
      %p190 = scmp.gt.s32.totalorder %s189, 0
      %s191 = scalar_select %p190, %s189, 0
      %s192 = ssub.s32 %s188, %s191
      %p193 = scmp.eq.s32.totalorder %s192, 0
      %s195 = sadd.s32 %s194, 1
      %s196 = scalar_select %p193, %s194, %s195
      %p199 = pneg %p193
      %p200 = scmp.eq.s32.totalorder %s25, 1
      %p201 = por %p199, %p200
      %p202 = scmp.ne.s32.totalorder %s194, %s197
      %p203 = scmp.eq.s32.totalorder %s25, 0
      %p204 = por %p202, %p203
      %p205 = scmp.ne.s32.totalorder %s194, %s197
      %p206 = scmp.eq.s32.totalorder %s30, 1
      %p207 = por %p205, %p206
      %p208 = scmp.ne.s32.totalorder %s197, %s198
      %p209 = scmp.eq.s32.totalorder %s30, 0
      %p210 = por %p208, %p209
      %p211 = scmp.ne.s32.totalorder %s197, %s198
      %p212 = scmp.eq.s32.totalorder %s31, 1
      %p213 = por %p211, %p212
      %p215 = scmp.ne.s32.totalorder %s198, %s214
      %p216 = scmp.eq.s32.totalorder %s31, 0
      %p217 = por %p215, %p216
      %s219 = sadd.s32 %s218, 1
      %p222 = scmp.eq.s32.totalorder %s25, 1
      %p223 = scmp.ne.s32.totalorder %s218, %s220
      %p224 = scmp.eq.s32.totalorder %s25, 0
      %p225 = por %p223, %p224
      %p226 = scmp.ne.s32.totalorder %s218, %s220
      %p227 = scmp.eq.s32.totalorder %s30, 1
      %p228 = por %p226, %p227
      %p229 = scmp.ne.s32.totalorder %s220, %s221
      %p230 = scmp.eq.s32.totalorder %s30, 0
      %p231 = por %p229, %p230
      %p232 = scmp.ne.s32.totalorder %s220, %s221
      %p233 = scmp.eq.s32.totalorder %s31, 1
      %p234 = por %p232, %p233
      %p236 = scmp.ne.s32.totalorder %s221, %s235
      %p237 = scmp.eq.s32.totalorder %s31, 0
      %p238 = por %p236, %p237
      %s240 = sadd.s32 %s239, 1
      %p243 = scmp.eq.s32.totalorder %s25, 1
      %p244 = scmp.ne.s32.totalorder %s239, %s241
      %p245 = scmp.eq.s32.totalorder %s25, 0
      %p246 = por %p244, %p245
      %p247 = scmp.ne.s32.totalorder %s239, %s241
      %p248 = scmp.eq.s32.totalorder %s30, 1
      %p249 = por %p247, %p248
      %p250 = scmp.ne.s32.totalorder %s241, %s242
      %p251 = scmp.eq.s32.totalorder %s30, 0
      %p252 = por %p250, %p251
      %p253 = scmp.ne.s32.totalorder %s241, %s242
      %p254 = scmp.eq.s32.totalorder %s31, 1
      %p255 = por %p253, %p254
      %p257 = scmp.ne.s32.totalorder %s242, %s256
      %p258 = scmp.eq.s32.totalorder %s31, 0
      %p259 = por %p257, %p258
      %s260 = ssub.s32 %s33, 1
      %p261 = scmp.gt.s32.totalorder %s260, 0
      %s262 = scalar_select %p261, %s260, 0
      %s263 = ssub.s32 %s40, 1
      %p264 = scmp.gt.s32.totalorder %s263, 0
      %s265 = scalar_select %p264, %s263, 0
      %s266 = ssub.s32 %s262, %s265
      %p267 = scmp.eq.s32.totalorder %s266, 0
      %s269 = sadd.s32 %s268, 1
      %s270 = scalar_select %p267, %s268, %s269
      %p273 = pneg %p267
      %p274 = scmp.eq.s32.totalorder %s25, 1
      %p275 = por %p273, %p274
      %p276 = scmp.ne.s32.totalorder %s268, %s271
      %p277 = scmp.eq.s32.totalorder %s25, 0
      %p278 = por %p276, %p277
      %p279 = scmp.ne.s32.totalorder %s268, %s271
      %p280 = scmp.eq.s32.totalorder %s30, 1
      %p281 = por %p279, %p280
      %p282 = scmp.ne.s32.totalorder %s271, %s272
      %p283 = scmp.eq.s32.totalorder %s30, 0
      %p284 = por %p282, %p283
      %p285 = scmp.ne.s32.totalorder %s271, %s272
      %p286 = scmp.eq.s32.totalorder %s31, 1
      %p287 = por %p285, %p286
      %p289 = scmp.ne.s32.totalorder %s272, %s288
      %p290 = scmp.eq.s32.totalorder %s31, 0
      %p291 = por %p289, %p290
      %s293 = sadd.s32 %s292, 1
      %p296 = scmp.eq.s32.totalorder %s25, 1
      %p297 = scmp.ne.s32.totalorder %s292, %s294
      %p298 = scmp.eq.s32.totalorder %s25, 0
      %p299 = por %p297, %p298
      %p300 = scmp.ne.s32.totalorder %s292, %s294
      %p301 = scmp.eq.s32.totalorder %s30, 1
      %p302 = por %p300, %p301
      %p303 = scmp.ne.s32.totalorder %s294, %s295
      %p304 = scmp.eq.s32.totalorder %s30, 0
      %p305 = por %p303, %p304
      %p306 = scmp.ne.s32.totalorder %s294, %s295
      %p307 = scmp.eq.s32.totalorder %s31, 1
      %p308 = por %p306, %p307
      %p310 = scmp.ne.s32.totalorder %s295, %s309
      %p311 = scmp.eq.s32.totalorder %s31, 0
      %p312 = por %p310, %p311
      %s314 = sadd.s32 %s313, 1
      %p317 = scmp.eq.s32.totalorder %s25, 1
      %p318 = scmp.ne.s32.totalorder %s313, %s315
      %p319 = scmp.eq.s32.totalorder %s25, 0
      %p320 = por %p318, %p319
      %p321 = scmp.ne.s32.totalorder %s313, %s315
      %p322 = scmp.eq.s32.totalorder %s30, 1
      %p323 = por %p321, %p322
      %p324 = scmp.ne.s32.totalorder %s315, %s316
      %p325 = scmp.eq.s32.totalorder %s30, 0
      %p326 = por %p324, %p325
      %p327 = scmp.ne.s32.totalorder %s315, %s316
      %p328 = scmp.eq.s32.totalorder %s31, 1
      %p329 = por %p327, %p328
      %p331 = scmp.ne.s32.totalorder %s316, %s330
      %p332 = scmp.eq.s32.totalorder %s31, 0
      %p333 = por %p331, %p332
      %s335 = sadd.s32 %s334, 1
      %p338 = scmp.eq.s32.totalorder %s25, 1
      %p339 = scmp.ne.s32.totalorder %s334, %s336
      %p340 = scmp.eq.s32.totalorder %s25, 0
      %p341 = por %p339, %p340
      %p342 = scmp.ne.s32.totalorder %s334, %s336
      %p343 = scmp.eq.s32.totalorder %s30, 1
      %p344 = por %p342, %p343
      %p345 = scmp.ne.s32.totalorder %s336, %s337
      %p346 = scmp.eq.s32.totalorder %s30, 0
      %p347 = por %p345, %p346
      %p348 = scmp.ne.s32.totalorder %s336, %s337
      %p349 = scmp.eq.s32.totalorder %s31, 1
      %p350 = por %p348, %p349
      %p352 = scmp.ne.s32.totalorder %s337, %s351
      %p353 = scmp.eq.s32.totalorder %s31, 0
      %p354 = por %p352, %p353
      %s355 = ssub.s32 %s32, %s44
      %p356 = scmp.eq.s32.totalorder %s355, 0
      %s358 = sadd.s32 %s357, 1
      %s359 = scalar_select %p356, %s357, %s358
      %p362 = pneg %p356
      %p363 = scmp.eq.s32.totalorder %s25, 1
      %p364 = por %p362, %p363
      %p365 = scmp.ne.s32.totalorder %s357, %s360
      %p366 = scmp.eq.s32.totalorder %s25, 0
      %p367 = por %p365, %p366
      %p368 = scmp.ne.s32.totalorder %s357, %s360
      %p369 = scmp.eq.s32.totalorder %s30, 1
      %p370 = por %p368, %p369
      %p371 = scmp.ne.s32.totalorder %s360, %s361
      %p372 = scmp.eq.s32.totalorder %s30, 0
      %p373 = por %p371, %p372
      %p374 = scmp.ne.s32.totalorder %s360, %s361
      %p375 = scmp.eq.s32.totalorder %s31, 1
      %p376 = por %p374, %p375
      %p378 = scmp.ne.s32.totalorder %s361, %s377
      %p379 = scmp.eq.s32.totalorder %s31, 0
      %p380 = por %p378, %p379
      %p381 = scmp.le.s32.totalorder 1, %s25
      %p382 = scmp.lt.s32.totalorder %s25, 3
      %p383 = pnand %p381, %p382
      %p384 = pneg %p383
      // Predicated region
      $region9: #{tpu_custom_call.1} parent=5 // pred_check
        _
      $region10: #{tpu_custom_call.1} parent=5 // pred_check_branch
        %386 = sbr.rel (%p383) target = $region12
      $region11: #{tpu_custom_call.1} parent=5 // pred_region
        %s387 = ssub.s32 %s25, 1
        // Predicated region
        $region13: #{tpu_custom_call.1} parent=11 // pred_check
          %p388 = pneg %p95
        $region14: #{tpu_custom_call.1} parent=11 // pred_check_branch
          %390 = sbr.rel (%p388) target = $region16
        $region15: #{tpu_custom_call.1} parent=11 // pred_region
          %s391 = smul.u32 2, %s34
          %p392 = scmp.lt.s32.totalorder %s391, 1
          %s393 = scalar_select %p392, %s391, 1
          %s394 = smul.addr %s393, 8
          %s395 = scalar_lea.vmem %s1, %s394
          %s396 = smul.u32 2, %s34
        $region16: #{tpu_custom_call.1} parent=11 // pred_fallthru
          _
        // Predicated region
        $region17: #{tpu_custom_call.1} parent=11 // pred_check
          %p397 = pneg %p146
        $region18: #{tpu_custom_call.1} parent=11 // pred_check_branch
          %399 = sbr.rel (%p397) target = $region20
        $region19: #{tpu_custom_call.1} parent=11 // pred_region
          _
        $region20: #{tpu_custom_call.1} parent=11 // pred_fallthru
          _
        // Predicated region
        $region21: #{tpu_custom_call.1} parent=11 // pred_check
          %p400 = pneg %p231
        $region22: #{tpu_custom_call.1} parent=11 // pred_check_branch
          %402 = sbr.rel (%p400) target = $region24
        $region23: #{tpu_custom_call.1} parent=11 // pred_region
          _
        $region24: #{tpu_custom_call.1} parent=11 // pred_fallthru
          _
        // Predicated region
        $region25: #{tpu_custom_call.1} parent=11 // pred_check
          %p403 = pneg %p252
        $region26: #{tpu_custom_call.1} parent=11 // pred_check_branch
          %405 = sbr.rel (%p403) target = $region28
        $region27: #{tpu_custom_call.1} parent=11 // pred_region
          _
        $region28: #{tpu_custom_call.1} parent=11 // pred_fallthru
          _
        // Predicated region
        $region29: #{tpu_custom_call.1} parent=11 // pred_check
          %p406 = pneg %p305
        $region30: #{tpu_custom_call.1} parent=11 // pred_check_branch
          %408 = sbr.rel (%p406) target = $region32
        $region31: #{tpu_custom_call.1} parent=11 // pred_region
          _
        $region32: #{tpu_custom_call.1} parent=11 // pred_fallthru
          _
        // Predicated region
        $region33: #{tpu_custom_call.1} parent=11 // pred_check
          %p409 = pneg %p326
        $region34: #{tpu_custom_call.1} parent=11 // pred_check_branch
          %411 = sbr.rel (%p409) target = $region36
        $region35: #{tpu_custom_call.1} parent=11 // pred_region
          _
        $region36: #{tpu_custom_call.1} parent=11 // pred_fallthru
          _
        // Predicated region
        $region37: #{tpu_custom_call.1} parent=11 // pred_check
          %p412 = pneg %p347
        $region38: #{tpu_custom_call.1} parent=11 // pred_check_branch
          %414 = sbr.rel (%p412) target = $region40
        $region39: #{tpu_custom_call.1} parent=11 // pred_region
          _
        $region40: #{tpu_custom_call.1} parent=11 // pred_fallthru
          _
      $region12: #{tpu_custom_call.1} parent=5 // pred_fallthru
        _
      %p415 = scmp.lt.s32.totalorder %s25, 2
      // Predicated region
      $region41: #{tpu_custom_call.1} parent=5 // pred_check
        %p416 = pneg %p415
      $region42: #{tpu_custom_call.1} parent=5 // pred_check_branch
        %418 = sbr.rel (%p416) target = $region44
      $region43: #{tpu_custom_call.1} parent=5 // pred_region
        // Predicated region
        $region45: #{tpu_custom_call.1} parent=43 // pred_check
          %p419 = pneg %p63
        $region46: #{tpu_custom_call.1} parent=43 // pred_check_branch
          %421 = sbr.rel (%p419) target = $region48
        $region47: #{tpu_custom_call.1} parent=43 // pred_region
          %p422 = scmp.lt.s32.totalorder %s33, 0
          %s423 = scalar_select %p422, %s33, 0
          %s424 = smul.u32 2, %s32
          %s425 = smul.u32 2, %s423
          %p426 = scmp.lt.s32.totalorder %s424, 1
          %s427 = scalar_select %p426, %s424, 1
          %p428 = scmp.lt.s32.totalorder %s425, 1
          %s429 = scalar_select %p428, %s425, 1
          %s430 = smul.addr %s427, 2
          %s431 = sadd.s32 %s429, %s430
          %s432 = smul.addr %s431, 8
          %s433 = scalar_lea.vmem %s0, %s432
          %p434 = scmp.lt.s32.totalorder %s33, 0
          %s435 = scalar_select %p434, %s33, 0
          %s436 = smul.u32 2, %s32
          %s437 = smul.u32 2, %s435
        $region48: #{tpu_custom_call.1} parent=43 // pred_fallthru
          _
        // Predicated region
        $region49: #{tpu_custom_call.1} parent=43 // pred_check
          %p438 = pneg %p119
        $region50: #{tpu_custom_call.1} parent=43 // pred_check_branch
          %440 = sbr.rel (%p438) target = $region52
        $region51: #{tpu_custom_call.1} parent=43 // pred_region
          %s441 = sand.u32 %s109, 1
          %s442 = scalar_lea.sflag [#allocation6], %s441
          %s443 = sand.u32 %s109, 1
          %s444 = smul.addr %s443, 1152
          %s445 = scalar_lea.vmem [#allocation5], %s444
          %p446 = scmp.lt.s32.totalorder %s33, 0
          %s447 = scalar_select %p446, %s33, 0
          %s448 = smul.u32 32, %s447
          %s450 = ssub.s32 18432, 18432
          %451 = vsyncadd %s442, %s450
          %s452 = smul.addr %s448, 9
          %s453 = smul.addr %s452, 64
          %s454 = scalar_lea.hbm %s2, %s453
          %s455 = sshll.u32 %s445, 4
          %s456 = int_to_ptr.vmem [resolvable:$true] %s455
          %461 = dma.hbm_to_vmem [thread:$0]  %s454, 18432, %s456, %s442, 576, 576, 36
        $region52: #{tpu_custom_call.1} parent=43 // pred_fallthru
          _
        // Predicated region
        $region53: #{tpu_custom_call.1} parent=43 // pred_check
          %p462 = pneg %p172
        $region54: #{tpu_custom_call.1} parent=43 // pred_check_branch
          %464 = sbr.rel (%p462) target = $region56
        $region55: #{tpu_custom_call.1} parent=43 // pred_region
          %s465 = sand.u32 %s162, 1
          %s466 = scalar_lea.sflag [#allocation9], %s465
          %s467 = sand.u32 %s162, 1
          %s468 = smul.addr %s467, 1024
          %s469 = scalar_lea.vmem [#allocation8], %s468
          %s470 = ssub.s32 %s33, 1
          %p471 = scmp.gt.s32.totalorder %s470, 0
          %s472 = scalar_select %p471, %s470, 0
          %s473 = smul.u32 2, %s472
          %s475 = ssub.s32 16384, 16384
          %476 = vsyncadd %s466, %s475
          %s477 = smul.addr %s473, 64
          %s478 = scalar_lea.hbm %s4, %s477
          %s479 = sshll.u32 %s469, 4
          %s480 = int_to_ptr.vmem [resolvable:$true] %s479
          %485 = dma.hbm_to_vmem [thread:$0]  %s478, 16384, %s480, %s466, 128, 128, 8
        $region56: #{tpu_custom_call.1} parent=43 // pred_fallthru
          _
        // Predicated region
        $region57: #{tpu_custom_call.1} parent=43 // pred_check
          %p486 = pneg %p204
        $region58: #{tpu_custom_call.1} parent=43 // pred_check_branch
          %488 = sbr.rel (%p486) target = $region60
        $region59: #{tpu_custom_call.1} parent=43 // pred_region
          %s489 = ssub.s32 %s33, 1
          %p490 = scmp.gt.s32.totalorder %s489, 0
          %s491 = scalar_select %p490, %s489, 0
          %s492 = smul.u32 2, %s491
          %p493 = scmp.lt.s32.totalorder %s492, 1
          %s494 = scalar_select %p493, %s492, 1
          %s495 = scalar_lea.vmem %s5, %s494
          %s496 = ssub.s32 %s33, 1
          %p497 = scmp.gt.s32.totalorder %s496, 0
          %s498 = scalar_select %p497, %s496, 0
          %s499 = smul.u32 2, %s498
        $region60: #{tpu_custom_call.1} parent=43 // pred_fallthru
          _
        // Predicated region
        $region61: #{tpu_custom_call.1} parent=43 // pred_check
          %p500 = pneg %p278
        $region62: #{tpu_custom_call.1} parent=43 // pred_check_branch
          %502 = sbr.rel (%p500) target = $region64
        $region63: #{tpu_custom_call.1} parent=43 // pred_region
          %s503 = ssub.s32 %s33, 1
          %p504 = scmp.gt.s32.totalorder %s503, 0
          %s505 = scalar_select %p504, %s503, 0
          %s506 = smul.u32 32, %s505
          %p507 = scmp.lt.s32.totalorder %s506, 31
          %s508 = scalar_select %p507, %s506, 31
          %s509 = smul.addr %s508, 4
          %s510 = scalar_lea.vmem %s8, %s509
          %s511 = ssub.s32 %s33, 1
          %p512 = scmp.gt.s32.totalorder %s511, 0
          %s513 = scalar_select %p512, %s511, 0
          %s514 = smul.u32 32, %s513
        $region64: #{tpu_custom_call.1} parent=43 // pred_fallthru
          _
      $region44: #{tpu_custom_call.1} parent=5 // pred_fallthru
        _
      %p515 = scmp.le.s32.totalorder 1, %s25
      %p516 = scmp.lt.s32.totalorder %s25, 3
      %p517 = pnand %p515, %p516
      %p518 = pneg %p517
      // Predicated region
      $region65: #{tpu_custom_call.1} parent=5 // pred_check
        _
      $region66: #{tpu_custom_call.1} parent=5 // pred_check_branch
        %520 = sbr.rel (%p517) target = $region68
      $region67: #{tpu_custom_call.1} parent=5 // pred_region
        %s521 = ssub.s32 %s25, 1
        %s522 = sand.u32 %s112, 1
        %s523 = scalar_lea.sflag [#allocation6], %s522
        %s524 = sand.u32 %s112, 1
        %s525 = smul.addr %s524, 1152
        %s526 = scalar_lea.vmem [#allocation5], %s525
        // Predicated region
        $region69: #{tpu_custom_call.1} parent=67 // pred_check
          %p527 = pneg %p125
        $region70: #{tpu_custom_call.1} parent=67 // pred_check_branch
          %529 = sbr.rel (%p527) target = $region72
        $region71: #{tpu_custom_call.1} parent=67 // pred_region
          %530 = dma.done %s523, 18432
        $region72: #{tpu_custom_call.1} parent=67 // pred_fallthru
          _
        %s531 = sand.u32 %s165, 1
        %s532 = scalar_lea.sflag [#allocation9], %s531
        %s533 = sand.u32 %s165, 1
        %s534 = smul.addr %s533, 1024
        %s535 = scalar_lea.vmem [#allocation8], %s534
        // Predicated region
        $region73: #{tpu_custom_call.1} parent=67 // pred_check
          %p536 = pneg %p178
        $region74: #{tpu_custom_call.1} parent=67 // pred_check_branch
          %538 = sbr.rel (%p536) target = $region76
        $region75: #{tpu_custom_call.1} parent=67 // pred_region
          %539 = dma.done %s532, 16384
        $region76: #{tpu_custom_call.1} parent=67 // pred_fallthru
          _
        %p540 = scmp.lt.s32.totalorder %s35, 0
        %s541 = scalar_select %p540, %s35, 0
        %s542 = smul.u32 2, %s34
        %s543 = smul.u32 2, %s541
        %p544 = scmp.lt.s32.totalorder %s542, 1
        %s545 = scalar_select %p544, %s542, 1
        %p546 = scmp.lt.s32.totalorder %s543, 1
        %s547 = scalar_select %p546, %s543, 1
        %s548 = smul.addr %s545, 2
        %s549 = sadd.s32 %s547, %s548
        %s550 = smul.addr %s549, 8
        %s551 = scalar_lea.vmem %s0, %s550
        %p552 = pneg %p69
        %p553 = pneg %p66
        %s554 = smul.u32 2, %s34
        %p555 = scmp.lt.s32.totalorder %s554, 1
        %s556 = scalar_select %p555, %s554, 1
        %s557 = smul.addr %s556, 8
        %s558 = scalar_lea.vmem %s1, %s557
        %p559 = pneg %p95
        %p560 = pneg %p92
        %s561 = sand.u32 %s112, 1
        %s562 = scalar_lea.sflag [#allocation6], %s561
        %s563 = sand.u32 %s112, 1
        %s564 = smul.addr %s563, 1152
        %s565 = scalar_lea.vmem [#allocation5], %s564
        %p566 = pneg %p125
        %p567 = pneg %p122
        %p568 = pneg %p146
        %p569 = pneg %p143
        %s570 = sand.u32 %s165, 1
        %s571 = scalar_lea.sflag [#allocation9], %s570
        %s572 = sand.u32 %s165, 1
        %s573 = smul.addr %s572, 1024
        %s574 = scalar_lea.vmem [#allocation8], %s573
        %p575 = pneg %p178
        %p576 = pneg %p175
        %s577 = ssub.s32 %s35, 1
        %p578 = scmp.gt.s32.totalorder %s577, 0
        %s579 = scalar_select %p578, %s577, 0
        %s580 = smul.u32 2, %s579
        %p581 = scmp.lt.s32.totalorder %s580, 1
        %s582 = scalar_select %p581, %s580, 1
        %s583 = scalar_lea.vmem %s5, %s582
        %p584 = pneg %p210
        %p585 = pneg %p207
        %p586 = pneg %p231
        %p587 = pneg %p228
        %p588 = pneg %p252
        %p589 = pneg %p249
        %s590 = ssub.s32 %s35, 1
        %p591 = scmp.gt.s32.totalorder %s590, 0
        %s592 = scalar_select %p591, %s590, 0
        %s593 = smul.u32 32, %s592
        %p594 = scmp.lt.s32.totalorder %s593, 31
        %s595 = scalar_select %p594, %s593, 31
        %s596 = smul.addr %s595, 4
        %s597 = scalar_lea.vmem %s8, %s596
        %p598 = pneg %p284
        %p599 = pneg %p281
        %p600 = pneg %p305
        %p601 = pneg %p302
        %p602 = pneg %p326
        %p603 = pneg %p323
        %p604 = pneg %p347
        %p605 = pneg %p344
        %p606 = pneg %p373
        %p607 = pneg %p370
        %p608 = scmp.lt.s32.totalorder %s35, 0
        %s609 = scalar_select %p608, %s35, 0
        %s610 = smul.u32 2, %s34
        %s611 = smul.u32 2, %s609
        %p612 = scmp.lt.s32.totalorder %s610, 1
        %s613 = scalar_select %p612, %s610, 1
        %p614 = scmp.lt.s32.totalorder %s611, 1
        %s615 = scalar_select %p614, %s611, 1
        %s616 = smul.addr %s613, 2
        %s617 = sadd.s32 %s615, %s616
        %s618 = smul.addr %s617, 8
        %s619 = scalar_lea.vmem %s0, %s618
        %p620 = scmp.lt.s32.totalorder %s35, 0
        %s621 = scalar_select %p620, %s35, 0
        %s622 = smul.u32 2, %s34
        %s623 = smul.u32 2, %s621
        %s624 = smul.u32 2, %s34
        %p625 = scmp.lt.s32.totalorder %s624, 1
        %s626 = scalar_select %p625, %s624, 1
        %s627 = smul.addr %s626, 8
        %s628 = scalar_lea.vmem %s1, %s627
        %s629 = smul.u32 2, %s34
        %p630 = scmp.lt.s32.totalorder %s35, 0
        %s631 = scalar_select %p630, %s35, 0
        %s632 = smul.u32 32, %s631
        %s633 = ssub.s32 %s35, 1
        %p634 = scmp.gt.s32.totalorder %s633, 0
        %s635 = scalar_select %p634, %s633, 0
        %s636 = smul.u32 2, %s635
        %s637 = ssub.s32 %s35, 1
        %p638 = scmp.gt.s32.totalorder %s637, 0
        %s639 = scalar_select %p638, %s637, 0
        %s640 = smul.u32 2, %s639
        %p641 = scmp.lt.s32.totalorder %s640, 1
        %s642 = scalar_select %p641, %s640, 1
        %s643 = scalar_lea.vmem %s5, %s642
        %s644 = ssub.s32 %s35, 1
        %p645 = scmp.gt.s32.totalorder %s644, 0
        %s646 = scalar_select %p645, %s644, 0
        %s647 = smul.u32 2, %s646
        %s648 = ssub.s32 %s35, 1
        %p649 = scmp.gt.s32.totalorder %s648, 0
        %s650 = scalar_select %p649, %s648, 0
        %s651 = smul.u32 32, %s650
        %p652 = scmp.lt.s32.totalorder %s651, 31
        %s653 = scalar_select %p652, %s651, 31
        %s654 = smul.addr %s653, 4
        %s655 = scalar_lea.vmem %s8, %s654
        %s656 = ssub.s32 %s35, 1
        %p657 = scmp.gt.s32.totalorder %s656, 0
        %s658 = scalar_select %p657, %s656, 0
        %s659 = smul.u32 32, %s658
        %s660 = smul.u32 2, %s34
        %p662 = scmp.eq.s32.totalorder %s35, 0
        // Predicated region
        $region77: #{tpu_custom_call.1} parent=67 // pred_check
          %p663 = pneg %p662
        $region78: #{tpu_custom_call.1} parent=67 // pred_check_branch
          %665 = sbr.rel (%p663) target = $region80
        $region79: #{tpu_custom_call.1} parent=67 // pred_region
          %666 = vst [vmem:[#allocation2] sm:$0xff] 0.0
          %667 = vst [vmem:[#allocation2 + $0x8] sm:$0xff] 0.0
          %668 = vst [vmem:[#allocation2 + $0x10] sm:$0xff] 0.0
          %669 = vst [vmem:[#allocation2 + $0x18] sm:$0xff] 0.0
          %670 = vst [vmem:[#allocation2 + $0x20] sm:$0xff] 0.0
          %671 = vst [vmem:[#allocation2 + $0x28] sm:$0xff] 0.0
          %672 = vst [vmem:[#allocation2 + $0x30] sm:$0xff] 0.0
          %673 = vst [vmem:[#allocation2 + $0x38] sm:$0xff] 0.0
          %674 = vst [vmem:[#allocation2 + $0x40] sm:$0xff] 0.0
          %675 = vst [vmem:[#allocation2 + $0x48] sm:$0xff] 0.0
          %676 = vst [vmem:[#allocation2 + $0x50] sm:$0xff] 0.0
          %677 = vst [vmem:[#allocation2 + $0x58] sm:$0xff] 0.0
          %678 = vst [vmem:[#allocation2 + $0x60] sm:$0xff] 0.0
          %679 = vst [vmem:[#allocation2 + $0x68] sm:$0xff] 0.0
          %680 = vst [vmem:[#allocation2 + $0x70] sm:$0xff] 0.0
          %681 = vst [vmem:[#allocation2 + $0x78] sm:$0xff] 0.0
          %682 = vst [vmem:[#allocation2 + $0x80] sm:$0xff] 0.0
          %683 = vst [vmem:[#allocation2 + $0x88] sm:$0xff] 0.0
          %vm684 = vcmask 523264
          %685 = vst.msk [vmem:[#allocation4] sm:$0xff] %vm684, 0.0
          %686 = vst.msk [vmem:[#allocation4 + $0x8] sm:$0xff] %vm684, 0.0
        $region80: #{tpu_custom_call.1} parent=67 // pred_fallthru
          _
        %p687 = scmp.lt.s32.totalorder %s35, 1
        // Predicated region
        $region81: #{tpu_custom_call.1} parent=67 // pred_check
          %p688 = pneg %p687
        $region82: #{tpu_custom_call.1} parent=67 // pred_check_branch
          %690 = sbr.rel (%p688) target = $region84
        $region83: #{tpu_custom_call.1} parent=67 // pred_region
          %v691 = vld [vmem:[%s619] sm:$0xff]
          %v692 = vld [vmem:[%s619 + $0x8] sm:$0xff]
          %v693 = vld [vmem:[%s619 + $0x10] sm:$0xff]
          %v694 = vld [vmem:[%s619 + $0x18] sm:$0xff]
          %v695 = vadd.f32 %v691, 1.0
          %v696 = vadd.f32 %v692, 1.0
          %v697 = vadd.f32 %v693, 1.0
          %v698 = vadd.f32 %v694, 1.0
          %v699 = vlog2.pop %v695
          %v700 = vmul.f32 %v699, 0.6931472
          %v701 = vlog2.pop %v696
          %v702 = vmul.f32 %v701, 0.6931472
          %v703 = vlog2.pop %v697
          %v704 = vmul.f32 %v703, 0.6931472
          %v705 = vlog2.pop %v698
          %v706 = vmul.f32 %v705, 0.6931472
          %v707 = vld [vmem:[#allocation2] sm:$0xff]
          %v708 = vld [vmem:[#allocation2 + $0x8] sm:$0xff]
          %v709 = vld [vmem:[#allocation2 + $0x10] sm:$0xff]
          %v710 = vld [vmem:[#allocation2 + $0x18] sm:$0xff]
          %v711 = vld [vmem:[#allocation2 + $0x20] sm:$0xff]
          %v712 = vld [vmem:[#allocation2 + $0x28] sm:$0xff]
          %v713 = vld [vmem:[#allocation2 + $0x30] sm:$0xff]
          %v714 = vld [vmem:[#allocation2 + $0x38] sm:$0xff]
          %v715 = vld [vmem:[#allocation2 + $0x40] sm:$0xff]
          %v716 = vld [vmem:[#allocation2 + $0x48] sm:$0xff]
          %v717 = vld [vmem:[#allocation2 + $0x50] sm:$0xff]
          %v718 = vld [vmem:[#allocation2 + $0x58] sm:$0xff]
          %v719 = vld [vmem:[#allocation2 + $0x60] sm:$0xff]
          %v720 = vld [vmem:[#allocation2 + $0x68] sm:$0xff]
          %v721 = vld [vmem:[#allocation2 + $0x70] sm:$0xff]
          %v722 = vld [vmem:[#allocation2 + $0x78] sm:$0xff]
          %v723 = vld [vmem:[#allocation2 + $0x80] sm:$0xff]
          %v724 = vld [vmem:[#allocation2 + $0x88] sm:$0xff]
          %v725 = vpack.c.bf16 %v704, %v700
          %v726 = vpack.c.bf16 %v706, %v702
          %v727 = vld [vmem:[%s526] sm:$0xff]
          %v728 = vld [vmem:[%s526 + $0x8] sm:$0xff]
          %v729 = vld [vmem:[%s526 + $0x10] sm:$0xff]
          %v730 = vld [vmem:[%s526 + $0x18] sm:$0xff]
          %v731 = vld [vmem:[%s526 + $0x20] sm:$0xf]
          %v732 = vld [vmem:[%s526 + $0x24] sm:$0xff]
          %v733 = vld [vmem:[%s526 + $0x2c] sm:$0xff]
          %v734 = vld [vmem:[%s526 + $0x34] sm:$0xff]
          %v735 = vld [vmem:[%s526 + $0x3c] sm:$0xff]
          %v736 = vld [vmem:[%s526 + $0x44] sm:$0xf]
          %v737 = vld [vmem:[%s526 + $0x48] sm:$0xff]
          %v738 = vld [vmem:[%s526 + $0x50] sm:$0xff]
          %v739 = vld [vmem:[%s526 + $0x58] sm:$0xff]
          %v740 = vld [vmem:[%s526 + $0x60] sm:$0xff]
          %v741 = vld [vmem:[%s526 + $0x68] sm:$0xf]
          %v742 = vld [vmem:[%s526 + $0x6c] sm:$0xff]
          %v743 = vld [vmem:[%s526 + $0x74] sm:$0xff]
          %v744 = vld [vmem:[%s526 + $0x7c] sm:$0xff]
          %v745 = vld [vmem:[%s526 + $0x84] sm:$0xff]
          %v746 = vld [vmem:[%s526 + $0x8c] sm:$0xf]
          %v747 = vld [vmem:[%s526 + $0x90] sm:$0xff]
          %v748 = vld [vmem:[%s526 + $0x98] sm:$0xff]
          %v749 = vld [vmem:[%s526 + $0xa0] sm:$0xff]
          %v750 = vld [vmem:[%s526 + $0xa8] sm:$0xff]
          %v751 = vld [vmem:[%s526 + $0xb0] sm:$0xf]
          %v752 = vld [vmem:[%s526 + $0xb4] sm:$0xff]
          %v753 = vld [vmem:[%s526 + $0xbc] sm:$0xff]
          %v754 = vld [vmem:[%s526 + $0xc4] sm:$0xff]
          %v755 = vld [vmem:[%s526 + $0xcc] sm:$0xff]
          %v756 = vld [vmem:[%s526 + $0xd4] sm:$0xf]
          %v757 = vld [vmem:[%s526 + $0xd8] sm:$0xff]
          %v758 = vld [vmem:[%s526 + $0xe0] sm:$0xff]
          %v759 = vld [vmem:[%s526 + $0xe8] sm:$0xff]
          %v760 = vld [vmem:[%s526 + $0xf0] sm:$0xff]
          %v761 = vld [vmem:[%s526 + $0xf8] sm:$0xf]
          %v762 = vld [vmem:[%s526 + $0xfc] sm:$0xff]
          %v763 = vld [vmem:[%s526 + $0x104] sm:$0xff]
          %v764 = vld [vmem:[%s526 + $0x10c] sm:$0xff]
          %v765 = vld [vmem:[%s526 + $0x114] sm:$0xff]
          %v766 = vld [vmem:[%s526 + $0x11c] sm:$0xf]
          %v767 = vld [vmem:[%s526 + $0x120] sm:$0xff]
          %v768 = vld [vmem:[%s526 + $0x128] sm:$0xff]
          %v769 = vld [vmem:[%s526 + $0x130] sm:$0xff]
          %v770 = vld [vmem:[%s526 + $0x138] sm:$0xff]
          %v771 = vld [vmem:[%s526 + $0x140] sm:$0xf]
          %v772 = vld [vmem:[%s526 + $0x144] sm:$0xff]
          %v773 = vld [vmem:[%s526 + $0x14c] sm:$0xff]
          %v774 = vld [vmem:[%s526 + $0x154] sm:$0xff]
          %v775 = vld [vmem:[%s526 + $0x15c] sm:$0xff]
          %v776 = vld [vmem:[%s526 + $0x164] sm:$0xf]
          %v777 = vld [vmem:[%s526 + $0x168] sm:$0xff]
          %v778 = vld [vmem:[%s526 + $0x170] sm:$0xff]
          %v779 = vld [vmem:[%s526 + $0x178] sm:$0xff]
          %v780 = vld [vmem:[%s526 + $0x180] sm:$0xff]
          %v781 = vld [vmem:[%s526 + $0x188] sm:$0xf]
          %v782 = vld [vmem:[%s526 + $0x18c] sm:$0xff]
          %v783 = vld [vmem:[%s526 + $0x194] sm:$0xff]
          %v784 = vld [vmem:[%s526 + $0x19c] sm:$0xff]
          %v785 = vld [vmem:[%s526 + $0x1a4] sm:$0xff]
          %v786 = vld [vmem:[%s526 + $0x1ac] sm:$0xf]
          %v787 = vld [vmem:[%s526 + $0x1b0] sm:$0xff]
          %v788 = vld [vmem:[%s526 + $0x1b8] sm:$0xff]
          %v789 = vld [vmem:[%s526 + $0x1c0] sm:$0xff]
          %v790 = vld [vmem:[%s526 + $0x1c8] sm:$0xff]
          %v791 = vld [vmem:[%s526 + $0x1d0] sm:$0xf]
          %v792 = vld [vmem:[%s526 + $0x1d4] sm:$0xff]
          %v793 = vld [vmem:[%s526 + $0x1dc] sm:$0xff]
          %v794 = vld [vmem:[%s526 + $0x1e4] sm:$0xff]
          %v795 = vld [vmem:[%s526 + $0x1ec] sm:$0xff]
          %v796 = vld [vmem:[%s526 + $0x1f4] sm:$0xf]
          %v797 = vld [vmem:[%s526 + $0x1f8] sm:$0xff]
          %v798 = vld [vmem:[%s526 + $0x200] sm:$0xff]
          %v799 = vld [vmem:[%s526 + $0x208] sm:$0xff]
          %v800 = vld [vmem:[%s526 + $0x210] sm:$0xff]
          %v801 = vld [vmem:[%s526 + $0x218] sm:$0xf]
          %v802 = vld [vmem:[%s526 + $0x21c] sm:$0xff]
          %v803 = vld [vmem:[%s526 + $0x224] sm:$0xff]
          %v804 = vld [vmem:[%s526 + $0x22c] sm:$0xff]
          %v805 = vld [vmem:[%s526 + $0x234] sm:$0xff]
          %v806 = vld [vmem:[%s526 + $0x23c] sm:$0xf]
          %v807 = vld [vmem:[%s526 + $0x240] sm:$0xff]
          %v808 = vld [vmem:[%s526 + $0x248] sm:$0xff]
          %v809 = vld [vmem:[%s526 + $0x250] sm:$0xff]
          %v810 = vld [vmem:[%s526 + $0x258] sm:$0xff]
          %v811 = vld [vmem:[%s526 + $0x260] sm:$0xf]
          %v812 = vld [vmem:[%s526 + $0x264] sm:$0xff]
          %v813 = vld [vmem:[%s526 + $0x26c] sm:$0xff]
          %v814 = vld [vmem:[%s526 + $0x274] sm:$0xff]
          %v815 = vld [vmem:[%s526 + $0x27c] sm:$0xff]
          %v816 = vld [vmem:[%s526 + $0x284] sm:$0xf]
          %v817 = vld [vmem:[%s526 + $0x288] sm:$0xff]
          %v818 = vld [vmem:[%s526 + $0x290] sm:$0xff]
          %v819 = vld [vmem:[%s526 + $0x298] sm:$0xff]
          %v820 = vld [vmem:[%s526 + $0x2a0] sm:$0xff]
          %v821 = vld [vmem:[%s526 + $0x2a8] sm:$0xf]
          %v822 = vld [vmem:[%s526 + $0x2ac] sm:$0xff]
          %v823 = vld [vmem:[%s526 + $0x2b4] sm:$0xff]
          %v824 = vld [vmem:[%s526 + $0x2bc] sm:$0xff]
          %v825 = vld [vmem:[%s526 + $0x2c4] sm:$0xff]
          %v826 = vld [vmem:[%s526 + $0x2cc] sm:$0xf]
          %v827 = vld [vmem:[%s526 + $0x2d0] sm:$0xff]
          %v828 = vld [vmem:[%s526 + $0x2d8] sm:$0xff]
          %v829 = vld [vmem:[%s526 + $0x2e0] sm:$0xff]
          %v830 = vld [vmem:[%s526 + $0x2e8] sm:$0xff]
          %v831 = vld [vmem:[%s526 + $0x2f0] sm:$0xf]
          %v832 = vld [vmem:[%s526 + $0x2f4] sm:$0xff]
          %v833 = vld [vmem:[%s526 + $0x2fc] sm:$0xff]
          %v834 = vld [vmem:[%s526 + $0x304] sm:$0xff]
          %v835 = vld [vmem:[%s526 + $0x30c] sm:$0xff]
          %v836 = vld [vmem:[%s526 + $0x314] sm:$0xf]
          %v837 = vld [vmem:[%s526 + $0x318] sm:$0xff]
          %v838 = vld [vmem:[%s526 + $0x320] sm:$0xff]
          %v839 = vld [vmem:[%s526 + $0x328] sm:$0xff]
          %v840 = vld [vmem:[%s526 + $0x330] sm:$0xff]
          %v841 = vld [vmem:[%s526 + $0x338] sm:$0xf]
          %v842 = vld [vmem:[%s526 + $0x33c] sm:$0xff]
          %v843 = vld [vmem:[%s526 + $0x344] sm:$0xff]
          %v844 = vld [vmem:[%s526 + $0x34c] sm:$0xff]
          %v845 = vld [vmem:[%s526 + $0x354] sm:$0xff]
          %v846 = vld [vmem:[%s526 + $0x35c] sm:$0xf]
          %v847 = vld [vmem:[%s526 + $0x360] sm:$0xff]
          %v848 = vld [vmem:[%s526 + $0x368] sm:$0xff]
          %v849 = vld [vmem:[%s526 + $0x370] sm:$0xff]
          %v850 = vld [vmem:[%s526 + $0x378] sm:$0xff]
          %v851 = vld [vmem:[%s526 + $0x380] sm:$0xf]
          %v852 = vld [vmem:[%s526 + $0x384] sm:$0xff]
          %v853 = vld [vmem:[%s526 + $0x38c] sm:$0xff]
          %v854 = vld [vmem:[%s526 + $0x394] sm:$0xff]
          %v855 = vld [vmem:[%s526 + $0x39c] sm:$0xff]
          %v856 = vld [vmem:[%s526 + $0x3a4] sm:$0xf]
          %v857 = vld [vmem:[%s526 + $0x3a8] sm:$0xff]
          %v858 = vld [vmem:[%s526 + $0x3b0] sm:$0xff]
          %v859 = vld [vmem:[%s526 + $0x3b8] sm:$0xff]
          %v860 = vld [vmem:[%s526 + $0x3c0] sm:$0xff]
          %v861 = vld [vmem:[%s526 + $0x3c8] sm:$0xf]
          %v862 = vld [vmem:[%s526 + $0x3cc] sm:$0xff]
          %v863 = vld [vmem:[%s526 + $0x3d4] sm:$0xff]
          %v864 = vld [vmem:[%s526 + $0x3dc] sm:$0xff]
          %v865 = vld [vmem:[%s526 + $0x3e4] sm:$0xff]
          %v866 = vld [vmem:[%s526 + $0x3ec] sm:$0xf]
          %v867 = vld [vmem:[%s526 + $0x3f0] sm:$0xff]
          %v868 = vld [vmem:[%s526 + $0x3f8] sm:$0xff]
          %v869 = vld [vmem:[%s526 + $0x400] sm:$0xff]
          %v870 = vld [vmem:[%s526 + $0x408] sm:$0xff]
          %v871 = vld [vmem:[%s526 + $0x410] sm:$0xf]
          %v872 = vld [vmem:[%s526 + $0x414] sm:$0xff]
          %v873 = vld [vmem:[%s526 + $0x41c] sm:$0xff]
          %v874 = vld [vmem:[%s526 + $0x424] sm:$0xff]
          %v875 = vld [vmem:[%s526 + $0x42c] sm:$0xff]
          %v876 = vld [vmem:[%s526 + $0x434] sm:$0xf]
          %v877 = vld [vmem:[%s526 + $0x438] sm:$0xff]
          %v878 = vld [vmem:[%s526 + $0x440] sm:$0xff]
          %v879 = vld [vmem:[%s526 + $0x448] sm:$0xff]
          %v880 = vld [vmem:[%s526 + $0x450] sm:$0xff]
          %v881 = vld [vmem:[%s526 + $0x458] sm:$0xf]
          %v882 = vld [vmem:[%s526 + $0x45c] sm:$0xff]
          %v883 = vld [vmem:[%s526 + $0x464] sm:$0xff]
          %v884 = vld [vmem:[%s526 + $0x46c] sm:$0xff]
          %v885 = vld [vmem:[%s526 + $0x474] sm:$0xff]
          %v886 = vld [vmem:[%s526 + $0x47c] sm:$0xf]
          %v1047 = vunpack.c.l.b16 %v727
          %v1048 = vunpack.c.h.b16 %v727
          %v1049 = vunpack.c.l.b16 %v728
          %v1050 = vunpack.c.h.b16 %v728
          %v1051 = vunpack.c.l.b16 %v729
          %v1052 = vunpack.c.h.b16 %v729
          %v1053 = vunpack.c.l.b16 %v730
          %v1054 = vunpack.c.h.b16 %v730
          %v1055 = vunpack.c.l.b16 %v731
          %v1056 = vunpack.c.l.b16 %v732
          %v1057 = vunpack.c.h.b16 %v732
          %v1058 = vunpack.c.l.b16 %v733
          %v1059 = vunpack.c.h.b16 %v733
          %v1060 = vunpack.c.l.b16 %v734
          %v1061 = vunpack.c.h.b16 %v734
          %v1062 = vunpack.c.l.b16 %v735
          %v1063 = vunpack.c.h.b16 %v735
          %v1064 = vunpack.c.l.b16 %v736
          %v1065 = vunpack.c.l.b16 %v737
          %v1066 = vunpack.c.h.b16 %v737
          %v1067 = vunpack.c.l.b16 %v738
          %v1068 = vunpack.c.h.b16 %v738
          %v1069 = vunpack.c.l.b16 %v739
          %v1070 = vunpack.c.h.b16 %v739
          %v1071 = vunpack.c.l.b16 %v740
          %v1072 = vunpack.c.h.b16 %v740
          %v1073 = vunpack.c.l.b16 %v741
          %v1074 = vunpack.c.l.b16 %v742
          %v1075 = vunpack.c.h.b16 %v742
          %v1076 = vunpack.c.l.b16 %v743
          %v1077 = vunpack.c.h.b16 %v743
          %v1078 = vunpack.c.l.b16 %v744
          %v1079 = vunpack.c.h.b16 %v744
          %v1080 = vunpack.c.l.b16 %v745
          %v1081 = vunpack.c.h.b16 %v745
          %v1082 = vunpack.c.l.b16 %v746
          %v1083 = vunpack.c.l.b16 %v747
          %v1084 = vunpack.c.h.b16 %v747
          %v1085 = vunpack.c.l.b16 %v748
          %v1086 = vunpack.c.h.b16 %v748
          %v1087 = vunpack.c.l.b16 %v749
          %v1088 = vunpack.c.h.b16 %v749
          %v1089 = vunpack.c.l.b16 %v750
          %v1090 = vunpack.c.h.b16 %v750
          %v1091 = vunpack.c.l.b16 %v751
          %v1092 = vunpack.c.l.b16 %v752
          %v1093 = vunpack.c.h.b16 %v752
          %v1094 = vunpack.c.l.b16 %v753
          %v1095 = vunpack.c.h.b16 %v753
          %v1096 = vunpack.c.l.b16 %v754
          %v1097 = vunpack.c.h.b16 %v754
          %v1098 = vunpack.c.l.b16 %v755
          %v1099 = vunpack.c.h.b16 %v755
          %v1100 = vunpack.c.l.b16 %v756
          %v1101 = vunpack.c.l.b16 %v757
          %v1102 = vunpack.c.h.b16 %v757
          %v1103 = vunpack.c.l.b16 %v758
          %v1104 = vunpack.c.h.b16 %v758
          %v1105 = vunpack.c.l.b16 %v759
          %v1106 = vunpack.c.h.b16 %v759
          %v1107 = vunpack.c.l.b16 %v760
          %v1108 = vunpack.c.h.b16 %v760
          %v1109 = vunpack.c.l.b16 %v761
          %v1110 = vunpack.c.l.b16 %v762
          %v1111 = vunpack.c.h.b16 %v762
          %v1112 = vunpack.c.l.b16 %v763
          %v1113 = vunpack.c.h.b16 %v763
          %v1114 = vunpack.c.l.b16 %v764
          %v1115 = vunpack.c.h.b16 %v764
          %v1116 = vunpack.c.l.b16 %v765
          %v1117 = vunpack.c.h.b16 %v765
          %v1118 = vunpack.c.l.b16 %v766
          %v1119 = vunpack.c.l.b16 %v767
          %v1120 = vunpack.c.h.b16 %v767
          %v1121 = vunpack.c.l.b16 %v768
          %v1122 = vunpack.c.h.b16 %v768
          %v1123 = vunpack.c.l.b16 %v769
          %v1124 = vunpack.c.h.b16 %v769
          %v1125 = vunpack.c.l.b16 %v770
          %v1126 = vunpack.c.h.b16 %v770
          %v1127 = vunpack.c.l.b16 %v771
          %v1128 = vunpack.c.l.b16 %v772
          %v1129 = vunpack.c.h.b16 %v772
          %v1130 = vunpack.c.l.b16 %v773
          %v1131 = vunpack.c.h.b16 %v773
          %v1132 = vunpack.c.l.b16 %v774
          %v1133 = vunpack.c.h.b16 %v774
          %v1134 = vunpack.c.l.b16 %v775
          %v1135 = vunpack.c.h.b16 %v775
          %v1136 = vunpack.c.l.b16 %v776
          %v1137 = vunpack.c.l.b16 %v777
          %v1138 = vunpack.c.h.b16 %v777
          %v1139 = vunpack.c.l.b16 %v778
          %v1140 = vunpack.c.h.b16 %v778
          %v1141 = vunpack.c.l.b16 %v779
          %v1142 = vunpack.c.h.b16 %v779
          %v1143 = vunpack.c.l.b16 %v780
          %v1144 = vunpack.c.h.b16 %v780
          %v1145 = vunpack.c.l.b16 %v781
          %v1146 = vunpack.c.l.b16 %v782
          %v1147 = vunpack.c.h.b16 %v782
          %v1148 = vunpack.c.l.b16 %v783
          %v1149 = vunpack.c.h.b16 %v783
          %v1150 = vunpack.c.l.b16 %v784
          %v1151 = vunpack.c.h.b16 %v784
          %v1152 = vunpack.c.l.b16 %v785
          %v1153 = vunpack.c.h.b16 %v785
          %v1154 = vunpack.c.l.b16 %v786
          %v1155 = vunpack.c.l.b16 %v787
          %v1156 = vunpack.c.h.b16 %v787
          %v1157 = vunpack.c.l.b16 %v788
          %v1158 = vunpack.c.h.b16 %v788
          %v1159 = vunpack.c.l.b16 %v789
          %v1160 = vunpack.c.h.b16 %v789
          %v1161 = vunpack.c.l.b16 %v790
          %v1162 = vunpack.c.h.b16 %v790
          %v1163 = vunpack.c.l.b16 %v791
          %v1164 = vunpack.c.l.b16 %v792
          %v1165 = vunpack.c.h.b16 %v792
          %v1166 = vunpack.c.l.b16 %v793
          %v1167 = vunpack.c.h.b16 %v793
          %v1168 = vunpack.c.l.b16 %v794
          %v1169 = vunpack.c.h.b16 %v794
          %v1170 = vunpack.c.l.b16 %v795
          %v1171 = vunpack.c.h.b16 %v795
          %v1172 = vunpack.c.l.b16 %v796
          %v1173 = vunpack.c.l.b16 %v797
          %v1174 = vunpack.c.h.b16 %v797
          %v1175 = vunpack.c.l.b16 %v798
          %v1176 = vunpack.c.h.b16 %v798
          %v1177 = vunpack.c.l.b16 %v799
          %v1178 = vunpack.c.h.b16 %v799
          %v1179 = vunpack.c.l.b16 %v800
          %v1180 = vunpack.c.h.b16 %v800
          %v1181 = vunpack.c.l.b16 %v801
          %v1182 = vunpack.c.l.b16 %v802
          %v1183 = vunpack.c.h.b16 %v802
          %v1184 = vunpack.c.l.b16 %v803
          %v1185 = vunpack.c.h.b16 %v803
          %v1186 = vunpack.c.l.b16 %v804
          %v1187 = vunpack.c.h.b16 %v804
          %v1188 = vunpack.c.l.b16 %v805
          %v1189 = vunpack.c.h.b16 %v805
          %v1190 = vunpack.c.l.b16 %v806
          %v1191 = vunpack.c.l.b16 %v807
          %v1192 = vunpack.c.h.b16 %v807
          %v1193 = vunpack.c.l.b16 %v808
          %v1194 = vunpack.c.h.b16 %v808
          %v1195 = vunpack.c.l.b16 %v809
          %v1196 = vunpack.c.h.b16 %v809
          %v1197 = vunpack.c.l.b16 %v810
          %v1198 = vunpack.c.h.b16 %v810
          %v1199 = vunpack.c.l.b16 %v811
          %v1200 = vunpack.c.l.b16 %v812
          %v1201 = vunpack.c.h.b16 %v812
          %v1202 = vunpack.c.l.b16 %v813
          %v1203 = vunpack.c.h.b16 %v813
          %v1204 = vunpack.c.l.b16 %v814
          %v1205 = vunpack.c.h.b16 %v814
          %v1206 = vunpack.c.l.b16 %v815
          %v1207 = vunpack.c.h.b16 %v815
          %v1208 = vunpack.c.l.b16 %v816
          %v1209 = vunpack.c.l.b16 %v817
          %v1210 = vunpack.c.h.b16 %v817
          %v1211 = vunpack.c.l.b16 %v818
          %v1212 = vunpack.c.h.b16 %v818
          %v1213 = vunpack.c.l.b16 %v819
          %v1214 = vunpack.c.h.b16 %v819
          %v1215 = vunpack.c.l.b16 %v820
          %v1216 = vunpack.c.h.b16 %v820
          %v1217 = vunpack.c.l.b16 %v821
          %v1218 = vunpack.c.l.b16 %v822
          %v1219 = vunpack.c.h.b16 %v822
          %v1220 = vunpack.c.l.b16 %v823
          %v1221 = vunpack.c.h.b16 %v823
          %v1222 = vunpack.c.l.b16 %v824
          %v1223 = vunpack.c.h.b16 %v824
          %v1224 = vunpack.c.l.b16 %v825
          %v1225 = vunpack.c.h.b16 %v825
          %v1226 = vunpack.c.l.b16 %v826
          %v1227 = vunpack.c.l.b16 %v827
          %v1228 = vunpack.c.h.b16 %v827
          %v1229 = vunpack.c.l.b16 %v828
          %v1230 = vunpack.c.h.b16 %v828
          %v1231 = vunpack.c.l.b16 %v829
          %v1232 = vunpack.c.h.b16 %v829
          %v1233 = vunpack.c.l.b16 %v830
          %v1234 = vunpack.c.h.b16 %v830
          %v1235 = vunpack.c.l.b16 %v831
          %v1236 = vunpack.c.l.b16 %v832
          %v1237 = vunpack.c.h.b16 %v832
          %v1238 = vunpack.c.l.b16 %v833
          %v1239 = vunpack.c.h.b16 %v833
          %v1240 = vunpack.c.l.b16 %v834
          %v1241 = vunpack.c.h.b16 %v834
          %v1242 = vunpack.c.l.b16 %v835
          %v1243 = vunpack.c.h.b16 %v835
          %v1244 = vunpack.c.l.b16 %v836
          %v1245 = vunpack.c.l.b16 %v837
          %v1246 = vunpack.c.h.b16 %v837
          %v1247 = vunpack.c.l.b16 %v838
          %v1248 = vunpack.c.h.b16 %v838
          %v1249 = vunpack.c.l.b16 %v839
          %v1250 = vunpack.c.h.b16 %v839
          %v1251 = vunpack.c.l.b16 %v840
          %v1252 = vunpack.c.h.b16 %v840
          %v1253 = vunpack.c.l.b16 %v841
          %v1254 = vunpack.c.l.b16 %v842
          %v1255 = vunpack.c.h.b16 %v842
          %v1256 = vunpack.c.l.b16 %v843
          %v1257 = vunpack.c.h.b16 %v843
          %v1258 = vunpack.c.l.b16 %v844
          %v1259 = vunpack.c.h.b16 %v844
          %v1260 = vunpack.c.l.b16 %v845
          %v1261 = vunpack.c.h.b16 %v845
          %v1262 = vunpack.c.l.b16 %v846
          %v1263 = vunpack.c.l.b16 %v847
          %v1264 = vunpack.c.h.b16 %v847
          %v1265 = vunpack.c.l.b16 %v848
          %v1266 = vunpack.c.h.b16 %v848
          %v1267 = vunpack.c.l.b16 %v849
          %v1268 = vunpack.c.h.b16 %v849
          %v1269 = vunpack.c.l.b16 %v850
          %v1270 = vunpack.c.h.b16 %v850
          %v1271 = vunpack.c.l.b16 %v851
          %v1272 = vunpack.c.l.b16 %v852
          %v1273 = vunpack.c.h.b16 %v852
          %v1274 = vunpack.c.l.b16 %v853
          %v1275 = vunpack.c.h.b16 %v853
          %v1276 = vunpack.c.l.b16 %v854
          %v1277 = vunpack.c.h.b16 %v854
          %v1278 = vunpack.c.l.b16 %v855
          %v1279 = vunpack.c.h.b16 %v855
          %v1280 = vunpack.c.l.b16 %v856
          %v1281 = vunpack.c.l.b16 %v857
          %v1282 = vunpack.c.h.b16 %v857
          %v1283 = vunpack.c.l.b16 %v858
          %v1284 = vunpack.c.h.b16 %v858
          %v1285 = vunpack.c.l.b16 %v859
          %v1286 = vunpack.c.h.b16 %v859
          %v1287 = vunpack.c.l.b16 %v860
          %v1288 = vunpack.c.h.b16 %v860
          %v1289 = vunpack.c.l.b16 %v861
          %v1290 = vunpack.c.l.b16 %v862
          %v1291 = vunpack.c.h.b16 %v862
          %v1292 = vunpack.c.l.b16 %v863
          %v1293 = vunpack.c.h.b16 %v863
          %v1294 = vunpack.c.l.b16 %v864
          %v1295 = vunpack.c.h.b16 %v864
          %v1296 = vunpack.c.l.b16 %v865
          %v1297 = vunpack.c.h.b16 %v865
          %v1298 = vunpack.c.l.b16 %v866
          %v1299 = vunpack.c.l.b16 %v867
          %v1300 = vunpack.c.h.b16 %v867
          %v1301 = vunpack.c.l.b16 %v868
          %v1302 = vunpack.c.h.b16 %v868
          %v1303 = vunpack.c.l.b16 %v869
          %v1304 = vunpack.c.h.b16 %v869
          %v1305 = vunpack.c.l.b16 %v870
          %v1306 = vunpack.c.h.b16 %v870
          %v1307 = vunpack.c.l.b16 %v871
          %v1308 = vunpack.c.l.b16 %v872
          %v1309 = vunpack.c.h.b16 %v872
          %v1310 = vunpack.c.l.b16 %v873
          %v1311 = vunpack.c.h.b16 %v873
          %v1312 = vunpack.c.l.b16 %v874
          %v1313 = vunpack.c.h.b16 %v874
          %v1314 = vunpack.c.l.b16 %v875
          %v1315 = vunpack.c.h.b16 %v875
          %v1316 = vunpack.c.l.b16 %v876
          %v1317 = vunpack.c.l.b16 %v877
          %v1318 = vunpack.c.h.b16 %v877
          %v1319 = vunpack.c.l.b16 %v878
          %v1320 = vunpack.c.h.b16 %v878
          %v1321 = vunpack.c.l.b16 %v879
          %v1322 = vunpack.c.h.b16 %v879
          %v1323 = vunpack.c.l.b16 %v880
          %v1324 = vunpack.c.h.b16 %v880
          %v1325 = vunpack.c.l.b16 %v881
          %v1326 = vunpack.c.l.b16 %v882
          %v1327 = vunpack.c.h.b16 %v882
          %v1328 = vunpack.c.l.b16 %v883
          %v1329 = vunpack.c.h.b16 %v883
          %v1330 = vunpack.c.l.b16 %v884
          %v1331 = vunpack.c.h.b16 %v884
          %v1332 = vunpack.c.l.b16 %v885
          %v1333 = vunpack.c.h.b16 %v885
          %v1334 = vunpack.c.l.b16 %v886
          %v1335 = vpack.c.b16 %v1056, %v1047
          %v1336 = vpack.c.b16 %v1057, %v1048
          %v1337 = vpack.c.b16 %v1058, %v1049
          %v1338 = vpack.c.b16 %v1059, %v1050
          %v1339 = vpack.c.b16 %v1060, %v1051
          %v1340 = vpack.c.b16 %v1061, %v1052
          %v1341 = vpack.c.b16 %v1062, %v1053
          %v1342 = vpack.c.b16 %v1063, %v1054
          %v1343 = vpack.c.b16 %v1064, %v1055
          %v1344 = vpack.c.b16 %v1074, %v1065
          %v1345 = vpack.c.b16 %v1075, %v1066
          %v1346 = vpack.c.b16 %v1076, %v1067
          %v1347 = vpack.c.b16 %v1077, %v1068
          %v1348 = vpack.c.b16 %v1078, %v1069
          %v1349 = vpack.c.b16 %v1079, %v1070
          %v1350 = vpack.c.b16 %v1080, %v1071
          %v1351 = vpack.c.b16 %v1081, %v1072
          %v1352 = vpack.c.b16 %v1082, %v1073
          %v1353 = vpack.c.b16 %v1092, %v1083
          %v1354 = vpack.c.b16 %v1093, %v1084
          %v1355 = vpack.c.b16 %v1094, %v1085
          %v1356 = vpack.c.b16 %v1095, %v1086
          %v1357 = vpack.c.b16 %v1096, %v1087
          %v1358 = vpack.c.b16 %v1097, %v1088
          %v1359 = vpack.c.b16 %v1098, %v1089
          %v1360 = vpack.c.b16 %v1099, %v1090
          %v1361 = vpack.c.b16 %v1100, %v1091
          %v1362 = vpack.c.b16 %v1110, %v1101
          %v1363 = vpack.c.b16 %v1111, %v1102
          %v1364 = vpack.c.b16 %v1112, %v1103
          %v1365 = vpack.c.b16 %v1113, %v1104
          %v1366 = vpack.c.b16 %v1114, %v1105
          %v1367 = vpack.c.b16 %v1115, %v1106
          %v1368 = vpack.c.b16 %v1116, %v1107
          %v1369 = vpack.c.b16 %v1117, %v1108
          %v1370 = vpack.c.b16 %v1118, %v1109
          %v1371 = vpack.c.b16 %v1128, %v1119
          %v1372 = vpack.c.b16 %v1129, %v1120
          %v1373 = vpack.c.b16 %v1130, %v1121
          %v1374 = vpack.c.b16 %v1131, %v1122
          %v1375 = vpack.c.b16 %v1132, %v1123
          %v1376 = vpack.c.b16 %v1133, %v1124
          %v1377 = vpack.c.b16 %v1134, %v1125
          %v1378 = vpack.c.b16 %v1135, %v1126
          %v1379 = vpack.c.b16 %v1136, %v1127
          %v1380 = vpack.c.b16 %v1146, %v1137
          %v1381 = vpack.c.b16 %v1147, %v1138
          %v1382 = vpack.c.b16 %v1148, %v1139
          %v1383 = vpack.c.b16 %v1149, %v1140
          %v1384 = vpack.c.b16 %v1150, %v1141
          %v1385 = vpack.c.b16 %v1151, %v1142
          %v1386 = vpack.c.b16 %v1152, %v1143
          %v1387 = vpack.c.b16 %v1153, %v1144
          %v1388 = vpack.c.b16 %v1154, %v1145
          %v1389 = vpack.c.b16 %v1164, %v1155
          %v1390 = vpack.c.b16 %v1165, %v1156
          %v1391 = vpack.c.b16 %v1166, %v1157
          %v1392 = vpack.c.b16 %v1167, %v1158
          %v1393 = vpack.c.b16 %v1168, %v1159
          %v1394 = vpack.c.b16 %v1169, %v1160
          %v1395 = vpack.c.b16 %v1170, %v1161
          %v1396 = vpack.c.b16 %v1171, %v1162
          %v1397 = vpack.c.b16 %v1172, %v1163
          %v1398 = vpack.c.b16 %v1182, %v1173
          %v1399 = vpack.c.b16 %v1183, %v1174
          %v1400 = vpack.c.b16 %v1184, %v1175
          %v1401 = vpack.c.b16 %v1185, %v1176
          %v1402 = vpack.c.b16 %v1186, %v1177
          %v1403 = vpack.c.b16 %v1187, %v1178
          %v1404 = vpack.c.b16 %v1188, %v1179
          %v1405 = vpack.c.b16 %v1189, %v1180
          %v1406 = vpack.c.b16 %v1190, %v1181
          %v1407 = vpack.c.b16 %v1200, %v1191
          %v1408 = vpack.c.b16 %v1201, %v1192
          %v1409 = vpack.c.b16 %v1202, %v1193
          %v1410 = vpack.c.b16 %v1203, %v1194
          %v1411 = vpack.c.b16 %v1204, %v1195
          %v1412 = vpack.c.b16 %v1205, %v1196
          %v1413 = vpack.c.b16 %v1206, %v1197
          %v1414 = vpack.c.b16 %v1207, %v1198
          %v1415 = vpack.c.b16 %v1208, %v1199
          %v1416 = vpack.c.b16 %v1218, %v1209
          %v1417 = vpack.c.b16 %v1219, %v1210
          %v1418 = vpack.c.b16 %v1220, %v1211
          %v1419 = vpack.c.b16 %v1221, %v1212
          %v1420 = vpack.c.b16 %v1222, %v1213
          %v1421 = vpack.c.b16 %v1223, %v1214
          %v1422 = vpack.c.b16 %v1224, %v1215
          %v1423 = vpack.c.b16 %v1225, %v1216
          %v1424 = vpack.c.b16 %v1226, %v1217
          %v1425 = vpack.c.b16 %v1236, %v1227
          %v1426 = vpack.c.b16 %v1237, %v1228
          %v1427 = vpack.c.b16 %v1238, %v1229
          %v1428 = vpack.c.b16 %v1239, %v1230
          %v1429 = vpack.c.b16 %v1240, %v1231
          %v1430 = vpack.c.b16 %v1241, %v1232
          %v1431 = vpack.c.b16 %v1242, %v1233
          %v1432 = vpack.c.b16 %v1243, %v1234
          %v1433 = vpack.c.b16 %v1244, %v1235
          %v1434 = vpack.c.b16 %v1254, %v1245
          %v1435 = vpack.c.b16 %v1255, %v1246
          %v1436 = vpack.c.b16 %v1256, %v1247
          %v1437 = vpack.c.b16 %v1257, %v1248
          %v1438 = vpack.c.b16 %v1258, %v1249
          %v1439 = vpack.c.b16 %v1259, %v1250
          %v1440 = vpack.c.b16 %v1260, %v1251
          %v1441 = vpack.c.b16 %v1261, %v1252
          %v1442 = vpack.c.b16 %v1262, %v1253
          %v1443 = vpack.c.b16 %v1272, %v1263
          %v1444 = vpack.c.b16 %v1273, %v1264
          %v1445 = vpack.c.b16 %v1274, %v1265
          %v1446 = vpack.c.b16 %v1275, %v1266
          %v1447 = vpack.c.b16 %v1276, %v1267
          %v1448 = vpack.c.b16 %v1277, %v1268
          %v1449 = vpack.c.b16 %v1278, %v1269
          %v1450 = vpack.c.b16 %v1279, %v1270
          %v1451 = vpack.c.b16 %v1280, %v1271
          %v1452 = vpack.c.b16 %v1290, %v1281
          %v1453 = vpack.c.b16 %v1291, %v1282
          %v1454 = vpack.c.b16 %v1292, %v1283
          %v1455 = vpack.c.b16 %v1293, %v1284
          %v1456 = vpack.c.b16 %v1294, %v1285
          %v1457 = vpack.c.b16 %v1295, %v1286
          %v1458 = vpack.c.b16 %v1296, %v1287
          %v1459 = vpack.c.b16 %v1297, %v1288
          %v1460 = vpack.c.b16 %v1298, %v1289
          %v1461 = vpack.c.b16 %v1308, %v1299
          %v1462 = vpack.c.b16 %v1309, %v1300
          %v1463 = vpack.c.b16 %v1310, %v1301
          %v1464 = vpack.c.b16 %v1311, %v1302
          %v1465 = vpack.c.b16 %v1312, %v1303
          %v1466 = vpack.c.b16 %v1313, %v1304
          %v1467 = vpack.c.b16 %v1314, %v1305
          %v1468 = vpack.c.b16 %v1315, %v1306
          %v1469 = vpack.c.b16 %v1316, %v1307
          %v1470 = vpack.c.b16 %v1326, %v1317
          %v1471 = vpack.c.b16 %v1327, %v1318
          %v1472 = vpack.c.b16 %v1328, %v1319
          %v1473 = vpack.c.b16 %v1329, %v1320
          %v1474 = vpack.c.b16 %v1330, %v1321
          %v1475 = vpack.c.b16 %v1331, %v1322
          %v1476 = vpack.c.b16 %v1332, %v1323
          %v1477 = vpack.c.b16 %v1333, %v1324
          %v1478 = vpack.c.b16 %v1334, %v1325
          %1623 = vmatprep.subr.bf16.mxu0 %v1336
          %1624 = vmatpush1.bf16.msra.mxu0 %v1335
          %1625 = vmatprep.subr.bf16.mxu0 %v1345
          %1626 = vmatpush1.bf16.msra.mxu0 %v1344
          %1627 = vmatprep.subr.bf16.mxu0 %v1354
          %1628 = vmatpush1.bf16.msra.mxu0 %v1353
          %1629 = vmatprep.subr.bf16.mxu0 %v1363
          %1630 = vmatpush1.bf16.msra.mxu0 %v1362
          %1631 = vmatprep.subr.bf16.mxu0 %v1372
          %1632 = vmatpush1.bf16.msra.mxu0 %v1371
          %1633 = vmatprep.subr.bf16.mxu0 %v1381
          %1634 = vmatpush1.bf16.msra.mxu0 %v1380
          %1635 = vmatprep.subr.bf16.mxu0 %v1390
          %1636 = vmatpush1.bf16.msra.mxu0 %v1389
          %1637 = vmatprep.subr.bf16.mxu0 %v1399
          %1638 = vmatpush1.bf16.msra.mxu0 %v1398
          %1639 = vmatprep.subr.bf16.mxu0 %v1408
          %1640 = vmatpush1.bf16.msra.mxu0 %v1407
          %1641 = vmatprep.subr.bf16.mxu0 %v1417
          %1642 = vmatpush1.bf16.msra.mxu0 %v1416
          %1643 = vmatprep.subr.bf16.mxu0 %v1426
          %1644 = vmatpush1.bf16.msra.mxu0 %v1425
          %1645 = vmatprep.subr.bf16.mxu0 %v1435
          %1646 = vmatpush1.bf16.msra.mxu0 %v1434
          %1647 = vmatprep.subr.bf16.mxu0 %v1444
          %1648 = vmatpush1.bf16.msra.mxu0 %v1443
          %1649 = vmatprep.subr.bf16.mxu0 %v1453
          %1650 = vmatpush1.bf16.msra.mxu0 %v1452
          %1651 = vmatprep.subr.bf16.mxu0 %v1462
          %1652 = vmatpush1.bf16.msra.mxu0 %v1461
          %1653 = vmatprep.subr.bf16.mxu0 %v1471
          %1654 = vmatpush1.bf16.msra.mxu0 %v1470
          %1655 = vmatprep.mubr.bf16.mxu0 %v726
          %1656 = vmatmul.mubr.bf16.gmra.mrb[0].mxu0 %v725
          %v1657 = vpop.f32.mrb[0].mxu0
          %v1658 = vadd.f32 0.0, %v1657
          %v1659 = vpop.f32.mrb[0].mxu0
          %v1660 = vadd.f32 0.0, %v1659
          %v1661 = vpop.f32.mrb[0].mxu0
          %v1662 = vadd.f32 0.0, %v1661
          %v1663 = vpop.f32.mrb[0].mxu0
          %v1664 = vadd.f32 0.0, %v1663
          %1665 = vdwg.mxu0
          %1666 = vmatprep.subr.bf16.mxu0 %v1338
          %1667 = vmatpush1.bf16.msra.mxu0 %v1337
          %1668 = vmatprep.subr.bf16.mxu0 %v1347
          %1669 = vmatpush1.bf16.msra.mxu0 %v1346
          %1670 = vmatprep.subr.bf16.mxu0 %v1356
          %1671 = vmatpush1.bf16.msra.mxu0 %v1355
          %1672 = vmatprep.subr.bf16.mxu0 %v1365
          %1673 = vmatpush1.bf16.msra.mxu0 %v1364
          %1674 = vmatprep.subr.bf16.mxu0 %v1374
          %1675 = vmatpush1.bf16.msra.mxu0 %v1373
          %1676 = vmatprep.subr.bf16.mxu0 %v1383
          %1677 = vmatpush1.bf16.msra.mxu0 %v1382
          %1678 = vmatprep.subr.bf16.mxu0 %v1392
          %1679 = vmatpush1.bf16.msra.mxu0 %v1391
          %1680 = vmatprep.subr.bf16.mxu0 %v1401
          %1681 = vmatpush1.bf16.msra.mxu0 %v1400
          %1682 = vmatprep.subr.bf16.mxu0 %v1410
          %1683 = vmatpush1.bf16.msra.mxu0 %v1409
          %1684 = vmatprep.subr.bf16.mxu0 %v1419
          %1685 = vmatpush1.bf16.msra.mxu0 %v1418
          %1686 = vmatprep.subr.bf16.mxu0 %v1428
          %1687 = vmatpush1.bf16.msra.mxu0 %v1427
          %1688 = vmatprep.subr.bf16.mxu0 %v1437
          %1689 = vmatpush1.bf16.msra.mxu0 %v1436
          %1690 = vmatprep.subr.bf16.mxu0 %v1446
          %1691 = vmatpush1.bf16.msra.mxu0 %v1445
          %1692 = vmatprep.subr.bf16.mxu0 %v1455
          %1693 = vmatpush1.bf16.msra.mxu0 %v1454
          %1694 = vmatprep.subr.bf16.mxu0 %v1464
          %1695 = vmatpush1.bf16.msra.mxu0 %v1463
          %1696 = vmatprep.subr.bf16.mxu0 %v1473
          %1697 = vmatpush1.bf16.msra.mxu0 %v1472
          %1698 = vmatprep.mubr.bf16.mxu0 %v726
          %1699 = vmatmul.mubr.bf16.gmra.mrb[0].mxu0 %v725
          %v1700 = vpop.f32.mrb[0].mxu0
          %v1701 = vadd.f32 0.0, %v1700
          %v1702 = vpop.f32.mrb[0].mxu0
          %v1703 = vadd.f32 0.0, %v1702
          %v1704 = vpop.f32.mrb[0].mxu0
          %v1705 = vadd.f32 0.0, %v1704
          %v1706 = vpop.f32.mrb[0].mxu0
          %v1707 = vadd.f32 0.0, %v1706
          %1708 = vdwg.mxu0
          %1709 = vmatprep.subr.bf16.mxu0 %v1340
          %1710 = vmatpush1.bf16.msra.mxu0 %v1339
          %1711 = vmatprep.subr.bf16.mxu0 %v1349
          %1712 = vmatpush1.bf16.msra.mxu0 %v1348
          %1713 = vmatprep.subr.bf16.mxu0 %v1358
          %1714 = vmatpush1.bf16.msra.mxu0 %v1357
          %1715 = vmatprep.subr.bf16.mxu0 %v1367
          %1716 = vmatpush1.bf16.msra.mxu0 %v1366
          %1717 = vmatprep.subr.bf16.mxu0 %v1376
          %1718 = vmatpush1.bf16.msra.mxu0 %v1375
          %1719 = vmatprep.subr.bf16.mxu0 %v1385
          %1720 = vmatpush1.bf16.msra.mxu0 %v1384
          %1721 = vmatprep.subr.bf16.mxu0 %v1394
          %1722 = vmatpush1.bf16.msra.mxu0 %v1393
          %1723 = vmatprep.subr.bf16.mxu0 %v1403
          %1724 = vmatpush1.bf16.msra.mxu0 %v1402
          %1725 = vmatprep.subr.bf16.mxu0 %v1412
          %1726 = vmatpush1.bf16.msra.mxu0 %v1411
          %1727 = vmatprep.subr.bf16.mxu0 %v1421
          %1728 = vmatpush1.bf16.msra.mxu0 %v1420
          %1729 = vmatprep.subr.bf16.mxu0 %v1430
          %1730 = vmatpush1.bf16.msra.mxu0 %v1429
          %1731 = vmatprep.subr.bf16.mxu0 %v1439
          %1732 = vmatpush1.bf16.msra.mxu0 %v1438
          %1733 = vmatprep.subr.bf16.mxu0 %v1448
          %1734 = vmatpush1.bf16.msra.mxu0 %v1447
          %1735 = vmatprep.subr.bf16.mxu0 %v1457
          %1736 = vmatpush1.bf16.msra.mxu0 %v1456
          %1737 = vmatprep.subr.bf16.mxu0 %v1466
          %1738 = vmatpush1.bf16.msra.mxu0 %v1465
          %1739 = vmatprep.subr.bf16.mxu0 %v1475
          %1740 = vmatpush1.bf16.msra.mxu0 %v1474
          %1741 = vmatprep.mubr.bf16.mxu0 %v726
          %1742 = vmatmul.mubr.bf16.gmra.mrb[0].mxu0 %v725
          %v1743 = vpop.f32.mrb[0].mxu0
          %v1744 = vadd.f32 0.0, %v1743
          %v1745 = vpop.f32.mrb[0].mxu0
          %v1746 = vadd.f32 0.0, %v1745
          %v1747 = vpop.f32.mrb[0].mxu0
          %v1748 = vadd.f32 0.0, %v1747
          %v1749 = vpop.f32.mrb[0].mxu0
          %v1750 = vadd.f32 0.0, %v1749
          %1751 = vdwg.mxu0
          %1752 = vmatprep.subr.bf16.mxu0 %v1342
          %1753 = vmatpush1.bf16.msra.mxu0 %v1341
          %1754 = vmatprep.subr.bf16.mxu0 %v1351
          %1755 = vmatpush1.bf16.msra.mxu0 %v1350
          %1756 = vmatprep.subr.bf16.mxu0 %v1360
          %1757 = vmatpush1.bf16.msra.mxu0 %v1359
          %1758 = vmatprep.subr.bf16.mxu0 %v1369
          %1759 = vmatpush1.bf16.msra.mxu0 %v1368
          %1760 = vmatprep.subr.bf16.mxu0 %v1378
          %1761 = vmatpush1.bf16.msra.mxu0 %v1377
          %1762 = vmatprep.subr.bf16.mxu0 %v1387
          %1763 = vmatpush1.bf16.msra.mxu0 %v1386
          %1764 = vmatprep.subr.bf16.mxu0 %v1396
          %1765 = vmatpush1.bf16.msra.mxu0 %v1395
          %1766 = vmatprep.subr.bf16.mxu0 %v1405
          %1767 = vmatpush1.bf16.msra.mxu0 %v1404
          %1768 = vmatprep.subr.bf16.mxu0 %v1414
          %1769 = vmatpush1.bf16.msra.mxu0 %v1413
          %1770 = vmatprep.subr.bf16.mxu0 %v1423
          %1771 = vmatpush1.bf16.msra.mxu0 %v1422
          %1772 = vmatprep.subr.bf16.mxu0 %v1432
          %1773 = vmatpush1.bf16.msra.mxu0 %v1431
          %1774 = vmatprep.subr.bf16.mxu0 %v1441
          %1775 = vmatpush1.bf16.msra.mxu0 %v1440
          %1776 = vmatprep.subr.bf16.mxu0 %v1450
          %1777 = vmatpush1.bf16.msra.mxu0 %v1449
          %1778 = vmatprep.subr.bf16.mxu0 %v1459
          %1779 = vmatpush1.bf16.msra.mxu0 %v1458
          %1780 = vmatprep.subr.bf16.mxu0 %v1468
          %1781 = vmatpush1.bf16.msra.mxu0 %v1467
          %1782 = vmatprep.subr.bf16.mxu0 %v1477
          %1783 = vmatpush1.bf16.msra.mxu0 %v1476
          %1784 = vmatprep.mubr.bf16.mxu0 %v726
          %1785 = vmatmul.mubr.bf16.gmra.mrb[0].mxu0 %v725
          %v1786 = vpop.f32.mrb[0].mxu0
          %v1787 = vadd.f32 0.0, %v1786
          %v1788 = vpop.f32.mrb[0].mxu0
          %v1789 = vadd.f32 0.0, %v1788
          %v1790 = vpop.f32.mrb[0].mxu0
          %v1791 = vadd.f32 0.0, %v1790
          %v1792 = vpop.f32.mrb[0].mxu0
          %v1793 = vadd.f32 0.0, %v1792
          %1794 = vdwg.mxu0
          %1795 = vmatprep.subr.bf16.mxu0 0
          %1796 = vmatpush1.bf16.msra.mxu0 %v1343
          %1797 = vmatprep.subr.bf16.mxu0 0
          %1798 = vmatpush1.bf16.msra.mxu0 %v1352
          %1799 = vmatprep.subr.bf16.mxu0 0
          %1800 = vmatpush1.bf16.msra.mxu0 %v1361
          %1801 = vmatprep.subr.bf16.mxu0 0
          %1802 = vmatpush1.bf16.msra.mxu0 %v1370
          %1803 = vmatprep.subr.bf16.mxu0 0
          %1804 = vmatpush1.bf16.msra.mxu0 %v1379
          %1805 = vmatprep.subr.bf16.mxu0 0
          %1806 = vmatpush1.bf16.msra.mxu0 %v1388
          %1807 = vmatprep.subr.bf16.mxu0 0
          %1808 = vmatpush1.bf16.msra.mxu0 %v1397
          %1809 = vmatprep.subr.bf16.mxu0 0
          %1810 = vmatpush1.bf16.msra.mxu0 %v1406
          %1811 = vmatprep.subr.bf16.mxu0 0
          %1812 = vmatpush1.bf16.msra.mxu0 %v1415
          %1813 = vmatprep.subr.bf16.mxu0 0
          %1814 = vmatpush1.bf16.msra.mxu0 %v1424
          %1815 = vmatprep.subr.bf16.mxu0 0
          %1816 = vmatpush1.bf16.msra.mxu0 %v1433
          %1817 = vmatprep.subr.bf16.mxu0 0
          %1818 = vmatpush1.bf16.msra.mxu0 %v1442
          %1819 = vmatprep.subr.bf16.mxu0 0
          %1820 = vmatpush1.bf16.msra.mxu0 %v1451
          %1821 = vmatprep.subr.bf16.mxu0 0
          %1822 = vmatpush1.bf16.msra.mxu0 %v1460
          %1823 = vmatprep.subr.bf16.mxu0 0
          %1824 = vmatpush1.bf16.msra.mxu0 %v1469
          %1825 = vmatprep.subr.bf16.mxu0 0
          %1826 = vmatpush1.bf16.msra.mxu0 %v1478
          %1827 = vmatprep.mubr.bf16.mxu0 %v726
          %1828 = vmatmul.mubr.bf16.gmra.mrb[0].mxu0 %v725
          %v1829 = vpop.f32.mrb[0].mxu0
          %v1830 = vadd.f32 0.0, %v1829
          %v1831 = vpop.f32.mrb[0].mxu0
          %v1832 = vpop.f32.mrb[0].mxu0
          %v1833 = vadd.f32 0.0, %v1832
          %v1834 = vpop.f32.mrb[0].mxu0
          %1835 = vdwg.mxu0
          %v1836 = vadd.f32 %v707, %v1658
          %v1837 = vadd.f32 %v708, %v1660
          %v1838 = vadd.f32 %v709, %v1701
          %v1839 = vadd.f32 %v710, %v1703
          %v1840 = vadd.f32 %v711, %v1744
          %v1841 = vadd.f32 %v712, %v1746
          %v1842 = vadd.f32 %v713, %v1787
          %v1843 = vadd.f32 %v714, %v1789
          %v1844 = vadd.f32 %v715, %v1830
          %v1845 = vadd.f32 %v716, %v1662
          %v1846 = vadd.f32 %v717, %v1664
          %v1847 = vadd.f32 %v718, %v1705
          %v1848 = vadd.f32 %v719, %v1707
          %v1849 = vadd.f32 %v720, %v1748
          %v1850 = vadd.f32 %v721, %v1750
          %v1851 = vadd.f32 %v722, %v1791
          %v1852 = vadd.f32 %v723, %v1793
          %v1853 = vadd.f32 %v724, %v1833
          %1854 = vst [vmem:[#allocation2] sm:$0xff] %v1836
          %1855 = vst [vmem:[#allocation2 + $0x8] sm:$0xff] %v1837
          %1856 = vst [vmem:[#allocation2 + $0x10] sm:$0xff] %v1838
          %1857 = vst [vmem:[#allocation2 + $0x18] sm:$0xff] %v1839
          %1858 = vst [vmem:[#allocation2 + $0x20] sm:$0xff] %v1840
          %1859 = vst [vmem:[#allocation2 + $0x28] sm:$0xff] %v1841
          %1860 = vst [vmem:[#allocation2 + $0x30] sm:$0xff] %v1842
          %1861 = vst [vmem:[#allocation2 + $0x38] sm:$0xff] %v1843
          %1862 = vst [vmem:[#allocation2 + $0x40] sm:$0xff] %v1844
          %1863 = vst [vmem:[#allocation2 + $0x48] sm:$0xff] %v1845
          %1864 = vst [vmem:[#allocation2 + $0x50] sm:$0xff] %v1846
          %1865 = vst [vmem:[#allocation2 + $0x58] sm:$0xff] %v1847
          %1866 = vst [vmem:[#allocation2 + $0x60] sm:$0xff] %v1848
          %1867 = vst [vmem:[#allocation2 + $0x68] sm:$0xff] %v1849
          %1868 = vst [vmem:[#allocation2 + $0x70] sm:$0xff] %v1850
          %1869 = vst [vmem:[#allocation2 + $0x78] sm:$0xff] %v1851
          %1870 = vst [vmem:[#allocation2 + $0x80] sm:$0xff] %v1852
          %1871 = vst [vmem:[#allocation2 + $0x88] sm:$0xff] %v1853
        $region84: #{tpu_custom_call.1} parent=67 // pred_fallthru
          _
        %p1872 = scmp.eq.s32.totalorder %s35, 1
        // Predicated region
        $region85: #{tpu_custom_call.1} parent=67 // pred_check
          %p1873 = pneg %p1872
        $region86: #{tpu_custom_call.1} parent=67 // pred_check_branch
          %1875 = sbr.rel (%p1873) target = $region88
        $region87: #{tpu_custom_call.1} parent=67 // pred_region
          %v1876 = vld [vmem:[#allocation2] sm:$0xff]
          %v1877 = vld [vmem:[#allocation2 + $0x8] sm:$0xff]
          %v1878 = vld [vmem:[#allocation2 + $0x10] sm:$0xff]
          %v1879 = vld [vmem:[#allocation2 + $0x18] sm:$0xff]
          %v1880 = vld [vmem:[#allocation2 + $0x20] sm:$0xff]
          %v1881 = vld [vmem:[#allocation2 + $0x28] sm:$0xff]
          %v1882 = vld [vmem:[#allocation2 + $0x30] sm:$0xff]
          %v1883 = vld [vmem:[#allocation2 + $0x38] sm:$0xff]
          %v1884 = vld [vmem:[#allocation2 + $0x40] sm:$0xff]
          %v1885 = vld [vmem:[#allocation2 + $0x48] sm:$0xff]
          %v1886 = vld [vmem:[#allocation2 + $0x50] sm:$0xff]
          %v1887 = vld [vmem:[#allocation2 + $0x58] sm:$0xff]
          %v1888 = vld [vmem:[#allocation2 + $0x60] sm:$0xff]
          %v1889 = vld [vmem:[#allocation2 + $0x68] sm:$0xff]
          %v1890 = vld [vmem:[#allocation2 + $0x70] sm:$0xff]
          %v1891 = vld [vmem:[#allocation2 + $0x78] sm:$0xff]
          %v1892 = vld [vmem:[#allocation2 + $0x80] sm:$0xff]
          %v1893 = vld [vmem:[#allocation2 + $0x88] sm:$0xff]
          %v1894 = vld [vmem:[%s3] sm:$0xff]
          %v1895 = vld [vmem:[%s3 + $0x8] sm:$0x1]
          %v1898 = vlaneseq
          %v1899 = vshrl.u32 %v1898, 7
          %v1900 = vsub.s32 0, %v1899
          %v1901 = vrot.slane %v1894, %v1900
          %v1902 = vlaneseq
          %v1903 = vshrl.u32 %v1902, 7
          %v1904 = vsub.s32 1, %v1903
          %v1905 = vrot.slane %v1894, %v1904
          %v1906 = vlaneseq
          %v1907 = vshrl.u32 %v1906, 7
          %v1908 = vsub.s32 2, %v1907
          %v1909 = vrot.slane %v1894, %v1908
          %v1910 = vlaneseq
          %v1911 = vshrl.u32 %v1910, 7
          %v1912 = vsub.s32 3, %v1911
          %v1913 = vrot.slane %v1894, %v1912
          %v1914 = vlaneseq
          %v1915 = vshrl.u32 %v1914, 7
          %v1916 = vsub.s32 4, %v1915
          %v1917 = vrot.slane %v1894, %v1916
          %v1918 = vlaneseq
          %v1919 = vshrl.u32 %v1918, 7
          %v1920 = vsub.s32 5, %v1919
          %v1921 = vrot.slane %v1894, %v1920
          %v1922 = vlaneseq
          %v1923 = vshrl.u32 %v1922, 7
          %v1924 = vsub.s32 6, %v1923
          %v1925 = vrot.slane %v1894, %v1924
          %v1926 = vlaneseq
          %v1927 = vshrl.u32 %v1926, 7
          %v1928 = vsub.s32 7, %v1927
          %v1929 = vrot.slane %v1894, %v1928
          %v1930 = vlaneseq
          %v1931 = vshrl.u32 %v1930, 7
          %v1932 = vsub.s32 0, %v1931
          %v1933 = vrot.slane %v1895, %v1932
          %v1943 = vadd.f32 %v1876, %v1901
          %v1944 = vadd.f32 %v1877, %v1905
          %v1945 = vadd.f32 %v1878, %v1909
          %v1946 = vadd.f32 %v1879, %v1913
          %v1947 = vadd.f32 %v1880, %v1917
          %v1948 = vadd.f32 %v1881, %v1921
          %v1949 = vadd.f32 %v1882, %v1925
          %v1950 = vadd.f32 %v1883, %v1929
          %v1951 = vadd.f32 %v1884, %v1933
          %v1952 = vadd.f32 %v1885, %v1901
          %v1953 = vadd.f32 %v1886, %v1905
          %v1954 = vadd.f32 %v1887, %v1909
          %v1955 = vadd.f32 %v1888, %v1913
          %v1956 = vadd.f32 %v1889, %v1917
          %v1957 = vadd.f32 %v1890, %v1921
          %v1958 = vadd.f32 %v1891, %v1925
          %v1959 = vadd.f32 %v1892, %v1929
          %v1960 = vadd.f32 %v1893, %v1933
          %v1961 = vmax.f32 %v1943, 0.0
          %v1962 = vmax.f32 %v1944, 0.0
          %v1963 = vmax.f32 %v1945, 0.0
          %v1964 = vmax.f32 %v1946, 0.0
          %v1965 = vmax.f32 %v1947, 0.0
          %v1966 = vmax.f32 %v1948, 0.0
          %v1967 = vmax.f32 %v1949, 0.0
          %v1968 = vmax.f32 %v1950, 0.0
          %v1969 = vmax.f32 %v1951, 0.0
          %v1970 = vmax.f32 %v1952, 0.0
          %v1971 = vmax.f32 %v1953, 0.0
          %v1972 = vmax.f32 %v1954, 0.0
          %v1973 = vmax.f32 %v1955, 0.0
          %v1974 = vmax.f32 %v1956, 0.0
          %v1975 = vmax.f32 %v1957, 0.0
          %v1976 = vmax.f32 %v1958, 0.0
          %v1977 = vmax.f32 %v1959, 0.0
          %v1978 = vmax.f32 %v1960, 0.0
          %v1979 = vpack.c.bf16 %v1970, %v1961
          %v1980 = vpack.c.bf16 %v1971, %v1962
          %v1981 = vpack.c.bf16 %v1972, %v1963
          %v1982 = vpack.c.bf16 %v1973, %v1964
          %v1983 = vpack.c.bf16 %v1974, %v1965
          %v1984 = vpack.c.bf16 %v1975, %v1966
          %v1985 = vpack.c.bf16 %v1976, %v1967
          %v1986 = vpack.c.bf16 %v1977, %v1968
          %1987 = vst [vmem:[#allocation3] sm:$0xff] %v1979
          %1988 = vst [vmem:[#allocation3 + $0x8] sm:$0xff] %v1980
          %1989 = vst [vmem:[#allocation3 + $0x10] sm:$0xff] %v1981
          %1990 = vst [vmem:[#allocation3 + $0x18] sm:$0xff] %v1982
          %1991 = vst [vmem:[#allocation3 + $0x20] sm:$0xff] %v1983
          %1992 = vst [vmem:[#allocation3 + $0x28] sm:$0xff] %v1984
          %1993 = vst [vmem:[#allocation3 + $0x30] sm:$0xff] %v1985
          %1994 = vst [vmem:[#allocation3 + $0x38] sm:$0xff] %v1986
          %v1995 = vpack.c.bf16 %v1978, %v1969
          %v1996 = vld [vmem:[%s6] sm:$0xf]
          %v1997 = vld [vmem:[%s6 + $0x4] sm:$0xf]
          %v1998 = vld [vmem:[%s6 + $0x8] sm:$0xf]
          %v1999 = vld [vmem:[%s6 + $0xc] sm:$0xf]
          %v2000 = vld [vmem:[%s6 + $0x10] sm:$0xf]
          %v2001 = vld [vmem:[%s6 + $0x14] sm:$0xf]
          %v2002 = vld [vmem:[%s6 + $0x18] sm:$0xf]
          %v2003 = vld [vmem:[%s6 + $0x1c] sm:$0xf]
          %v2004 = vld [vmem:[%s6 + $0x20] sm:$0xf]
          %v2005 = vld [vmem:[%s6 + $0x24] sm:$0xf]
          %v2006 = vld [vmem:[%s6 + $0x28] sm:$0xf]
          %v2007 = vld [vmem:[%s6 + $0x2c] sm:$0xf]
          %v2008 = vld [vmem:[%s6 + $0x30] sm:$0xf]
          %v2009 = vld [vmem:[%s6 + $0x34] sm:$0xf]
          %v2010 = vld [vmem:[%s6 + $0x38] sm:$0xf]
          %v2011 = vld [vmem:[%s6 + $0x3c] sm:$0xf]
          %v2012 = vld [vmem:[%s7] sm:$0x1]
          %v2014 = vlaneseq
          %v2015 = vshrl.u32 %v2014, 7
          %v2016 = vsub.s32 0, %v2015
          %v2017 = vrot.slane %v2012, %v2016
          %v2035 = vunpack.c.l.b16 %v1996
          %v2036 = vunpack.c.l.b16 %v1997
          %v2037 = vunpack.c.l.b16 %v1998
          %v2038 = vunpack.c.l.b16 %v1999
          %v2039 = vunpack.c.l.b16 %v2000
          %v2040 = vunpack.c.l.b16 %v2001
          %v2041 = vunpack.c.l.b16 %v2002
          %v2042 = vunpack.c.l.b16 %v2003
          %v2043 = vunpack.c.l.b16 %v2004
          %v2044 = vunpack.c.l.b16 %v2005
          %v2045 = vunpack.c.l.b16 %v2006
          %v2046 = vunpack.c.l.b16 %v2007
          %v2047 = vunpack.c.l.b16 %v2008
          %v2048 = vunpack.c.l.b16 %v2009
          %v2049 = vunpack.c.l.b16 %v2010
          %v2050 = vunpack.c.l.b16 %v2011
          %v2051 = vpack.c.b16 %v2036, %v2035
          %v2052 = vpack.c.b16 %v2038, %v2037
          %v2053 = vpack.c.b16 %v2040, %v2039
          %v2054 = vpack.c.b16 %v2042, %v2041
          %v2055 = vpack.c.b16 %v2044, %v2043
          %v2056 = vpack.c.b16 %v2046, %v2045
          %v2057 = vpack.c.b16 %v2048, %v2047
          %v2058 = vpack.c.b16 %v2050, %v2049
          %2067 = vmatprep.subr.bf16.mxu0 0
          %2068 = vmatpush1.bf16.msra.mxu0 %v2051
          %2069 = vmatprep.subr.bf16.mxu0 0
          %2070 = vmatpush1.bf16.msra.mxu0 %v2052
          %2071 = vmatprep.subr.bf16.mxu0 0
          %2072 = vmatpush1.bf16.msra.mxu0 %v2053
          %2073 = vmatprep.subr.bf16.mxu0 0
          %2074 = vmatpush1.bf16.msra.mxu0 %v2054
          %2075 = vmatprep.subr.bf16.mxu0 0
          %2076 = vmatpush1.bf16.msra.mxu0 %v2055
          %2077 = vmatprep.subr.bf16.mxu0 0
          %2078 = vmatpush1.bf16.msra.mxu0 %v2056
          %2079 = vmatprep.subr.bf16.mxu0 0
          %2080 = vmatpush1.bf16.msra.mxu0 %v2057
          %2081 = vmatprep.subr.bf16.mxu0 0
          %2082 = vmatpush1.bf16.msra.mxu0 %v2058
          %2083 = vmatprep.subr.bf16.mxu0 0
          %2084 = vmatpush1.bf16.msra.mxu0 0
          %2085 = vmatprep.subr.bf16.mxu0 0
          %2086 = vmatpush1.bf16.msra.mxu0 0
          %2087 = vmatprep.subr.bf16.mxu0 0
          %2088 = vmatpush1.bf16.msra.mxu0 0
          %2089 = vmatprep.subr.bf16.mxu0 0
          %2090 = vmatpush1.bf16.msra.mxu0 0
          %2091 = vmatprep.subr.bf16.mxu0 0
          %2092 = vmatpush1.bf16.msra.mxu0 0
          %2093 = vmatprep.subr.bf16.mxu0 0
          %2094 = vmatpush1.bf16.msra.mxu0 0
          %2095 = vmatprep.subr.bf16.mxu0 0
          %2096 = vmatpush1.bf16.msra.mxu0 0
          %2097 = vmatprep.subr.bf16.mxu0 0
          %2098 = vmatpush1.bf16.msra.mxu0 0
          %2099 = vmatprep.mubr.bf16.mxu0 0
          %2100 = vmatmul.mubr.bf16.gmra.mrb[0].mxu0 %v1995
          %v2101 = vpop.f32.mrb[0].mxu0
          %v2102 = vadd.f32 %v2017, %v2101
          %v2103 = vpop.f32.mrb[0].mxu0
          %v2104 = vpop.f32.mrb[0].mxu0
          %v2105 = vadd.f32 %v2017, %v2104
          %v2106 = vpop.f32.mrb[0].mxu0
          %2107 = vdwg.mxu0
          %v2108 = vmax.f32 %v2102, 0.0
          %v2109 = vmax.f32 %v2105, 0.0
          %v2110 = vpack.c.bf16 %v2109, %v2108
          %v2111 = vld [vmem:[%s10] sm:$0xf]
          %v2112 = vld [vmem:[%s10 + $0x4] sm:$0xf]
          %v2113 = vld [vmem:[%s10 + $0x8] sm:$0xf]
          %v2114 = vld [vmem:[%s10 + $0xc] sm:$0xf]
          %v2115 = vld [vmem:[%s10 + $0x10] sm:$0xf]
          %v2116 = vld [vmem:[%s10 + $0x14] sm:$0xf]
          %v2117 = vld [vmem:[%s10 + $0x18] sm:$0xf]
          %v2118 = vld [vmem:[%s10 + $0x1c] sm:$0xf]
          %v2119 = vld [vmem:[%s10 + $0x20] sm:$0xf]
          %v2120 = vld [vmem:[%s10 + $0x24] sm:$0xf]
          %v2121 = vld [vmem:[%s10 + $0x28] sm:$0xf]
          %v2122 = vld [vmem:[%s10 + $0x2c] sm:$0xf]
          %v2123 = vld [vmem:[%s10 + $0x30] sm:$0xf]
          %v2124 = vld [vmem:[%s10 + $0x34] sm:$0xf]
          %v2125 = vld [vmem:[%s10 + $0x38] sm:$0xf]
          %v2126 = vld [vmem:[%s10 + $0x3c] sm:$0xf]
          %v2127 = vld [vmem:[%s11] sm:$0x1]
          %v2129 = vlaneseq
          %v2130 = vshrl.u32 %v2129, 7
          %v2131 = vsub.s32 0, %v2130
          %v2132 = vrot.slane %v2127, %v2131
          %v2150 = vunpack.c.l.b16 %v2111
          %v2151 = vunpack.c.l.b16 %v2112
          %v2152 = vunpack.c.l.b16 %v2113
          %v2153 = vunpack.c.l.b16 %v2114
          %v2154 = vunpack.c.l.b16 %v2115
          %v2155 = vunpack.c.l.b16 %v2116
          %v2156 = vunpack.c.l.b16 %v2117
          %v2157 = vunpack.c.l.b16 %v2118
          %v2158 = vunpack.c.l.b16 %v2119
          %v2159 = vunpack.c.l.b16 %v2120
          %v2160 = vunpack.c.l.b16 %v2121
          %v2161 = vunpack.c.l.b16 %v2122
          %v2162 = vunpack.c.l.b16 %v2123
          %v2163 = vunpack.c.l.b16 %v2124
          %v2164 = vunpack.c.l.b16 %v2125
          %v2165 = vunpack.c.l.b16 %v2126
          %v2166 = vpack.c.b16 %v2151, %v2150
          %v2167 = vpack.c.b16 %v2153, %v2152
          %v2168 = vpack.c.b16 %v2155, %v2154
          %v2169 = vpack.c.b16 %v2157, %v2156
          %v2170 = vpack.c.b16 %v2159, %v2158
          %v2171 = vpack.c.b16 %v2161, %v2160
          %v2172 = vpack.c.b16 %v2163, %v2162
          %v2173 = vpack.c.b16 %v2165, %v2164
          %2182 = vmatprep.subr.bf16.mxu0 0
          %2183 = vmatpush1.bf16.msra.mxu0 %v2166
          %2184 = vmatprep.subr.bf16.mxu0 0
          %2185 = vmatpush1.bf16.msra.mxu0 %v2167
          %2186 = vmatprep.subr.bf16.mxu0 0
          %2187 = vmatpush1.bf16.msra.mxu0 %v2168
          %2188 = vmatprep.subr.bf16.mxu0 0
          %2189 = vmatpush1.bf16.msra.mxu0 %v2169
          %2190 = vmatprep.subr.bf16.mxu0 0
          %2191 = vmatpush1.bf16.msra.mxu0 %v2170
          %2192 = vmatprep.subr.bf16.mxu0 0
          %2193 = vmatpush1.bf16.msra.mxu0 %v2171
          %2194 = vmatprep.subr.bf16.mxu0 0
          %2195 = vmatpush1.bf16.msra.mxu0 %v2172
          %2196 = vmatprep.subr.bf16.mxu0 0
          %2197 = vmatpush1.bf16.msra.mxu0 %v2173
          %2198 = vmatprep.subr.bf16.mxu0 0
          %2199 = vmatpush1.bf16.msra.mxu0 0
          %2200 = vmatprep.subr.bf16.mxu0 0
          %2201 = vmatpush1.bf16.msra.mxu0 0
          %2202 = vmatprep.subr.bf16.mxu0 0
          %2203 = vmatpush1.bf16.msra.mxu0 0
          %2204 = vmatprep.subr.bf16.mxu0 0
          %2205 = vmatpush1.bf16.msra.mxu0 0
          %2206 = vmatprep.subr.bf16.mxu0 0
          %2207 = vmatpush1.bf16.msra.mxu0 0
          %2208 = vmatprep.subr.bf16.mxu0 0
          %2209 = vmatpush1.bf16.msra.mxu0 0
          %2210 = vmatprep.subr.bf16.mxu0 0
          %2211 = vmatpush1.bf16.msra.mxu0 0
          %2212 = vmatprep.subr.bf16.mxu0 0
          %2213 = vmatpush1.bf16.msra.mxu0 0
          %2214 = vmatprep.mubr.bf16.mxu0 0
          %2215 = vmatmul.mubr.bf16.gmra.mrb[0].mxu0 %v2110
          %v2216 = vpop.f32.mrb[0].mxu0
          %v2217 = vadd.f32 %v2132, %v2216
          %v2218 = vpop.f32.mrb[0].mxu0
          %v2219 = vpop.f32.mrb[0].mxu0
          %v2220 = vadd.f32 %v2132, %v2219
          %v2221 = vpop.f32.mrb[0].mxu0
          %2222 = vdwg.mxu0
          %v2223 = vmul.f32 %v2217, 0.5
          %v2224 = vmul.f32 %v2220, 0.5
          %v2225 = vmul.f32 %v2223, 1.442695
          %v2226 = vpow.pop %v2225
          %v2227 = vmul.f32 %v2224, 1.442695
          %v2228 = vpow.pop %v2227
          %v2229 = vld [vmem:[%s628] sm:$0xff]
          %v2230 = vld [vmem:[%s628 + $0x8] sm:$0xff]
          %2233 = vrot.lane.b32.xlu0 %v2229, 97
          %v2234 = vpop.permute.xlu0 %2233
          %2235 = vrot.lane.b32.xlu0 %v2230, 97
          %v2236 = vpop.permute.xlu0 %2235
          %v2239 = vmul.f32 %v2226, %v2234
          %v2240 = vmul.f32 %v2228, %v2236
          %2243 = vrot.lane.b32.xlu0 %v2239, 127
          %v2244 = vpop.permute.xlu0 %2243
          %2245 = vrot.lane.b32.xlu0 %v2240, 127
          %v2246 = vpop.permute.xlu0 %2245
          %v2249 = vadd.f32 %v2217, %v2244
          %v2250 = vadd.f32 %v2220, %v2246
          %2253 = vrot.lane.b32.xlu0 %v2217, 96
          %v2254 = vpop.permute.xlu0 %2253
          %2255 = vrot.lane.b32.xlu0 %v2220, 96
          %v2256 = vpop.permute.xlu0 %2255
          %vm2259 = vcmask 802560
          %2260 = vst.msk [vmem:[#allocation10] sm:$0xff] %vm2259, %v2254
          %2261 = vst.msk [vmem:[#allocation10 + $0x8] sm:$0xff] %vm2259, %v2256
          %2264 = vrot.lane.b32.xlu0 %v2249, 98
          %v2265 = vpop.permute.xlu0 %2264
          %2266 = vrot.lane.b32.xlu0 %v2250, 98
          %v2267 = vpop.permute.xlu0 %2266
          %vm2270 = vcmask 810768
          %2271 = vst.msk [vmem:[#allocation10] sm:$0xff] %vm2270, %v2265
          %2272 = vst.msk [vmem:[#allocation10 + $0x8] sm:$0xff] %vm2270, %v2267
          %vm2273 = vcmask 1048344
          %2274 = vst.msk [vmem:[#allocation10] sm:$0xff] %vm2273, 0.0
          %2275 = vst.msk [vmem:[#allocation10 + $0x8] sm:$0xff] %vm2273, 0.0
        $region88: #{tpu_custom_call.1} parent=67 // pred_fallthru
          _
        %p2276 = scmp.ge.s32.totalorder %s35, 1
        // Predicated region
        $region89: #{tpu_custom_call.1} parent=67 // pred_check
          %p2277 = pneg %p2276
        $region90: #{tpu_custom_call.1} parent=67 // pred_check_branch
          %2279 = sbr.rel (%p2277) target = $region92
        $region91: #{tpu_custom_call.1} parent=67 // pred_region
          %v2280 = vld [vmem:[#allocation3] sm:$0xff]
          %v2281 = vld [vmem:[#allocation3 + $0x8] sm:$0xff]
          %v2282 = vld [vmem:[#allocation3 + $0x10] sm:$0xff]
          %v2283 = vld [vmem:[#allocation3 + $0x18] sm:$0xff]
          %v2284 = vld [vmem:[#allocation3 + $0x20] sm:$0xff]
          %v2285 = vld [vmem:[#allocation3 + $0x28] sm:$0xff]
          %v2286 = vld [vmem:[#allocation3 + $0x30] sm:$0xff]
          %v2287 = vld [vmem:[#allocation3 + $0x38] sm:$0xff]
          %v2288 = vld [vmem:[%s535] sm:$0xff]
          %v2289 = vld [vmem:[%s535 + $0x8] sm:$0xff]
          %v2290 = vld [vmem:[%s535 + $0x10] sm:$0xff]
          %v2291 = vld [vmem:[%s535 + $0x18] sm:$0xff]
          %v2292 = vld [vmem:[%s535 + $0x20] sm:$0xff]
          %v2293 = vld [vmem:[%s535 + $0x28] sm:$0xff]
          %v2294 = vld [vmem:[%s535 + $0x30] sm:$0xff]
          %v2295 = vld [vmem:[%s535 + $0x38] sm:$0xff]
          %v2296 = vld [vmem:[%s535 + $0x40] sm:$0xff]
          %v2297 = vld [vmem:[%s535 + $0x48] sm:$0xff]
          %v2298 = vld [vmem:[%s535 + $0x50] sm:$0xff]
          %v2299 = vld [vmem:[%s535 + $0x58] sm:$0xff]
          %v2300 = vld [vmem:[%s535 + $0x60] sm:$0xff]
          %v2301 = vld [vmem:[%s535 + $0x68] sm:$0xff]
          %v2302 = vld [vmem:[%s535 + $0x70] sm:$0xff]
          %v2303 = vld [vmem:[%s535 + $0x78] sm:$0xff]
          %v2304 = vld [vmem:[%s535 + $0x80] sm:$0xff]
          %v2305 = vld [vmem:[%s535 + $0x88] sm:$0xff]
          %v2306 = vld [vmem:[%s535 + $0x90] sm:$0xff]
          %v2307 = vld [vmem:[%s535 + $0x98] sm:$0xff]
          %v2308 = vld [vmem:[%s535 + $0xa0] sm:$0xff]
          %v2309 = vld [vmem:[%s535 + $0xa8] sm:$0xff]
          %v2310 = vld [vmem:[%s535 + $0xb0] sm:$0xff]
          %v2311 = vld [vmem:[%s535 + $0xb8] sm:$0xff]
          %v2312 = vld [vmem:[%s535 + $0xc0] sm:$0xff]
          %v2313 = vld [vmem:[%s535 + $0xc8] sm:$0xff]
          %v2314 = vld [vmem:[%s535 + $0xd0] sm:$0xff]
          %v2315 = vld [vmem:[%s535 + $0xd8] sm:$0xff]
          %v2316 = vld [vmem:[%s535 + $0xe0] sm:$0xff]
          %v2317 = vld [vmem:[%s535 + $0xe8] sm:$0xff]
          %v2318 = vld [vmem:[%s535 + $0xf0] sm:$0xff]
          %v2319 = vld [vmem:[%s535 + $0xf8] sm:$0xff]
          %v2320 = vld [vmem:[%s535 + $0x100] sm:$0xff]
          %v2321 = vld [vmem:[%s535 + $0x108] sm:$0xff]
          %v2322 = vld [vmem:[%s535 + $0x110] sm:$0xff]
          %v2323 = vld [vmem:[%s535 + $0x118] sm:$0xff]
          %v2324 = vld [vmem:[%s535 + $0x120] sm:$0xff]
          %v2325 = vld [vmem:[%s535 + $0x128] sm:$0xff]
          %v2326 = vld [vmem:[%s535 + $0x130] sm:$0xff]
          %v2327 = vld [vmem:[%s535 + $0x138] sm:$0xff]
          %v2328 = vld [vmem:[%s535 + $0x140] sm:$0xff]
          %v2329 = vld [vmem:[%s535 + $0x148] sm:$0xff]
          %v2330 = vld [vmem:[%s535 + $0x150] sm:$0xff]
          %v2331 = vld [vmem:[%s535 + $0x158] sm:$0xff]
          %v2332 = vld [vmem:[%s535 + $0x160] sm:$0xff]
          %v2333 = vld [vmem:[%s535 + $0x168] sm:$0xff]
          %v2334 = vld [vmem:[%s535 + $0x170] sm:$0xff]
          %v2335 = vld [vmem:[%s535 + $0x178] sm:$0xff]
          %v2336 = vld [vmem:[%s535 + $0x180] sm:$0xff]
          %v2337 = vld [vmem:[%s535 + $0x188] sm:$0xff]
          %v2338 = vld [vmem:[%s535 + $0x190] sm:$0xff]
          %v2339 = vld [vmem:[%s535 + $0x198] sm:$0xff]
          %v2340 = vld [vmem:[%s535 + $0x1a0] sm:$0xff]
          %v2341 = vld [vmem:[%s535 + $0x1a8] sm:$0xff]
          %v2342 = vld [vmem:[%s535 + $0x1b0] sm:$0xff]
          %v2343 = vld [vmem:[%s535 + $0x1b8] sm:$0xff]
          %v2344 = vld [vmem:[%s535 + $0x1c0] sm:$0xff]
          %v2345 = vld [vmem:[%s535 + $0x1c8] sm:$0xff]
          %v2346 = vld [vmem:[%s535 + $0x1d0] sm:$0xff]
          %v2347 = vld [vmem:[%s535 + $0x1d8] sm:$0xff]
          %v2348 = vld [vmem:[%s535 + $0x1e0] sm:$0xff]
          %v2349 = vld [vmem:[%s535 + $0x1e8] sm:$0xff]
          %v2350 = vld [vmem:[%s535 + $0x1f0] sm:$0xff]
          %v2351 = vld [vmem:[%s535 + $0x1f8] sm:$0xff]
          %v2352 = vld [vmem:[%s535 + $0x200] sm:$0xff]
          %v2353 = vld [vmem:[%s535 + $0x208] sm:$0xff]
          %v2354 = vld [vmem:[%s535 + $0x210] sm:$0xff]
          %v2355 = vld [vmem:[%s535 + $0x218] sm:$0xff]
          %v2356 = vld [vmem:[%s535 + $0x220] sm:$0xff]
          %v2357 = vld [vmem:[%s535 + $0x228] sm:$0xff]
          %v2358 = vld [vmem:[%s535 + $0x230] sm:$0xff]
          %v2359 = vld [vmem:[%s535 + $0x238] sm:$0xff]
          %v2360 = vld [vmem:[%s535 + $0x240] sm:$0xff]
          %v2361 = vld [vmem:[%s535 + $0x248] sm:$0xff]
          %v2362 = vld [vmem:[%s535 + $0x250] sm:$0xff]
          %v2363 = vld [vmem:[%s535 + $0x258] sm:$0xff]
          %v2364 = vld [vmem:[%s535 + $0x260] sm:$0xff]
          %v2365 = vld [vmem:[%s535 + $0x268] sm:$0xff]
          %v2366 = vld [vmem:[%s535 + $0x270] sm:$0xff]
          %v2367 = vld [vmem:[%s535 + $0x278] sm:$0xff]
          %v2368 = vld [vmem:[%s535 + $0x280] sm:$0xff]
          %v2369 = vld [vmem:[%s535 + $0x288] sm:$0xff]
          %v2370 = vld [vmem:[%s535 + $0x290] sm:$0xff]
          %v2371 = vld [vmem:[%s535 + $0x298] sm:$0xff]
          %v2372 = vld [vmem:[%s535 + $0x2a0] sm:$0xff]
          %v2373 = vld [vmem:[%s535 + $0x2a8] sm:$0xff]
          %v2374 = vld [vmem:[%s535 + $0x2b0] sm:$0xff]
          %v2375 = vld [vmem:[%s535 + $0x2b8] sm:$0xff]
          %v2376 = vld [vmem:[%s535 + $0x2c0] sm:$0xff]
          %v2377 = vld [vmem:[%s535 + $0x2c8] sm:$0xff]
          %v2378 = vld [vmem:[%s535 + $0x2d0] sm:$0xff]
          %v2379 = vld [vmem:[%s535 + $0x2d8] sm:$0xff]
          %v2380 = vld [vmem:[%s535 + $0x2e0] sm:$0xff]
          %v2381 = vld [vmem:[%s535 + $0x2e8] sm:$0xff]
          %v2382 = vld [vmem:[%s535 + $0x2f0] sm:$0xff]
          %v2383 = vld [vmem:[%s535 + $0x2f8] sm:$0xff]
          %v2384 = vld [vmem:[%s535 + $0x300] sm:$0xff]
          %v2385 = vld [vmem:[%s535 + $0x308] sm:$0xff]
          %v2386 = vld [vmem:[%s535 + $0x310] sm:$0xff]
          %v2387 = vld [vmem:[%s535 + $0x318] sm:$0xff]
          %v2388 = vld [vmem:[%s535 + $0x320] sm:$0xff]
          %v2389 = vld [vmem:[%s535 + $0x328] sm:$0xff]
          %v2390 = vld [vmem:[%s535 + $0x330] sm:$0xff]
          %v2391 = vld [vmem:[%s535 + $0x338] sm:$0xff]
          %v2392 = vld [vmem:[%s535 + $0x340] sm:$0xff]
          %v2393 = vld [vmem:[%s535 + $0x348] sm:$0xff]
          %v2394 = vld [vmem:[%s535 + $0x350] sm:$0xff]
          %v2395 = vld [vmem:[%s535 + $0x358] sm:$0xff]
          %v2396 = vld [vmem:[%s535 + $0x360] sm:$0xff]
          %v2397 = vld [vmem:[%s535 + $0x368] sm:$0xff]
          %v2398 = vld [vmem:[%s535 + $0x370] sm:$0xff]
          %v2399 = vld [vmem:[%s535 + $0x378] sm:$0xff]
          %v2400 = vld [vmem:[%s535 + $0x380] sm:$0xff]
          %v2401 = vld [vmem:[%s535 + $0x388] sm:$0xff]
          %v2402 = vld [vmem:[%s535 + $0x390] sm:$0xff]
          %v2403 = vld [vmem:[%s535 + $0x398] sm:$0xff]
          %v2404 = vld [vmem:[%s535 + $0x3a0] sm:$0xff]
          %v2405 = vld [vmem:[%s535 + $0x3a8] sm:$0xff]
          %v2406 = vld [vmem:[%s535 + $0x3b0] sm:$0xff]
          %v2407 = vld [vmem:[%s535 + $0x3b8] sm:$0xff]
          %v2408 = vld [vmem:[%s535 + $0x3c0] sm:$0xff]
          %v2409 = vld [vmem:[%s535 + $0x3c8] sm:$0xff]
          %v2410 = vld [vmem:[%s535 + $0x3d0] sm:$0xff]
          %v2411 = vld [vmem:[%s535 + $0x3d8] sm:$0xff]
          %v2412 = vld [vmem:[%s535 + $0x3e0] sm:$0xff]
          %v2413 = vld [vmem:[%s535 + $0x3e8] sm:$0xff]
          %v2414 = vld [vmem:[%s535 + $0x3f0] sm:$0xff]
          %v2415 = vld [vmem:[%s535 + $0x3f8] sm:$0xff]
          %v2416 = vld [vmem:[%s643] sm:$0x3]
          %v2418 = vlaneseq
          %v2419 = vshrl.u32 %v2418, 7
          %v2420 = vsub.s32 0, %v2419
          %v2421 = vrot.slane %v2416, %v2420
          %v2422 = vlaneseq
          %v2423 = vshrl.u32 %v2422, 7
          %v2424 = vsub.s32 1, %v2423
          %v2425 = vrot.slane %v2416, %v2424
          %v2556 = vunpack.c.l.b16 %v2288
          %v2557 = vunpack.c.h.b16 %v2288
          %v2558 = vunpack.c.l.b16 %v2289
          %v2559 = vunpack.c.h.b16 %v2289
          %v2560 = vunpack.c.l.b16 %v2290
          %v2561 = vunpack.c.h.b16 %v2290
          %v2562 = vunpack.c.l.b16 %v2291
          %v2563 = vunpack.c.h.b16 %v2291
          %v2564 = vunpack.c.l.b16 %v2292
          %v2565 = vunpack.c.h.b16 %v2292
          %v2566 = vunpack.c.l.b16 %v2293
          %v2567 = vunpack.c.h.b16 %v2293
          %v2568 = vunpack.c.l.b16 %v2294
          %v2569 = vunpack.c.h.b16 %v2294
          %v2570 = vunpack.c.l.b16 %v2295
          %v2571 = vunpack.c.h.b16 %v2295
          %v2572 = vunpack.c.l.b16 %v2296
          %v2573 = vunpack.c.h.b16 %v2296
          %v2574 = vunpack.c.l.b16 %v2297
          %v2575 = vunpack.c.h.b16 %v2297
          %v2576 = vunpack.c.l.b16 %v2298
          %v2577 = vunpack.c.h.b16 %v2298
          %v2578 = vunpack.c.l.b16 %v2299
          %v2579 = vunpack.c.h.b16 %v2299
          %v2580 = vunpack.c.l.b16 %v2300
          %v2581 = vunpack.c.h.b16 %v2300
          %v2582 = vunpack.c.l.b16 %v2301
          %v2583 = vunpack.c.h.b16 %v2301
          %v2584 = vunpack.c.l.b16 %v2302
          %v2585 = vunpack.c.h.b16 %v2302
          %v2586 = vunpack.c.l.b16 %v2303
          %v2587 = vunpack.c.h.b16 %v2303
          %v2588 = vunpack.c.l.b16 %v2304
          %v2589 = vunpack.c.h.b16 %v2304
          %v2590 = vunpack.c.l.b16 %v2305
          %v2591 = vunpack.c.h.b16 %v2305
          %v2592 = vunpack.c.l.b16 %v2306
          %v2593 = vunpack.c.h.b16 %v2306
          %v2594 = vunpack.c.l.b16 %v2307
          %v2595 = vunpack.c.h.b16 %v2307
          %v2596 = vunpack.c.l.b16 %v2308
          %v2597 = vunpack.c.h.b16 %v2308
          %v2598 = vunpack.c.l.b16 %v2309
          %v2599 = vunpack.c.h.b16 %v2309
          %v2600 = vunpack.c.l.b16 %v2310
          %v2601 = vunpack.c.h.b16 %v2310
          %v2602 = vunpack.c.l.b16 %v2311
          %v2603 = vunpack.c.h.b16 %v2311
          %v2604 = vunpack.c.l.b16 %v2312
          %v2605 = vunpack.c.h.b16 %v2312
          %v2606 = vunpack.c.l.b16 %v2313
          %v2607 = vunpack.c.h.b16 %v2313
          %v2608 = vunpack.c.l.b16 %v2314
          %v2609 = vunpack.c.h.b16 %v2314
          %v2610 = vunpack.c.l.b16 %v2315
          %v2611 = vunpack.c.h.b16 %v2315
          %v2612 = vunpack.c.l.b16 %v2316
          %v2613 = vunpack.c.h.b16 %v2316
          %v2614 = vunpack.c.l.b16 %v2317
          %v2615 = vunpack.c.h.b16 %v2317
          %v2616 = vunpack.c.l.b16 %v2318
          %v2617 = vunpack.c.h.b16 %v2318
          %v2618 = vunpack.c.l.b16 %v2319
          %v2619 = vunpack.c.h.b16 %v2319
          %v2620 = vunpack.c.l.b16 %v2320
          %v2621 = vunpack.c.h.b16 %v2320
          %v2622 = vunpack.c.l.b16 %v2321
          %v2623 = vunpack.c.h.b16 %v2321
          %v2624 = vunpack.c.l.b16 %v2322
          %v2625 = vunpack.c.h.b16 %v2322
          %v2626 = vunpack.c.l.b16 %v2323
          %v2627 = vunpack.c.h.b16 %v2323
          %v2628 = vunpack.c.l.b16 %v2324
          %v2629 = vunpack.c.h.b16 %v2324
          %v2630 = vunpack.c.l.b16 %v2325
          %v2631 = vunpack.c.h.b16 %v2325
          %v2632 = vunpack.c.l.b16 %v2326
          %v2633 = vunpack.c.h.b16 %v2326
          %v2634 = vunpack.c.l.b16 %v2327
          %v2635 = vunpack.c.h.b16 %v2327
          %v2636 = vunpack.c.l.b16 %v2328
          %v2637 = vunpack.c.h.b16 %v2328
          %v2638 = vunpack.c.l.b16 %v2329
          %v2639 = vunpack.c.h.b16 %v2329
          %v2640 = vunpack.c.l.b16 %v2330
          %v2641 = vunpack.c.h.b16 %v2330
          %v2642 = vunpack.c.l.b16 %v2331
          %v2643 = vunpack.c.h.b16 %v2331
          %v2644 = vunpack.c.l.b16 %v2332
          %v2645 = vunpack.c.h.b16 %v2332
          %v2646 = vunpack.c.l.b16 %v2333
          %v2647 = vunpack.c.h.b16 %v2333
          %v2648 = vunpack.c.l.b16 %v2334
          %v2649 = vunpack.c.h.b16 %v2334
          %v2650 = vunpack.c.l.b16 %v2335
          %v2651 = vunpack.c.h.b16 %v2335
          %v2652 = vunpack.c.l.b16 %v2336
          %v2653 = vunpack.c.h.b16 %v2336
          %v2654 = vunpack.c.l.b16 %v2337
          %v2655 = vunpack.c.h.b16 %v2337
          %v2656 = vunpack.c.l.b16 %v2338
          %v2657 = vunpack.c.h.b16 %v2338
          %v2658 = vunpack.c.l.b16 %v2339
          %v2659 = vunpack.c.h.b16 %v2339
          %v2660 = vunpack.c.l.b16 %v2340
          %v2661 = vunpack.c.h.b16 %v2340
          %v2662 = vunpack.c.l.b16 %v2341
          %v2663 = vunpack.c.h.b16 %v2341
          %v2664 = vunpack.c.l.b16 %v2342
          %v2665 = vunpack.c.h.b16 %v2342
          %v2666 = vunpack.c.l.b16 %v2343
          %v2667 = vunpack.c.h.b16 %v2343
          %v2668 = vunpack.c.l.b16 %v2344
          %v2669 = vunpack.c.h.b16 %v2344
          %v2670 = vunpack.c.l.b16 %v2345
          %v2671 = vunpack.c.h.b16 %v2345
          %v2672 = vunpack.c.l.b16 %v2346
          %v2673 = vunpack.c.h.b16 %v2346
          %v2674 = vunpack.c.l.b16 %v2347
          %v2675 = vunpack.c.h.b16 %v2347
          %v2676 = vunpack.c.l.b16 %v2348
          %v2677 = vunpack.c.h.b16 %v2348
          %v2678 = vunpack.c.l.b16 %v2349
          %v2679 = vunpack.c.h.b16 %v2349
          %v2680 = vunpack.c.l.b16 %v2350
          %v2681 = vunpack.c.h.b16 %v2350
          %v2682 = vunpack.c.l.b16 %v2351
          %v2683 = vunpack.c.h.b16 %v2351
          %v2684 = vunpack.c.l.b16 %v2352
          %v2685 = vunpack.c.h.b16 %v2352
          %v2686 = vunpack.c.l.b16 %v2353
          %v2687 = vunpack.c.h.b16 %v2353
          %v2688 = vunpack.c.l.b16 %v2354
          %v2689 = vunpack.c.h.b16 %v2354
          %v2690 = vunpack.c.l.b16 %v2355
          %v2691 = vunpack.c.h.b16 %v2355
          %v2692 = vunpack.c.l.b16 %v2356
          %v2693 = vunpack.c.h.b16 %v2356
          %v2694 = vunpack.c.l.b16 %v2357
          %v2695 = vunpack.c.h.b16 %v2357
          %v2696 = vunpack.c.l.b16 %v2358
          %v2697 = vunpack.c.h.b16 %v2358
          %v2698 = vunpack.c.l.b16 %v2359
          %v2699 = vunpack.c.h.b16 %v2359
          %v2700 = vunpack.c.l.b16 %v2360
          %v2701 = vunpack.c.h.b16 %v2360
          %v2702 = vunpack.c.l.b16 %v2361
          %v2703 = vunpack.c.h.b16 %v2361
          %v2704 = vunpack.c.l.b16 %v2362
          %v2705 = vunpack.c.h.b16 %v2362
          %v2706 = vunpack.c.l.b16 %v2363
          %v2707 = vunpack.c.h.b16 %v2363
          %v2708 = vunpack.c.l.b16 %v2364
          %v2709 = vunpack.c.h.b16 %v2364
          %v2710 = vunpack.c.l.b16 %v2365
          %v2711 = vunpack.c.h.b16 %v2365
          %v2712 = vunpack.c.l.b16 %v2366
          %v2713 = vunpack.c.h.b16 %v2366
          %v2714 = vunpack.c.l.b16 %v2367
          %v2715 = vunpack.c.h.b16 %v2367
          %v2716 = vunpack.c.l.b16 %v2368
          %v2717 = vunpack.c.h.b16 %v2368
          %v2718 = vunpack.c.l.b16 %v2369
          %v2719 = vunpack.c.h.b16 %v2369
          %v2720 = vunpack.c.l.b16 %v2370
          %v2721 = vunpack.c.h.b16 %v2370
          %v2722 = vunpack.c.l.b16 %v2371
          %v2723 = vunpack.c.h.b16 %v2371
          %v2724 = vunpack.c.l.b16 %v2372
          %v2725 = vunpack.c.h.b16 %v2372
          %v2726 = vunpack.c.l.b16 %v2373
          %v2727 = vunpack.c.h.b16 %v2373
          %v2728 = vunpack.c.l.b16 %v2374
          %v2729 = vunpack.c.h.b16 %v2374
          %v2730 = vunpack.c.l.b16 %v2375
          %v2731 = vunpack.c.h.b16 %v2375
          %v2732 = vunpack.c.l.b16 %v2376
          %v2733 = vunpack.c.h.b16 %v2376
          %v2734 = vunpack.c.l.b16 %v2377
          %v2735 = vunpack.c.h.b16 %v2377
          %v2736 = vunpack.c.l.b16 %v2378
          %v2737 = vunpack.c.h.b16 %v2378
          %v2738 = vunpack.c.l.b16 %v2379
          %v2739 = vunpack.c.h.b16 %v2379
          %v2740 = vunpack.c.l.b16 %v2380
          %v2741 = vunpack.c.h.b16 %v2380
          %v2742 = vunpack.c.l.b16 %v2381
          %v2743 = vunpack.c.h.b16 %v2381
          %v2744 = vunpack.c.l.b16 %v2382
          %v2745 = vunpack.c.h.b16 %v2382
          %v2746 = vunpack.c.l.b16 %v2383
          %v2747 = vunpack.c.h.b16 %v2383
          %v2748 = vunpack.c.l.b16 %v2384
          %v2749 = vunpack.c.h.b16 %v2384
          %v2750 = vunpack.c.l.b16 %v2385
          %v2751 = vunpack.c.h.b16 %v2385
          %v2752 = vunpack.c.l.b16 %v2386
          %v2753 = vunpack.c.h.b16 %v2386
          %v2754 = vunpack.c.l.b16 %v2387
          %v2755 = vunpack.c.h.b16 %v2387
          %v2756 = vunpack.c.l.b16 %v2388
          %v2757 = vunpack.c.h.b16 %v2388
          %v2758 = vunpack.c.l.b16 %v2389
          %v2759 = vunpack.c.h.b16 %v2389
          %v2760 = vunpack.c.l.b16 %v2390
          %v2761 = vunpack.c.h.b16 %v2390
          %v2762 = vunpack.c.l.b16 %v2391
          %v2763 = vunpack.c.h.b16 %v2391
          %v2764 = vunpack.c.l.b16 %v2392
          %v2765 = vunpack.c.h.b16 %v2392
          %v2766 = vunpack.c.l.b16 %v2393
          %v2767 = vunpack.c.h.b16 %v2393
          %v2768 = vunpack.c.l.b16 %v2394
          %v2769 = vunpack.c.h.b16 %v2394
          %v2770 = vunpack.c.l.b16 %v2395
          %v2771 = vunpack.c.h.b16 %v2395
          %v2772 = vunpack.c.l.b16 %v2396
          %v2773 = vunpack.c.h.b16 %v2396
          %v2774 = vunpack.c.l.b16 %v2397
          %v2775 = vunpack.c.h.b16 %v2397
          %v2776 = vunpack.c.l.b16 %v2398
          %v2777 = vunpack.c.h.b16 %v2398
          %v2778 = vunpack.c.l.b16 %v2399
          %v2779 = vunpack.c.h.b16 %v2399
          %v2780 = vunpack.c.l.b16 %v2400
          %v2781 = vunpack.c.h.b16 %v2400
          %v2782 = vunpack.c.l.b16 %v2401
          %v2783 = vunpack.c.h.b16 %v2401
          %v2784 = vunpack.c.l.b16 %v2402
          %v2785 = vunpack.c.h.b16 %v2402
          %v2786 = vunpack.c.l.b16 %v2403
          %v2787 = vunpack.c.h.b16 %v2403
          %v2788 = vunpack.c.l.b16 %v2404
          %v2789 = vunpack.c.h.b16 %v2404
          %v2790 = vunpack.c.l.b16 %v2405
          %v2791 = vunpack.c.h.b16 %v2405
          %v2792 = vunpack.c.l.b16 %v2406
          %v2793 = vunpack.c.h.b16 %v2406
          %v2794 = vunpack.c.l.b16 %v2407
          %v2795 = vunpack.c.h.b16 %v2407
          %v2796 = vunpack.c.l.b16 %v2408
          %v2797 = vunpack.c.h.b16 %v2408
          %v2798 = vunpack.c.l.b16 %v2409
          %v2799 = vunpack.c.h.b16 %v2409
          %v2800 = vunpack.c.l.b16 %v2410
          %v2801 = vunpack.c.h.b16 %v2410
          %v2802 = vunpack.c.l.b16 %v2411
          %v2803 = vunpack.c.h.b16 %v2411
          %v2804 = vunpack.c.l.b16 %v2412
          %v2805 = vunpack.c.h.b16 %v2412
          %v2806 = vunpack.c.l.b16 %v2413
          %v2807 = vunpack.c.h.b16 %v2413
          %v2808 = vunpack.c.l.b16 %v2414
          %v2809 = vunpack.c.h.b16 %v2414
          %v2810 = vunpack.c.l.b16 %v2415
          %v2811 = vunpack.c.h.b16 %v2415
          %v2812 = vpack.c.b16 %v2558, %v2556
          %v2813 = vpack.c.b16 %v2559, %v2557
          %v2814 = vpack.c.b16 %v2562, %v2560
          %v2815 = vpack.c.b16 %v2563, %v2561
          %v2816 = vpack.c.b16 %v2566, %v2564
          %v2817 = vpack.c.b16 %v2567, %v2565
          %v2818 = vpack.c.b16 %v2570, %v2568
          %v2819 = vpack.c.b16 %v2571, %v2569
          %v2820 = vpack.c.b16 %v2574, %v2572
          %v2821 = vpack.c.b16 %v2575, %v2573
          %v2822 = vpack.c.b16 %v2578, %v2576
          %v2823 = vpack.c.b16 %v2579, %v2577
          %v2824 = vpack.c.b16 %v2582, %v2580
          %v2825 = vpack.c.b16 %v2583, %v2581
          %v2826 = vpack.c.b16 %v2586, %v2584
          %v2827 = vpack.c.b16 %v2587, %v2585
          %v2828 = vpack.c.b16 %v2590, %v2588
          %v2829 = vpack.c.b16 %v2591, %v2589
          %v2830 = vpack.c.b16 %v2594, %v2592
          %v2831 = vpack.c.b16 %v2595, %v2593
          %v2832 = vpack.c.b16 %v2598, %v2596
          %v2833 = vpack.c.b16 %v2599, %v2597
          %v2834 = vpack.c.b16 %v2602, %v2600
          %v2835 = vpack.c.b16 %v2603, %v2601
          %v2836 = vpack.c.b16 %v2606, %v2604
          %v2837 = vpack.c.b16 %v2607, %v2605
          %v2838 = vpack.c.b16 %v2610, %v2608
          %v2839 = vpack.c.b16 %v2611, %v2609
          %v2840 = vpack.c.b16 %v2614, %v2612
          %v2841 = vpack.c.b16 %v2615, %v2613
          %v2842 = vpack.c.b16 %v2618, %v2616
          %v2843 = vpack.c.b16 %v2619, %v2617
          %v2844 = vpack.c.b16 %v2622, %v2620
          %v2845 = vpack.c.b16 %v2623, %v2621
          %v2846 = vpack.c.b16 %v2626, %v2624
          %v2847 = vpack.c.b16 %v2627, %v2625
          %v2848 = vpack.c.b16 %v2630, %v2628
          %v2849 = vpack.c.b16 %v2631, %v2629
          %v2850 = vpack.c.b16 %v2634, %v2632
          %v2851 = vpack.c.b16 %v2635, %v2633
          %v2852 = vpack.c.b16 %v2638, %v2636
          %v2853 = vpack.c.b16 %v2639, %v2637
          %v2854 = vpack.c.b16 %v2642, %v2640
          %v2855 = vpack.c.b16 %v2643, %v2641
          %v2856 = vpack.c.b16 %v2646, %v2644
          %v2857 = vpack.c.b16 %v2647, %v2645
          %v2858 = vpack.c.b16 %v2650, %v2648
          %v2859 = vpack.c.b16 %v2651, %v2649
          %v2860 = vpack.c.b16 %v2654, %v2652
          %v2861 = vpack.c.b16 %v2655, %v2653
          %v2862 = vpack.c.b16 %v2658, %v2656
          %v2863 = vpack.c.b16 %v2659, %v2657
          %v2864 = vpack.c.b16 %v2662, %v2660
          %v2865 = vpack.c.b16 %v2663, %v2661
          %v2866 = vpack.c.b16 %v2666, %v2664
          %v2867 = vpack.c.b16 %v2667, %v2665
          %v2868 = vpack.c.b16 %v2670, %v2668
          %v2869 = vpack.c.b16 %v2671, %v2669
          %v2870 = vpack.c.b16 %v2674, %v2672
          %v2871 = vpack.c.b16 %v2675, %v2673
          %v2872 = vpack.c.b16 %v2678, %v2676
          %v2873 = vpack.c.b16 %v2679, %v2677
          %v2874 = vpack.c.b16 %v2682, %v2680
          %v2875 = vpack.c.b16 %v2683, %v2681
          %v2876 = vpack.c.b16 %v2686, %v2684
          %v2877 = vpack.c.b16 %v2687, %v2685
          %v2878 = vpack.c.b16 %v2690, %v2688
          %v2879 = vpack.c.b16 %v2691, %v2689
          %v2880 = vpack.c.b16 %v2694, %v2692
          %v2881 = vpack.c.b16 %v2695, %v2693
          %v2882 = vpack.c.b16 %v2698, %v2696
          %v2883 = vpack.c.b16 %v2699, %v2697
          %v2884 = vpack.c.b16 %v2702, %v2700
          %v2885 = vpack.c.b16 %v2703, %v2701
          %v2886 = vpack.c.b16 %v2706, %v2704
          %v2887 = vpack.c.b16 %v2707, %v2705
          %v2888 = vpack.c.b16 %v2710, %v2708
          %v2889 = vpack.c.b16 %v2711, %v2709
          %v2890 = vpack.c.b16 %v2714, %v2712
          %v2891 = vpack.c.b16 %v2715, %v2713
          %v2892 = vpack.c.b16 %v2718, %v2716
          %v2893 = vpack.c.b16 %v2719, %v2717
          %v2894 = vpack.c.b16 %v2722, %v2720
          %v2895 = vpack.c.b16 %v2723, %v2721
          %v2896 = vpack.c.b16 %v2726, %v2724
          %v2897 = vpack.c.b16 %v2727, %v2725
          %v2898 = vpack.c.b16 %v2730, %v2728
          %v2899 = vpack.c.b16 %v2731, %v2729
          %v2900 = vpack.c.b16 %v2734, %v2732
          %v2901 = vpack.c.b16 %v2735, %v2733
          %v2902 = vpack.c.b16 %v2738, %v2736
          %v2903 = vpack.c.b16 %v2739, %v2737
          %v2904 = vpack.c.b16 %v2742, %v2740
          %v2905 = vpack.c.b16 %v2743, %v2741
          %v2906 = vpack.c.b16 %v2746, %v2744
          %v2907 = vpack.c.b16 %v2747, %v2745
          %v2908 = vpack.c.b16 %v2750, %v2748
          %v2909 = vpack.c.b16 %v2751, %v2749
          %v2910 = vpack.c.b16 %v2754, %v2752
          %v2911 = vpack.c.b16 %v2755, %v2753
          %v2912 = vpack.c.b16 %v2758, %v2756
          %v2913 = vpack.c.b16 %v2759, %v2757
          %v2914 = vpack.c.b16 %v2762, %v2760
          %v2915 = vpack.c.b16 %v2763, %v2761
          %v2916 = vpack.c.b16 %v2766, %v2764
          %v2917 = vpack.c.b16 %v2767, %v2765
          %v2918 = vpack.c.b16 %v2770, %v2768
          %v2919 = vpack.c.b16 %v2771, %v2769
          %v2920 = vpack.c.b16 %v2774, %v2772
          %v2921 = vpack.c.b16 %v2775, %v2773
          %v2922 = vpack.c.b16 %v2778, %v2776
          %v2923 = vpack.c.b16 %v2779, %v2777
          %v2924 = vpack.c.b16 %v2782, %v2780
          %v2925 = vpack.c.b16 %v2783, %v2781
          %v2926 = vpack.c.b16 %v2786, %v2784
          %v2927 = vpack.c.b16 %v2787, %v2785
          %v2928 = vpack.c.b16 %v2790, %v2788
          %v2929 = vpack.c.b16 %v2791, %v2789
          %v2930 = vpack.c.b16 %v2794, %v2792
          %v2931 = vpack.c.b16 %v2795, %v2793
          %v2932 = vpack.c.b16 %v2798, %v2796
          %v2933 = vpack.c.b16 %v2799, %v2797
          %v2934 = vpack.c.b16 %v2802, %v2800
          %v2935 = vpack.c.b16 %v2803, %v2801
          %v2936 = vpack.c.b16 %v2806, %v2804
          %v2937 = vpack.c.b16 %v2807, %v2805
          %v2938 = vpack.c.b16 %v2810, %v2808
          %v2939 = vpack.c.b16 %v2811, %v2809
          %3068 = vmatprep.subr.bf16.mxu0 %v2813
          %3069 = vmatpush1.bf16.msra.mxu0 %v2812
          %3070 = vmatprep.subr.bf16.mxu0 %v2815
          %3071 = vmatpush1.bf16.msra.mxu0 %v2814
          %3072 = vmatprep.subr.bf16.mxu0 %v2817
          %3073 = vmatpush1.bf16.msra.mxu0 %v2816
          %3074 = vmatprep.subr.bf16.mxu0 %v2819
          %3075 = vmatpush1.bf16.msra.mxu0 %v2818
          %3076 = vmatprep.subr.bf16.mxu0 %v2821
          %3077 = vmatpush1.bf16.msra.mxu0 %v2820
          %3078 = vmatprep.subr.bf16.mxu0 %v2823
          %3079 = vmatpush1.bf16.msra.mxu0 %v2822
          %3080 = vmatprep.subr.bf16.mxu0 %v2825
          %3081 = vmatpush1.bf16.msra.mxu0 %v2824
          %3082 = vmatprep.subr.bf16.mxu0 %v2827
          %3083 = vmatpush1.bf16.msra.mxu0 %v2826
          %3084 = vmatprep.subr.bf16.mxu0 %v2829
          %3085 = vmatpush1.bf16.msra.mxu0 %v2828
          %3086 = vmatprep.subr.bf16.mxu0 %v2831
          %3087 = vmatpush1.bf16.msra.mxu0 %v2830
          %3088 = vmatprep.subr.bf16.mxu0 %v2833
          %3089 = vmatpush1.bf16.msra.mxu0 %v2832
          %3090 = vmatprep.subr.bf16.mxu0 %v2835
          %3091 = vmatpush1.bf16.msra.mxu0 %v2834
          %3092 = vmatprep.subr.bf16.mxu0 %v2837
          %3093 = vmatpush1.bf16.msra.mxu0 %v2836
          %3094 = vmatprep.subr.bf16.mxu0 %v2839
          %3095 = vmatpush1.bf16.msra.mxu0 %v2838
          %3096 = vmatprep.subr.bf16.mxu0 %v2841
          %3097 = vmatpush1.bf16.msra.mxu0 %v2840
          %3098 = vmatprep.subr.bf16.mxu0 %v2843
          %3099 = vmatpush1.bf16.msra.mxu0 %v2842
          %3100 = vmatprep.mubr.bf16.mxu0 %v2281
          %3101 = vmatmul.mubr.bf16.gmra.mrb[0].mxu0 %v2280
          %v3102 = vpop.f32.mrb[0].mxu0
          %v3103 = vadd.f32 %v2421, %v3102
          %v3104 = vpop.f32.mrb[0].mxu0
          %v3105 = vadd.f32 %v2425, %v3104
          %v3106 = vpop.f32.mrb[0].mxu0
          %v3107 = vadd.f32 %v2421, %v3106
          %v3108 = vpop.f32.mrb[0].mxu0
          %v3109 = vadd.f32 %v2425, %v3108
          %3110 = vdwg.mxu0
          %3111 = vmatprep.subr.bf16.mxu0 %v2845
          %3112 = vmatpush1.bf16.msra.mxu0 %v2844
          %3113 = vmatprep.subr.bf16.mxu0 %v2847
          %3114 = vmatpush1.bf16.msra.mxu0 %v2846
          %3115 = vmatprep.subr.bf16.mxu0 %v2849
          %3116 = vmatpush1.bf16.msra.mxu0 %v2848
          %3117 = vmatprep.subr.bf16.mxu0 %v2851
          %3118 = vmatpush1.bf16.msra.mxu0 %v2850
          %3119 = vmatprep.subr.bf16.mxu0 %v2853
          %3120 = vmatpush1.bf16.msra.mxu0 %v2852
          %3121 = vmatprep.subr.bf16.mxu0 %v2855
          %3122 = vmatpush1.bf16.msra.mxu0 %v2854
          %3123 = vmatprep.subr.bf16.mxu0 %v2857
          %3124 = vmatpush1.bf16.msra.mxu0 %v2856
          %3125 = vmatprep.subr.bf16.mxu0 %v2859
          %3126 = vmatpush1.bf16.msra.mxu0 %v2858
          %3127 = vmatprep.subr.bf16.mxu0 %v2861
          %3128 = vmatpush1.bf16.msra.mxu0 %v2860
          %3129 = vmatprep.subr.bf16.mxu0 %v2863
          %3130 = vmatpush1.bf16.msra.mxu0 %v2862
          %3131 = vmatprep.subr.bf16.mxu0 %v2865
          %3132 = vmatpush1.bf16.msra.mxu0 %v2864
          %3133 = vmatprep.subr.bf16.mxu0 %v2867
          %3134 = vmatpush1.bf16.msra.mxu0 %v2866
          %3135 = vmatprep.subr.bf16.mxu0 %v2869
          %3136 = vmatpush1.bf16.msra.mxu0 %v2868
          %3137 = vmatprep.subr.bf16.mxu0 %v2871
          %3138 = vmatpush1.bf16.msra.mxu0 %v2870
          %3139 = vmatprep.subr.bf16.mxu0 %v2873
          %3140 = vmatpush1.bf16.msra.mxu0 %v2872
          %3141 = vmatprep.subr.bf16.mxu0 %v2875
          %3142 = vmatpush1.bf16.msra.mxu0 %v2874
          %3143 = vmatprep.mubr.bf16.mxu0 %v2283
          %3144 = vmatmul.mubr.bf16.gmra.mrb[0].mxu0 %v2282
          %v3145 = vpop.f32.mrb[0].mxu0
          %v3146 = vadd.f32 %v3103, %v3145
          %v3147 = vpop.f32.mrb[0].mxu0
          %v3148 = vadd.f32 %v3105, %v3147
          %v3149 = vpop.f32.mrb[0].mxu0
          %v3150 = vadd.f32 %v3107, %v3149
          %v3151 = vpop.f32.mrb[0].mxu0
          %v3152 = vadd.f32 %v3109, %v3151
          %3153 = vdwg.mxu0
          %3154 = vmatprep.subr.bf16.mxu0 %v2877
          %3155 = vmatpush1.bf16.msra.mxu0 %v2876
          %3156 = vmatprep.subr.bf16.mxu0 %v2879
          %3157 = vmatpush1.bf16.msra.mxu0 %v2878
          %3158 = vmatprep.subr.bf16.mxu0 %v2881
          %3159 = vmatpush1.bf16.msra.mxu0 %v2880
          %3160 = vmatprep.subr.bf16.mxu0 %v2883
          %3161 = vmatpush1.bf16.msra.mxu0 %v2882
          %3162 = vmatprep.subr.bf16.mxu0 %v2885
          %3163 = vmatpush1.bf16.msra.mxu0 %v2884
          %3164 = vmatprep.subr.bf16.mxu0 %v2887
          %3165 = vmatpush1.bf16.msra.mxu0 %v2886
          %3166 = vmatprep.subr.bf16.mxu0 %v2889
          %3167 = vmatpush1.bf16.msra.mxu0 %v2888
          %3168 = vmatprep.subr.bf16.mxu0 %v2891
          %3169 = vmatpush1.bf16.msra.mxu0 %v2890
          %3170 = vmatprep.subr.bf16.mxu0 %v2893
          %3171 = vmatpush1.bf16.msra.mxu0 %v2892
          %3172 = vmatprep.subr.bf16.mxu0 %v2895
          %3173 = vmatpush1.bf16.msra.mxu0 %v2894
          %3174 = vmatprep.subr.bf16.mxu0 %v2897
          %3175 = vmatpush1.bf16.msra.mxu0 %v2896
          %3176 = vmatprep.subr.bf16.mxu0 %v2899
          %3177 = vmatpush1.bf16.msra.mxu0 %v2898
          %3178 = vmatprep.subr.bf16.mxu0 %v2901
          %3179 = vmatpush1.bf16.msra.mxu0 %v2900
          %3180 = vmatprep.subr.bf16.mxu0 %v2903
          %3181 = vmatpush1.bf16.msra.mxu0 %v2902
          %3182 = vmatprep.subr.bf16.mxu0 %v2905
          %3183 = vmatpush1.bf16.msra.mxu0 %v2904
          %3184 = vmatprep.subr.bf16.mxu0 %v2907
          %3185 = vmatpush1.bf16.msra.mxu0 %v2906
          %3186 = vmatprep.mubr.bf16.mxu0 %v2285
          %3187 = vmatmul.mubr.bf16.gmra.mrb[0].mxu0 %v2284
          %v3188 = vpop.f32.mrb[0].mxu0
          %v3189 = vadd.f32 %v3146, %v3188
          %v3190 = vpop.f32.mrb[0].mxu0
          %v3191 = vadd.f32 %v3148, %v3190
          %v3192 = vpop.f32.mrb[0].mxu0
          %v3193 = vadd.f32 %v3150, %v3192
          %v3194 = vpop.f32.mrb[0].mxu0
          %v3195 = vadd.f32 %v3152, %v3194
          %3196 = vdwg.mxu0
          %3197 = vmatprep.subr.bf16.mxu0 %v2909
          %3198 = vmatpush1.bf16.msra.mxu0 %v2908
          %3199 = vmatprep.subr.bf16.mxu0 %v2911
          %3200 = vmatpush1.bf16.msra.mxu0 %v2910
          %3201 = vmatprep.subr.bf16.mxu0 %v2913
          %3202 = vmatpush1.bf16.msra.mxu0 %v2912
          %3203 = vmatprep.subr.bf16.mxu0 %v2915
          %3204 = vmatpush1.bf16.msra.mxu0 %v2914
          %3205 = vmatprep.subr.bf16.mxu0 %v2917
          %3206 = vmatpush1.bf16.msra.mxu0 %v2916
          %3207 = vmatprep.subr.bf16.mxu0 %v2919
          %3208 = vmatpush1.bf16.msra.mxu0 %v2918
          %3209 = vmatprep.subr.bf16.mxu0 %v2921
          %3210 = vmatpush1.bf16.msra.mxu0 %v2920
          %3211 = vmatprep.subr.bf16.mxu0 %v2923
          %3212 = vmatpush1.bf16.msra.mxu0 %v2922
          %3213 = vmatprep.subr.bf16.mxu0 %v2925
          %3214 = vmatpush1.bf16.msra.mxu0 %v2924
          %3215 = vmatprep.subr.bf16.mxu0 %v2927
          %3216 = vmatpush1.bf16.msra.mxu0 %v2926
          %3217 = vmatprep.subr.bf16.mxu0 %v2929
          %3218 = vmatpush1.bf16.msra.mxu0 %v2928
          %3219 = vmatprep.subr.bf16.mxu0 %v2931
          %3220 = vmatpush1.bf16.msra.mxu0 %v2930
          %3221 = vmatprep.subr.bf16.mxu0 %v2933
          %3222 = vmatpush1.bf16.msra.mxu0 %v2932
          %3223 = vmatprep.subr.bf16.mxu0 %v2935
          %3224 = vmatpush1.bf16.msra.mxu0 %v2934
          %3225 = vmatprep.subr.bf16.mxu0 %v2937
          %3226 = vmatpush1.bf16.msra.mxu0 %v2936
          %3227 = vmatprep.subr.bf16.mxu0 %v2939
          %3228 = vmatpush1.bf16.msra.mxu0 %v2938
          %3229 = vmatprep.mubr.bf16.mxu0 %v2287
          %3230 = vmatmul.mubr.bf16.gmra.mrb[0].mxu0 %v2286
          %v3231 = vpop.f32.mrb[0].mxu0
          %v3232 = vadd.f32 %v3189, %v3231
          %v3233 = vpop.f32.mrb[0].mxu0
          %v3234 = vadd.f32 %v3191, %v3233
          %v3235 = vpop.f32.mrb[0].mxu0
          %v3236 = vadd.f32 %v3193, %v3235
          %v3237 = vpop.f32.mrb[0].mxu0
          %v3238 = vadd.f32 %v3195, %v3237
          %3239 = vdwg.mxu0
          %v3240 = vmax.f32 %v3232, 0.0
          %v3241 = vmax.f32 %v3234, 0.0
          %v3242 = vmax.f32 %v3236, 0.0
          %v3243 = vmax.f32 %v3238, 0.0
          %v3244 = vld [vmem:[#allocation4] sm:$0xff]
          %v3245 = vld [vmem:[#allocation4 + $0x8] sm:$0xff]
          %v3246 = vpack.c.bf16 %v3242, %v3240
          %v3247 = vpack.c.bf16 %v3243, %v3241
          %v3248 = vld [vmem:[%s655] sm:$0xf]
          %v3249 = vld [vmem:[%s655 + $0x4] sm:$0xf]
          %v3250 = vld [vmem:[%s655 + $0x8] sm:$0xf]
          %v3251 = vld [vmem:[%s655 + $0xc] sm:$0xf]
          %v3252 = vld [vmem:[%s655 + $0x10] sm:$0xf]
          %v3253 = vld [vmem:[%s655 + $0x14] sm:$0xf]
          %v3254 = vld [vmem:[%s655 + $0x18] sm:$0xf]
          %v3255 = vld [vmem:[%s655 + $0x1c] sm:$0xf]
          %v3256 = vld [vmem:[%s655 + $0x20] sm:$0xf]
          %v3257 = vld [vmem:[%s655 + $0x24] sm:$0xf]
          %v3258 = vld [vmem:[%s655 + $0x28] sm:$0xf]
          %v3259 = vld [vmem:[%s655 + $0x2c] sm:$0xf]
          %v3260 = vld [vmem:[%s655 + $0x30] sm:$0xf]
          %v3261 = vld [vmem:[%s655 + $0x34] sm:$0xf]
          %v3262 = vld [vmem:[%s655 + $0x38] sm:$0xf]
          %v3263 = vld [vmem:[%s655 + $0x3c] sm:$0xf]
          %v3264 = vld [vmem:[%s655 + $0x40] sm:$0xf]
          %v3265 = vld [vmem:[%s655 + $0x44] sm:$0xf]
          %v3266 = vld [vmem:[%s655 + $0x48] sm:$0xf]
          %v3267 = vld [vmem:[%s655 + $0x4c] sm:$0xf]
          %v3268 = vld [vmem:[%s655 + $0x50] sm:$0xf]
          %v3269 = vld [vmem:[%s655 + $0x54] sm:$0xf]
          %v3270 = vld [vmem:[%s655 + $0x58] sm:$0xf]
          %v3271 = vld [vmem:[%s655 + $0x5c] sm:$0xf]
          %v3272 = vld [vmem:[%s655 + $0x60] sm:$0xf]
          %v3273 = vld [vmem:[%s655 + $0x64] sm:$0xf]
          %v3274 = vld [vmem:[%s655 + $0x68] sm:$0xf]
          %v3275 = vld [vmem:[%s655 + $0x6c] sm:$0xf]
          %v3276 = vld [vmem:[%s655 + $0x70] sm:$0xf]
          %v3277 = vld [vmem:[%s655 + $0x74] sm:$0xf]
          %v3278 = vld [vmem:[%s655 + $0x78] sm:$0xf]
          %v3279 = vld [vmem:[%s655 + $0x7c] sm:$0xf]
          %v3312 = vunpack.c.l.b16 %v3248
          %v3313 = vunpack.c.l.b16 %v3249
          %v3314 = vunpack.c.l.b16 %v3250
          %v3315 = vunpack.c.l.b16 %v3251
          %v3316 = vunpack.c.l.b16 %v3252
          %v3317 = vunpack.c.l.b16 %v3253
          %v3318 = vunpack.c.l.b16 %v3254
          %v3319 = vunpack.c.l.b16 %v3255
          %v3320 = vunpack.c.l.b16 %v3256
          %v3321 = vunpack.c.l.b16 %v3257
          %v3322 = vunpack.c.l.b16 %v3258
          %v3323 = vunpack.c.l.b16 %v3259
          %v3324 = vunpack.c.l.b16 %v3260
          %v3325 = vunpack.c.l.b16 %v3261
          %v3326 = vunpack.c.l.b16 %v3262
          %v3327 = vunpack.c.l.b16 %v3263
          %v3328 = vunpack.c.l.b16 %v3264
          %v3329 = vunpack.c.l.b16 %v3265
          %v3330 = vunpack.c.l.b16 %v3266
          %v3331 = vunpack.c.l.b16 %v3267
          %v3332 = vunpack.c.l.b16 %v3268
          %v3333 = vunpack.c.l.b16 %v3269
          %v3334 = vunpack.c.l.b16 %v3270
          %v3335 = vunpack.c.l.b16 %v3271
          %v3336 = vunpack.c.l.b16 %v3272
          %v3337 = vunpack.c.l.b16 %v3273
          %v3338 = vunpack.c.l.b16 %v3274
          %v3339 = vunpack.c.l.b16 %v3275
          %v3340 = vunpack.c.l.b16 %v3276
          %v3341 = vunpack.c.l.b16 %v3277
          %v3342 = vunpack.c.l.b16 %v3278
          %v3343 = vunpack.c.l.b16 %v3279
          %v3344 = vpack.c.b16 %v3313, %v3312
          %v3345 = vpack.c.b16 %v3315, %v3314
          %v3346 = vpack.c.b16 %v3317, %v3316
          %v3347 = vpack.c.b16 %v3319, %v3318
          %v3348 = vpack.c.b16 %v3321, %v3320
          %v3349 = vpack.c.b16 %v3323, %v3322
          %v3350 = vpack.c.b16 %v3325, %v3324
          %v3351 = vpack.c.b16 %v3327, %v3326
          %v3352 = vpack.c.b16 %v3329, %v3328
          %v3353 = vpack.c.b16 %v3331, %v3330
          %v3354 = vpack.c.b16 %v3333, %v3332
          %v3355 = vpack.c.b16 %v3335, %v3334
          %v3356 = vpack.c.b16 %v3337, %v3336
          %v3357 = vpack.c.b16 %v3339, %v3338
          %v3358 = vpack.c.b16 %v3341, %v3340
          %v3359 = vpack.c.b16 %v3343, %v3342
          %3376 = vmatprep.subr.bf16.mxu0 0
          %3377 = vmatpush1.bf16.msra.mxu0 %v3344
          %3378 = vmatprep.subr.bf16.mxu0 0
          %3379 = vmatpush1.bf16.msra.mxu0 %v3345
          %3380 = vmatprep.subr.bf16.mxu0 0
          %3381 = vmatpush1.bf16.msra.mxu0 %v3346
          %3382 = vmatprep.subr.bf16.mxu0 0
          %3383 = vmatpush1.bf16.msra.mxu0 %v3347
          %3384 = vmatprep.subr.bf16.mxu0 0
          %3385 = vmatpush1.bf16.msra.mxu0 %v3348
          %3386 = vmatprep.subr.bf16.mxu0 0
          %3387 = vmatpush1.bf16.msra.mxu0 %v3349
          %3388 = vmatprep.subr.bf16.mxu0 0
          %3389 = vmatpush1.bf16.msra.mxu0 %v3350
          %3390 = vmatprep.subr.bf16.mxu0 0
          %3391 = vmatpush1.bf16.msra.mxu0 %v3351
          %3392 = vmatprep.subr.bf16.mxu0 0
          %3393 = vmatpush1.bf16.msra.mxu0 %v3352
          %3394 = vmatprep.subr.bf16.mxu0 0
          %3395 = vmatpush1.bf16.msra.mxu0 %v3353
          %3396 = vmatprep.subr.bf16.mxu0 0
          %3397 = vmatpush1.bf16.msra.mxu0 %v3354
          %3398 = vmatprep.subr.bf16.mxu0 0
          %3399 = vmatpush1.bf16.msra.mxu0 %v3355
          %3400 = vmatprep.subr.bf16.mxu0 0
          %3401 = vmatpush1.bf16.msra.mxu0 %v3356
          %3402 = vmatprep.subr.bf16.mxu0 0
          %3403 = vmatpush1.bf16.msra.mxu0 %v3357
          %3404 = vmatprep.subr.bf16.mxu0 0
          %3405 = vmatpush1.bf16.msra.mxu0 %v3358
          %3406 = vmatprep.subr.bf16.mxu0 0
          %3407 = vmatpush1.bf16.msra.mxu0 %v3359
          %3408 = vmatprep.mubr.bf16.mxu0 %v3247
          %3409 = vmatmul.mubr.bf16.gmra.mrb[0].mxu0 %v3246
          %v3410 = vpop.f32.mrb[0].mxu0
          %v3411 = vadd.f32 0.0, %v3410
          %v3412 = vpop.f32.mrb[0].mxu0
          %v3413 = vpop.f32.mrb[0].mxu0
          %v3414 = vadd.f32 0.0, %v3413
          %v3415 = vpop.f32.mrb[0].mxu0
          %3416 = vdwg.mxu0
          %v3417 = vadd.f32 %v3244, %v3411
          %v3418 = vadd.f32 %v3245, %v3414
          %vm3419 = vcmask 523264
          %3420 = vst.msk [vmem:[#allocation4] sm:$0xff] %vm3419, %v3417
          %3421 = vst.msk [vmem:[#allocation4 + $0x8] sm:$0xff] %vm3419, %v3418
        $region92: #{tpu_custom_call.1} parent=67 // pred_fallthru
          _
        // Predicated region
        $region93: #{tpu_custom_call.1} parent=67 // pred_check
          %p3422 = pneg %p1872
        $region94: #{tpu_custom_call.1} parent=67 // pred_check_branch
          %3424 = sbr.rel (%p3422) target = $region96
        $region95: #{tpu_custom_call.1} parent=67 // pred_region
          %v3425 = vld [vmem:[#allocation4] sm:$0xff]
          %v3426 = vld [vmem:[#allocation4 + $0x8] sm:$0xff]
          %v3427 = vld [vmem:[%s9] sm:$0x1]
          %v3429 = vlaneseq
          %v3430 = vshrl.u32 %v3429, 7
          %v3431 = vsub.s32 0, %v3430
          %v3432 = vrot.slane %v3427, %v3431
          %v3434 = vadd.f32 %v3425, %v3432
          %v3435 = vadd.f32 %v3426, %v3432
          %v3436 = vmul.f32 %v3434, 0.5
          %v3437 = vmul.f32 %v3435, 0.5
          %v3438 = vmul.f32 %v3436, 1.442695
          %v3439 = vpow.pop %v3438
          %v3440 = vmul.f32 %v3437, 1.442695
          %v3441 = vpow.pop %v3440
          %v3442 = vld [vmem:[%s628] sm:$0xff]
          %v3443 = vld [vmem:[%s628 + $0x8] sm:$0xff]
          %3446 = vrot.lane.b32.xlu0 %v3442, 32
          %v3447 = vpop.permute.xlu0 %3446
          %3448 = vrot.lane.b32.xlu0 %v3443, 32
          %v3449 = vpop.permute.xlu0 %3448
          %v3452 = vmul.f32 %v3439, %v3447
          %v3453 = vmul.f32 %v3441, %v3449
          %3456 = vrot.lane.b32.xlu0 %v3452, 96
          %v3457 = vpop.permute.xlu0 %3456
          %3458 = vrot.lane.b32.xlu0 %v3453, 96
          %v3459 = vpop.permute.xlu0 %3458
          %v3462 = vadd.f32 %v3434, %v3457
          %v3463 = vadd.f32 %v3435, %v3459
          %vm3464 = vcmask 523264
          %3465 = vst.msk [vmem:[#allocation10] sm:$0xff] %vm3464, %v3434
          %3466 = vst.msk [vmem:[#allocation10 + $0x8] sm:$0xff] %vm3464, %v3435
          %3469 = vrot.lane.b32.xlu0 %v3462, 64
          %v3470 = vpop.permute.xlu0 %3469
          %3471 = vrot.lane.b32.xlu0 %v3463, 64
          %v3472 = vpop.permute.xlu0 %3471
          %vm3475 = vcmask 785920
          %3476 = vst.msk [vmem:[#allocation10] sm:$0xff] %vm3475, %v3470
          %3477 = vst.msk [vmem:[#allocation10 + $0x8] sm:$0xff] %vm3475, %v3472
        $region96: #{tpu_custom_call.1} parent=67 // pred_fallthru
          _
        // Predicated region
        $region97: #{tpu_custom_call.1} parent=67 // pred_check
          %p3478 = pneg %p370
        $region98: #{tpu_custom_call.1} parent=67 // pred_check_branch
          %3480 = sbr.rel (%p3478) target = $region100
        $region99: #{tpu_custom_call.1} parent=67 // pred_region
          %s3481 = smul.u32 2, %s34
          %s3483 = ssub.s32 256, 256
          %3484 = vsyncadd [#allocation7], %s3483
          %s3485 = smul.addr %s3481, 128
          %s3486 = scalar_lea.hbm %s12, %s3485
          %s3487 = sshll.u32 [#allocation10], 4
          %s3488 = int_to_ptr.vmem [resolvable:$true] %s3487
          %3493 = dma.vmem_to_hbm [thread:$0]  %s3488, 256, %s3486, [#allocation7], 128, 128, 8
        $region100: #{tpu_custom_call.1} parent=67 // pred_fallthru
          _
        // Predicated region
        $region101: #{tpu_custom_call.1} parent=67 // pred_check
          %p3494 = pneg %p370
        $region102: #{tpu_custom_call.1} parent=67 // pred_check_branch
          %3496 = sbr.rel (%p3494) target = $region104
        $region103: #{tpu_custom_call.1} parent=67 // pred_region
          %3497 = dma.done [#allocation7], 256
        $region104: #{tpu_custom_call.1} parent=67 // pred_fallthru
          _
      $region68: #{tpu_custom_call.1} parent=5 // pred_fallthru
        _
      %p3498 = scmp.le.s32.totalorder 2, %s25
      // Predicated region
      $region105: #{tpu_custom_call.1} parent=5 // pred_check
        %p3499 = pneg %p3498
      $region106: #{tpu_custom_call.1} parent=5 // pred_check_branch
        %3501 = sbr.rel (%p3499) target = $region108
      $region107: #{tpu_custom_call.1} parent=5 // pred_region
        %s3502 = ssub.s32 %s25, 2
      $region108: #{tpu_custom_call.1} parent=5 // pred_fallthru
        _
    $region6: #{tpu_custom_call.1} parent=1 // loop_footer
      %s29 = sadd.s32 1, %s25
    $region7: #{tpu_custom_call.1} parent=1 // loop_footer_branch
      %24 = sbr.rel target = $region3
    $region8: #{tpu_custom_call.1} parent=1 // loop_exit
      _
    %3503 = vsyncpa [#allocation6], 1
    %s3504 = scalar_lea.sflag [#allocation6], 1
    %3505 = vsyncpa %s3504, 1
    %3506 = vsyncpa [#allocation9], 1
    %s3507 = scalar_lea.sflag [#allocation9], 1
    %3508 = vsyncpa %s3507, 1
    %3509 = vsyncpa [#allocation7], 1
    %s3510 = scalar_lea.sflag [#allocation7], 1
    %3511 = vsyncpa %s3510, 1

</llo_original>
